<compile_context>
chip_gen: v5e
topology: v5e:2x2
jax: 0.10.0
libtpu: 0.0.40
codegen_flags: <defaults>
</compile_context>

<pallas_src>
import functools

import jax
import jax.numpy as jnp
from jax import lax
from jax.experimental import pallas as pl
from jax.experimental.pallas import tpu as pltpu

BN_EPS = 1e-5
LEAKY_SLOPE = 0.2
LANE = 128
MAX_TILE_L = 512


def _round_up(x, m):
    return ((x + m - 1) // m) * m


# ----------------------------------------------------------------------------
# Kernel 1: Conv1d as polyphase tap accumulation on the MXU
#           (+ bias, + optional per-tile BatchNorm partial statistics).
# ----------------------------------------------------------------------------
def _conv_tap_kernel(x_ref, xh_ref, w_ref, b_ref, y_ref, *stats_refs,
                     taps_cin, tile_l, l_out, with_stats):
    # x_ref : (1, Cs, TILE_L)   bf16   current input tile (polyphase channels)
    # xh_ref: (1, Cs, 128)      bf16   128-lane halo (head of the next tile)
    # w_ref : (Q, C_out, Cs)    bf16   packed taps
    # b_ref : (C_out, 1)        f32
    # y_ref : (1, C_out, TILE_L)
    t = pl.program_id(1)
    c_out = y_ref.shape[1]

    xcat = jnp.concatenate([x_ref[0], xh_ref[0]], axis=-1)        # (Cs, TILE_L+128)

    acc = jnp.zeros((c_out, tile_l), jnp.float32)
    for q, cin_q in enumerate(taps_cin):                          # static unroll
        xq = xcat[:cin_q, q:q + tile_l]                           # static offsets
        wq = w_ref[q, :, :cin_q]                                  # (C_out, cin_q)
        acc = acc + jnp.dot(wq, xq, preferred_element_type=jnp.float32)
    acc = acc + b_ref[...]                                        # lane broadcast

    y_ref[0] = acc.astype(y_ref.dtype)

    if with_stats:
        stats_ref = stats_refs[0]
        lane_idx = lax.broadcasted_iota(jnp.int32, (1, tile_l), 1) + t * tile_l
        valid = lane_idx < l_out                                  # mask L padding
        ym = jnp.where(valid, acc, 0.0)
        s1 = jnp.sum(ym, axis=-1, keepdims=True)                  # (C_out, 1)
        s2 = jnp.sum(ym * ym, axis=-1, keepdims=True)             # (C_out, 1)
        stats_ref[0, 0] = jnp.concatenate([s1, s2], axis=-1)      # (C_out, 2)


# ----------------------------------------------------------------------------
# Kernel 2: per-channel affine (folded BatchNorm) + LeakyReLU, lane-dense.
# ----------------------------------------------------------------------------
def _bn_lrelu_kernel(y_ref, scale_ref, shift_ref, o_ref):
    z = y_ref[0].astype(jnp.float32) * scale_ref[...] + shift_ref[...]
    o_ref[0] = jnp.where(z >= 0.0, z, LEAKY_SLOPE * z).astype(o_ref.dtype)


# ----------------------------------------------------------------------------
# Wrappers
# ----------------------------------------------------------------------------
def _conv1d_pallas(h, w2, bias, *, c_in, c_out, kernel, stride, pad,
                   taps_cin, with_stats, out_dtype):
    n, _, l_in = h.shape
    l_out = (l_in + 2 * pad - kernel) // stride + 1
    tile_l = min(MAX_TILE_L, _round_up(l_out, LANE))
    n_tiles = _round_up(l_out, tile_l) // tile_l
    m_tot = (n_tiles + 1) * tile_l           # +1 tile => halo block never OOB
    l_padded = m_tot * stride

    # Host glue (single 1x pass): zero-pad + polyphase reorder -> channels = s*C_in.
    x_pad = jnp.pad(h.astype(jnp.bfloat16),
                    ((0, 0), (0, 0), (pad, l_padded - l_in - pad)))
    x2 = x_pad.reshape(n, c_in, m_tot, stride)
    x2 = jnp.transpose(x2, (0, 3, 1, 2)).reshape(n, stride * c_in, m_tot)

    cs = stride * c_in
    n_taps = len(taps_cin)
    halo_blocks = tile_l // LANE

    kernel_fn = functools.partial(
        _conv_tap_kernel, taps_cin=taps_cin, tile_l=tile_l, l_out=l_out,
        with_stats=with_stats)

    y_shape = jax.ShapeDtypeStruct((n, c_out, n_tiles * tile_l), out_dtype)
    y_spec = pl.BlockSpec((1, c_out, tile_l), lambda i, t: (i, 0, t))
    if with_stats:
        out_shape = (y_shape,
                     jax.ShapeDtypeStruct((n, n_tiles, c_out, 2), jnp.float32))
        out_specs = (y_spec,
                     pl.BlockSpec((1, 1, c_out, 2), lambda i, t: (i, t, 0, 0)))
    else:
        out_shape = y_shape
        out_specs = y_spec

    flops = 2 * n * n_tiles * tile_l * c_out * sum(taps_cin)
    bytes_accessed = (2 * x2.size + 2 * w2.size + 4 * bias.size
                      + n * c_out * n_tiles * tile_l * jnp.dtype(out_dtype).itemsize)

    res = pl.pallas_call(
        kernel_fn,
        grid=(n, n_tiles),
        in_specs=[
            pl.BlockSpec((1, cs, tile_l), lambda i, t: (i, 0, t)),
            pl.BlockSpec((1, cs, LANE), lambda i, t: (i, 0, (t + 1) * halo_blocks)),
            pl.BlockSpec((n_taps, c_out, cs), lambda i, t: (0, 0, 0)),
            pl.BlockSpec((c_out, 1), lambda i, t: (0, 0)),
        ],
        out_specs=out_specs,
        out_shape=out_shape,
        compiler_params=pltpu.CompilerParams(
            dimension_semantics=("parallel", "parallel"),
            vmem_limit_bytes=32 * 1024 * 1024),
        cost_estimate=pl.CostEstimate(flops=flops, transcendentals=0,
                                      bytes_accessed=bytes_accessed),
    )(x2, x2, w2, bias)

    if with_stats:
        y, stats = res
    else:
        y, stats = res, None
    return y, stats, l_out, tile_l


def _bn_leaky_relu_pallas(y, scale, shift, tile_l, out_dtype):
    n, c_out, l_pad = y.shape
    n_tiles = l_pad // tile_l
    return pl.pallas_call(
        _bn_lrelu_kernel,
        grid=(n, n_tiles),
        in_specs=[
            pl.BlockSpec((1, c_out, tile_l), lambda i, t: (i, 0, t)),
            pl.BlockSpec((c_out, 1), lambda i, t: (0, 0)),
            pl.BlockSpec((c_out, 1), lambda i, t: (0, 0)),
        ],
        out_specs=pl.BlockSpec((1, c_out, tile_l), lambda i, t: (i, 0, t)),
        out_shape=jax.ShapeDtypeStruct((n, c_out, l_pad), out_dtype),
        compiler_params=pltpu.CompilerParams(
            dimension_semantics=("parallel", "parallel")),
    )(y, scale, shift)


# ----------------------------------------------------------------------------
# Parameters (PyTorch-default-style init) + one-time weight packing.
# ----------------------------------------------------------------------------
def _init_conv(key, c_in, c_out, k):
    kw, kb = jax.random.split(key)
    bound = 1.0 / jnp.sqrt(jnp.float32(c_in * k))
    w = jax.random.uniform(kw, (c_out, c_in, k), jnp.float32, -bound, bound)
    b = jax.random.uniform(kb, (c_out,), jnp.float32, -bound, bound)
    return w, b


def _pack_weight(w, stride, kernel, c_in, c_out):
    """(C_out, C_in, K) -> (Q, C_out, stride*C_in) polyphase taps + per-tap widths."""
    n_taps = (kernel - 1) // stride + 1
    w2 = jnp.zeros((n_taps, c_out, stride * c_in), jnp.float32)
    taps_cin = []
    for q in range(n_taps):
        r_max = min(stride, kernel - q * stride)
        taps_cin.append(r_max * c_in)
        for r in range(r_max):
            w2 = w2.at[q, :, r * c_in:(r + 1) * c_in].set(w[:, :, q * stride + r])
    return w2.astype(jnp.bfloat16), tuple(taps_cin)


def make_encoder(key, data_size, latent_dim, hidden_dim):
    ratios = [4, 4, 4, 2]
    defs = [dict(c_in=data_size, c_out=hidden_dim, k=7, s=1, p=3, bn=False, head=False)]
    for i, r in enumerate(ratios):
        defs.append(dict(c_in=2 ** i * hidden_dim, c_out=2 ** (i + 1) * hidden_dim,
                         k=2 * r + 1, s=r, p=r, bn=True, head=False))
    head_in = 2 ** len(ratios) * hidden_dim
    # mean and var heads fused along C_out (split again after the conv).
    defs.append(dict(c_in=head_in, c_out=2 * latent_dim, k=5, s=1, p=2,
                     bn=False, head=True))

    params, specs = [], []
    keys = jax.random.split(key, len(defs))
    for d, kk in zip(defs, keys):
        if d["head"]:
            k1, k2 = jax.random.split(kk)
            w_m, b_m = _init_conv(k1, d["c_in"], latent_dim, d["k"])
            w_v, b_v = _init_conv(k2, d["c_in"], latent_dim, d["k"])
            w = jnp.concatenate([w_m, w_v], axis=0)
            b = jnp.concatenate([b_m, b_v], axis=0)
        else:
            w, b = _init_conv(kk, d["c_in"], d["c_out"], d["k"])
        w2, taps_cin = _pack_weight(w, d["s"], d["k"], d["c_in"], d["c_out"])
        arrs = dict(w2=w2, b=b.reshape(d["c_out"], 1).astype(jnp.float32))
        if d["bn"]:
            arrs["gamma"] = jnp.ones((d["c_out"],), jnp.float32)  # BatchNorm1d weight
            arrs["beta"] = jnp.zeros((d["c_out"],), jnp.float32)  # BatchNorm1d bias
        params.append(arrs)
        specs.append(dict(c_in=d["c_in"], c_out=d["c_out"], k=d["k"], s=d["s"],
                          p=d["p"], bn=d["bn"], taps_cin=taps_cin))
    return params, specs


def make_forward(specs, latent_dim):
    """Returns forward(x, params) -> (mean, var); x is NCL [N, data_size, L]."""
    n_layers = len(specs)

    def forward(x, params):
        h = x
        for idx, (spec, arrs) in enumerate(zip(specs, params)):
            last = idx == n_layers - 1
            out_dtype = jnp.float32 if last else jnp.bfloat16
            y, stats, l_out, tile_l = _conv1d_pallas(
                h, arrs["w2"], arrs["b"],
                c_in=spec["c_in"], c_out=spec["c_out"], kernel=spec["k"],
                stride=spec["s"], pad=spec["p"], taps_cin=spec["taps_cin"],
                with_stats=spec["bn"], out_dtype=out_dtype)
            if spec["bn"]:
                # Training-mode BatchNorm1d: batch stats over (N, L), biased variance.
                count = jnp.float32(h.shape[0] * l_out)
                tot = jnp.sum(stats[..., 0], axis=(0, 1))
                tot2 = jnp.sum(stats[..., 1], axis=(0, 1))
                mean = tot / count
                var = jnp.maximum(tot2 / count - mean * mean, 0.0)
                scale = arrs["gamma"] * lax.rsqrt(var + BN_EPS)
                shift = arrs["beta"] - mean * scale
                y = _bn_leaky_relu_pallas(y, scale.reshape(-1, 1),
                                          shift.reshape(-1, 1), tile_l,
                                          out_dtype=jnp.bfloat16)
            h = y[:, :, :l_out]            # drop L tile padding
        mean_out = h[:, :latent_dim, :]
        var_out = h[:, latent_dim:, :]
        return mean_out, var_out

    return forward


# ----------------------------------------------------------------------------
if __name__ == "__main__":
    # Small, forward-consistent shapes: data_size=16 (n_band), hidden_dim=8,
    # latent_dim=16, batch=2, seq length L=128 (divisible by total stride 4*4*4*2).
    data_size, hidden_dim, latent_dim = 16, 8, 16
    N, L = 2, 128

    key = jax.random.PRNGKey(0)
    k_params, k_x = jax.random.split(key)

    params, specs = make_encoder(k_params, data_size, latent_dim, hidden_dim)
    x = jax.random.normal(k_x, (N, data_size, L), jnp.float32)

    fwd = jax.jit(make_forward(specs, latent_dim))
    mean, var = fwd(x, params)
    jax.block_until_ready((mean, var))

    assert mean.shape == (N, latent_dim, L // 128), mean.shape
    assert var.shape == (N, latent_dim, L // 128), var.shape
    assert jnp.all(jnp.isfinite(mean)) and jnp.all(jnp.isfinite(var))

    print("KERNEL_OK")
</pallas_src>

<mosaic_0001>
module attributes {stable_mosaic.version = 11 : i64} {
  func.func @_conv_tap_kernel(%arg0: i32, %arg1: i32, %arg2: memref<1x16x128xbf16, #tpu.memory_space<vmem>>, %arg3: memref<1x16x128xbf16, #tpu.memory_space<vmem>>, %arg4: memref<7x8x16xbf16, #tpu.memory_space<vmem>>, %arg5: memref<8x1xf32, #tpu.memory_space<vmem>>, %arg6: memref<1x8x128xbf16, #tpu.memory_space<vmem>>) attributes {dimension_semantics = [#tpu.dimension_semantics<parallel>, #tpu.dimension_semantics<parallel>], iteration_bounds = array<i64: 2, 1>, scalar_prefetch = 0 : i64, scratch_operands = 0 : i64, tpu.core_type = #tpu.core_type<tc>, window_params = [{transform_indices = @transform_0, window_bounds = array<i64: 1, 16, 128>}, {transform_indices = @transform_1, window_bounds = array<i64: 1, 16, 128>}, {pipeline_mode = #tpu.pipeline_mode<synchronous>, transform_indices = @transform_2, window_bounds = array<i64: 7, 8, 16>}, {pipeline_mode = #tpu.pipeline_mode<synchronous>, transform_indices = @transform_3, window_bounds = array<i64: 8, 1>}, {transform_indices = @transform_4, window_bounds = array<i64: 1, 8, 128>}]} {
    %c0 = arith.constant 0 : index
    %c0_0 = arith.constant 0 : index
    %c0_1 = arith.constant 0 : index
    %0 = vector.load %arg2[%c0, %c0_0, %c0_1] : memref<1x16x128xbf16, #tpu.memory_space<vmem>>, vector<1x16x128xbf16>
    %1 = vector.shape_cast %0 : vector<1x16x128xbf16> to vector<16x128xbf16>
    %c0_2 = arith.constant 0 : index
    %c0_3 = arith.constant 0 : index
    %c0_4 = arith.constant 0 : index
    %2 = vector.load %arg3[%c0_2, %c0_3, %c0_4] : memref<1x16x128xbf16, #tpu.memory_space<vmem>>, vector<1x16x128xbf16>
    %3 = vector.shape_cast %2 : vector<1x16x128xbf16> to vector<16x128xbf16>
    %4 = tpu.concatenate %1, %3 in 1 : vector<16x128xbf16>, vector<16x128xbf16> -> vector<16x256xbf16>
    %cst = arith.constant 0.000000e+00 : f32
    %5 = vector.broadcast %cst : f32 to vector<8x128xf32>
    %6 = vector.extract_strided_slice %4 {offsets = [0, 0], sizes = [16, 128], strides = [1, 1]} : vector<16x256xbf16> to vector<16x128xbf16>
    %c0_5 = arith.constant 0 : index
    %c0_6 = arith.constant 0 : index
    %c0_7 = arith.constant 0 : index
    %7 = vector.load %arg4[%c0_5, %c0_6, %c0_7] : memref<7x8x16xbf16, #tpu.memory_space<vmem>>, vector<1x8x16xbf16>
    %8 = vector.shape_cast %7 : vector<1x8x16xbf16> to vector<8x16xbf16>
    %cst_8 = arith.constant dense<0.000000e+00> : vector<8x128xf32>
    %9 = tpu.matmul %8, %6, %cst_8 {dimension_numbers = #tpu.dot_dimension_numbers<[1], [0], [0], [1], [0, 0, 1, 1], [], []>} : vector<8x16xbf16>, vector<16x128xbf16>, vector<8x128xf32> -> vector<8x128xf32>
    %10 = arith.addf %5, %9 : vector<8x128xf32>
    %11 = vector.extract_strided_slice %4 {offsets = [0, 1], sizes = [16, 128], strides = [1, 1]} : vector<16x256xbf16> to vector<16x128xbf16>
    %c1 = arith.constant 1 : index
    %c0_9 = arith.constant 0 : index
    %c0_10 = arith.constant 0 : index
    %12 = vector.load %arg4[%c1, %c0_9, %c0_10] : memref<7x8x16xbf16, #tpu.memory_space<vmem>>, vector<1x8x16xbf16>
    %13 = vector.shape_cast %12 : vector<1x8x16xbf16> to vector<8x16xbf16>
    %cst_11 = arith.constant dense<0.000000e+00> : vector<8x128xf32>
    %14 = tpu.matmul %13, %11, %cst_11 {dimension_numbers = #tpu.dot_dimension_numbers<[1], [0], [0], [1], [0, 0, 1, 1], [], []>} : vector<8x16xbf16>, vector<16x128xbf16>, vector<8x128xf32> -> vector<8x128xf32>
    %15 = arith.addf %10, %14 : vector<8x128xf32>
    %16 = vector.extract_strided_slice %4 {offsets = [0, 2], sizes = [16, 128], strides = [1, 1]} : vector<16x256xbf16> to vector<16x128xbf16>
    %c2 = arith.constant 2 : index
    %c0_12 = arith.constant 0 : index
    %c0_13 = arith.constant 0 : index
    %17 = vector.load %arg4[%c2, %c0_12, %c0_13] : memref<7x8x16xbf16, #tpu.memory_space<vmem>>, vector<1x8x16xbf16>
    %18 = vector.shape_cast %17 : vector<1x8x16xbf16> to vector<8x16xbf16>
    %cst_14 = arith.constant dense<0.000000e+00> : vector<8x128xf32>
    %19 = tpu.matmul %18, %16, %cst_14 {dimension_numbers = #tpu.dot_dimension_numbers<[1], [0], [0], [1], [0, 0, 1, 1], [], []>} : vector<8x16xbf16>, vector<16x128xbf16>, vector<8x128xf32> -> vector<8x128xf32>
    %20 = arith.addf %15, %19 : vector<8x128xf32>
    %21 = vector.extract_strided_slice %4 {offsets = [0, 3], sizes = [16, 128], strides = [1, 1]} : vector<16x256xbf16> to vector<16x128xbf16>
    %c3 = arith.constant 3 : index
    %c0_15 = arith.constant 0 : index
    %c0_16 = arith.constant 0 : index
    %22 = vector.load %arg4[%c3, %c0_15, %c0_16] : memref<7x8x16xbf16, #tpu.memory_space<vmem>>, vector<1x8x16xbf16>
    %23 = vector.shape_cast %22 : vector<1x8x16xbf16> to vector<8x16xbf16>
    %cst_17 = arith.constant dense<0.000000e+00> : vector<8x128xf32>
    %24 = tpu.matmul %23, %21, %cst_17 {dimension_numbers = #tpu.dot_dimension_numbers<[1], [0], [0], [1], [0, 0, 1, 1], [], []>} : vector<8x16xbf16>, vector<16x128xbf16>, vector<8x128xf32> -> vector<8x128xf32>
    %25 = arith.addf %20, %24 : vector<8x128xf32>
    %26 = vector.extract_strided_slice %4 {offsets = [0, 4], sizes = [16, 128], strides = [1, 1]} : vector<16x256xbf16> to vector<16x128xbf16>
    %c4 = arith.constant 4 : index
    %c0_18 = arith.constant 0 : index
    %c0_19 = arith.constant 0 : index
    %27 = vector.load %arg4[%c4, %c0_18, %c0_19] : memref<7x8x16xbf16, #tpu.memory_space<vmem>>, vector<1x8x16xbf16>
    %28 = vector.shape_cast %27 : vector<1x8x16xbf16> to vector<8x16xbf16>
    %cst_20 = arith.constant dense<0.000000e+00> : vector<8x128xf32>
    %29 = tpu.matmul %28, %26, %cst_20 {dimension_numbers = #tpu.dot_dimension_numbers<[1], [0], [0], [1], [0, 0, 1, 1], [], []>} : vector<8x16xbf16>, vector<16x128xbf16>, vector<8x128xf32> -> vector<8x128xf32>
    %30 = arith.addf %25, %29 : vector<8x128xf32>
    %31 = vector.extract_strided_slice %4 {offsets = [0, 5], sizes = [16, 128], strides = [1, 1]} : vector<16x256xbf16> to vector<16x128xbf16>
    %c5 = arith.constant 5 : index
    %c0_21 = arith.constant 0 : index
    %c0_22 = arith.constant 0 : index
    %32 = vector.load %arg4[%c5, %c0_21, %c0_22] : memref<7x8x16xbf16, #tpu.memory_space<vmem>>, vector<1x8x16xbf16>
    %33 = vector.shape_cast %32 : vector<1x8x16xbf16> to vector<8x16xbf16>
    %cst_23 = arith.constant dense<0.000000e+00> : vector<8x128xf32>
    %34 = tpu.matmul %33, %31, %cst_23 {dimension_numbers = #tpu.dot_dimension_numbers<[1], [0], [0], [1], [0, 0, 1, 1], [], []>} : vector<8x16xbf16>, vector<16x128xbf16>, vector<8x128xf32> -> vector<8x128xf32>
    %35 = arith.addf %30, %34 : vector<8x128xf32>
    %36 = vector.extract_strided_slice %4 {offsets = [0, 6], sizes = [16, 128], strides = [1, 1]} : vector<16x256xbf16> to vector<16x128xbf16>
    %c6 = arith.constant 6 : index
    %c0_24 = arith.constant 0 : index
    %c0_25 = arith.constant 0 : index
    %37 = vector.load %arg4[%c6, %c0_24, %c0_25] : memref<7x8x16xbf16, #tpu.memory_space<vmem>>, vector<1x8x16xbf16>
    %38 = vector.shape_cast %37 : vector<1x8x16xbf16> to vector<8x16xbf16>
    %cst_26 = arith.constant dense<0.000000e+00> : vector<8x128xf32>
    %39 = tpu.matmul %38, %36, %cst_26 {dimension_numbers = #tpu.dot_dimension_numbers<[1], [0], [0], [1], [0, 0, 1, 1], [], []>} : vector<8x16xbf16>, vector<16x128xbf16>, vector<8x128xf32> -> vector<8x128xf32>
    %40 = arith.addf %35, %39 : vector<8x128xf32>
    %c0_27 = arith.constant 0 : index
    %c0_28 = arith.constant 0 : index
    %41 = vector.load %arg5[%c0_27, %c0_28] : memref<8x1xf32, #tpu.memory_space<vmem>>, vector<8x1xf32>
    %42 = vector.broadcast %41 : vector<8x1xf32> to vector<8x128xf32>
    %43 = arith.addf %40, %42 : vector<8x128xf32>
    %44 = arith.truncf %43 : vector<8x128xf32> to vector<8x128xbf16>
    %c0_29 = arith.constant 0 : index
    %c0_30 = arith.constant 0 : index
    %c0_31 = arith.constant 0 : index
    %45 = vector.load %arg6[%c0_29, %c0_30, %c0_31] : memref<1x8x128xbf16, #tpu.memory_space<vmem>>, vector<1x8x128xbf16>
    %46 = vector.shape_cast %45 : vector<1x8x128xbf16> to vector<8x128xbf16>
    %47 = vector.shape_cast %44 : vector<8x128xbf16> to vector<1x8x128xbf16>
    tpu.vector_store %arg6[%c0_29, %c0_30, %c0_31], %47 {strides = array<i32>} : memref<1x8x128xbf16, #tpu.memory_space<vmem>>, vector<1x8x128xbf16>,
    return
  }
  func.func @transform_0(%arg0: i32, %arg1: i32) -> (i32, i32, i32) {
    %c0_i32 = arith.constant 0 : i32
    %c0_i32_0 = arith.constant 0 : i32
    return %arg0, %c0_i32, %arg1 : i32, i32, i32
  }
  func.func @transform_1(%arg0: i32, %arg1: i32) -> (i32, i32, i32) {
    %c1_i32 = arith.constant 1 : i32
    %0 = arith.addi %arg1, %c1_i32 : i32
    %c1_i32_0 = arith.constant 1 : i32
    %1 = arith.muli %0, %c1_i32_0 : i32
    %c0_i32 = arith.constant 0 : i32
    %c0_i32_1 = arith.constant 0 : i32
    return %arg0, %c0_i32, %1 : i32, i32, i32
  }
  func.func @transform_2(%arg0: i32, %arg1: i32) -> (i32, i32, i32) {
    %c0_i32 = arith.constant 0 : i32
    %c0_i32_0 = arith.constant 0 : i32
    %c0_i32_1 = arith.constant 0 : i32
    %c0_i32_2 = arith.constant 0 : i32
    return %c0_i32, %c0_i32_0, %c0_i32_1 : i32, i32, i32
  }
  func.func @transform_3(%arg0: i32, %arg1: i32) -> (i32, i32) {
    %c0_i32 = arith.constant 0 : i32
    %c0_i32_0 = arith.constant 0 : i32
    %c0_i32_1 = arith.constant 0 : i32
    return %c0_i32, %c0_i32_0 : i32, i32
  }
  func.func @transform_4(%arg0: i32, %arg1: i32) -> (i32, i32, i32) {
    %c0_i32 = arith.constant 0 : i32
    %c0_i32_0 = arith.constant 0 : i32
    return %arg0, %c0_i32, %arg1 : i32, i32, i32
  }
}

module attributes {stable_mosaic.version = 11 : i64} {
  func.func @_conv_tap_kernel(%arg0: i32, %arg1: i32, %arg2: memref<1x32x128xbf16, #tpu.memory_space<vmem>>, %arg3: memref<1x32x128xbf16, #tpu.memory_space<vmem>>, %arg4: memref<3x16x32xbf16, #tpu.memory_space<vmem>>, %arg5: memref<16x1xf32, #tpu.memory_space<vmem>>, %arg6: memref<1x16x128xbf16, #tpu.memory_space<vmem>>, %arg7: memref<1x1x16x2xf32, #tpu.memory_space<vmem>>) attributes {dimension_semantics = [#tpu.dimension_semantics<parallel>, #tpu.dimension_semantics<parallel>], iteration_bounds = array<i64: 2, 1>, scalar_prefetch = 0 : i64, scratch_operands = 0 : i64, tpu.core_type = #tpu.core_type<tc>, window_params = [{transform_indices = @transform_0, window_bounds = array<i64: 1, 32, 128>}, {transform_indices = @transform_1, window_bounds = array<i64: 1, 32, 128>}, {pipeline_mode = #tpu.pipeline_mode<synchronous>, transform_indices = @transform_2, window_bounds = array<i64: 3, 16, 32>}, {pipeline_mode = #tpu.pipeline_mode<synchronous>, transform_indices = @transform_3, window_bounds = array<i64: 16, 1>}, {transform_indices = @transform_4, window_bounds = array<i64: 1, 16, 128>}, {transform_indices = @transform_5, window_bounds = array<i64: 1, 1, 16, 2>}]} {
    %c0 = arith.constant 0 : index
    %c0_0 = arith.constant 0 : index
    %c0_1 = arith.constant 0 : index
    %0 = vector.load %arg2[%c0, %c0_0, %c0_1] : memref<1x32x128xbf16, #tpu.memory_space<vmem>>, vector<1x32x128xbf16>
    %1 = vector.shape_cast %0 : vector<1x32x128xbf16> to vector<32x128xbf16>
    %c0_2 = arith.constant 0 : index
    %c0_3 = arith.constant 0 : index
    %c0_4 = arith.constant 0 : index
    %2 = vector.load %arg3[%c0_2, %c0_3, %c0_4] : memref<1x32x128xbf16, #tpu.memory_space<vmem>>, vector<1x32x128xbf16>
    %3 = vector.shape_cast %2 : vector<1x32x128xbf16> to vector<32x128xbf16>
    %4 = tpu.concatenate %1, %3 in 1 : vector<32x128xbf16>, vector<32x128xbf16> -> vector<32x256xbf16>
    %cst = arith.constant 0.000000e+00 : f32
    %5 = vector.broadcast %cst : f32 to vector<16x128xf32>
    %6 = vector.extract_strided_slice %4 {offsets = [0, 0], sizes = [32, 128], strides = [1, 1]} : vector<32x256xbf16> to vector<32x128xbf16>
    %c0_5 = arith.constant 0 : index
    %c0_6 = arith.constant 0 : index
    %c0_7 = arith.constant 0 : index
    %7 = vector.load %arg4[%c0_5, %c0_6, %c0_7] : memref<3x16x32xbf16, #tpu.memory_space<vmem>>, vector<1x16x32xbf16>
    %8 = vector.shape_cast %7 : vector<1x16x32xbf16> to vector<16x32xbf16>
    %cst_8 = arith.constant dense<0.000000e+00> : vector<16x128xf32>
    %9 = tpu.matmul %8, %6, %cst_8 {dimension_numbers = #tpu.dot_dimension_numbers<[1], [0], [0], [1], [0, 0, 1, 1], [], []>} : vector<16x32xbf16>, vector<32x128xbf16>, vector<16x128xf32> -> vector<16x128xf32>
    %10 = arith.addf %5, %9 : vector<16x128xf32>
    %11 = vector.extract_strided_slice %4 {offsets = [0, 1], sizes = [32, 128], strides = [1, 1]} : vector<32x256xbf16> to vector<32x128xbf16>
    %c1 = arith.constant 1 : index
    %c0_9 = arith.constant 0 : index
    %c0_10 = arith.constant 0 : index
    %12 = vector.load %arg4[%c1, %c0_9, %c0_10] : memref<3x16x32xbf16, #tpu.memory_space<vmem>>, vector<1x16x32xbf16>
    %13 = vector.shape_cast %12 : vector<1x16x32xbf16> to vector<16x32xbf16>
    %cst_11 = arith.constant dense<0.000000e+00> : vector<16x128xf32>
    %14 = tpu.matmul %13, %11, %cst_11 {dimension_numbers = #tpu.dot_dimension_numbers<[1], [0], [0], [1], [0, 0, 1, 1], [], []>} : vector<16x32xbf16>, vector<32x128xbf16>, vector<16x128xf32> -> vector<16x128xf32>
    %15 = arith.addf %10, %14 : vector<16x128xf32>
    %16 = vector.extract_strided_slice %4 {offsets = [0, 2], sizes = [8, 128], strides = [1, 1]} : vector<32x256xbf16> to vector<8x128xbf16>
    %c2 = arith.constant 2 : index
    %c0_12 = arith.constant 0 : index
    %c0_13 = arith.constant 0 : index
    %17 = vector.load %arg4[%c2, %c0_12, %c0_13] : memref<3x16x32xbf16, #tpu.memory_space<vmem>>, vector<1x16x8xbf16>
    %18 = vector.shape_cast %17 : vector<1x16x8xbf16> to vector<16x8xbf16>
    %cst_14 = arith.constant dense<0.000000e+00> : vector<16x128xf32>
    %19 = tpu.matmul %18, %16, %cst_14 {dimension_numbers = #tpu.dot_dimension_numbers<[1], [0], [0], [1], [0, 0, 1, 1], [], []>} : vector<16x8xbf16>, vector<8x128xbf16>, vector<16x128xf32> -> vector<16x128xf32>
    %20 = arith.addf %15, %19 : vector<16x128xf32>
    %c0_15 = arith.constant 0 : index
    %c0_16 = arith.constant 0 : index
    %21 = vector.load %arg5[%c0_15, %c0_16] : memref<16x1xf32, #tpu.memory_space<vmem>>, vector<16x1xf32>
    %22 = vector.broadcast %21 : vector<16x1xf32> to vector<16x128xf32>
    %23 = arith.addf %20, %22 : vector<16x128xf32>
    %24 = arith.truncf %23 : vector<16x128xf32> to vector<16x128xbf16>
    %c0_17 = arith.constant 0 : index
    %c0_18 = arith.constant 0 : index
    %c0_19 = arith.constant 0 : index
    %25 = vector.load %arg6[%c0_17, %c0_18, %c0_19] : memref<1x16x128xbf16, #tpu.memory_space<vmem>>, vector<1x16x128xbf16>
    %26 = vector.shape_cast %25 : vector<1x16x128xbf16> to vector<16x128xbf16>
    %27 = vector.shape_cast %24 : vector<16x128xbf16> to vector<1x16x128xbf16>
    tpu.vector_store %arg6[%c0_17, %c0_18, %c0_19], %27 {strides = array<i32>} : memref<1x16x128xbf16, #tpu.memory_space<vmem>>, vector<1x16x128xbf16>,
    %28 = tpu.iota {dimensions = array<i32: 1>} : vector<1x128xi32>
    %c128_i32 = arith.constant 128 : i32
    %29 = arith.muli %arg1, %c128_i32 : i32
    %30 = vector.broadcast %29 : i32 to vector<1x128xi32>
    %31 = arith.addi %28, %30 : vector<1x128xi32>
    %c32_i32 = arith.constant 32 : i32
    %32 = vector.broadcast %c32_i32 : i32 to vector<1x128xi32>
    %33 = arith.cmpi slt, %31, %32 : vector<1x128xi32>
    %cst_20 = arith.constant 0.000000e+00 : f32
    %34 = vector.shape_cast %33 : vector<1x128xi1> to vector<1x128xi1>
    %35 = vector.broadcast %34 : vector<1x128xi1> to vector<16x128xi1>
    %36 = vector.broadcast %cst_20 : f32 to vector<16x128xf32>
    %37 = arith.select %35, %23, %36 : vector<16x128xi1>, vector<16x128xf32>
    %cst_21 = arith.constant dense<0.000000e+00> : vector<16xf32>
    %38 = vector.multi_reduction <add>, %37, %cst_21 [1] : vector<16x128xf32> to vector<16xf32>
    %39 = vector.shape_cast %38 : vector<16xf32> to vector<16x1xf32>
    %40 = arith.mulf %37, %37 : vector<16x128xf32>
    %cst_22 = arith.constant dense<0.000000e+00> : vector<16xf32>
    %41 = vector.multi_reduction <add>, %40, %cst_22 [1] : vector<16x128xf32> to vector<16xf32>
    %42 = vector.shape_cast %41 : vector<16xf32> to vector<16x1xf32>
    %43 = tpu.concatenate %39, %42 in 1 : vector<16x1xf32>, vector<16x1xf32> -> vector<16x2xf32>
    %c0_23 = arith.constant 0 : index
    %c0_24 = arith.constant 0 : index
    %c0_25 = arith.constant 0 : index
    %c0_26 = arith.constant 0 : index
    %44 = vector.load %arg7[%c0_23, %c0_24, %c0_25, %c0_26] : memref<1x1x16x2xf32, #tpu.memory_space<vmem>>, vector<1x1x16x2xf32>
    %45 = vector.shape_cast %44 : vector<1x1x16x2xf32> to vector<16x2xf32>
    %46 = vector.shape_cast %43 : vector<16x2xf32> to vector<1x1x16x2xf32>
    tpu.vector_store %arg7[%c0_23, %c0_24, %c0_25, %c0_26], %46 {strides = array<i32>} : memref<1x1x16x2xf32, #tpu.memory_space<vmem>>, vector<1x1x16x2xf32>,
    return
  }
  func.func @transform_0(%arg0: i32, %arg1: i32) -> (i32, i32, i32) {
    %c0_i32 = arith.constant 0 : i32
    %c0_i32_0 = arith.constant 0 : i32
    return %arg0, %c0_i32, %arg1 : i32, i32, i32
  }
  func.func @transform_1(%arg0: i32, %arg1: i32) -> (i32, i32, i32) {
    %c1_i32 = arith.constant 1 : i32
    %0 = arith.addi %arg1, %c1_i32 : i32
    %c1_i32_0 = arith.constant 1 : i32
    %1 = arith.muli %0, %c1_i32_0 : i32
    %c0_i32 = arith.constant 0 : i32
    %c0_i32_1 = arith.constant 0 : i32
    return %arg0, %c0_i32, %1 : i32, i32, i32
  }
  func.func @transform_2(%arg0: i32, %arg1: i32) -> (i32, i32, i32) {
    %c0_i32 = arith.constant 0 : i32
    %c0_i32_0 = arith.constant 0 : i32
    %c0_i32_1 = arith.constant 0 : i32
    %c0_i32_2 = arith.constant 0 : i32
    return %c0_i32, %c0_i32_0, %c0_i32_1 : i32, i32, i32
  }
  func.func @transform_3(%arg0: i32, %arg1: i32) -> (i32, i32) {
    %c0_i32 = arith.constant 0 : i32
    %c0_i32_0 = arith.constant 0 : i32
    %c0_i32_1 = arith.constant 0 : i32
    return %c0_i32, %c0_i32_0 : i32, i32
  }
  func.func @transform_4(%arg0: i32, %arg1: i32) -> (i32, i32, i32) {
    %c0_i32 = arith.constant 0 : i32
    %c0_i32_0 = arith.constant 0 : i32
    return %arg0, %c0_i32, %arg1 : i32, i32, i32
  }
  func.func @transform_5(%arg0: i32, %arg1: i32) -> (i32, i32, i32, i32) {
    %c0_i32 = arith.constant 0 : i32
    %c0_i32_0 = arith.constant 0 : i32
    %c0_i32_1 = arith.constant 0 : i32
    return %arg0, %arg1, %c0_i32, %c0_i32_0 : i32, i32, i32, i32
  }
}

module attributes {stable_mosaic.version = 11 : i64} {
  func.func @_bn_lrelu_kernel(%arg0: i32, %arg1: i32, %arg2: memref<1x16x128xbf16, #tpu.memory_space<vmem>>, %arg3: memref<16x1xf32, #tpu.memory_space<vmem>>, %arg4: memref<16x1xf32, #tpu.memory_space<vmem>>, %arg5: memref<1x16x128xbf16, #tpu.memory_space<vmem>>) attributes {dimension_semantics = [#tpu.dimension_semantics<parallel>, #tpu.dimension_semantics<parallel>], iteration_bounds = array<i64: 2, 1>, scalar_prefetch = 0 : i64, scratch_operands = 0 : i64, tpu.core_type = #tpu.core_type<tc>, window_params = [{transform_indices = @transform_0, window_bounds = array<i64: 1, 16, 128>}, {pipeline_mode = #tpu.pipeline_mode<synchronous>, transform_indices = @transform_1, window_bounds = array<i64: 16, 1>}, {pipeline_mode = #tpu.pipeline_mode<synchronous>, transform_indices = @transform_2, window_bounds = array<i64: 16, 1>}, {transform_indices = @transform_3, window_bounds = array<i64: 1, 16, 128>}]} {
    %c0 = arith.constant 0 : index
    %c0_0 = arith.constant 0 : index
    %c0_1 = arith.constant 0 : index
    %0 = vector.load %arg2[%c0, %c0_0, %c0_1] : memref<1x16x128xbf16, #tpu.memory_space<vmem>>, vector<1x16x128xbf16>
    %1 = vector.shape_cast %0 : vector<1x16x128xbf16> to vector<16x128xbf16>
    %2 = arith.extf %1 : vector<16x128xbf16> to vector<16x128xf32>
    %c0_2 = arith.constant 0 : index
    %c0_3 = arith.constant 0 : index
    %3 = vector.load %arg3[%c0_2, %c0_3] : memref<16x1xf32, #tpu.memory_space<vmem>>, vector<16x1xf32>
    %4 = vector.broadcast %3 : vector<16x1xf32> to vector<16x128xf32>
    %5 = arith.mulf %2, %4 : vector<16x128xf32>
    %c0_4 = arith.constant 0 : index
    %c0_5 = arith.constant 0 : index
    %6 = vector.load %arg4[%c0_4, %c0_5] : memref<16x1xf32, #tpu.memory_space<vmem>>, vector<16x1xf32>
    %7 = vector.broadcast %6 : vector<16x1xf32> to vector<16x128xf32>
    %8 = arith.addf %5, %7 : vector<16x128xf32>
    %cst = arith.constant 0.000000e+00 : f32
    %9 = vector.broadcast %cst : f32 to vector<16x128xf32>
    %10 = arith.cmpf oge, %8, %9 : vector<16x128xf32>
    %cst_6 = arith.constant 2.000000e-01 : f32
    %11 = vector.broadcast %cst_6 : f32 to vector<16x128xf32>
    %12 = arith.mulf %11, %8 : vector<16x128xf32>
    %13 = arith.select %10, %8, %12 : vector<16x128xi1>, vector<16x128xf32>
    %14 = arith.truncf %13 : vector<16x128xf32> to vector<16x128xbf16>
    %c0_7 = arith.constant 0 : index
    %c0_8 = arith.constant 0 : index
    %c0_9 = arith.constant 0 : index
    %15 = vector.load %arg5[%c0_7, %c0_8, %c0_9] : memref<1x16x128xbf16, #tpu.memory_space<vmem>>, vector<1x16x128xbf16>
    %16 = vector.shape_cast %15 : vector<1x16x128xbf16> to vector<16x128xbf16>
    %17 = vector.shape_cast %14 : vector<16x128xbf16> to vector<1x16x128xbf16>
    tpu.vector_store %arg5[%c0_7, %c0_8, %c0_9], %17 {strides = array<i32>} : memref<1x16x128xbf16, #tpu.memory_space<vmem>>, vector<1x16x128xbf16>,
    return
  }
  func.func @transform_0(%arg0: i32, %arg1: i32) -> (i32, i32, i32) {
    %c0_i32 = arith.constant 0 : i32
    %c0_i32_0 = arith.constant 0 : i32
    return %arg0, %c0_i32, %arg1 : i32, i32, i32
  }
  func.func @transform_1(%arg0: i32, %arg1: i32) -> (i32, i32) {
    %c0_i32 = arith.constant 0 : i32
    %c0_i32_0 = arith.constant 0 : i32
    %c0_i32_1 = arith.constant 0 : i32
    return %c0_i32, %c0_i32_0 : i32, i32
  }
  func.func @transform_2(%arg0: i32, %arg1: i32) -> (i32, i32) {
    %c0_i32 = arith.constant 0 : i32
    %c0_i32_0 = arith.constant 0 : i32
    %c0_i32_1 = arith.constant 0 : i32
    return %c0_i32, %c0_i32_0 : i32, i32
  }
  func.func @transform_3(%arg0: i32, %arg1: i32) -> (i32, i32, i32) {
    %c0_i32 = arith.constant 0 : i32
    %c0_i32_0 = arith.constant 0 : i32
    return %arg0, %c0_i32, %arg1 : i32, i32, i32
  }
}

module attributes {stable_mosaic.version = 11 : i64} {
  func.func @_conv_tap_kernel(%arg0: i32, %arg1: i32, %arg2: memref<1x64x128xbf16, #tpu.memory_space<vmem>>, %arg3: memref<1x64x128xbf16, #tpu.memory_space<vmem>>, %arg4: memref<3x32x64xbf16, #tpu.memory_space<vmem>>, %arg5: memref<32x1xf32, #tpu.memory_space<vmem>>, %arg6: memref<1x32x128xbf16, #tpu.memory_space<vmem>>, %arg7: memref<1x1x32x2xf32, #tpu.memory_space<vmem>>) attributes {dimension_semantics = [#tpu.dimension_semantics<parallel>, #tpu.dimension_semantics<parallel>], iteration_bounds = array<i64: 2, 1>, scalar_prefetch = 0 : i64, scratch_operands = 0 : i64, tpu.core_type = #tpu.core_type<tc>, window_params = [{transform_indices = @transform_0, window_bounds = array<i64: 1, 64, 128>}, {transform_indices = @transform_1, window_bounds = array<i64: 1, 64, 128>}, {pipeline_mode = #tpu.pipeline_mode<synchronous>, transform_indices = @transform_2, window_bounds = array<i64: 3, 32, 64>}, {pipeline_mode = #tpu.pipeline_mode<synchronous>, transform_indices = @transform_3, window_bounds = array<i64: 32, 1>}, {transform_indices = @transform_4, window_bounds = array<i64: 1, 32, 128>}, {transform_indices = @transform_5, window_bounds = array<i64: 1, 1, 32, 2>}]} {
    %c0 = arith.constant 0 : index
    %c0_0 = arith.constant 0 : index
    %c0_1 = arith.constant 0 : index
    %0 = vector.load %arg2[%c0, %c0_0, %c0_1] : memref<1x64x128xbf16, #tpu.memory_space<vmem>>, vector<1x64x128xbf16>
    %1 = vector.shape_cast %0 : vector<1x64x128xbf16> to vector<64x128xbf16>
    %c0_2 = arith.constant 0 : index
    %c0_3 = arith.constant 0 : index
    %c0_4 = arith.constant 0 : index
    %2 = vector.load %arg3[%c0_2, %c0_3, %c0_4] : memref<1x64x128xbf16, #tpu.memory_space<vmem>>, vector<1x64x128xbf16>
    %3 = vector.shape_cast %2 : vector<1x64x128xbf16> to vector<64x128xbf16>
    %4 = tpu.concatenate %1, %3 in 1 : vector<64x128xbf16>, vector<64x128xbf16> -> vector<64x256xbf16>
    %cst = arith.constant 0.000000e+00 : f32
    %5 = vector.broadcast %cst : f32 to vector<32x128xf32>
    %6 = vector.extract_strided_slice %4 {offsets = [0, 0], sizes = [64, 128], strides = [1, 1]} : vector<64x256xbf16> to vector<64x128xbf16>
    %c0_5 = arith.constant 0 : index
    %c0_6 = arith.constant 0 : index
    %c0_7 = arith.constant 0 : index
    %7 = vector.load %arg4[%c0_5, %c0_6, %c0_7] : memref<3x32x64xbf16, #tpu.memory_space<vmem>>, vector<1x32x64xbf16>
    %8 = vector.shape_cast %7 : vector<1x32x64xbf16> to vector<32x64xbf16>
    %cst_8 = arith.constant dense<0.000000e+00> : vector<32x128xf32>
    %9 = tpu.matmul %8, %6, %cst_8 {dimension_numbers = #tpu.dot_dimension_numbers<[1], [0], [0], [1], [0, 0, 1, 1], [], []>} : vector<32x64xbf16>, vector<64x128xbf16>, vector<32x128xf32> -> vector<32x128xf32>
    %10 = arith.addf %5, %9 : vector<32x128xf32>
    %11 = vector.extract_strided_slice %4 {offsets = [0, 1], sizes = [64, 128], strides = [1, 1]} : vector<64x256xbf16> to vector<64x128xbf16>
    %c1 = arith.constant 1 : index
    %c0_9 = arith.constant 0 : index
    %c0_10 = arith.constant 0 : index
    %12 = vector.load %arg4[%c1, %c0_9, %c0_10] : memref<3x32x64xbf16, #tpu.memory_space<vmem>>, vector<1x32x64xbf16>
    %13 = vector.shape_cast %12 : vector<1x32x64xbf16> to vector<32x64xbf16>
    %cst_11 = arith.constant dense<0.000000e+00> : vector<32x128xf32>
    %14 = tpu.matmul %13, %11, %cst_11 {dimension_numbers = #tpu.dot_dimension_numbers<[1], [0], [0], [1], [0, 0, 1, 1], [], []>} : vector<32x64xbf16>, vector<64x128xbf16>, vector<32x128xf32> -> vector<32x128xf32>
    %15 = arith.addf %10, %14 : vector<32x128xf32>
    %16 = vector.extract_strided_slice %4 {offsets = [0, 2], sizes = [16, 128], strides = [1, 1]} : vector<64x256xbf16> to vector<16x128xbf16>
    %c2 = arith.constant 2 : index
    %c0_12 = arith.constant 0 : index
    %c0_13 = arith.constant 0 : index
    %17 = vector.load %arg4[%c2, %c0_12, %c0_13] : memref<3x32x64xbf16, #tpu.memory_space<vmem>>, vector<1x32x16xbf16>
    %18 = vector.shape_cast %17 : vector<1x32x16xbf16> to vector<32x16xbf16>
    %cst_14 = arith.constant dense<0.000000e+00> : vector<32x128xf32>
    %19 = tpu.matmul %18, %16, %cst_14 {dimension_numbers = #tpu.dot_dimension_numbers<[1], [0], [0], [1], [0, 0, 1, 1], [], []>} : vector<32x16xbf16>, vector<16x128xbf16>, vector<32x128xf32> -> vector<32x128xf32>
    %20 = arith.addf %15, %19 : vector<32x128xf32>
    %c0_15 = arith.constant 0 : index
    %c0_16 = arith.constant 0 : index
    %21 = vector.load %arg5[%c0_15, %c0_16] : memref<32x1xf32, #tpu.memory_space<vmem>>, vector<32x1xf32>
    %22 = vector.broadcast %21 : vector<32x1xf32> to vector<32x128xf32>
    %23 = arith.addf %20, %22 : vector<32x128xf32>
    %24 = arith.truncf %23 : vector<32x128xf32> to vector<32x128xbf16>
    %c0_17 = arith.constant 0 : index
    %c0_18 = arith.constant 0 : index
    %c0_19 = arith.constant 0 : index
    %25 = vector.load %arg6[%c0_17, %c0_18, %c0_19] : memref<1x32x128xbf16, #tpu.memory_space<vmem>>, vector<1x32x128xbf16>
    %26 = vector.shape_cast %25 : vector<1x32x128xbf16> to vector<32x128xbf16>
    %27 = vector.shape_cast %24 : vector<32x128xbf16> to vector<1x32x128xbf16>
    tpu.vector_store %arg6[%c0_17, %c0_18, %c0_19], %27 {strides = array<i32>} : memref<1x32x128xbf16, #tpu.memory_space<vmem>>, vector<1x32x128xbf16>,
    %28 = tpu.iota {dimensions = array<i32: 1>} : vector<1x128xi32>
    %c128_i32 = arith.constant 128 : i32
    %29 = arith.muli %arg1, %c128_i32 : i32
    %30 = vector.broadcast %29 : i32 to vector<1x128xi32>
    %31 = arith.addi %28, %30 : vector<1x128xi32>
    %c8_i32 = arith.constant 8 : i32
    %32 = vector.broadcast %c8_i32 : i32 to vector<1x128xi32>
    %33 = arith.cmpi slt, %31, %32 : vector<1x128xi32>
    %cst_20 = arith.constant 0.000000e+00 : f32
    %34 = vector.shape_cast %33 : vector<1x128xi1> to vector<1x128xi1>
    %35 = vector.broadcast %34 : vector<1x128xi1> to vector<32x128xi1>
    %36 = vector.broadcast %cst_20 : f32 to vector<32x128xf32>
    %37 = arith.select %35, %23, %36 : vector<32x128xi1>, vector<32x128xf32>
    %cst_21 = arith.constant dense<0.000000e+00> : vector<32xf32>
    %38 = vector.multi_reduction <add>, %37, %cst_21 [1] : vector<32x128xf32> to vector<32xf32>
    %39 = vector.shape_cast %38 : vector<32xf32> to vector<32x1xf32>
    %40 = arith.mulf %37, %37 : vector<32x128xf32>
    %cst_22 = arith.constant dense<0.000000e+00> : vector<32xf32>
    %41 = vector.multi_reduction <add>, %40, %cst_22 [1] : vector<32x128xf32> to vector<32xf32>
    %42 = vector.shape_cast %41 : vector<32xf32> to vector<32x1xf32>
    %43 = tpu.concatenate %39, %42 in 1 : vector<32x1xf32>, vector<32x1xf32> -> vector<32x2xf32>
    %c0_23 = arith.constant 0 : index
    %c0_24 = arith.constant 0 : index
    %c0_25 = arith.constant 0 : index
    %c0_26 = arith.constant 0 : index
    %44 = vector.load %arg7[%c0_23, %c0_24, %c0_25, %c0_26] : memref<1x1x32x2xf32, #tpu.memory_space<vmem>>, vector<1x1x32x2xf32>
    %45 = vector.shape_cast %44 : vector<1x1x32x2xf32> to vector<32x2xf32>
    %46 = vector.shape_cast %43 : vector<32x2xf32> to vector<1x1x32x2xf32>
    tpu.vector_store %arg7[%c0_23, %c0_24, %c0_25, %c0_26], %46 {strides = array<i32>} : memref<1x1x32x2xf32, #tpu.memory_space<vmem>>, vector<1x1x32x2xf32>,
    return
  }
  func.func @transform_0(%arg0: i32, %arg1: i32) -> (i32, i32, i32) {
    %c0_i32 = arith.constant 0 : i32
    %c0_i32_0 = arith.constant 0 : i32
    return %arg0, %c0_i32, %arg1 : i32, i32, i32
  }
  func.func @transform_1(%arg0: i32, %arg1: i32) -> (i32, i32, i32) {
    %c1_i32 = arith.constant 1 : i32
    %0 = arith.addi %arg1, %c1_i32 : i32
    %c1_i32_0 = arith.constant 1 : i32
    %1 = arith.muli %0, %c1_i32_0 : i32
    %c0_i32 = arith.constant 0 : i32
    %c0_i32_1 = arith.constant 0 : i32
    return %arg0, %c0_i32, %1 : i32, i32, i32
  }
  func.func @transform_2(%arg0: i32, %arg1: i32) -> (i32, i32, i32) {
    %c0_i32 = arith.constant 0 : i32
    %c0_i32_0 = arith.constant 0 : i32
    %c0_i32_1 = arith.constant 0 : i32
    %c0_i32_2 = arith.constant 0 : i32
    return %c0_i32, %c0_i32_0, %c0_i32_1 : i32, i32, i32
  }
  func.func @transform_3(%arg0: i32, %arg1: i32) -> (i32, i32) {
    %c0_i32 = arith.constant 0 : i32
    %c0_i32_0 = arith.constant 0 : i32
    %c0_i32_1 = arith.constant 0 : i32
    return %c0_i32, %c0_i32_0 : i32, i32
  }
  func.func @transform_4(%arg0: i32, %arg1: i32) -> (i32, i32, i32) {
    %c0_i32 = arith.constant 0 : i32
    %c0_i32_0 = arith.constant 0 : i32
    return %arg0, %c0_i32, %arg1 : i32, i32, i32
  }
  func.func @transform_5(%arg0: i32, %arg1: i32) -> (i32, i32, i32, i32) {
    %c0_i32 = arith.constant 0 : i32
    %c0_i32_0 = arith.constant 0 : i32
    %c0_i32_1 = arith.constant 0 : i32
    return %arg0, %arg1, %c0_i32, %c0_i32_0 : i32, i32, i32, i32
  }
}

module attributes {stable_mosaic.version = 11 : i64} {
  func.func @_bn_lrelu_kernel(%arg0: i32, %arg1: i32, %arg2: memref<1x32x128xbf16, #tpu.memory_space<vmem>>, %arg3: memref<32x1xf32, #tpu.memory_space<vmem>>, %arg4: memref<32x1xf32, #tpu.memory_space<vmem>>, %arg5: memref<1x32x128xbf16, #tpu.memory_space<vmem>>) attributes {dimension_semantics = [#tpu.dimension_semantics<parallel>, #tpu.dimension_semantics<parallel>], iteration_bounds = array<i64: 2, 1>, scalar_prefetch = 0 : i64, scratch_operands = 0 : i64, tpu.core_type = #tpu.core_type<tc>, window_params = [{transform_indices = @transform_0, window_bounds = array<i64: 1, 32, 128>}, {pipeline_mode = #tpu.pipeline_mode<synchronous>, transform_indices = @transform_1, window_bounds = array<i64: 32, 1>}, {pipeline_mode = #tpu.pipeline_mode<synchronous>, transform_indices = @transform_2, window_bounds = array<i64: 32, 1>}, {transform_indices = @transform_3, window_bounds = array<i64: 1, 32, 128>}]} {
    %c0 = arith.constant 0 : index
    %c0_0 = arith.constant 0 : index
    %c0_1 = arith.constant 0 : index
    %0 = vector.load %arg2[%c0, %c0_0, %c0_1] : memref<1x32x128xbf16, #tpu.memory_space<vmem>>, vector<1x32x128xbf16>
    %1 = vector.shape_cast %0 : vector<1x32x128xbf16> to vector<32x128xbf16>
    %2 = arith.extf %1 : vector<32x128xbf16> to vector<32x128xf32>
    %c0_2 = arith.constant 0 : index
    %c0_3 = arith.constant 0 : index
    %3 = vector.load %arg3[%c0_2, %c0_3] : memref<32x1xf32, #tpu.memory_space<vmem>>, vector<32x1xf32>
    %4 = vector.broadcast %3 : vector<32x1xf32> to vector<32x128xf32>
    %5 = arith.mulf %2, %4 : vector<32x128xf32>
    %c0_4 = arith.constant 0 : index
    %c0_5 = arith.constant 0 : index
    %6 = vector.load %arg4[%c0_4, %c0_5] : memref<32x1xf32, #tpu.memory_space<vmem>>, vector<32x1xf32>
    %7 = vector.broadcast %6 : vector<32x1xf32> to vector<32x128xf32>
    %8 = arith.addf %5, %7 : vector<32x128xf32>
    %cst = arith.constant 0.000000e+00 : f32
    %9 = vector.broadcast %cst : f32 to vector<32x128xf32>
    %10 = arith.cmpf oge, %8, %9 : vector<32x128xf32>
    %cst_6 = arith.constant 2.000000e-01 : f32
    %11 = vector.broadcast %cst_6 : f32 to vector<32x128xf32>
    %12 = arith.mulf %11, %8 : vector<32x128xf32>
    %13 = arith.select %10, %8, %12 : vector<32x128xi1>, vector<32x128xf32>
    %14 = arith.truncf %13 : vector<32x128xf32> to vector<32x128xbf16>
    %c0_7 = arith.constant 0 : index
    %c0_8 = arith.constant 0 : index
    %c0_9 = arith.constant 0 : index
    %15 = vector.load %arg5[%c0_7, %c0_8, %c0_9] : memref<1x32x128xbf16, #tpu.memory_space<vmem>>, vector<1x32x128xbf16>
    %16 = vector.shape_cast %15 : vector<1x32x128xbf16> to vector<32x128xbf16>
    %17 = vector.shape_cast %14 : vector<32x128xbf16> to vector<1x32x128xbf16>
    tpu.vector_store %arg5[%c0_7, %c0_8, %c0_9], %17 {strides = array<i32>} : memref<1x32x128xbf16, #tpu.memory_space<vmem>>, vector<1x32x128xbf16>,
    return
  }
  func.func @transform_0(%arg0: i32, %arg1: i32) -> (i32, i32, i32) {
    %c0_i32 = arith.constant 0 : i32
    %c0_i32_0 = arith.constant 0 : i32
    return %arg0, %c0_i32, %arg1 : i32, i32, i32
  }
  func.func @transform_1(%arg0: i32, %arg1: i32) -> (i32, i32) {
    %c0_i32 = arith.constant 0 : i32
    %c0_i32_0 = arith.constant 0 : i32
    %c0_i32_1 = arith.constant 0 : i32
    return %c0_i32, %c0_i32_0 : i32, i32
  }
  func.func @transform_2(%arg0: i32, %arg1: i32) -> (i32, i32) {
    %c0_i32 = arith.constant 0 : i32
    %c0_i32_0 = arith.constant 0 : i32
    %c0_i32_1 = arith.constant 0 : i32
    return %c0_i32, %c0_i32_0 : i32, i32
  }
  func.func @transform_3(%arg0: i32, %arg1: i32) -> (i32, i32, i32) {
    %c0_i32 = arith.constant 0 : i32
    %c0_i32_0 = arith.constant 0 : i32
    return %arg0, %c0_i32, %arg1 : i32, i32, i32
  }
}

module attributes {stable_mosaic.version = 11 : i64} {
  func.func @_conv_tap_kernel(%arg0: i32, %arg1: i32, %arg2: memref<1x128x128xbf16, #tpu.memory_space<vmem>>, %arg3: memref<1x128x128xbf16, #tpu.memory_space<vmem>>, %arg4: memref<3x64x128xbf16, #tpu.memory_space<vmem>>, %arg5: memref<64x1xf32, #tpu.memory_space<vmem>>, %arg6: memref<1x64x128xbf16, #tpu.memory_space<vmem>>, %arg7: memref<1x1x64x2xf32, #tpu.memory_space<vmem>>) attributes {dimension_semantics = [#tpu.dimension_semantics<parallel>, #tpu.dimension_semantics<parallel>], iteration_bounds = array<i64: 2, 1>, scalar_prefetch = 0 : i64, scratch_operands = 0 : i64, tpu.core_type = #tpu.core_type<tc>, window_params = [{transform_indices = @transform_0, window_bounds = array<i64: 1, 128, 128>}, {transform_indices = @transform_1, window_bounds = array<i64: 1, 128, 128>}, {pipeline_mode = #tpu.pipeline_mode<synchronous>, transform_indices = @transform_2, window_bounds = array<i64: 3, 64, 128>}, {pipeline_mode = #tpu.pipeline_mode<synchronous>, transform_indices = @transform_3, window_bounds = array<i64: 64, 1>}, {transform_indices = @transform_4, window_bounds = array<i64: 1, 64, 128>}, {transform_indices = @transform_5, window_bounds = array<i64: 1, 1, 64, 2>}]} {
    %c0 = arith.constant 0 : index
    %c0_0 = arith.constant 0 : index
    %c0_1 = arith.constant 0 : index
    %0 = vector.load %arg2[%c0, %c0_0, %c0_1] : memref<1x128x128xbf16, #tpu.memory_space<vmem>>, vector<1x128x128xbf16>
    %1 = vector.shape_cast %0 : vector<1x128x128xbf16> to vector<128x128xbf16>
    %c0_2 = arith.constant 0 : index
    %c0_3 = arith.constant 0 : index
    %c0_4 = arith.constant 0 : index
    %2 = vector.load %arg3[%c0_2, %c0_3, %c0_4] : memref<1x128x128xbf16, #tpu.memory_space<vmem>>, vector<1x128x128xbf16>
    %3 = vector.shape_cast %2 : vector<1x128x128xbf16> to vector<128x128xbf16>
    %4 = tpu.concatenate %1, %3 in 1 : vector<128x128xbf16>, vector<128x128xbf16> -> vector<128x256xbf16>
    %cst = arith.constant 0.000000e+00 : f32
    %5 = vector.broadcast %cst : f32 to vector<64x128xf32>
    %6 = vector.extract_strided_slice %4 {offsets = [0, 0], sizes = [128, 128], strides = [1, 1]} : vector<128x256xbf16> to vector<128x128xbf16>
    %c0_5 = arith.constant 0 : index
    %c0_6 = arith.constant 0 : index
    %c0_7 = arith.constant 0 : index
    %7 = vector.load %arg4[%c0_5, %c0_6, %c0_7] : memref<3x64x128xbf16, #tpu.memory_space<vmem>>, vector<1x64x128xbf16>
    %8 = vector.shape_cast %7 : vector<1x64x128xbf16> to vector<64x128xbf16>
    %cst_8 = arith.constant dense<0.000000e+00> : vector<64x128xf32>
    %9 = tpu.matmul %8, %6, %cst_8 {dimension_numbers = #tpu.dot_dimension_numbers<[1], [0], [0], [1], [0, 0, 1, 1], [], []>} : vector<64x128xbf16>, vector<128x128xbf16>, vector<64x128xf32> -> vector<64x128xf32>
    %10 = arith.addf %5, %9 : vector<64x128xf32>
    %11 = vector.extract_strided_slice %4 {offsets = [0, 1], sizes = [128, 128], strides = [1, 1]} : vector<128x256xbf16> to vector<128x128xbf16>
    %c1 = arith.constant 1 : index
    %c0_9 = arith.constant 0 : index
    %c0_10 = arith.constant 0 : index
    %12 = vector.load %arg4[%c1, %c0_9, %c0_10] : memref<3x64x128xbf16, #tpu.memory_space<vmem>>, vector<1x64x128xbf16>
    %13 = vector.shape_cast %12 : vector<1x64x128xbf16> to vector<64x128xbf16>
    %cst_11 = arith.constant dense<0.000000e+00> : vector<64x128xf32>
    %14 = tpu.matmul %13, %11, %cst_11 {dimension_numbers = #tpu.dot_dimension_numbers<[1], [0], [0], [1], [0, 0, 1, 1], [], []>} : vector<64x128xbf16>, vector<128x128xbf16>, vector<64x128xf32> -> vector<64x128xf32>
    %15 = arith.addf %10, %14 : vector<64x128xf32>
    %16 = vector.extract_strided_slice %4 {offsets = [0, 2], sizes = [32, 128], strides = [1, 1]} : vector<128x256xbf16> to vector<32x128xbf16>
    %c2 = arith.constant 2 : index
    %c0_12 = arith.constant 0 : index
    %c0_13 = arith.constant 0 : index
    %17 = vector.load %arg4[%c2, %c0_12, %c0_13] : memref<3x64x128xbf16, #tpu.memory_space<vmem>>, vector<1x64x32xbf16>
    %18 = vector.shape_cast %17 : vector<1x64x32xbf16> to vector<64x32xbf16>
    %cst_14 = arith.constant dense<0.000000e+00> : vector<64x128xf32>
    %19 = tpu.matmul %18, %16, %cst_14 {dimension_numbers = #tpu.dot_dimension_numbers<[1], [0], [0], [1], [0, 0, 1, 1], [], []>} : vector<64x32xbf16>, vector<32x128xbf16>, vector<64x128xf32> -> vector<64x128xf32>
    %20 = arith.addf %15, %19 : vector<64x128xf32>
    %c0_15 = arith.constant 0 : index
    %c0_16 = arith.constant 0 : index
    %21 = vector.load %arg5[%c0_15, %c0_16] : memref<64x1xf32, #tpu.memory_space<vmem>>, vector<64x1xf32>
    %22 = vector.broadcast %21 : vector<64x1xf32> to vector<64x128xf32>
    %23 = arith.addf %20, %22 : vector<64x128xf32>
    %24 = arith.truncf %23 : vector<64x128xf32> to vector<64x128xbf16>
    %c0_17 = arith.constant 0 : index
    %c0_18 = arith.constant 0 : index
    %c0_19 = arith.constant 0 : index
    %25 = vector.load %arg6[%c0_17, %c0_18, %c0_19] : memref<1x64x128xbf16, #tpu.memory_space<vmem>>, vector<1x64x128xbf16>
    %26 = vector.shape_cast %25 : vector<1x64x128xbf16> to vector<64x128xbf16>
    %27 = vector.shape_cast %24 : vector<64x128xbf16> to vector<1x64x128xbf16>
    tpu.vector_store %arg6[%c0_17, %c0_18, %c0_19], %27 {strides = array<i32>} : memref<1x64x128xbf16, #tpu.memory_space<vmem>>, vector<1x64x128xbf16>,
    %28 = tpu.iota {dimensions = array<i32: 1>} : vector<1x128xi32>
    %c128_i32 = arith.constant 128 : i32
    %29 = arith.muli %arg1, %c128_i32 : i32
    %30 = vector.broadcast %29 : i32 to vector<1x128xi32>
    %31 = arith.addi %28, %30 : vector<1x128xi32>
    %c2_i32 = arith.constant 2 : i32
    %32 = vector.broadcast %c2_i32 : i32 to vector<1x128xi32>
    %33 = arith.cmpi slt, %31, %32 : vector<1x128xi32>
    %cst_20 = arith.constant 0.000000e+00 : f32
    %34 = vector.shape_cast %33 : vector<1x128xi1> to vector<1x128xi1>
    %35 = vector.broadcast %34 : vector<1x128xi1> to vector<64x128xi1>
    %36 = vector.broadcast %cst_20 : f32 to vector<64x128xf32>
    %37 = arith.select %35, %23, %36 : vector<64x128xi1>, vector<64x128xf32>
    %cst_21 = arith.constant dense<0.000000e+00> : vector<64xf32>
    %38 = vector.multi_reduction <add>, %37, %cst_21 [1] : vector<64x128xf32> to vector<64xf32>
    %39 = vector.shape_cast %38 : vector<64xf32> to vector<64x1xf32>
    %40 = arith.mulf %37, %37 : vector<64x128xf32>
    %cst_22 = arith.constant dense<0.000000e+00> : vector<64xf32>
    %41 = vector.multi_reduction <add>, %40, %cst_22 [1] : vector<64x128xf32> to vector<64xf32>
    %42 = vector.shape_cast %41 : vector<64xf32> to vector<64x1xf32>
    %43 = tpu.concatenate %39, %42 in 1 : vector<64x1xf32>, vector<64x1xf32> -> vector<64x2xf32>
    %c0_23 = arith.constant 0 : index
    %c0_24 = arith.constant 0 : index
    %c0_25 = arith.constant 0 : index
    %c0_26 = arith.constant 0 : index
    %44 = vector.load %arg7[%c0_23, %c0_24, %c0_25, %c0_26] : memref<1x1x64x2xf32, #tpu.memory_space<vmem>>, vector<1x1x64x2xf32>
    %45 = vector.shape_cast %44 : vector<1x1x64x2xf32> to vector<64x2xf32>
    %46 = vector.shape_cast %43 : vector<64x2xf32> to vector<1x1x64x2xf32>
    tpu.vector_store %arg7[%c0_23, %c0_24, %c0_25, %c0_26], %46 {strides = array<i32>} : memref<1x1x64x2xf32, #tpu.memory_space<vmem>>, vector<1x1x64x2xf32>,
    return
  }
  func.func @transform_0(%arg0: i32, %arg1: i32) -> (i32, i32, i32) {
    %c0_i32 = arith.constant 0 : i32
    %c0_i32_0 = arith.constant 0 : i32
    return %arg0, %c0_i32, %arg1 : i32, i32, i32
  }
  func.func @transform_1(%arg0: i32, %arg1: i32) -> (i32, i32, i32) {
    %c1_i32 = arith.constant 1 : i32
    %0 = arith.addi %arg1, %c1_i32 : i32
    %c1_i32_0 = arith.constant 1 : i32
    %1 = arith.muli %0, %c1_i32_0 : i32
    %c0_i32 = arith.constant 0 : i32
    %c0_i32_1 = arith.constant 0 : i32
    return %arg0, %c0_i32, %1 : i32, i32, i32
  }
  func.func @transform_2(%arg0: i32, %arg1: i32) -> (i32, i32, i32) {
    %c0_i32 = arith.constant 0 : i32
    %c0_i32_0 = arith.constant 0 : i32
    %c0_i32_1 = arith.constant 0 : i32
    %c0_i32_2 = arith.constant 0 : i32
    return %c0_i32, %c0_i32_0, %c0_i32_1 : i32, i32, i32
  }
  func.func @transform_3(%arg0: i32, %arg1: i32) -> (i32, i32) {
    %c0_i32 = arith.constant 0 : i32
    %c0_i32_0 = arith.constant 0 : i32
    %c0_i32_1 = arith.constant 0 : i32
    return %c0_i32, %c0_i32_0 : i32, i32
  }
  func.func @transform_4(%arg0: i32, %arg1: i32) -> (i32, i32, i32) {
    %c0_i32 = arith.constant 0 : i32
    %c0_i32_0 = arith.constant 0 : i32
    return %arg0, %c0_i32, %arg1 : i32, i32, i32
  }
  func.func @transform_5(%arg0: i32, %arg1: i32) -> (i32, i32, i32, i32) {
    %c0_i32 = arith.constant 0 : i32
    %c0_i32_0 = arith.constant 0 : i32
    %c0_i32_1 = arith.constant 0 : i32
    return %arg0, %arg1, %c0_i32, %c0_i32_0 : i32, i32, i32, i32
  }
}

module attributes {stable_mosaic.version = 11 : i64} {
  func.func @_bn_lrelu_kernel(%arg0: i32, %arg1: i32, %arg2: memref<1x64x128xbf16, #tpu.memory_space<vmem>>, %arg3: memref<64x1xf32, #tpu.memory_space<vmem>>, %arg4: memref<64x1xf32, #tpu.memory_space<vmem>>, %arg5: memref<1x64x128xbf16, #tpu.memory_space<vmem>>) attributes {dimension_semantics = [#tpu.dimension_semantics<parallel>, #tpu.dimension_semantics<parallel>], iteration_bounds = array<i64: 2, 1>, scalar_prefetch = 0 : i64, scratch_operands = 0 : i64, tpu.core_type = #tpu.core_type<tc>, window_params = [{transform_indices = @transform_0, window_bounds = array<i64: 1, 64, 128>}, {pipeline_mode = #tpu.pipeline_mode<synchronous>, transform_indices = @transform_1, window_bounds = array<i64: 64, 1>}, {pipeline_mode = #tpu.pipeline_mode<synchronous>, transform_indices = @transform_2, window_bounds = array<i64: 64, 1>}, {transform_indices = @transform_3, window_bounds = array<i64: 1, 64, 128>}]} {
    %c0 = arith.constant 0 : index
    %c0_0 = arith.constant 0 : index
    %c0_1 = arith.constant 0 : index
    %0 = vector.load %arg2[%c0, %c0_0, %c0_1] : memref<1x64x128xbf16, #tpu.memory_space<vmem>>, vector<1x64x128xbf16>
    %1 = vector.shape_cast %0 : vector<1x64x128xbf16> to vector<64x128xbf16>
    %2 = arith.extf %1 : vector<64x128xbf16> to vector<64x128xf32>
    %c0_2 = arith.constant 0 : index
    %c0_3 = arith.constant 0 : index
    %3 = vector.load %arg3[%c0_2, %c0_3] : memref<64x1xf32, #tpu.memory_space<vmem>>, vector<64x1xf32>
    %4 = vector.broadcast %3 : vector<64x1xf32> to vector<64x128xf32>
    %5 = arith.mulf %2, %4 : vector<64x128xf32>
    %c0_4 = arith.constant 0 : index
    %c0_5 = arith.constant 0 : index
    %6 = vector.load %arg4[%c0_4, %c0_5] : memref<64x1xf32, #tpu.memory_space<vmem>>, vector<64x1xf32>
    %7 = vector.broadcast %6 : vector<64x1xf32> to vector<64x128xf32>
    %8 = arith.addf %5, %7 : vector<64x128xf32>
    %cst = arith.constant 0.000000e+00 : f32
    %9 = vector.broadcast %cst : f32 to vector<64x128xf32>
    %10 = arith.cmpf oge, %8, %9 : vector<64x128xf32>
    %cst_6 = arith.constant 2.000000e-01 : f32
    %11 = vector.broadcast %cst_6 : f32 to vector<64x128xf32>
    %12 = arith.mulf %11, %8 : vector<64x128xf32>
    %13 = arith.select %10, %8, %12 : vector<64x128xi1>, vector<64x128xf32>
    %14 = arith.truncf %13 : vector<64x128xf32> to vector<64x128xbf16>
    %c0_7 = arith.constant 0 : index
    %c0_8 = arith.constant 0 : index
    %c0_9 = arith.constant 0 : index
    %15 = vector.load %arg5[%c0_7, %c0_8, %c0_9] : memref<1x64x128xbf16, #tpu.memory_space<vmem>>, vector<1x64x128xbf16>
    %16 = vector.shape_cast %15 : vector<1x64x128xbf16> to vector<64x128xbf16>
    %17 = vector.shape_cast %14 : vector<64x128xbf16> to vector<1x64x128xbf16>
    tpu.vector_store %arg5[%c0_7, %c0_8, %c0_9], %17 {strides = array<i32>} : memref<1x64x128xbf16, #tpu.memory_space<vmem>>, vector<1x64x128xbf16>,
    return
  }
  func.func @transform_0(%arg0: i32, %arg1: i32) -> (i32, i32, i32) {
    %c0_i32 = arith.constant 0 : i32
    %c0_i32_0 = arith.constant 0 : i32
    return %arg0, %c0_i32, %arg1 : i32, i32, i32
  }
  func.func @transform_1(%arg0: i32, %arg1: i32) -> (i32, i32) {
    %c0_i32 = arith.constant 0 : i32
    %c0_i32_0 = arith.constant 0 : i32
    %c0_i32_1 = arith.constant 0 : i32
    return %c0_i32, %c0_i32_0 : i32, i32
  }
  func.func @transform_2(%arg0: i32, %arg1: i32) -> (i32, i32) {
    %c0_i32 = arith.constant 0 : i32
    %c0_i32_0 = arith.constant 0 : i32
    %c0_i32_1 = arith.constant 0 : i32
    return %c0_i32, %c0_i32_0 : i32, i32
  }
  func.func @transform_3(%arg0: i32, %arg1: i32) -> (i32, i32, i32) {
    %c0_i32 = arith.constant 0 : i32
    %c0_i32_0 = arith.constant 0 : i32
    return %arg0, %c0_i32, %arg1 : i32, i32, i32
  }
}

module attributes {stable_mosaic.version = 11 : i64} {
  func.func @_conv_tap_kernel(%arg0: i32, %arg1: i32, %arg2: memref<1x128x128xbf16, #tpu.memory_space<vmem>>, %arg3: memref<1x128x128xbf16, #tpu.memory_space<vmem>>, %arg4: memref<3x128x128xbf16, #tpu.memory_space<vmem>>, %arg5: memref<128x1xf32, #tpu.memory_space<vmem>>, %arg6: memref<1x128x128xbf16, #tpu.memory_space<vmem>>, %arg7: memref<1x1x128x2xf32, #tpu.memory_space<vmem>>) attributes {dimension_semantics = [#tpu.dimension_semantics<parallel>, #tpu.dimension_semantics<parallel>], iteration_bounds = array<i64: 2, 1>, scalar_prefetch = 0 : i64, scratch_operands = 0 : i64, tpu.core_type = #tpu.core_type<tc>, window_params = [{transform_indices = @transform_0, window_bounds = array<i64: 1, 128, 128>}, {transform_indices = @transform_1, window_bounds = array<i64: 1, 128, 128>}, {pipeline_mode = #tpu.pipeline_mode<synchronous>, transform_indices = @transform_2, window_bounds = array<i64: 3, 128, 128>}, {pipeline_mode = #tpu.pipeline_mode<synchronous>, transform_indices = @transform_3, window_bounds = array<i64: 128, 1>}, {transform_indices = @transform_4, window_bounds = array<i64: 1, 128, 128>}, {transform_indices = @transform_5, window_bounds = array<i64: 1, 1, 128, 2>}]} {
    %c0 = arith.constant 0 : index
    %c0_0 = arith.constant 0 : index
    %c0_1 = arith.constant 0 : index
    %0 = vector.load %arg2[%c0, %c0_0, %c0_1] : memref<1x128x128xbf16, #tpu.memory_space<vmem>>, vector<1x128x128xbf16>
    %1 = vector.shape_cast %0 : vector<1x128x128xbf16> to vector<128x128xbf16>
    %c0_2 = arith.constant 0 : index
    %c0_3 = arith.constant 0 : index
    %c0_4 = arith.constant 0 : index
    %2 = vector.load %arg3[%c0_2, %c0_3, %c0_4] : memref<1x128x128xbf16, #tpu.memory_space<vmem>>, vector<1x128x128xbf16>
    %3 = vector.shape_cast %2 : vector<1x128x128xbf16> to vector<128x128xbf16>
    %4 = tpu.concatenate %1, %3 in 1 : vector<128x128xbf16>, vector<128x128xbf16> -> vector<128x256xbf16>
    %cst = arith.constant 0.000000e+00 : f32
    %5 = vector.broadcast %cst : f32 to vector<128x128xf32>
    %6 = vector.extract_strided_slice %4 {offsets = [0, 0], sizes = [128, 128], strides = [1, 1]} : vector<128x256xbf16> to vector<128x128xbf16>
    %c0_5 = arith.constant 0 : index
    %c0_6 = arith.constant 0 : index
    %c0_7 = arith.constant 0 : index
    %7 = vector.load %arg4[%c0_5, %c0_6, %c0_7] : memref<3x128x128xbf16, #tpu.memory_space<vmem>>, vector<1x128x128xbf16>
    %8 = vector.shape_cast %7 : vector<1x128x128xbf16> to vector<128x128xbf16>
    %cst_8 = arith.constant dense<0.000000e+00> : vector<128x128xf32>
    %9 = tpu.matmul %8, %6, %cst_8 {dimension_numbers = #tpu.dot_dimension_numbers<[1], [0], [0], [1], [0, 0, 1, 1], [], []>} : vector<128x128xbf16>, vector<128x128xbf16>, vector<128x128xf32> -> vector<128x128xf32>
    %10 = arith.addf %5, %9 : vector<128x128xf32>
    %11 = vector.extract_strided_slice %4 {offsets = [0, 1], sizes = [128, 128], strides = [1, 1]} : vector<128x256xbf16> to vector<128x128xbf16>
    %c1 = arith.constant 1 : index
    %c0_9 = arith.constant 0 : index
    %c0_10 = arith.constant 0 : index
    %12 = vector.load %arg4[%c1, %c0_9, %c0_10] : memref<3x128x128xbf16, #tpu.memory_space<vmem>>, vector<1x128x128xbf16>
    %13 = vector.shape_cast %12 : vector<1x128x128xbf16> to vector<128x128xbf16>
    %cst_11 = arith.constant dense<0.000000e+00> : vector<128x128xf32>
    %14 = tpu.matmul %13, %11, %cst_11 {dimension_numbers = #tpu.dot_dimension_numbers<[1], [0], [0], [1], [0, 0, 1, 1], [], []>} : vector<128x128xbf16>, vector<128x128xbf16>, vector<128x128xf32> -> vector<128x128xf32>
    %15 = arith.addf %10, %14 : vector<128x128xf32>
    %16 = vector.extract_strided_slice %4 {offsets = [0, 2], sizes = [64, 128], strides = [1, 1]} : vector<128x256xbf16> to vector<64x128xbf16>
    %c2 = arith.constant 2 : index
    %c0_12 = arith.constant 0 : index
    %c0_13 = arith.constant 0 : index
    %17 = vector.load %arg4[%c2, %c0_12, %c0_13] : memref<3x128x128xbf16, #tpu.memory_space<vmem>>, vector<1x128x64xbf16>
    %18 = vector.shape_cast %17 : vector<1x128x64xbf16> to vector<128x64xbf16>
    %cst_14 = arith.constant dense<0.000000e+00> : vector<128x128xf32>
    %19 = tpu.matmul %18, %16, %cst_14 {dimension_numbers = #tpu.dot_dimension_numbers<[1], [0], [0], [1], [0, 0, 1, 1], [], []>} : vector<128x64xbf16>, vector<64x128xbf16>, vector<128x128xf32> -> vector<128x128xf32>
    %20 = arith.addf %15, %19 : vector<128x128xf32>
    %c0_15 = arith.constant 0 : index
    %c0_16 = arith.constant 0 : index
    %21 = vector.load %arg5[%c0_15, %c0_16] : memref<128x1xf32, #tpu.memory_space<vmem>>, vector<128x1xf32>
    %22 = vector.broadcast %21 : vector<128x1xf32> to vector<128x128xf32>
    %23 = arith.addf %20, %22 : vector<128x128xf32>
    %24 = arith.truncf %23 : vector<128x128xf32> to vector<128x128xbf16>
    %c0_17 = arith.constant 0 : index
    %c0_18 = arith.constant 0 : index
    %c0_19 = arith.constant 0 : index
    %25 = vector.load %arg6[%c0_17, %c0_18, %c0_19] : memref<1x128x128xbf16, #tpu.memory_space<vmem>>, vector<1x128x128xbf16>
    %26 = vector.shape_cast %25 : vector<1x128x128xbf16> to vector<128x128xbf16>
    %27 = vector.shape_cast %24 : vector<128x128xbf16> to vector<1x128x128xbf16>
    tpu.vector_store %arg6[%c0_17, %c0_18, %c0_19], %27 {strides = array<i32>} : memref<1x128x128xbf16, #tpu.memory_space<vmem>>, vector<1x128x128xbf16>,
    %28 = tpu.iota {dimensions = array<i32: 1>} : vector<1x128xi32>
    %c128_i32 = arith.constant 128 : i32
    %29 = arith.muli %arg1, %c128_i32 : i32
    %30 = vector.broadcast %29 : i32 to vector<1x128xi32>
    %31 = arith.addi %28, %30 : vector<1x128xi32>
    %c1_i32 = arith.constant 1 : i32
    %32 = vector.broadcast %c1_i32 : i32 to vector<1x128xi32>
    %33 = arith.cmpi slt, %31, %32 : vector<1x128xi32>
    %cst_20 = arith.constant 0.000000e+00 : f32
    %34 = vector.shape_cast %33 : vector<1x128xi1> to vector<1x128xi1>
    %35 = vector.broadcast %34 : vector<1x128xi1> to vector<128x128xi1>
    %36 = vector.broadcast %cst_20 : f32 to vector<128x128xf32>
    %37 = arith.select %35, %23, %36 : vector<128x128xi1>, vector<128x128xf32>
    %cst_21 = arith.constant dense<0.000000e+00> : vector<128xf32>
    %38 = vector.multi_reduction <add>, %37, %cst_21 [1] : vector<128x128xf32> to vector<128xf32>
    %39 = vector.shape_cast %38 : vector<128xf32> to vector<128x1xf32>
    %40 = arith.mulf %37, %37 : vector<128x128xf32>
    %cst_22 = arith.constant dense<0.000000e+00> : vector<128xf32>
    %41 = vector.multi_reduction <add>, %40, %cst_22 [1] : vector<128x128xf32> to vector<128xf32>
    %42 = vector.shape_cast %41 : vector<128xf32> to vector<128x1xf32>
    %43 = tpu.concatenate %39, %42 in 1 : vector<128x1xf32>, vector<128x1xf32> -> vector<128x2xf32>
    %c0_23 = arith.constant 0 : index
    %c0_24 = arith.constant 0 : index
    %c0_25 = arith.constant 0 : index
    %c0_26 = arith.constant 0 : index
    %44 = vector.load %arg7[%c0_23, %c0_24, %c0_25, %c0_26] : memref<1x1x128x2xf32, #tpu.memory_space<vmem>>, vector<1x1x128x2xf32>
    %45 = vector.shape_cast %44 : vector<1x1x128x2xf32> to vector<128x2xf32>
    %46 = vector.shape_cast %43 : vector<128x2xf32> to vector<1x1x128x2xf32>
    tpu.vector_store %arg7[%c0_23, %c0_24, %c0_25, %c0_26], %46 {strides = array<i32>} : memref<1x1x128x2xf32, #tpu.memory_space<vmem>>, vector<1x1x128x2xf32>,
    return
  }
  func.func @transform_0(%arg0: i32, %arg1: i32) -> (i32, i32, i32) {
    %c0_i32 = arith.constant 0 : i32
    %c0_i32_0 = arith.constant 0 : i32
    return %arg0, %c0_i32, %arg1 : i32, i32, i32
  }
  func.func @transform_1(%arg0: i32, %arg1: i32) -> (i32, i32, i32) {
    %c1_i32 = arith.constant 1 : i32
    %0 = arith.addi %arg1, %c1_i32 : i32
    %c1_i32_0 = arith.constant 1 : i32
    %1 = arith.muli %0, %c1_i32_0 : i32
    %c0_i32 = arith.constant 0 : i32
    %c0_i32_1 = arith.constant 0 : i32
    return %arg0, %c0_i32, %1 : i32, i32, i32
  }
  func.func @transform_2(%arg0: i32, %arg1: i32) -> (i32, i32, i32) {
    %c0_i32 = arith.constant 0 : i32
    %c0_i32_0 = arith.constant 0 : i32
    %c0_i32_1 = arith.constant 0 : i32
    %c0_i32_2 = arith.constant 0 : i32
    return %c0_i32, %c0_i32_0, %c0_i32_1 : i32, i32, i32
  }
  func.func @transform_3(%arg0: i32, %arg1: i32) -> (i32, i32) {
    %c0_i32 = arith.constant 0 : i32
    %c0_i32_0 = arith.constant 0 : i32
    %c0_i32_1 = arith.constant 0 : i32
    return %c0_i32, %c0_i32_0 : i32, i32
  }
  func.func @transform_4(%arg0: i32, %arg1: i32) -> (i32, i32, i32) {
    %c0_i32 = arith.constant 0 : i32
    %c0_i32_0 = arith.constant 0 : i32
    return %arg0, %c0_i32, %arg1 : i32, i32, i32
  }
  func.func @transform_5(%arg0: i32, %arg1: i32) -> (i32, i32, i32, i32) {
    %c0_i32 = arith.constant 0 : i32
    %c0_i32_0 = arith.constant 0 : i32
    %c0_i32_1 = arith.constant 0 : i32
    return %arg0, %arg1, %c0_i32, %c0_i32_0 : i32, i32, i32, i32
  }
}

module attributes {stable_mosaic.version = 11 : i64} {
  func.func @_conv_tap_kernel(%arg0: i32, %arg1: i32, %arg2: memref<1x128x128xbf16, #tpu.memory_space<vmem>>, %arg3: memref<1x128x128xbf16, #tpu.memory_space<vmem>>, %arg4: memref<5x32x128xbf16, #tpu.memory_space<vmem>>, %arg5: memref<32x1xf32, #tpu.memory_space<vmem>>, %arg6: memref<1x32x128xf32, #tpu.memory_space<vmem>>) attributes {dimension_semantics = [#tpu.dimension_semantics<parallel>, #tpu.dimension_semantics<parallel>], iteration_bounds = array<i64: 2, 1>, scalar_prefetch = 0 : i64, scratch_operands = 0 : i64, tpu.core_type = #tpu.core_type<tc>, window_params = [{transform_indices = @transform_0, window_bounds = array<i64: 1, 128, 128>}, {transform_indices = @transform_1, window_bounds = array<i64: 1, 128, 128>}, {pipeline_mode = #tpu.pipeline_mode<synchronous>, transform_indices = @transform_2, window_bounds = array<i64: 5, 32, 128>}, {pipeline_mode = #tpu.pipeline_mode<synchronous>, transform_indices = @transform_3, window_bounds = array<i64: 32, 1>}, {transform_indices = @transform_4, window_bounds = array<i64: 1, 32, 128>}]} {
    %c0 = arith.constant 0 : index
    %c0_0 = arith.constant 0 : index
    %c0_1 = arith.constant 0 : index
    %0 = vector.load %arg2[%c0, %c0_0, %c0_1] : memref<1x128x128xbf16, #tpu.memory_space<vmem>>, vector<1x128x128xbf16>
    %1 = vector.shape_cast %0 : vector<1x128x128xbf16> to vector<128x128xbf16>
    %c0_2 = arith.constant 0 : index
    %c0_3 = arith.constant 0 : index
    %c0_4 = arith.constant 0 : index
    %2 = vector.load %arg3[%c0_2, %c0_3, %c0_4] : memref<1x128x128xbf16, #tpu.memory_space<vmem>>, vector<1x128x128xbf16>
    %3 = vector.shape_cast %2 : vector<1x128x128xbf16> to vector<128x128xbf16>
    %4 = tpu.concatenate %1, %3 in 1 : vector<128x128xbf16>, vector<128x128xbf16> -> vector<128x256xbf16>
    %cst = arith.constant 0.000000e+00 : f32
    %5 = vector.broadcast %cst : f32 to vector<32x128xf32>
    %6 = vector.extract_strided_slice %4 {offsets = [0, 0], sizes = [128, 128], strides = [1, 1]} : vector<128x256xbf16> to vector<128x128xbf16>
    %c0_5 = arith.constant 0 : index
    %c0_6 = arith.constant 0 : index
    %c0_7 = arith.constant 0 : index
    %7 = vector.load %arg4[%c0_5, %c0_6, %c0_7] : memref<5x32x128xbf16, #tpu.memory_space<vmem>>, vector<1x32x128xbf16>
    %8 = vector.shape_cast %7 : vector<1x32x128xbf16> to vector<32x128xbf16>
    %cst_8 = arith.constant dense<0.000000e+00> : vector<32x128xf32>
    %9 = tpu.matmul %8, %6, %cst_8 {dimension_numbers = #tpu.dot_dimension_numbers<[1], [0], [0], [1], [0, 0, 1, 1], [], []>} : vector<32x128xbf16>, vector<128x128xbf16>, vector<32x128xf32> -> vector<32x128xf32>
    %10 = arith.addf %5, %9 : vector<32x128xf32>
    %11 = vector.extract_strided_slice %4 {offsets = [0, 1], sizes = [128, 128], strides = [1, 1]} : vector<128x256xbf16> to vector<128x128xbf16>
    %c1 = arith.constant 1 : index
    %c0_9 = arith.constant 0 : index
    %c0_10 = arith.constant 0 : index
    %12 = vector.load %arg4[%c1, %c0_9, %c0_10] : memref<5x32x128xbf16, #tpu.memory_space<vmem>>, vector<1x32x128xbf16>
    %13 = vector.shape_cast %12 : vector<1x32x128xbf16> to vector<32x128xbf16>
    %cst_11 = arith.constant dense<0.000000e+00> : vector<32x128xf32>
    %14 = tpu.matmul %13, %11, %cst_11 {dimension_numbers = #tpu.dot_dimension_numbers<[1], [0], [0], [1], [0, 0, 1, 1], [], []>} : vector<32x128xbf16>, vector<128x128xbf16>, vector<32x128xf32> -> vector<32x128xf32>
    %15 = arith.addf %10, %14 : vector<32x128xf32>
    %16 = vector.extract_strided_slice %4 {offsets = [0, 2], sizes = [128, 128], strides = [1, 1]} : vector<128x256xbf16> to vector<128x128xbf16>
    %c2 = arith.constant 2 : index
    %c0_12 = arith.constant 0 : index
    %c0_13 = arith.constant 0 : index
    %17 = vector.load %arg4[%c2, %c0_12, %c0_13] : memref<5x32x128xbf16, #tpu.memory_space<vmem>>, vector<1x32x128xbf16>
    %18 = vector.shape_cast %17 : vector<1x32x128xbf16> to vector<32x128xbf16>
    %cst_14 = arith.constant dense<0.000000e+00> : vector<32x128xf32>
    %19 = tpu.matmul %18, %16, %cst_14 {dimension_numbers = #tpu.dot_dimension_numbers<[1], [0], [0], [1], [0, 0, 1, 1], [], []>} : vector<32x128xbf16>, vector<128x128xbf16>, vector<32x128xf32> -> vector<32x128xf32>
    %20 = arith.addf %15, %19 : vector<32x128xf32>
    %21 = vector.extract_strided_slice %4 {offsets = [0, 3], sizes = [128, 128], strides = [1, 1]} : vector<128x256xbf16> to vector<128x128xbf16>
    %c3 = arith.constant 3 : index
    %c0_15 = arith.constant 0 : index
    %c0_16 = arith.constant 0 : index
    %22 = vector.load %arg4[%c3, %c0_15, %c0_16] : memref<5x32x128xbf16, #tpu.memory_space<vmem>>, vector<1x32x128xbf16>
    %23 = vector.shape_cast %22 : vector<1x32x128xbf16> to vector<32x128xbf16>
    %cst_17 = arith.constant dense<0.000000e+00> : vector<32x128xf32>
    %24 = tpu.matmul %23, %21, %cst_17 {dimension_numbers = #tpu.dot_dimension_numbers<[1], [0], [0], [1], [0, 0, 1, 1], [], []>} : vector<32x128xbf16>, vector<128x128xbf16>, vector<32x128xf32> -> vector<32x128xf32>
    %25 = arith.addf %20, %24 : vector<32x128xf32>
    %26 = vector.extract_strided_slice %4 {offsets = [0, 4], sizes = [128, 128], strides = [1, 1]} : vector<128x256xbf16> to vector<128x128xbf16>
    %c4 = arith.constant 4 : index
    %c0_18 = arith.constant 0 : index
    %c0_19 = arith.constant 0 : index
    %27 = vector.load %arg4[%c4, %c0_18, %c0_19] : memref<5x32x128xbf16, #tpu.memory_space<vmem>>, vector<1x32x128xbf16>
    %28 = vector.shape_cast %27 : vector<1x32x128xbf16> to vector<32x128xbf16>
    %cst_20 = arith.constant dense<0.000000e+00> : vector<32x128xf32>
    %29 = tpu.matmul %28, %26, %cst_20 {dimension_numbers = #tpu.dot_dimension_numbers<[1], [0], [0], [1], [0, 0, 1, 1], [], []>} : vector<32x128xbf16>, vector<128x128xbf16>, vector<32x128xf32> -> vector<32x128xf32>
    %30 = arith.addf %25, %29 : vector<32x128xf32>
    %c0_21 = arith.constant 0 : index
    %c0_22 = arith.constant 0 : index
    %31 = vector.load %arg5[%c0_21, %c0_22] : memref<32x1xf32, #tpu.memory_space<vmem>>, vector<32x1xf32>
    %32 = vector.broadcast %31 : vector<32x1xf32> to vector<32x128xf32>
    %33 = arith.addf %30, %32 : vector<32x128xf32>
    %c0_23 = arith.constant 0 : index
    %c0_24 = arith.constant 0 : index
    %c0_25 = arith.constant 0 : index
    %34 = vector.load %arg6[%c0_23, %c0_24, %c0_25] : memref<1x32x128xf32, #tpu.memory_space<vmem>>, vector<1x32x128xf32>
    %35 = vector.shape_cast %34 : vector<1x32x128xf32> to vector<32x128xf32>
    %36 = vector.shape_cast %33 : vector<32x128xf32> to vector<1x32x128xf32>
    tpu.vector_store %arg6[%c0_23, %c0_24, %c0_25], %36 {strides = array<i32>} : memref<1x32x128xf32, #tpu.memory_space<vmem>>, vector<1x32x128xf32>,
    return
  }
  func.func @transform_0(%arg0: i32, %arg1: i32) -> (i32, i32, i32) {
    %c0_i32 = arith.constant 0 : i32
    %c0_i32_0 = arith.constant 0 : i32
    return %arg0, %c0_i32, %arg1 : i32, i32, i32
  }
  func.func @transform_1(%arg0: i32, %arg1: i32) -> (i32, i32, i32) {
    %c1_i32 = arith.constant 1 : i32
    %0 = arith.addi %arg1, %c1_i32 : i32
    %c1_i32_0 = arith.constant 1 : i32
    %1 = arith.muli %0, %c1_i32_0 : i32
    %c0_i32 = arith.constant 0 : i32
    %c0_i32_1 = arith.constant 0 : i32
    return %arg0, %c0_i32, %1 : i32, i32, i32
  }
  func.func @transform_2(%arg0: i32, %arg1: i32) -> (i32, i32, i32) {
    %c0_i32 = arith.constant 0 : i32
    %c0_i32_0 = arith.constant 0 : i32
    %c0_i32_1 = arith.constant 0 : i32
    %c0_i32_2 = arith.constant 0 : i32
    return %c0_i32, %c0_i32_0, %c0_i32_1 : i32, i32, i32
  }
  func.func @transform_3(%arg0: i32, %arg1: i32) -> (i32, i32) {
    %c0_i32 = arith.constant 0 : i32
    %c0_i32_0 = arith.constant 0 : i32
    %c0_i32_1 = arith.constant 0 : i32
    return %c0_i32, %c0_i32_0 : i32, i32
  }
  func.func @transform_4(%arg0: i32, %arg1: i32) -> (i32, i32, i32) {
    %c0_i32 = arith.constant 0 : i32
    %c0_i32_0 = arith.constant 0 : i32
    return %arg0, %c0_i32, %arg1 : i32, i32, i32
  }
}

module attributes {stable_mosaic.version = 11 : i64} {
  func.func @_bn_lrelu_kernel(%arg0: i32, %arg1: i32, %arg2: memref<1x128x128xbf16, #tpu.memory_space<vmem>>, %arg3: memref<128x1xf32, #tpu.memory_space<vmem>>, %arg4: memref<128x1xf32, #tpu.memory_space<vmem>>, %arg5: memref<1x128x128xbf16, #tpu.memory_space<vmem>>) attributes {dimension_semantics = [#tpu.dimension_semantics<parallel>, #tpu.dimension_semantics<parallel>], iteration_bounds = array<i64: 2, 1>, scalar_prefetch = 0 : i64, scratch_operands = 0 : i64, tpu.core_type = #tpu.core_type<tc>, window_params = [{transform_indices = @transform_0, window_bounds = array<i64: 1, 128, 128>}, {pipeline_mode = #tpu.pipeline_mode<synchronous>, transform_indices = @transform_1, window_bounds = array<i64: 128, 1>}, {pipeline_mode = #tpu.pipeline_mode<synchronous>, transform_indices = @transform_2, window_bounds = array<i64: 128, 1>}, {transform_indices = @transform_3, window_bounds = array<i64: 1, 128, 128>}]} {
    %c0 = arith.constant 0 : index
    %c0_0 = arith.constant 0 : index
    %c0_1 = arith.constant 0 : index
    %0 = vector.load %arg2[%c0, %c0_0, %c0_1] : memref<1x128x128xbf16, #tpu.memory_space<vmem>>, vector<1x128x128xbf16>
    %1 = vector.shape_cast %0 : vector<1x128x128xbf16> to vector<128x128xbf16>
    %2 = arith.extf %1 : vector<128x128xbf16> to vector<128x128xf32>
    %c0_2 = arith.constant 0 : index
    %c0_3 = arith.constant 0 : index
    %3 = vector.load %arg3[%c0_2, %c0_3] : memref<128x1xf32, #tpu.memory_space<vmem>>, vector<128x1xf32>
    %4 = vector.broadcast %3 : vector<128x1xf32> to vector<128x128xf32>
    %5 = arith.mulf %2, %4 : vector<128x128xf32>
    %c0_4 = arith.constant 0 : index
    %c0_5 = arith.constant 0 : index
    %6 = vector.load %arg4[%c0_4, %c0_5] : memref<128x1xf32, #tpu.memory_space<vmem>>, vector<128x1xf32>
    %7 = vector.broadcast %6 : vector<128x1xf32> to vector<128x128xf32>
    %8 = arith.addf %5, %7 : vector<128x128xf32>
    %cst = arith.constant 0.000000e+00 : f32
    %9 = vector.broadcast %cst : f32 to vector<128x128xf32>
    %10 = arith.cmpf oge, %8, %9 : vector<128x128xf32>
    %cst_6 = arith.constant 2.000000e-01 : f32
    %11 = vector.broadcast %cst_6 : f32 to vector<128x128xf32>
    %12 = arith.mulf %11, %8 : vector<128x128xf32>
    %13 = arith.select %10, %8, %12 : vector<128x128xi1>, vector<128x128xf32>
    %14 = arith.truncf %13 : vector<128x128xf32> to vector<128x128xbf16>
    %c0_7 = arith.constant 0 : index
    %c0_8 = arith.constant 0 : index
    %c0_9 = arith.constant 0 : index
    %15 = vector.load %arg5[%c0_7, %c0_8, %c0_9] : memref<1x128x128xbf16, #tpu.memory_space<vmem>>, vector<1x128x128xbf16>
    %16 = vector.shape_cast %15 : vector<1x128x128xbf16> to vector<128x128xbf16>
    %17 = vector.shape_cast %14 : vector<128x128xbf16> to vector<1x128x128xbf16>
    tpu.vector_store %arg5[%c0_7, %c0_8, %c0_9], %17 {strides = array<i32>} : memref<1x128x128xbf16, #tpu.memory_space<vmem>>, vector<1x128x128xbf16>,
    return
  }
  func.func @transform_0(%arg0: i32, %arg1: i32) -> (i32, i32, i32) {
    %c0_i32 = arith.constant 0 : i32
    %c0_i32_0 = arith.constant 0 : i32
    return %arg0, %c0_i32, %arg1 : i32, i32, i32
  }
  func.func @transform_1(%arg0: i32, %arg1: i32) -> (i32, i32) {
    %c0_i32 = arith.constant 0 : i32
    %c0_i32_0 = arith.constant 0 : i32
    %c0_i32_1 = arith.constant 0 : i32
    return %c0_i32, %c0_i32_0 : i32, i32
  }
  func.func @transform_2(%arg0: i32, %arg1: i32) -> (i32, i32) {
    %c0_i32 = arith.constant 0 : i32
    %c0_i32_0 = arith.constant 0 : i32
    %c0_i32_1 = arith.constant 0 : i32
    return %c0_i32, %c0_i32_0 : i32, i32
  }
  func.func @transform_3(%arg0: i32, %arg1: i32) -> (i32, i32, i32) {
    %c0_i32 = arith.constant 0 : i32
    %c0_i32_0 = arith.constant 0 : i32
    return %arg0, %c0_i32, %arg1 : i32, i32, i32
  }
}

</mosaic_0001>

<llo_original>
// kernel: forward.10
$region0: #{forward.10}
  #allocation0 [shape = 'u32[]', space=smem, size = 0x4, offset = 0x4, fixed_abs, tag = 'smem constant byte address 0x4 - core index']
  #allocation1 [shape = 'u32[72,128]{1,0:T(1,128)}', space=vmem, size = 0x9000, scoped, tag = 'internal scratch']
  %s0 = inlined_call_operand.vmem [shape: bf16[2,16,256], index: 0, kind: input, shape index: {}, may-alias: {0,1}]
  %s1 = inlined_call_operand.vmem [shape: bf16[2,16,256], index: 1, kind: input, shape index: {}, may-alias: {0,1}]
  %s2 = inlined_call_operand.vmem [shape: bf16[7,8,16], index: 2, kind: input, shape index: {}]
  %s3 = inlined_call_operand.vmem [shape: f32[8,1], index: 3, kind: input, shape index: {}]
  %s4 = inlined_call_operand.vmem [shape: bf16[2,8,128], index: 4, kind: output, shape index: {}]
  %s5 = sld [smem:[#allocation0]]
  $region131: #{forward.10} parent=0
    _
  %s7 = ssub.s32 1, %s5
  %s8 = scalar_select 0, %s7, %s5
  $region1: #{forward.10} parent=0
    #allocation2 [shape = 'u8[8192]{0}', space=vmem, size = 0x2000, scoped, tag = 'input window, operand 0']
    #allocation3 [shape = 'u8[8192]{0}', space=vmem, size = 0x2000, scoped, tag = 'input window, operand 1']
    loop: start=0, step=1, limit=4
    $region2: #{forward.10} parent=1 // loop_pre_header
      _
    $region3: #{forward.10} parent=1 // loop_header
      %s10 = sphi 0, %s14
      %p11 = scmp.ge.s32.totalorder %s10, 4
      %s17 = sphi 0, %s29
      %s18 = sphi 0, %s25
      %s19 = sphi 0, %s17
      %s20 = sphi 0, %s18
      %s21 = sphi 0, %s19
      %s22 = sphi 0, %s20
      %s34 = sphi 0, %s36
      %s37 = sphi 0, %s34
      %s38 = sphi 0, %s37
      %s54 = sphi 0, %s38
      %s64 = sphi 0, %s66
      %s67 = sphi 0, %s64
      %s68 = sphi 0, %s67
      %s84 = sphi 0, %s68
      %s88 = sphi 0, %s88
      %s90 = sphi 0, %s88
      %s91 = sphi 0, %s90
      %s105 = sphi 0, %s91
      %s109 = sphi 0, %s109
      %s111 = sphi 0, %s109
      %s112 = sphi 0, %s111
      %s126 = sphi 0, %s112
      %s134 = sphi 0, %s136
      %s137 = sphi 0, %s134
      %s138 = sphi 0, %s137
      %s154 = sphi 0, %s138
    $region4: #{forward.10} parent=1 // loop_header_branch
      %13 = sbr.rel (%p11) target = $region8
    $region5: #{forward.10} parent=1 // loop_body
      %s15 = ssub.s32 %s10, 1
      %s16 = ssub.s32 %s10, 2
      %s23 = sadd.s32 1, %s18
      %p24 = scmp.ge.s32.totalorder %s23, 1
      %s25 = scalar_select %p24, 0, %s23
      %s26 = sadd.s32 1, %s17
      %s27 = scalar_select %p24, %s26, %s17
      %p28 = scmp.ge.s32.totalorder %s27, 2
      %s29 = scalar_select %p28, 0, %s27
      %s30 = ssub.s32 %s17, %s29
      %s31 = ssub.s32 %s18, %s25
      %s32 = sor.u32 %s30, %s31
      %p33 = scmp.eq.s32.totalorder %s32, 0
      %s35 = sadd.s32 %s34, 1
      %s36 = scalar_select %p33, %s34, %s35
      %p39 = pneg %p33
      %p40 = scmp.eq.s32.totalorder %s10, 1
      %p41 = por %p39, %p40
      %p42 = scmp.ne.s32.totalorder %s34, %s37
      %p43 = scmp.eq.s32.totalorder %s10, 0
      %p44 = por %p42, %p43
      %p45 = scmp.ne.s32.totalorder %s34, %s37
      %p46 = scmp.eq.s32.totalorder %s15, 1
      %p47 = por %p45, %p46
      %p48 = scmp.ne.s32.totalorder %s37, %s38
      %p49 = scmp.eq.s32.totalorder %s15, 0
      %p50 = por %p48, %p49
      %p51 = scmp.ne.s32.totalorder %s37, %s38
      %p52 = scmp.eq.s32.totalorder %s16, 1
      %p53 = por %p51, %p52
      %p55 = scmp.ne.s32.totalorder %s38, %s54
      %p56 = scmp.eq.s32.totalorder %s16, 0
      %p57 = por %p55, %p56
      %s58 = sadd.s32 %s18, 1
      %s59 = sadd.s32 %s25, 1
      %s60 = ssub.s32 %s17, %s29
      %s61 = ssub.s32 %s58, %s59
      %s62 = sor.u32 %s60, %s61
      %p63 = scmp.eq.s32.totalorder %s62, 0
      %s65 = sadd.s32 %s64, 1
      %s66 = scalar_select %p63, %s64, %s65
      %p69 = pneg %p63
      %p70 = scmp.eq.s32.totalorder %s10, 1
      %p71 = por %p69, %p70
      %p72 = scmp.ne.s32.totalorder %s64, %s67
      %p73 = scmp.eq.s32.totalorder %s10, 0
      %p74 = por %p72, %p73
      %p75 = scmp.ne.s32.totalorder %s64, %s67
      %p76 = scmp.eq.s32.totalorder %s15, 1
      %p77 = por %p75, %p76
      %p78 = scmp.ne.s32.totalorder %s67, %s68
      %p79 = scmp.eq.s32.totalorder %s15, 0
      %p80 = por %p78, %p79
      %p81 = scmp.ne.s32.totalorder %s67, %s68
      %p82 = scmp.eq.s32.totalorder %s16, 1
      %p83 = por %p81, %p82
      %p85 = scmp.ne.s32.totalorder %s68, %s84
      %p86 = scmp.eq.s32.totalorder %s16, 0
      %p87 = por %p85, %p86
      %s89 = sadd.s32 %s88, 1
      %p92 = scmp.eq.s32.totalorder %s10, 1
      %p93 = scmp.ne.s32.totalorder %s88, %s90
      %p94 = scmp.eq.s32.totalorder %s10, 0
      %p95 = por %p93, %p94
      %p96 = scmp.ne.s32.totalorder %s88, %s90
      %p97 = scmp.eq.s32.totalorder %s15, 1
      %p98 = por %p96, %p97
      %p99 = scmp.ne.s32.totalorder %s90, %s91
      %p100 = scmp.eq.s32.totalorder %s15, 0
      %p101 = por %p99, %p100
      %p102 = scmp.ne.s32.totalorder %s90, %s91
      %p103 = scmp.eq.s32.totalorder %s16, 1
      %p104 = por %p102, %p103
      %p106 = scmp.ne.s32.totalorder %s91, %s105
      %p107 = scmp.eq.s32.totalorder %s16, 0
      %p108 = por %p106, %p107
      %s110 = sadd.s32 %s109, 1
      %p113 = scmp.eq.s32.totalorder %s10, 1
      %p114 = scmp.ne.s32.totalorder %s109, %s111
      %p115 = scmp.eq.s32.totalorder %s10, 0
      %p116 = por %p114, %p115
      %p117 = scmp.ne.s32.totalorder %s109, %s111
      %p118 = scmp.eq.s32.totalorder %s15, 1
      %p119 = por %p117, %p118
      %p120 = scmp.ne.s32.totalorder %s111, %s112
      %p121 = scmp.eq.s32.totalorder %s15, 0
      %p122 = por %p120, %p121
      %p123 = scmp.ne.s32.totalorder %s111, %s112
      %p124 = scmp.eq.s32.totalorder %s16, 1
      %p125 = por %p123, %p124
      %p127 = scmp.ne.s32.totalorder %s112, %s126
      %p128 = scmp.eq.s32.totalorder %s16, 0
      %p129 = por %p127, %p128
      %s130 = ssub.s32 %s17, %s29
      %s131 = ssub.s32 %s18, %s25
      %s132 = sor.u32 %s130, %s131
      %p133 = scmp.eq.s32.totalorder %s132, 0
      %s135 = sadd.s32 %s134, 1
      %s136 = scalar_select %p133, %s134, %s135
      %p139 = pneg %p133
      %p140 = scmp.eq.s32.totalorder %s10, 1
      %p141 = por %p139, %p140
      %p142 = scmp.ne.s32.totalorder %s134, %s137
      %p143 = scmp.eq.s32.totalorder %s10, 0
      %p144 = por %p142, %p143
      %p145 = scmp.ne.s32.totalorder %s134, %s137
      %p146 = scmp.eq.s32.totalorder %s15, 1
      %p147 = por %p145, %p146
      %p148 = scmp.ne.s32.totalorder %s137, %s138
      %p149 = scmp.eq.s32.totalorder %s15, 0
      %p150 = por %p148, %p149
      %p151 = scmp.ne.s32.totalorder %s137, %s138
      %p152 = scmp.eq.s32.totalorder %s16, 1
      %p153 = por %p151, %p152
      %p155 = scmp.ne.s32.totalorder %s138, %s154
      %p156 = scmp.eq.s32.totalorder %s16, 0
      %p157 = por %p155, %p156
      %p158 = scmp.le.s32.totalorder 1, %s10
      %p159 = scmp.lt.s32.totalorder %s10, 3
      %p160 = pnand %p158, %p159
      %p161 = pneg %p160
      // Predicated region
      $region9: #{forward.10} parent=5 // pred_check
        _
      $region10: #{forward.10} parent=5 // pred_check_branch
        %163 = sbr.rel (%p160) target = $region12
      $region11: #{forward.10} parent=5 // pred_region
        %s164 = ssub.s32 %s10, 1
        // Predicated region
        $region13: #{forward.10} parent=11 // pred_check
          %p165 = pneg %p101
        $region14: #{forward.10} parent=11 // pred_check_branch
          %167 = sbr.rel (%p165) target = $region16
        $region15: #{forward.10} parent=11 // pred_region
          _
        $region16: #{forward.10} parent=11 // pred_fallthru
          _
        // Predicated region
        $region17: #{forward.10} parent=11 // pred_check
          %p168 = pneg %p122
        $region18: #{forward.10} parent=11 // pred_check_branch
          %170 = sbr.rel (%p168) target = $region20
        $region19: #{forward.10} parent=11 // pred_region
          _
        $region20: #{forward.10} parent=11 // pred_fallthru
          _
      $region12: #{forward.10} parent=5 // pred_fallthru
        _
      %p171 = scmp.lt.s32.totalorder %s10, 2
      // Predicated region
      $region21: #{forward.10} parent=5 // pred_check
        %p172 = pneg %p171
      $region22: #{forward.10} parent=5 // pred_check_branch
        %174 = sbr.rel (%p172) target = $region24
      $region23: #{forward.10} parent=5 // pred_region
        // Predicated region
        $region25: #{forward.10} parent=23 // pred_check
          %p175 = pneg %p44
        $region26: #{forward.10} parent=23 // pred_check_branch
          %177 = sbr.rel (%p175) target = $region28
        $region27: #{forward.10} parent=23 // pred_region
          %s178 = sand.u32 %s34, 1
          %s179 = sand.u32 %s34, 1
          %s180 = smul.addr %s179, 8
          %s181 = scalar_lea.vmem [#allocation2], %s180
          %s182 = smul.addr %s17, 4
          %s183 = sadd.s32 %s18, %s182
          %s184 = smul.addr %s183, 4
          %s185 = scalar_lea.vmem %s0, %s184
          // Predicated region
          $region29: #{forward.10} parent=27 // pred_check
            _
          $region30: #{forward.10} parent=27 // pred_check_branch
            %187 = sbr.rel (0) target = $region32
          $region31: #{forward.10} parent=27 // pred_region
            // Predicated region
            $region33: #{forward.10} parent=31 // pred_check
              _
            $region34: #{forward.10} parent=31 // pred_check_branch
              %189 = sbr.rel target = $region36
            $region35: #{forward.10} parent=31 // pred_region
              // Predicated region
              $region48: #{forward.10} parent=35 // pred_check
                _
              $region49: #{forward.10} parent=35 // pred_check_branch
                %207 = sbr.rel (0) target = $region51
              $region50: #{forward.10} parent=35 // pred_region
                loop: start=0, step=1, limit=1
                $region52: #{forward.10} parent=50 // loop_pre_header
                  _
                $region53: #{forward.10} parent=50 // loop_header
                  %s209 = sphi 0, %s213
                  %p210 = scmp.ge.s32.totalorder %s209, 1
                  %s214 = sphi %s185, %s185
                  %s215 = sphi %s181, %s181
                $region54: #{forward.10} parent=50 // loop_header_branch
                  %212 = sbr.rel (%p210) target = $region58
                $region55: #{forward.10} parent=50 // loop_body
                  _
                $region56: #{forward.10} parent=50 // loop_footer
                  %s213 = sadd.s32 1, %s209
                $region57: #{forward.10} parent=50 // loop_footer_branch
                  %208 = sbr.rel target = $region53
                $region58: #{forward.10} parent=50 // loop_exit
                  _
                %s217 = ssub.s32 16, 1
                loop: start=0, step=1, limit=1
                $region59: #{forward.10} parent=50 // loop_pre_header
                  _
                $region60: #{forward.10} parent=50 // loop_header
                  %s219 = sphi 0, %s223
                  %p220 = scmp.ge.s32.totalorder %s219, 1
                  %s224 = sphi %s185, %s185
                  %s225 = sphi %s181, %s181
                $region61: #{forward.10} parent=50 // loop_header_branch
                  %222 = sbr.rel (%p220) target = $region65
                $region62: #{forward.10} parent=50 // loop_body
                  %v226 = vld [vmem:[%s224] sm:%s217]
                  %227 = vst [vmem:[%s225] sm:%s217] %v226
                  %v228 = vld [vmem:[%s224 + $0x8] sm:%s217]
                  %229 = vst [vmem:[%s225 + $0x4] sm:%s217] %v228
                $region63: #{forward.10} parent=50 // loop_footer
                  %s223 = sadd.s32 1, %s219
                $region64: #{forward.10} parent=50 // loop_footer_branch
                  %218 = sbr.rel target = $region60
                $region65: #{forward.10} parent=50 // loop_exit
                  _
              $region51: #{forward.10} parent=35 // pred_fallthru
                _
            $region36: #{forward.10} parent=31 // pred_fallthru
              _
            // Predicated region
            $region37: #{forward.10} parent=31 // pred_check
              _
            $region38: #{forward.10} parent=31 // pred_check_branch
              %191 = sbr.rel (0) target = $region40
            $region39: #{forward.10} parent=31 // pred_region
              %s193 = ssub.s32 16, 1
              loop: start=0, step=1, limit=1
              $region41: #{forward.10} parent=39 // loop_pre_header
                _
              $region42: #{forward.10} parent=39 // loop_header
                %s195 = sphi 0, %s199
                %p196 = scmp.ge.s32.totalorder %s195, 1
                %s200 = sphi %s185, %s185
                %s201 = sphi %s181, %s181
              $region43: #{forward.10} parent=39 // loop_header_branch
                %198 = sbr.rel (%p196) target = $region47
              $region44: #{forward.10} parent=39 // loop_body
                %v202 = vld [vmem:[%s200] sm:%s193]
                %203 = vst [vmem:[%s201] sm:%s193] %v202
                %v204 = vld [vmem:[%s200 + $0x8] sm:%s193]
                %205 = vst [vmem:[%s201 + $0x4] sm:%s193] %v204
              $region45: #{forward.10} parent=39 // loop_footer
                %s199 = sadd.s32 1, %s195
              $region46: #{forward.10} parent=39 // loop_footer_branch
                %194 = sbr.rel target = $region42
              $region47: #{forward.10} parent=39 // loop_exit
                _
            $region40: #{forward.10} parent=31 // pred_fallthru
              _
          $region32: #{forward.10} parent=27 // pred_fallthru
            _
          %230 = vnop
        $region28: #{forward.10} parent=23 // pred_fallthru
          _
        // Predicated region
        $region66: #{forward.10} parent=23 // pred_check
          %p231 = pneg %p74
        $region67: #{forward.10} parent=23 // pred_check_branch
          %233 = sbr.rel (%p231) target = $region69
        $region68: #{forward.10} parent=23 // pred_region
          %s234 = sand.u32 %s64, 1
          %s235 = sand.u32 %s64, 1
          %s236 = smul.addr %s235, 8
          %s237 = scalar_lea.vmem [#allocation3], %s236
          %s238 = sadd.s32 %s18, 1
          %s239 = smul.addr %s17, 4
          %s240 = sadd.s32 %s238, %s239
          %s241 = smul.addr %s240, 4
          %s242 = scalar_lea.vmem %s1, %s241
          // Predicated region
          $region70: #{forward.10} parent=68 // pred_check
            _
          $region71: #{forward.10} parent=68 // pred_check_branch
            %244 = sbr.rel (0) target = $region73
          $region72: #{forward.10} parent=68 // pred_region
            // Predicated region
            $region74: #{forward.10} parent=72 // pred_check
              _
            $region75: #{forward.10} parent=72 // pred_check_branch
              %246 = sbr.rel target = $region77
            $region76: #{forward.10} parent=72 // pred_region
              // Predicated region
              $region89: #{forward.10} parent=76 // pred_check
                _
              $region90: #{forward.10} parent=76 // pred_check_branch
                %264 = sbr.rel (0) target = $region92
              $region91: #{forward.10} parent=76 // pred_region
                loop: start=0, step=1, limit=1
                $region93: #{forward.10} parent=91 // loop_pre_header
                  _
                $region94: #{forward.10} parent=91 // loop_header
                  %s266 = sphi 0, %s270
                  %p267 = scmp.ge.s32.totalorder %s266, 1
                  %s271 = sphi %s242, %s242
                  %s272 = sphi %s237, %s237
                $region95: #{forward.10} parent=91 // loop_header_branch
                  %269 = sbr.rel (%p267) target = $region99
                $region96: #{forward.10} parent=91 // loop_body
                  _
                $region97: #{forward.10} parent=91 // loop_footer
                  %s270 = sadd.s32 1, %s266
                $region98: #{forward.10} parent=91 // loop_footer_branch
                  %265 = sbr.rel target = $region94
                $region99: #{forward.10} parent=91 // loop_exit
                  _
                %s274 = ssub.s32 16, 1
                loop: start=0, step=1, limit=1
                $region100: #{forward.10} parent=91 // loop_pre_header
                  _
                $region101: #{forward.10} parent=91 // loop_header
                  %s276 = sphi 0, %s280
                  %p277 = scmp.ge.s32.totalorder %s276, 1
                  %s281 = sphi %s242, %s242
                  %s282 = sphi %s237, %s237
                $region102: #{forward.10} parent=91 // loop_header_branch
                  %279 = sbr.rel (%p277) target = $region106
                $region103: #{forward.10} parent=91 // loop_body
                  %v283 = vld [vmem:[%s281] sm:%s274]
                  %284 = vst [vmem:[%s282] sm:%s274] %v283
                  %v285 = vld [vmem:[%s281 + $0x8] sm:%s274]
                  %286 = vst [vmem:[%s282 + $0x4] sm:%s274] %v285
                $region104: #{forward.10} parent=91 // loop_footer
                  %s280 = sadd.s32 1, %s276
                $region105: #{forward.10} parent=91 // loop_footer_branch
                  %275 = sbr.rel target = $region101
                $region106: #{forward.10} parent=91 // loop_exit
                  _
              $region92: #{forward.10} parent=76 // pred_fallthru
                _
            $region77: #{forward.10} parent=72 // pred_fallthru
              _
            // Predicated region
            $region78: #{forward.10} parent=72 // pred_check
              _
            $region79: #{forward.10} parent=72 // pred_check_branch
              %248 = sbr.rel (0) target = $region81
            $region80: #{forward.10} parent=72 // pred_region
              %s250 = ssub.s32 16, 1
              loop: start=0, step=1, limit=1
              $region82: #{forward.10} parent=80 // loop_pre_header
                _
              $region83: #{forward.10} parent=80 // loop_header
                %s252 = sphi 0, %s256
                %p253 = scmp.ge.s32.totalorder %s252, 1
                %s257 = sphi %s242, %s242
                %s258 = sphi %s237, %s237
              $region84: #{forward.10} parent=80 // loop_header_branch
                %255 = sbr.rel (%p253) target = $region88
              $region85: #{forward.10} parent=80 // loop_body
                %v259 = vld [vmem:[%s257] sm:%s250]
                %260 = vst [vmem:[%s258] sm:%s250] %v259
                %v261 = vld [vmem:[%s257 + $0x8] sm:%s250]
                %262 = vst [vmem:[%s258 + $0x4] sm:%s250] %v261
              $region86: #{forward.10} parent=80 // loop_footer
                %s256 = sadd.s32 1, %s252
              $region87: #{forward.10} parent=80 // loop_footer_branch
                %251 = sbr.rel target = $region83
              $region88: #{forward.10} parent=80 // loop_exit
                _
            $region81: #{forward.10} parent=72 // pred_fallthru
              _
          $region73: #{forward.10} parent=68 // pred_fallthru
            _
          %287 = vnop
        $region69: #{forward.10} parent=23 // pred_fallthru
          _
      $region24: #{forward.10} parent=5 // pred_fallthru
        _
      %p288 = scmp.le.s32.totalorder 1, %s10
      %p289 = scmp.lt.s32.totalorder %s10, 3
      %p290 = pnand %p288, %p289
      %p291 = pneg %p290
      // Predicated region
      $region107: #{forward.10} parent=5 // pred_check
        _
      $region108: #{forward.10} parent=5 // pred_check_branch
        %293 = sbr.rel (%p290) target = $region110
      $region109: #{forward.10} parent=5 // pred_region
        %s294 = ssub.s32 %s10, 1
        %s295 = sand.u32 %s37, 1
        %s296 = sand.u32 %s37, 1
        %s297 = smul.addr %s296, 8
        %s298 = scalar_lea.vmem [#allocation2], %s297
        // Predicated region
        $region111: #{forward.10} parent=109 // pred_check
          %p299 = pneg %p50
        $region112: #{forward.10} parent=109 // pred_check_branch
          %301 = sbr.rel (%p299) target = $region114
        $region113: #{forward.10} parent=109 // pred_region
          _
        $region114: #{forward.10} parent=109 // pred_fallthru
          _
        %s302 = sand.u32 %s67, 1
        %s303 = sand.u32 %s67, 1
        %s304 = smul.addr %s303, 8
        %s305 = scalar_lea.vmem [#allocation3], %s304
        // Predicated region
        $region115: #{forward.10} parent=109 // pred_check
          %p306 = pneg %p80
        $region116: #{forward.10} parent=109 // pred_check_branch
          %308 = sbr.rel (%p306) target = $region118
        $region117: #{forward.10} parent=109 // pred_region
          _
        $region118: #{forward.10} parent=109 // pred_fallthru
          _
        %s309 = sand.u32 %s37, 1
        %s310 = sand.u32 %s37, 1
        %s311 = smul.addr %s310, 8
        %s312 = scalar_lea.vmem [#allocation2], %s311
        %p313 = pneg %p50
        %p314 = pneg %p47
        %s315 = sand.u32 %s67, 1
        %s316 = sand.u32 %s67, 1
        %s317 = smul.addr %s316, 8
        %s318 = scalar_lea.vmem [#allocation3], %s317
        %p319 = pneg %p80
        %p320 = pneg %p77
        %p321 = pneg %p101
        %p322 = pneg %p98
        %p323 = pneg %p122
        %p324 = pneg %p119
        %p325 = pneg %p150
        %p326 = pneg %p147
        %p327 = scmp.lt.s32.totalorder %s19, 1
        %s328 = scalar_select %p327, %s19, 1
        %p329 = scmp.lt.s32.totalorder %s20, 0
        %s330 = scalar_select %p329, %s20, 0
        %s331 = sadd.s32 %s330, %s328
        %s332 = smul.addr %s331, 4
        %s333 = scalar_lea.vmem %s4, %s332
        %s334 = sadd.s32 %s20, 1
        %p335 = scmp.lt.s32.totalorder %s19, 1
        %s336 = scalar_select %p335, %s19, 1
        %p337 = scmp.lt.s32.totalorder %s20, 0
        %s338 = scalar_select %p337, %s20, 0
        %s339 = sadd.s32 %s338, %s336
        %s340 = smul.addr %s339, 4
        %s341 = scalar_lea.vmem %s4, %s340
        %v343 = vld [vmem:[%s298] sm:$0xf]
        %v344 = vld [vmem:[%s298 + $0x4] sm:$0xf]
        %v345 = vld [vmem:[%s305] sm:$0xf]
        %v346 = vld [vmem:[%s305 + $0x4] sm:$0xf]
        %v349 = vunpack.c.l.b16 %v343
        %v350 = vunpack.c.l.b16 %v344
        %v351 = vpack.c.b16 %v350, %v349
        %v355 = vunpack.c.l.b16 %v345
        %v356 = vunpack.c.l.b16 %v346
        %v357 = vpack.c.b16 %v356, %v355
        %v358 = vld [vmem:[%s2] sm:$0xf]
        %s359 = scalar_lea.vmem %s2, 4
        %v360 = vld [vmem:[%s359] sm:$0xf]
        %361 = vrot.lane.b32.xlu0 %v351, 127
        %v362 = vpop.permute.xlu0 %361
        %363 = vrot.lane.b32.xlu0 %v357, 127
        %v364 = vpop.permute.xlu0 %363
        %vm365 = vcmask 1039360
        %v366 = vsel %vm365, %v362, %v364
        %vm368 = vcmask 130048
        %v370 = vsel %vm368, %v360, 0
        %372 = vmatpush.bf16.msra.mxu0 0
        %373 = vmatpush.bf16.msra.mxu0 0
        %374 = vmatpush.bf16.msra.mxu0 0
        %375 = vmatpush.bf16.msra.mxu0 0
        %376 = vmatpush.bf16.msra.mxu0 0
        %377 = vmatpush.bf16.msra.mxu0 0
        %378 = vmatpush.bf16.msra.mxu0 0
        %379 = vmatpush.bf16.msra.mxu0 %v366
        %380 = vmatmul.bf16.gmra.mxu0 %v370
        %v381 = vpop.f32.mrf.mxu0
        %v382 = vadd.f32 0.0, %v381
        %v383 = vpop.f32.mrf.mxu0
        %384 = vdwg.mxu0
        %v386 = vsel %vm368, %v358, 0
        %388 = vmatpush.bf16.msra.mxu0 0
        %389 = vmatpush.bf16.msra.mxu0 0
        %390 = vmatpush.bf16.msra.mxu0 0
        %391 = vmatpush.bf16.msra.mxu0 0
        %392 = vmatpush.bf16.msra.mxu0 0
        %393 = vmatpush.bf16.msra.mxu0 0
        %394 = vmatpush.bf16.msra.mxu0 0
        %395 = vmatpush.bf16.msra.mxu0 %v351
        %396 = vmatmul.bf16.gmra.mxu0 %v386
        %v397 = vpop.f32.mrf.mxu0
        %v398 = vadd.f32 %v382, %v397
        %v399 = vpop.f32.mrf.mxu0
        %400 = vdwg.mxu0
        %s401 = scalar_lea.vmem %s2, 8
        %v402 = vld [vmem:[%s401] sm:$0xf]
        %403 = vrot.lane.b32.xlu0 %v351, 126
        %v404 = vpop.permute.xlu0 %403
        %405 = vrot.lane.b32.xlu0 %v357, 126
        %v406 = vpop.permute.xlu0 %405
        %vm407 = vcmask 1031168
        %v408 = vsel %vm407, %v404, %v406
        %v411 = vsel %vm368, %v402, 0
        %413 = vmatpush.bf16.msra.mxu0 0
        %414 = vmatpush.bf16.msra.mxu0 0
        %415 = vmatpush.bf16.msra.mxu0 0
        %416 = vmatpush.bf16.msra.mxu0 0
        %417 = vmatpush.bf16.msra.mxu0 0
        %418 = vmatpush.bf16.msra.mxu0 0
        %419 = vmatpush.bf16.msra.mxu0 0
        %420 = vmatpush.bf16.msra.mxu0 %v408
        %421 = vmatmul.bf16.gmra.mxu0 %v411
        %v422 = vpop.f32.mrf.mxu0
        %v423 = vadd.f32 0.0, %v422
        %v424 = vpop.f32.mrf.mxu0
        %425 = vdwg.mxu0
        %v426 = vadd.f32 %v398, %v423
        %s427 = scalar_lea.vmem %s2, 12
        %v428 = vld [vmem:[%s427] sm:$0xf]
        %429 = vrot.lane.b32.xlu0 %v351, 125
        %v430 = vpop.permute.xlu0 %429
        %431 = vrot.lane.b32.xlu0 %v357, 125
        %v432 = vpop.permute.xlu0 %431
        %vm433 = vcmask 1022976
        %v434 = vsel %vm433, %v430, %v432
        %v437 = vsel %vm368, %v428, 0
        %439 = vmatpush.bf16.msra.mxu0 0
        %440 = vmatpush.bf16.msra.mxu0 0
        %441 = vmatpush.bf16.msra.mxu0 0
        %442 = vmatpush.bf16.msra.mxu0 0
        %443 = vmatpush.bf16.msra.mxu0 0
        %444 = vmatpush.bf16.msra.mxu0 0
        %445 = vmatpush.bf16.msra.mxu0 0
        %446 = vmatpush.bf16.msra.mxu0 %v434
        %447 = vmatmul.bf16.gmra.mxu0 %v437
        %v448 = vpop.f32.mrf.mxu0
        %v449 = vadd.f32 0.0, %v448
        %v450 = vpop.f32.mrf.mxu0
        %451 = vdwg.mxu0
        %v452 = vadd.f32 %v426, %v449
        %s453 = scalar_lea.vmem %s2, 16
        %v454 = vld [vmem:[%s453] sm:$0xf]
        %455 = vrot.lane.b32.xlu0 %v351, 124
        %v456 = vpop.permute.xlu0 %455
        %457 = vrot.lane.b32.xlu0 %v357, 124
        %v458 = vpop.permute.xlu0 %457
        %vm459 = vcmask 1014784
        %v460 = vsel %vm459, %v456, %v458
        %v463 = vsel %vm368, %v454, 0
        %465 = vmatpush.bf16.msra.mxu0 0
        %466 = vmatpush.bf16.msra.mxu0 0
        %467 = vmatpush.bf16.msra.mxu0 0
        %468 = vmatpush.bf16.msra.mxu0 0
        %469 = vmatpush.bf16.msra.mxu0 0
        %470 = vmatpush.bf16.msra.mxu0 0
        %471 = vmatpush.bf16.msra.mxu0 0
        %472 = vmatpush.bf16.msra.mxu0 %v460
        %473 = vmatmul.bf16.gmra.mxu0 %v463
        %v474 = vpop.f32.mrf.mxu0
        %v475 = vadd.f32 0.0, %v474
        %v476 = vpop.f32.mrf.mxu0
        %477 = vdwg.mxu0
        %v478 = vadd.f32 %v452, %v475
        %s479 = scalar_lea.vmem %s2, 20
        %v480 = vld [vmem:[%s479] sm:$0xf]
        %481 = vrot.lane.b32.xlu0 %v351, 123
        %v482 = vpop.permute.xlu0 %481
        %483 = vrot.lane.b32.xlu0 %v357, 123
        %v484 = vpop.permute.xlu0 %483
        %vm485 = vcmask 1006592
        %v486 = vsel %vm485, %v482, %v484
        %v489 = vsel %vm368, %v480, 0
        %491 = vmatpush.bf16.msra.mxu0 0
        %492 = vmatpush.bf16.msra.mxu0 0
        %493 = vmatpush.bf16.msra.mxu0 0
        %494 = vmatpush.bf16.msra.mxu0 0
        %495 = vmatpush.bf16.msra.mxu0 0
        %496 = vmatpush.bf16.msra.mxu0 0
        %497 = vmatpush.bf16.msra.mxu0 0
        %498 = vmatpush.bf16.msra.mxu0 %v486
        %499 = vmatmul.bf16.gmra.mxu0 %v489
        %v500 = vpop.f32.mrf.mxu0
        %v501 = vadd.f32 0.0, %v500
        %v502 = vpop.f32.mrf.mxu0
        %503 = vdwg.mxu0
        %v504 = vadd.f32 %v478, %v501
        %s505 = scalar_lea.vmem %s2, 24
        %v506 = vld [vmem:[%s505] sm:$0xf]
        %507 = vrot.lane.b32.xlu0 %v351, 122
        %v508 = vpop.permute.xlu0 %507
        %509 = vrot.lane.b32.xlu0 %v357, 122
        %v510 = vpop.permute.xlu0 %509
        %vm511 = vcmask 998400
        %v512 = vsel %vm511, %v508, %v510
        %v515 = vsel %vm368, %v506, 0
        %517 = vmatpush.bf16.msra.mxu0 0
        %518 = vmatpush.bf16.msra.mxu0 0
        %519 = vmatpush.bf16.msra.mxu0 0
        %520 = vmatpush.bf16.msra.mxu0 0
        %521 = vmatpush.bf16.msra.mxu0 0
        %522 = vmatpush.bf16.msra.mxu0 0
        %523 = vmatpush.bf16.msra.mxu0 0
        %524 = vmatpush.bf16.msra.mxu0 %v512
        %525 = vmatmul.bf16.gmra.mxu0 %v515
        %v526 = vpop.f32.mrf.mxu0
        %v527 = vadd.f32 0.0, %v526
        %v528 = vpop.f32.mrf.mxu0
        %529 = vdwg.mxu0
        %v530 = vadd.f32 %v504, %v527
        %v531 = vld [vmem:[%s3] sm:$0xff]
        %533 = vset.pattern.permute.xlu0 0
        %534 = vperm.xlu0 %533, %v531
        %v535 = vpop.permute.xlu0 %534
        %v537 = vadd.f32 %v530, %v535
        %v538 = vpack.c.bf16 %v537, %v537
        %539 = vst [vmem:[%s341] sm:$0xf] %v538
        %p540 = scmp.lt.s32.totalorder %s19, 1
        %s541 = scalar_select %p540, %s19, 1
        %p542 = scmp.lt.s32.totalorder %s20, 0
        %s543 = scalar_select %p542, %s20, 0
        %s544 = sadd.s32 %s543, %s541
        %s545 = smul.addr %s544, 4
        %s546 = scalar_lea.vmem %s4, %s545
        // Predicated region
        $region119: #{forward.10} parent=109 // pred_check
          %p547 = pneg %p147
        $region120: #{forward.10} parent=109 // pred_check_branch
          %549 = sbr.rel (%p547) target = $region122
        $region121: #{forward.10} parent=109 // pred_region
          _
        $region122: #{forward.10} parent=109 // pred_fallthru
          _
      $region110: #{forward.10} parent=5 // pred_fallthru
        _
      %p550 = scmp.le.s32.totalorder 2, %s10
      // Predicated region
      $region123: #{forward.10} parent=5 // pred_check
        %p551 = pneg %p550
      $region124: #{forward.10} parent=5 // pred_check_branch
        %553 = sbr.rel (%p551) target = $region126
      $region125: #{forward.10} parent=5 // pred_region
        %s554 = ssub.s32 %s10, 2
        // Predicated region
        $region127: #{forward.10} parent=125 // pred_check
          %p555 = pneg %p153
        $region128: #{forward.10} parent=125 // pred_check_branch
          %557 = sbr.rel (%p555) target = $region130
        $region129: #{forward.10} parent=125 // pred_region
          %p558 = scmp.lt.s32.totalorder %s21, 1
          %s559 = scalar_select %p558, %s21, 1
          %p560 = scmp.lt.s32.totalorder %s22, 0
          %s561 = scalar_select %p560, %s22, 0
          %s562 = sadd.s32 %s561, %s559
          %s563 = smul.addr %s562, 4
          %s564 = scalar_lea.vmem %s4, %s563
        $region130: #{forward.10} parent=125 // pred_fallthru
          _
      $region126: #{forward.10} parent=5 // pred_fallthru
        _
    $region6: #{forward.10} parent=1 // loop_footer
      %s14 = sadd.s32 1, %s10
    $region7: #{forward.10} parent=1 // loop_footer_branch
      %9 = sbr.rel target = $region3
    $region8: #{forward.10} parent=1 // loop_exit
      _

// kernel: forward.11
$region0: #{forward.11}
  #allocation0 [shape = 'u32[]', space=smem, size = 0x4, offset = 0x4, fixed_abs, tag = 'smem constant byte address 0x4 - core index']
  #allocation1 [shape = 'u32[72,128]{1,0:T(1,128)}', space=vmem, size = 0x9000, scoped, tag = 'internal scratch']
  %s0 = inlined_call_operand.vmem [shape: bf16[2,32,256], index: 0, kind: input, shape index: {}, may-alias: {0,1}]
  %s1 = inlined_call_operand.vmem [shape: bf16[2,32,256], index: 1, kind: input, shape index: {}, may-alias: {0,1}]
  %s2 = inlined_call_operand.vmem [shape: bf16[3,16,32], index: 2, kind: input, shape index: {}]
  %s3 = inlined_call_operand.vmem [shape: f32[16,1], index: 3, kind: input, shape index: {}]
  %s4 = inlined_call_operand.vmem [shape: bf16[2,16,128], index: 4, kind: output, shape index: {0}]
  %s5 = inlined_call_operand.vmem [shape: f32[2,1,16,2], index: 5, kind: output, shape index: {1}]
  %6 = xla_tuple %s4, %s5
  %s7 = sld [smem:[#allocation0]]
  $region139: #{forward.11} parent=0
    _
  %s9 = ssub.s32 1, %s7
  %s10 = scalar_select 0, %s9, %s7
  $region1: #{forward.11} parent=0
    #allocation2 [shape = 'u8[16384]{0}', space=vmem, size = 0x4000, scoped, tag = 'input window, operand 0']
    #allocation3 [shape = 'u8[16384]{0}', space=vmem, size = 0x4000, scoped, tag = 'input window, operand 1']
    loop: start=0, step=1, limit=4
    $region2: #{forward.11} parent=1 // loop_pre_header
      _
    $region3: #{forward.11} parent=1 // loop_header
      %s12 = sphi 0, %s16
      %p13 = scmp.ge.s32.totalorder %s12, 4
      %s19 = sphi 0, %s31
      %s20 = sphi 0, %s27
      %s21 = sphi 0, %s19
      %s22 = sphi 0, %s20
      %s23 = sphi 0, %s21
      %s24 = sphi 0, %s22
      %s36 = sphi 0, %s38
      %s39 = sphi 0, %s36
      %s40 = sphi 0, %s39
      %s56 = sphi 0, %s40
      %s66 = sphi 0, %s68
      %s69 = sphi 0, %s66
      %s70 = sphi 0, %s69
      %s86 = sphi 0, %s70
      %s90 = sphi 0, %s90
      %s92 = sphi 0, %s90
      %s93 = sphi 0, %s92
      %s107 = sphi 0, %s93
      %s111 = sphi 0, %s111
      %s113 = sphi 0, %s111
      %s114 = sphi 0, %s113
      %s128 = sphi 0, %s114
      %s136 = sphi 0, %s138
      %s139 = sphi 0, %s136
      %s140 = sphi 0, %s139
      %s156 = sphi 0, %s140
      %s164 = sphi 0, %s166
      %s167 = sphi 0, %s164
      %s168 = sphi 0, %s167
      %s184 = sphi 0, %s168
    $region4: #{forward.11} parent=1 // loop_header_branch
      %15 = sbr.rel (%p13) target = $region8
    $region5: #{forward.11} parent=1 // loop_body
      %s17 = ssub.s32 %s12, 1
      %s18 = ssub.s32 %s12, 2
      %s25 = sadd.s32 1, %s20
      %p26 = scmp.ge.s32.totalorder %s25, 1
      %s27 = scalar_select %p26, 0, %s25
      %s28 = sadd.s32 1, %s19
      %s29 = scalar_select %p26, %s28, %s19
      %p30 = scmp.ge.s32.totalorder %s29, 2
      %s31 = scalar_select %p30, 0, %s29
      %s32 = ssub.s32 %s19, %s31
      %s33 = ssub.s32 %s20, %s27
      %s34 = sor.u32 %s32, %s33
      %p35 = scmp.eq.s32.totalorder %s34, 0
      %s37 = sadd.s32 %s36, 1
      %s38 = scalar_select %p35, %s36, %s37
      %p41 = pneg %p35
      %p42 = scmp.eq.s32.totalorder %s12, 1
      %p43 = por %p41, %p42
      %p44 = scmp.ne.s32.totalorder %s36, %s39
      %p45 = scmp.eq.s32.totalorder %s12, 0
      %p46 = por %p44, %p45
      %p47 = scmp.ne.s32.totalorder %s36, %s39
      %p48 = scmp.eq.s32.totalorder %s17, 1
      %p49 = por %p47, %p48
      %p50 = scmp.ne.s32.totalorder %s39, %s40
      %p51 = scmp.eq.s32.totalorder %s17, 0
      %p52 = por %p50, %p51
      %p53 = scmp.ne.s32.totalorder %s39, %s40
      %p54 = scmp.eq.s32.totalorder %s18, 1
      %p55 = por %p53, %p54
      %p57 = scmp.ne.s32.totalorder %s40, %s56
      %p58 = scmp.eq.s32.totalorder %s18, 0
      %p59 = por %p57, %p58
      %s60 = sadd.s32 %s20, 1
      %s61 = sadd.s32 %s27, 1
      %s62 = ssub.s32 %s19, %s31
      %s63 = ssub.s32 %s60, %s61
      %s64 = sor.u32 %s62, %s63
      %p65 = scmp.eq.s32.totalorder %s64, 0
      %s67 = sadd.s32 %s66, 1
      %s68 = scalar_select %p65, %s66, %s67
      %p71 = pneg %p65
      %p72 = scmp.eq.s32.totalorder %s12, 1
      %p73 = por %p71, %p72
      %p74 = scmp.ne.s32.totalorder %s66, %s69
      %p75 = scmp.eq.s32.totalorder %s12, 0
      %p76 = por %p74, %p75
      %p77 = scmp.ne.s32.totalorder %s66, %s69
      %p78 = scmp.eq.s32.totalorder %s17, 1
      %p79 = por %p77, %p78
      %p80 = scmp.ne.s32.totalorder %s69, %s70
      %p81 = scmp.eq.s32.totalorder %s17, 0
      %p82 = por %p80, %p81
      %p83 = scmp.ne.s32.totalorder %s69, %s70
      %p84 = scmp.eq.s32.totalorder %s18, 1
      %p85 = por %p83, %p84
      %p87 = scmp.ne.s32.totalorder %s70, %s86
      %p88 = scmp.eq.s32.totalorder %s18, 0
      %p89 = por %p87, %p88
      %s91 = sadd.s32 %s90, 1
      %p94 = scmp.eq.s32.totalorder %s12, 1
      %p95 = scmp.ne.s32.totalorder %s90, %s92
      %p96 = scmp.eq.s32.totalorder %s12, 0
      %p97 = por %p95, %p96
      %p98 = scmp.ne.s32.totalorder %s90, %s92
      %p99 = scmp.eq.s32.totalorder %s17, 1
      %p100 = por %p98, %p99
      %p101 = scmp.ne.s32.totalorder %s92, %s93
      %p102 = scmp.eq.s32.totalorder %s17, 0
      %p103 = por %p101, %p102
      %p104 = scmp.ne.s32.totalorder %s92, %s93
      %p105 = scmp.eq.s32.totalorder %s18, 1
      %p106 = por %p104, %p105
      %p108 = scmp.ne.s32.totalorder %s93, %s107
      %p109 = scmp.eq.s32.totalorder %s18, 0
      %p110 = por %p108, %p109
      %s112 = sadd.s32 %s111, 1
      %p115 = scmp.eq.s32.totalorder %s12, 1
      %p116 = scmp.ne.s32.totalorder %s111, %s113
      %p117 = scmp.eq.s32.totalorder %s12, 0
      %p118 = por %p116, %p117
      %p119 = scmp.ne.s32.totalorder %s111, %s113
      %p120 = scmp.eq.s32.totalorder %s17, 1
      %p121 = por %p119, %p120
      %p122 = scmp.ne.s32.totalorder %s113, %s114
      %p123 = scmp.eq.s32.totalorder %s17, 0
      %p124 = por %p122, %p123
      %p125 = scmp.ne.s32.totalorder %s113, %s114
      %p126 = scmp.eq.s32.totalorder %s18, 1
      %p127 = por %p125, %p126
      %p129 = scmp.ne.s32.totalorder %s114, %s128
      %p130 = scmp.eq.s32.totalorder %s18, 0
      %p131 = por %p129, %p130
      %s132 = ssub.s32 %s19, %s31
      %s133 = ssub.s32 %s20, %s27
      %s134 = sor.u32 %s132, %s133
      %p135 = scmp.eq.s32.totalorder %s134, 0
      %s137 = sadd.s32 %s136, 1
      %s138 = scalar_select %p135, %s136, %s137
      %p141 = pneg %p135
      %p142 = scmp.eq.s32.totalorder %s12, 1
      %p143 = por %p141, %p142
      %p144 = scmp.ne.s32.totalorder %s136, %s139
      %p145 = scmp.eq.s32.totalorder %s12, 0
      %p146 = por %p144, %p145
      %p147 = scmp.ne.s32.totalorder %s136, %s139
      %p148 = scmp.eq.s32.totalorder %s17, 1
      %p149 = por %p147, %p148
      %p150 = scmp.ne.s32.totalorder %s139, %s140
      %p151 = scmp.eq.s32.totalorder %s17, 0
      %p152 = por %p150, %p151
      %p153 = scmp.ne.s32.totalorder %s139, %s140
      %p154 = scmp.eq.s32.totalorder %s18, 1
      %p155 = por %p153, %p154
      %p157 = scmp.ne.s32.totalorder %s140, %s156
      %p158 = scmp.eq.s32.totalorder %s18, 0
      %p159 = por %p157, %p158
      %s160 = ssub.s32 %s19, %s31
      %s161 = ssub.s32 %s20, %s27
      %s162 = sor.u32 %s160, %s161
      %p163 = scmp.eq.s32.totalorder %s162, 0
      %s165 = sadd.s32 %s164, 1
      %s166 = scalar_select %p163, %s164, %s165
      %p169 = pneg %p163
      %p170 = scmp.eq.s32.totalorder %s12, 1
      %p171 = por %p169, %p170
      %p172 = scmp.ne.s32.totalorder %s164, %s167
      %p173 = scmp.eq.s32.totalorder %s12, 0
      %p174 = por %p172, %p173
      %p175 = scmp.ne.s32.totalorder %s164, %s167
      %p176 = scmp.eq.s32.totalorder %s17, 1
      %p177 = por %p175, %p176
      %p178 = scmp.ne.s32.totalorder %s167, %s168
      %p179 = scmp.eq.s32.totalorder %s17, 0
      %p180 = por %p178, %p179
      %p181 = scmp.ne.s32.totalorder %s167, %s168
      %p182 = scmp.eq.s32.totalorder %s18, 1
      %p183 = por %p181, %p182
      %p185 = scmp.ne.s32.totalorder %s168, %s184
      %p186 = scmp.eq.s32.totalorder %s18, 0
      %p187 = por %p185, %p186
      %p188 = scmp.le.s32.totalorder 1, %s12
      %p189 = scmp.lt.s32.totalorder %s12, 3
      %p190 = pnand %p188, %p189
      %p191 = pneg %p190
      // Predicated region
      $region9: #{forward.11} parent=5 // pred_check
        _
      $region10: #{forward.11} parent=5 // pred_check_branch
        %193 = sbr.rel (%p190) target = $region12
      $region11: #{forward.11} parent=5 // pred_region
        %s194 = ssub.s32 %s12, 1
        // Predicated region
        $region13: #{forward.11} parent=11 // pred_check
          %p195 = pneg %p103
        $region14: #{forward.11} parent=11 // pred_check_branch
          %197 = sbr.rel (%p195) target = $region16
        $region15: #{forward.11} parent=11 // pred_region
          _
        $region16: #{forward.11} parent=11 // pred_fallthru
          _
        // Predicated region
        $region17: #{forward.11} parent=11 // pred_check
          %p198 = pneg %p124
        $region18: #{forward.11} parent=11 // pred_check_branch
          %200 = sbr.rel (%p198) target = $region20
        $region19: #{forward.11} parent=11 // pred_region
          _
        $region20: #{forward.11} parent=11 // pred_fallthru
          _
      $region12: #{forward.11} parent=5 // pred_fallthru
        _
      %p201 = scmp.lt.s32.totalorder %s12, 2
      // Predicated region
      $region21: #{forward.11} parent=5 // pred_check
        %p202 = pneg %p201
      $region22: #{forward.11} parent=5 // pred_check_branch
        %204 = sbr.rel (%p202) target = $region24
      $region23: #{forward.11} parent=5 // pred_region
        // Predicated region
        $region25: #{forward.11} parent=23 // pred_check
          %p205 = pneg %p46
        $region26: #{forward.11} parent=23 // pred_check_branch
          %207 = sbr.rel (%p205) target = $region28
        $region27: #{forward.11} parent=23 // pred_region
          %s208 = sand.u32 %s36, 1
          %s209 = sand.u32 %s36, 1
          %s210 = smul.addr %s209, 16
          %s211 = scalar_lea.vmem [#allocation2], %s210
          %s212 = smul.addr %s19, 8
          %s213 = sadd.s32 %s20, %s212
          %s214 = smul.addr %s213, 4
          %s215 = scalar_lea.vmem %s0, %s214
          // Predicated region
          $region29: #{forward.11} parent=27 // pred_check
            _
          $region30: #{forward.11} parent=27 // pred_check_branch
            %217 = sbr.rel (0) target = $region32
          $region31: #{forward.11} parent=27 // pred_region
            // Predicated region
            $region33: #{forward.11} parent=31 // pred_check
              _
            $region34: #{forward.11} parent=31 // pred_check_branch
              %219 = sbr.rel target = $region36
            $region35: #{forward.11} parent=31 // pred_region
              // Predicated region
              $region48: #{forward.11} parent=35 // pred_check
                _
              $region49: #{forward.11} parent=35 // pred_check_branch
                %241 = sbr.rel (0) target = $region51
              $region50: #{forward.11} parent=35 // pred_region
                loop: start=0, step=1, limit=1
                $region52: #{forward.11} parent=50 // loop_pre_header
                  _
                $region53: #{forward.11} parent=50 // loop_header
                  %s243 = sphi 0, %s247
                  %p244 = scmp.ge.s32.totalorder %s243, 1
                  %s248 = sphi %s215, %s215
                  %s249 = sphi %s211, %s211
                $region54: #{forward.11} parent=50 // loop_header_branch
                  %246 = sbr.rel (%p244) target = $region58
                $region55: #{forward.11} parent=50 // loop_body
                  _
                $region56: #{forward.11} parent=50 // loop_footer
                  %s247 = sadd.s32 1, %s243
                $region57: #{forward.11} parent=50 // loop_footer_branch
                  %242 = sbr.rel target = $region53
                $region58: #{forward.11} parent=50 // loop_exit
                  _
                %s251 = ssub.s32 16, 1
                loop: start=0, step=1, limit=1
                $region59: #{forward.11} parent=50 // loop_pre_header
                  _
                $region60: #{forward.11} parent=50 // loop_header
                  %s253 = sphi 0, %s257
                  %p254 = scmp.ge.s32.totalorder %s253, 1
                  %s258 = sphi %s215, %s215
                  %s259 = sphi %s211, %s211
                $region61: #{forward.11} parent=50 // loop_header_branch
                  %256 = sbr.rel (%p254) target = $region65
                $region62: #{forward.11} parent=50 // loop_body
                  %v260 = vld [vmem:[%s258] sm:%s251]
                  %261 = vst [vmem:[%s259] sm:%s251] %v260
                  %v262 = vld [vmem:[%s258 + $0x8] sm:%s251]
                  %263 = vst [vmem:[%s259 + $0x4] sm:%s251] %v262
                  %v264 = vld [vmem:[%s258 + $0x10] sm:%s251]
                  %265 = vst [vmem:[%s259 + $0x8] sm:%s251] %v264
                  %v266 = vld [vmem:[%s258 + $0x18] sm:%s251]
                  %267 = vst [vmem:[%s259 + $0xc] sm:%s251] %v266
                $region63: #{forward.11} parent=50 // loop_footer
                  %s257 = sadd.s32 1, %s253
                $region64: #{forward.11} parent=50 // loop_footer_branch
                  %252 = sbr.rel target = $region60
                $region65: #{forward.11} parent=50 // loop_exit
                  _
              $region51: #{forward.11} parent=35 // pred_fallthru
                _
            $region36: #{forward.11} parent=31 // pred_fallthru
              _
            // Predicated region
            $region37: #{forward.11} parent=31 // pred_check
              _
            $region38: #{forward.11} parent=31 // pred_check_branch
              %221 = sbr.rel (0) target = $region40
            $region39: #{forward.11} parent=31 // pred_region
              %s223 = ssub.s32 16, 1
              loop: start=0, step=1, limit=1
              $region41: #{forward.11} parent=39 // loop_pre_header
                _
              $region42: #{forward.11} parent=39 // loop_header
                %s225 = sphi 0, %s229
                %p226 = scmp.ge.s32.totalorder %s225, 1
                %s230 = sphi %s215, %s215
                %s231 = sphi %s211, %s211
              $region43: #{forward.11} parent=39 // loop_header_branch
                %228 = sbr.rel (%p226) target = $region47
              $region44: #{forward.11} parent=39 // loop_body
                %v232 = vld [vmem:[%s230] sm:%s223]
                %233 = vst [vmem:[%s231] sm:%s223] %v232
                %v234 = vld [vmem:[%s230 + $0x8] sm:%s223]
                %235 = vst [vmem:[%s231 + $0x4] sm:%s223] %v234
                %v236 = vld [vmem:[%s230 + $0x10] sm:%s223]
                %237 = vst [vmem:[%s231 + $0x8] sm:%s223] %v236
                %v238 = vld [vmem:[%s230 + $0x18] sm:%s223]
                %239 = vst [vmem:[%s231 + $0xc] sm:%s223] %v238
              $region45: #{forward.11} parent=39 // loop_footer
                %s229 = sadd.s32 1, %s225
              $region46: #{forward.11} parent=39 // loop_footer_branch
                %224 = sbr.rel target = $region42
              $region47: #{forward.11} parent=39 // loop_exit
                _
            $region40: #{forward.11} parent=31 // pred_fallthru
              _
          $region32: #{forward.11} parent=27 // pred_fallthru
            _
          %268 = vnop
        $region28: #{forward.11} parent=23 // pred_fallthru
          _
        // Predicated region
        $region66: #{forward.11} parent=23 // pred_check
          %p269 = pneg %p76
        $region67: #{forward.11} parent=23 // pred_check_branch
          %271 = sbr.rel (%p269) target = $region69
        $region68: #{forward.11} parent=23 // pred_region
          %s272 = sand.u32 %s66, 1
          %s273 = sand.u32 %s66, 1
          %s274 = smul.addr %s273, 16
          %s275 = scalar_lea.vmem [#allocation3], %s274
          %s276 = sadd.s32 %s20, 1
          %s277 = smul.addr %s19, 8
          %s278 = sadd.s32 %s276, %s277
          %s279 = smul.addr %s278, 4
          %s280 = scalar_lea.vmem %s1, %s279
          // Predicated region
          $region70: #{forward.11} parent=68 // pred_check
            _
          $region71: #{forward.11} parent=68 // pred_check_branch
            %282 = sbr.rel (0) target = $region73
          $region72: #{forward.11} parent=68 // pred_region
            // Predicated region
            $region74: #{forward.11} parent=72 // pred_check
              _
            $region75: #{forward.11} parent=72 // pred_check_branch
              %284 = sbr.rel target = $region77
            $region76: #{forward.11} parent=72 // pred_region
              // Predicated region
              $region89: #{forward.11} parent=76 // pred_check
                _
              $region90: #{forward.11} parent=76 // pred_check_branch
                %306 = sbr.rel (0) target = $region92
              $region91: #{forward.11} parent=76 // pred_region
                loop: start=0, step=1, limit=1
                $region93: #{forward.11} parent=91 // loop_pre_header
                  _
                $region94: #{forward.11} parent=91 // loop_header
                  %s308 = sphi 0, %s312
                  %p309 = scmp.ge.s32.totalorder %s308, 1
                  %s313 = sphi %s280, %s280
                  %s314 = sphi %s275, %s275
                $region95: #{forward.11} parent=91 // loop_header_branch
                  %311 = sbr.rel (%p309) target = $region99
                $region96: #{forward.11} parent=91 // loop_body
                  _
                $region97: #{forward.11} parent=91 // loop_footer
                  %s312 = sadd.s32 1, %s308
                $region98: #{forward.11} parent=91 // loop_footer_branch
                  %307 = sbr.rel target = $region94
                $region99: #{forward.11} parent=91 // loop_exit
                  _
                %s316 = ssub.s32 16, 1
                loop: start=0, step=1, limit=1
                $region100: #{forward.11} parent=91 // loop_pre_header
                  _
                $region101: #{forward.11} parent=91 // loop_header
                  %s318 = sphi 0, %s322
                  %p319 = scmp.ge.s32.totalorder %s318, 1
                  %s323 = sphi %s280, %s280
                  %s324 = sphi %s275, %s275
                $region102: #{forward.11} parent=91 // loop_header_branch
                  %321 = sbr.rel (%p319) target = $region106
                $region103: #{forward.11} parent=91 // loop_body
                  %v325 = vld [vmem:[%s323] sm:%s316]
                  %326 = vst [vmem:[%s324] sm:%s316] %v325
                  %v327 = vld [vmem:[%s323 + $0x8] sm:%s316]
                  %328 = vst [vmem:[%s324 + $0x4] sm:%s316] %v327
                  %v329 = vld [vmem:[%s323 + $0x10] sm:%s316]
                  %330 = vst [vmem:[%s324 + $0x8] sm:%s316] %v329
                  %v331 = vld [vmem:[%s323 + $0x18] sm:%s316]
                  %332 = vst [vmem:[%s324 + $0xc] sm:%s316] %v331
                $region104: #{forward.11} parent=91 // loop_footer
                  %s322 = sadd.s32 1, %s318
                $region105: #{forward.11} parent=91 // loop_footer_branch
                  %317 = sbr.rel target = $region101
                $region106: #{forward.11} parent=91 // loop_exit
                  _
              $region92: #{forward.11} parent=76 // pred_fallthru
                _
            $region77: #{forward.11} parent=72 // pred_fallthru
              _
            // Predicated region
            $region78: #{forward.11} parent=72 // pred_check
              _
            $region79: #{forward.11} parent=72 // pred_check_branch
              %286 = sbr.rel (0) target = $region81
            $region80: #{forward.11} parent=72 // pred_region
              %s288 = ssub.s32 16, 1
              loop: start=0, step=1, limit=1
              $region82: #{forward.11} parent=80 // loop_pre_header
                _
              $region83: #{forward.11} parent=80 // loop_header
                %s290 = sphi 0, %s294
                %p291 = scmp.ge.s32.totalorder %s290, 1
                %s295 = sphi %s280, %s280
                %s296 = sphi %s275, %s275
              $region84: #{forward.11} parent=80 // loop_header_branch
                %293 = sbr.rel (%p291) target = $region88
              $region85: #{forward.11} parent=80 // loop_body
                %v297 = vld [vmem:[%s295] sm:%s288]
                %298 = vst [vmem:[%s296] sm:%s288] %v297
                %v299 = vld [vmem:[%s295 + $0x8] sm:%s288]
                %300 = vst [vmem:[%s296 + $0x4] sm:%s288] %v299
                %v301 = vld [vmem:[%s295 + $0x10] sm:%s288]
                %302 = vst [vmem:[%s296 + $0x8] sm:%s288] %v301
                %v303 = vld [vmem:[%s295 + $0x18] sm:%s288]
                %304 = vst [vmem:[%s296 + $0xc] sm:%s288] %v303
              $region86: #{forward.11} parent=80 // loop_footer
                %s294 = sadd.s32 1, %s290
              $region87: #{forward.11} parent=80 // loop_footer_branch
                %289 = sbr.rel target = $region83
              $region88: #{forward.11} parent=80 // loop_exit
                _
            $region81: #{forward.11} parent=72 // pred_fallthru
              _
          $region73: #{forward.11} parent=68 // pred_fallthru
            _
          %333 = vnop
        $region69: #{forward.11} parent=23 // pred_fallthru
          _
      $region24: #{forward.11} parent=5 // pred_fallthru
        _
      %p334 = scmp.le.s32.totalorder 1, %s12
      %p335 = scmp.lt.s32.totalorder %s12, 3
      %p336 = pnand %p334, %p335
      %p337 = pneg %p336
      // Predicated region
      $region107: #{forward.11} parent=5 // pred_check
        _
      $region108: #{forward.11} parent=5 // pred_check_branch
        %339 = sbr.rel (%p336) target = $region110
      $region109: #{forward.11} parent=5 // pred_region
        %s340 = ssub.s32 %s12, 1
        %s341 = sand.u32 %s39, 1
        %s342 = sand.u32 %s39, 1
        %s343 = smul.addr %s342, 16
        %s344 = scalar_lea.vmem [#allocation2], %s343
        // Predicated region
        $region111: #{forward.11} parent=109 // pred_check
          %p345 = pneg %p52
        $region112: #{forward.11} parent=109 // pred_check_branch
          %347 = sbr.rel (%p345) target = $region114
        $region113: #{forward.11} parent=109 // pred_region
          _
        $region114: #{forward.11} parent=109 // pred_fallthru
          _
        %s348 = sand.u32 %s69, 1
        %s349 = sand.u32 %s69, 1
        %s350 = smul.addr %s349, 16
        %s351 = scalar_lea.vmem [#allocation3], %s350
        // Predicated region
        $region115: #{forward.11} parent=109 // pred_check
          %p352 = pneg %p82
        $region116: #{forward.11} parent=109 // pred_check_branch
          %354 = sbr.rel (%p352) target = $region118
        $region117: #{forward.11} parent=109 // pred_region
          _
        $region118: #{forward.11} parent=109 // pred_fallthru
          _
        %s355 = sand.u32 %s39, 1
        %s356 = sand.u32 %s39, 1
        %s357 = smul.addr %s356, 16
        %s358 = scalar_lea.vmem [#allocation2], %s357
        %p359 = pneg %p52
        %p360 = pneg %p49
        %s361 = sand.u32 %s69, 1
        %s362 = sand.u32 %s69, 1
        %s363 = smul.addr %s362, 16
        %s364 = scalar_lea.vmem [#allocation3], %s363
        %p365 = pneg %p82
        %p366 = pneg %p79
        %p367 = pneg %p103
        %p368 = pneg %p100
        %p369 = pneg %p124
        %p370 = pneg %p121
        %p371 = pneg %p152
        %p372 = pneg %p149
        %p373 = scmp.lt.s32.totalorder %s21, 1
        %s374 = scalar_select %p373, %s21, 1
        %p375 = scmp.lt.s32.totalorder %s22, 0
        %s376 = scalar_select %p375, %s22, 0
        %s377 = smul.addr %s374, 2
        %s378 = sadd.s32 %s376, %s377
        %s379 = smul.addr %s378, 4
        %s380 = scalar_lea.vmem %s4, %s379
        %p381 = pneg %p180
        %p382 = pneg %p177
        %p383 = scmp.lt.s32.totalorder %s21, 1
        %s384 = scalar_select %p383, %s21, 1
        %p385 = scmp.lt.s32.totalorder %s22, 0
        %s386 = scalar_select %p385, %s22, 0
        %s387 = smul.addr %s386, 2
        %s388 = smul.addr %s384, 2
        %s389 = sadd.s32 %s387, %s388
        %s390 = smul.addr %s389, 8
        %s391 = scalar_lea.vmem %s5, %s390
        %s392 = sadd.s32 %s22, 1
        %p393 = scmp.lt.s32.totalorder %s21, 1
        %s394 = scalar_select %p393, %s21, 1
        %p395 = scmp.lt.s32.totalorder %s22, 0
        %s396 = scalar_select %p395, %s22, 0
        %s397 = smul.addr %s394, 2
        %s398 = sadd.s32 %s396, %s397
        %s399 = smul.addr %s398, 4
        %s400 = scalar_lea.vmem %s4, %s399
        %p401 = scmp.lt.s32.totalorder %s21, 1
        %s402 = scalar_select %p401, %s21, 1
        %p403 = scmp.lt.s32.totalorder %s22, 0
        %s404 = scalar_select %p403, %s22, 0
        %s405 = smul.addr %s404, 2
        %s406 = smul.addr %s402, 2
        %s407 = sadd.s32 %s405, %s406
        %s408 = smul.addr %s407, 8
        %s409 = scalar_lea.vmem %s5, %s408
        %v411 = vld [vmem:[%s344] sm:$0xf]
        %v412 = vld [vmem:[%s344 + $0x4] sm:$0xf]
        %v413 = vld [vmem:[%s344 + $0x8] sm:$0xf]
        %v414 = vld [vmem:[%s344 + $0xc] sm:$0xf]
        %v415 = vld [vmem:[%s351] sm:$0xf]
        %v416 = vld [vmem:[%s351 + $0x4] sm:$0xf]
        %v417 = vld [vmem:[%s351 + $0x8] sm:$0xf]
        %v418 = vld [vmem:[%s351 + $0xc] sm:$0xf]
        %v423 = vunpack.c.l.b16 %v411
        %v424 = vunpack.c.l.b16 %v412
        %v425 = vunpack.c.l.b16 %v413
        %v426 = vunpack.c.l.b16 %v414
        %v427 = vpack.c.b16 %v424, %v423
        %v428 = vpack.c.b16 %v426, %v425
        %v435 = vunpack.c.l.b16 %v415
        %v436 = vunpack.c.l.b16 %v416
        %v437 = vunpack.c.l.b16 %v417
        %v438 = vunpack.c.l.b16 %v418
        %v439 = vpack.c.b16 %v436, %v435
        %v440 = vpack.c.b16 %v438, %v437
        %v441 = vld [vmem:[%s2] sm:$0xf]
        %v442 = vld [vmem:[%s2 + $0x4] sm:$0xf]
        %s443 = scalar_lea.vmem %s2, 8
        %v444 = vld [vmem:[%s443] sm:$0xf]
        %v445 = vld [vmem:[%s443 + $0x4] sm:$0xf]
        %v448 = vunpack.c.l.b16 %v444
        %v449 = vunpack.c.l.b16 %v445
        %v450 = vpack.c.b16 %v449, %v448
        %451 = vrot.lane.b32.xlu0 %v427, 127
        %v452 = vpop.permute.xlu0 %451
        %453 = vrot.lane.b32.xlu0 %v439, 127
        %v454 = vpop.permute.xlu0 %453
        %455 = vrot.lane.b32.xlu0 %v428, 127
        %v456 = vpop.permute.xlu0 %455
        %457 = vrot.lane.b32.xlu0 %v440, 127
        %v458 = vpop.permute.xlu0 %457
        %vm459 = vcmask 1039360
        %v460 = vsel %vm459, %v452, %v454
        %v461 = vsel %vm459, %v456, %v458
        %vm464 = vcmask 261120
        %v466 = vsel %vm464, %v450, 0
        %468 = vmatpush.bf16.msra.mxu0 0
        %469 = vmatpush.bf16.msra.mxu0 0
        %470 = vmatpush.bf16.msra.mxu0 0
        %471 = vmatpush.bf16.msra.mxu0 0
        %472 = vmatpush.bf16.msra.mxu0 0
        %473 = vmatpush.bf16.msra.mxu0 0
        %474 = vmatpush.bf16.msra.mxu0 %v461
        %475 = vmatpush.bf16.msra.mxu0 %v460
        %476 = vmatmul.bf16.gmra.mxu0 %v466
        %v477 = vpop.f32.mrf.mxu0
        %v478 = vadd.f32 0.0, %v477
        %v479 = vpop.f32.mrf.mxu0
        %v480 = vadd.f32 0.0, %v479
        %481 = vdwg.mxu0
        %v484 = vunpack.c.l.b16 %v441
        %v485 = vunpack.c.l.b16 %v442
        %v486 = vpack.c.b16 %v485, %v484
        %v488 = vsel %vm464, %v486, 0
        %490 = vmatpush.bf16.msra.mxu0 0
        %491 = vmatpush.bf16.msra.mxu0 0
        %492 = vmatpush.bf16.msra.mxu0 0
        %493 = vmatpush.bf16.msra.mxu0 0
        %494 = vmatpush.bf16.msra.mxu0 0
        %495 = vmatpush.bf16.msra.mxu0 0
        %496 = vmatpush.bf16.msra.mxu0 %v428
        %497 = vmatpush.bf16.msra.mxu0 %v427
        %498 = vmatmul.bf16.gmra.mxu0 %v488
        %v499 = vpop.f32.mrf.mxu0
        %v500 = vadd.f32 %v478, %v499
        %v501 = vpop.f32.mrf.mxu0
        %v502 = vadd.f32 %v480, %v501
        %503 = vdwg.mxu0
        %s504 = scalar_lea.vmem %s2, 16
        %v505 = vld [vmem:[%s504] sm:$0xf]
        %v506 = vld [vmem:[%s504 + $0x4] sm:$0xf]
        %v509 = vunpack.c.l.b16 %v505
        %v510 = vunpack.c.l.b16 %v506
        %v511 = vpack.c.b16 %v510, %v509
        %512 = vrot.lane.b32.xlu0 %v427, 126
        %v513 = vpop.permute.xlu0 %512
        %514 = vrot.lane.b32.xlu0 %v439, 126
        %v515 = vpop.permute.xlu0 %514
        %vm516 = vcmask 1031168
        %v517 = vsel %vm516, %v513, %v515
        %vm518 = vcmask 64512
        %v520 = vsel %vm518, %v511, 0
        %vm522 = vcmask 1043456
        %v524 = vsel %vm522, %v517, 0
        %526 = vmatpush.bf16.msra.mxu0 0
        %527 = vmatpush.bf16.msra.mxu0 0
        %528 = vmatpush.bf16.msra.mxu0 0
        %529 = vmatpush.bf16.msra.mxu0 0
        %530 = vmatpush.bf16.msra.mxu0 0
        %531 = vmatpush.bf16.msra.mxu0 0
        %532 = vmatpush.bf16.msra.mxu0 0
        %533 = vmatpush.bf16.msra.mxu0 %v524
        %534 = vmatmul.bf16.gmra.mxu0 %v520
        %v535 = vpop.f32.mrf.mxu0
        %v536 = vadd.f32 0.0, %v535
        %v537 = vpop.f32.mrf.mxu0
        %v538 = vadd.f32 0.0, %v537
        %539 = vdwg.mxu0
        %v540 = vadd.f32 %v500, %v536
        %v541 = vadd.f32 %v502, %v538
        %v542 = vld [vmem:[%s3] sm:$0xff]
        %v543 = vld [vmem:[%s3 + $0x8] sm:$0xff]
        %545 = vset.pattern.permute.xlu0 0
        %546 = vperm.xlu0 %545, %v542
        %v547 = vpop.permute.xlu0 %546
        %550 = vset.pattern.permute.xlu0 0
        %551 = vperm.xlu0 %550, %v543
        %v552 = vpop.permute.xlu0 %551
        %v554 = vadd.f32 %v540, %v547
        %v555 = vadd.f32 %v541, %v552
        %v556 = vpack.c.bf16 %v554, %v554
        %v557 = vpack.c.bf16 %v555, %v555
        %558 = vst [vmem:[%s400] sm:$0xf] %v556
        %559 = vst [vmem:[%s400 + $0x4] sm:$0xf] %v557
        %v560 = vlaneseq
        %v561 = vand.u32 %v560, 127
        %s562 = smul.u32 %s22, 128
        %v563 = vstv %s562
        %v564 = vadd.s32 %v561, %v563
        %vm565 = vcmp.lt.s32.totalorder %v564, 32
        %v566 = vsel %vm565, 1, 0
        %vm567 = vcmp.eq.s32.totalorder %v566, 1
        %v568 = vsel %vm567, %v554, 0.0
        %v569 = vsel %vm567, %v555, 0.0
        %570 = vadd.xlane.f32.xlu0 %v568
        %v571 = vpop.xlane.xlu0 %570
        %572 = vadd.xlane.f32.xlu0 %v569
        %v573 = vpop.xlane.xlu0 %572
        %v574 = vmul.f32 %v568, %v568
        %v575 = vmul.f32 %v569, %v569
        %576 = vadd.xlane.f32.xlu0 %v574
        %v577 = vpop.xlane.xlu0 %576
        %578 = vadd.xlane.f32.xlu0 %v575
        %v579 = vpop.xlane.xlu0 %578
        %vm580 = vcmask 7168
        %v581 = vsel %vm580, %v571, %v577
        %v582 = vsel %vm580, %v573, %v579
        %vm583 = vcmask 15360
        %584 = vst.msk [vmem:[%s409] sm:$0xff] %vm583, %v581
        %585 = vst.msk [vmem:[%s409 + $0x8] sm:$0xff] %vm583, %v582
        %p586 = scmp.lt.s32.totalorder %s21, 1
        %s587 = scalar_select %p586, %s21, 1
        %p588 = scmp.lt.s32.totalorder %s22, 0
        %s589 = scalar_select %p588, %s22, 0
        %s590 = smul.addr %s587, 2
        %s591 = sadd.s32 %s589, %s590
        %s592 = smul.addr %s591, 4
        %s593 = scalar_lea.vmem %s4, %s592
        %p594 = scmp.lt.s32.totalorder %s21, 1
        %s595 = scalar_select %p594, %s21, 1
        %p596 = scmp.lt.s32.totalorder %s22, 0
        %s597 = scalar_select %p596, %s22, 0
        %s598 = smul.addr %s597, 2
        %s599 = smul.addr %s595, 2
        %s600 = sadd.s32 %s598, %s599
        %s601 = smul.addr %s600, 8
        %s602 = scalar_lea.vmem %s5, %s601
        // Predicated region
        $region119: #{forward.11} parent=109 // pred_check
          %p603 = pneg %p149
        $region120: #{forward.11} parent=109 // pred_check_branch
          %605 = sbr.rel (%p603) target = $region122
        $region121: #{forward.11} parent=109 // pred_region
          _
        $region122: #{forward.11} parent=109 // pred_fallthru
          _
        // Predicated region
        $region123: #{forward.11} parent=109 // pred_check
          %p606 = pneg %p177
        $region124: #{forward.11} parent=109 // pred_check_branch
          %608 = sbr.rel (%p606) target = $region126
        $region125: #{forward.11} parent=109 // pred_region
          _
        $region126: #{forward.11} parent=109 // pred_fallthru
          _
      $region110: #{forward.11} parent=5 // pred_fallthru
        _
      %p609 = scmp.le.s32.totalorder 2, %s12
      // Predicated region
      $region127: #{forward.11} parent=5 // pred_check
        %p610 = pneg %p609
      $region128: #{forward.11} parent=5 // pred_check_branch
        %612 = sbr.rel (%p610) target = $region130
      $region129: #{forward.11} parent=5 // pred_region
        %s613 = ssub.s32 %s12, 2
        // Predicated region
        $region131: #{forward.11} parent=129 // pred_check
          %p614 = pneg %p155
        $region132: #{forward.11} parent=129 // pred_check_branch
          %616 = sbr.rel (%p614) target = $region134
        $region133: #{forward.11} parent=129 // pred_region
          %p617 = scmp.lt.s32.totalorder %s23, 1
          %s618 = scalar_select %p617, %s23, 1
          %p619 = scmp.lt.s32.totalorder %s24, 0
          %s620 = scalar_select %p619, %s24, 0
          %s621 = smul.addr %s618, 2
          %s622 = sadd.s32 %s620, %s621
          %s623 = smul.addr %s622, 4
          %s624 = scalar_lea.vmem %s4, %s623
        $region134: #{forward.11} parent=129 // pred_fallthru
          _
        // Predicated region
        $region135: #{forward.11} parent=129 // pred_check
          %p625 = pneg %p183
        $region136: #{forward.11} parent=129 // pred_check_branch
          %627 = sbr.rel (%p625) target = $region138
        $region137: #{forward.11} parent=129 // pred_region
          %p628 = scmp.lt.s32.totalorder %s23, 1
          %s629 = scalar_select %p628, %s23, 1
          %p630 = scmp.lt.s32.totalorder %s24, 0
          %s631 = scalar_select %p630, %s24, 0
          %s632 = smul.addr %s631, 2
          %s633 = smul.addr %s629, 2
          %s634 = sadd.s32 %s632, %s633
          %s635 = smul.addr %s634, 8
          %s636 = scalar_lea.vmem %s5, %s635
        $region138: #{forward.11} parent=129 // pred_fallthru
          _
      $region130: #{forward.11} parent=5 // pred_fallthru
        _
    $region6: #{forward.11} parent=1 // loop_footer
      %s16 = sadd.s32 1, %s12
    $region7: #{forward.11} parent=1 // loop_footer_branch
      %11 = sbr.rel target = $region3
    $region8: #{forward.11} parent=1 // loop_exit
      _

// kernel: forward.12
$region0: #{forward.12}
  #allocation0 [shape = 'u32[]', space=smem, size = 0x4, offset = 0x4, fixed_abs, tag = 'smem constant byte address 0x4 - core index']
  #allocation1 [shape = 'u32[72,128]{1,0:T(1,128)}', space=vmem, size = 0x9000, scoped, tag = 'internal scratch']
  %s0 = inlined_call_operand.vmem [shape: bf16[2,16,128], index: 0, kind: input, shape index: {}]
  %s1 = inlined_call_operand.vmem [shape: f32[16,1], index: 1, kind: input, shape index: {}]
  %s2 = inlined_call_operand.vmem [shape: f32[16,1], index: 2, kind: input, shape index: {}]
  %s3 = inlined_call_operand.vmem [shape: bf16[2,16,128], index: 3, kind: output, shape index: {}]
  %s4 = sld [smem:[#allocation0]]
  $region45: #{forward.12} parent=0
    _
  %s6 = ssub.s32 1, %s4
  %s7 = scalar_select 0, %s6, %s4
  loop: start=0, step=1, limit=4
  $region2: #{forward.12} parent=0 // loop_pre_header
    _
  $region3: #{forward.12} parent=0 // loop_header
    %s9 = sphi 0, %s13
    %p10 = scmp.ge.s32.totalorder %s9, 4
    %s16 = sphi 0, %s28
    %s17 = sphi 0, %s24
    %s18 = sphi 0, %s16
    %s19 = sphi 0, %s17
    %s20 = sphi 0, %s18
    %s21 = sphi 0, %s19
    %s33 = sphi 0, %s35
    %s36 = sphi 0, %s33
    %s37 = sphi 0, %s36
    %s53 = sphi 0, %s37
    %s57 = sphi 0, %s57
    %s59 = sphi 0, %s57
    %s60 = sphi 0, %s59
    %s74 = sphi 0, %s60
    %s78 = sphi 0, %s78
    %s80 = sphi 0, %s78
    %s81 = sphi 0, %s80
    %s95 = sphi 0, %s81
    %s103 = sphi 0, %s105
    %s106 = sphi 0, %s103
    %s107 = sphi 0, %s106
    %s123 = sphi 0, %s107
  $region4: #{forward.12} parent=0 // loop_header_branch
    %12 = sbr.rel (%p10) target = $region8
  $region5: #{forward.12} parent=0 // loop_body
    %s14 = ssub.s32 %s9, 1
    %s15 = ssub.s32 %s9, 2
    %s22 = sadd.s32 1, %s17
    %p23 = scmp.ge.s32.totalorder %s22, 1
    %s24 = scalar_select %p23, 0, %s22
    %s25 = sadd.s32 1, %s16
    %s26 = scalar_select %p23, %s25, %s16
    %p27 = scmp.ge.s32.totalorder %s26, 2
    %s28 = scalar_select %p27, 0, %s26
    %s29 = ssub.s32 %s16, %s28
    %s30 = ssub.s32 %s17, %s24
    %s31 = sor.u32 %s29, %s30
    %p32 = scmp.eq.s32.totalorder %s31, 0
    %s34 = sadd.s32 %s33, 1
    %s35 = scalar_select %p32, %s33, %s34
    %p38 = pneg %p32
    %p39 = scmp.eq.s32.totalorder %s9, 1
    %p40 = por %p38, %p39
    %p41 = scmp.ne.s32.totalorder %s33, %s36
    %p42 = scmp.eq.s32.totalorder %s9, 0
    %p43 = por %p41, %p42
    %p44 = scmp.ne.s32.totalorder %s33, %s36
    %p45 = scmp.eq.s32.totalorder %s14, 1
    %p46 = por %p44, %p45
    %p47 = scmp.ne.s32.totalorder %s36, %s37
    %p48 = scmp.eq.s32.totalorder %s14, 0
    %p49 = por %p47, %p48
    %p50 = scmp.ne.s32.totalorder %s36, %s37
    %p51 = scmp.eq.s32.totalorder %s15, 1
    %p52 = por %p50, %p51
    %p54 = scmp.ne.s32.totalorder %s37, %s53
    %p55 = scmp.eq.s32.totalorder %s15, 0
    %p56 = por %p54, %p55
    %s58 = sadd.s32 %s57, 1
    %p61 = scmp.eq.s32.totalorder %s9, 1
    %p62 = scmp.ne.s32.totalorder %s57, %s59
    %p63 = scmp.eq.s32.totalorder %s9, 0
    %p64 = por %p62, %p63
    %p65 = scmp.ne.s32.totalorder %s57, %s59
    %p66 = scmp.eq.s32.totalorder %s14, 1
    %p67 = por %p65, %p66
    %p68 = scmp.ne.s32.totalorder %s59, %s60
    %p69 = scmp.eq.s32.totalorder %s14, 0
    %p70 = por %p68, %p69
    %p71 = scmp.ne.s32.totalorder %s59, %s60
    %p72 = scmp.eq.s32.totalorder %s15, 1
    %p73 = por %p71, %p72
    %p75 = scmp.ne.s32.totalorder %s60, %s74
    %p76 = scmp.eq.s32.totalorder %s15, 0
    %p77 = por %p75, %p76
    %s79 = sadd.s32 %s78, 1
    %p82 = scmp.eq.s32.totalorder %s9, 1
    %p83 = scmp.ne.s32.totalorder %s78, %s80
    %p84 = scmp.eq.s32.totalorder %s9, 0
    %p85 = por %p83, %p84
    %p86 = scmp.ne.s32.totalorder %s78, %s80
    %p87 = scmp.eq.s32.totalorder %s14, 1
    %p88 = por %p86, %p87
    %p89 = scmp.ne.s32.totalorder %s80, %s81
    %p90 = scmp.eq.s32.totalorder %s14, 0
    %p91 = por %p89, %p90
    %p92 = scmp.ne.s32.totalorder %s80, %s81
    %p93 = scmp.eq.s32.totalorder %s15, 1
    %p94 = por %p92, %p93
    %p96 = scmp.ne.s32.totalorder %s81, %s95
    %p97 = scmp.eq.s32.totalorder %s15, 0
    %p98 = por %p96, %p97
    %s99 = ssub.s32 %s16, %s28
    %s100 = ssub.s32 %s17, %s24
    %s101 = sor.u32 %s99, %s100
    %p102 = scmp.eq.s32.totalorder %s101, 0
    %s104 = sadd.s32 %s103, 1
    %s105 = scalar_select %p102, %s103, %s104
    %p108 = pneg %p102
    %p109 = scmp.eq.s32.totalorder %s9, 1
    %p110 = por %p108, %p109
    %p111 = scmp.ne.s32.totalorder %s103, %s106
    %p112 = scmp.eq.s32.totalorder %s9, 0
    %p113 = por %p111, %p112
    %p114 = scmp.ne.s32.totalorder %s103, %s106
    %p115 = scmp.eq.s32.totalorder %s14, 1
    %p116 = por %p114, %p115
    %p117 = scmp.ne.s32.totalorder %s106, %s107
    %p118 = scmp.eq.s32.totalorder %s14, 0
    %p119 = por %p117, %p118
    %p120 = scmp.ne.s32.totalorder %s106, %s107
    %p121 = scmp.eq.s32.totalorder %s15, 1
    %p122 = por %p120, %p121
    %p124 = scmp.ne.s32.totalorder %s107, %s123
    %p125 = scmp.eq.s32.totalorder %s15, 0
    %p126 = por %p124, %p125
    %p127 = scmp.le.s32.totalorder 1, %s9
    %p128 = scmp.lt.s32.totalorder %s9, 3
    %p129 = pnand %p127, %p128
    %p130 = pneg %p129
    // Predicated region
    $region9: #{forward.12} parent=5 // pred_check
      _
    $region10: #{forward.12} parent=5 // pred_check_branch
      %132 = sbr.rel (%p129) target = $region12
    $region11: #{forward.12} parent=5 // pred_region
      %s133 = ssub.s32 %s9, 1
      // Predicated region
      $region13: #{forward.12} parent=11 // pred_check
        %p134 = pneg %p70
      $region14: #{forward.12} parent=11 // pred_check_branch
        %136 = sbr.rel (%p134) target = $region16
      $region15: #{forward.12} parent=11 // pred_region
        _
      $region16: #{forward.12} parent=11 // pred_fallthru
        _
      // Predicated region
      $region17: #{forward.12} parent=11 // pred_check
        %p137 = pneg %p91
      $region18: #{forward.12} parent=11 // pred_check_branch
        %139 = sbr.rel (%p137) target = $region20
      $region19: #{forward.12} parent=11 // pred_region
        _
      $region20: #{forward.12} parent=11 // pred_fallthru
        _
    $region12: #{forward.12} parent=5 // pred_fallthru
      _
    %p140 = scmp.lt.s32.totalorder %s9, 2
    // Predicated region
    $region21: #{forward.12} parent=5 // pred_check
      %p141 = pneg %p140
    $region22: #{forward.12} parent=5 // pred_check_branch
      %143 = sbr.rel (%p141) target = $region24
    $region23: #{forward.12} parent=5 // pred_region
      // Predicated region
      $region25: #{forward.12} parent=23 // pred_check
        %p144 = pneg %p43
      $region26: #{forward.12} parent=23 // pred_check_branch
        %146 = sbr.rel (%p144) target = $region28
      $region27: #{forward.12} parent=23 // pred_region
        %p147 = scmp.lt.s32.totalorder %s16, 1
        %s148 = scalar_select %p147, %s16, 1
        %p149 = scmp.lt.s32.totalorder %s17, 0
        %s150 = scalar_select %p149, %s17, 0
        %s151 = smul.addr %s148, 2
        %s152 = sadd.s32 %s150, %s151
        %s153 = smul.addr %s152, 4
        %s154 = scalar_lea.vmem %s0, %s153
      $region28: #{forward.12} parent=23 // pred_fallthru
        _
    $region24: #{forward.12} parent=5 // pred_fallthru
      _
    %p155 = scmp.le.s32.totalorder 1, %s9
    %p156 = scmp.lt.s32.totalorder %s9, 3
    %p157 = pnand %p155, %p156
    %p158 = pneg %p157
    // Predicated region
    $region29: #{forward.12} parent=5 // pred_check
      _
    $region30: #{forward.12} parent=5 // pred_check_branch
      %160 = sbr.rel (%p157) target = $region32
    $region31: #{forward.12} parent=5 // pred_region
      %s161 = ssub.s32 %s9, 1
      %p162 = scmp.lt.s32.totalorder %s18, 1
      %s163 = scalar_select %p162, %s18, 1
      %p164 = scmp.lt.s32.totalorder %s19, 0
      %s165 = scalar_select %p164, %s19, 0
      %s166 = smul.addr %s163, 2
      %s167 = sadd.s32 %s165, %s166
      %s168 = smul.addr %s167, 4
      %s169 = scalar_lea.vmem %s0, %s168
      %p170 = pneg %p49
      %p171 = pneg %p46
      %p172 = pneg %p70
      %p173 = pneg %p67
      %p174 = pneg %p91
      %p175 = pneg %p88
      %p176 = pneg %p119
      %p177 = pneg %p116
      %p178 = scmp.lt.s32.totalorder %s18, 1
      %s179 = scalar_select %p178, %s18, 1
      %p180 = scmp.lt.s32.totalorder %s19, 0
      %s181 = scalar_select %p180, %s19, 0
      %s182 = smul.addr %s179, 2
      %s183 = sadd.s32 %s181, %s182
      %s184 = smul.addr %s183, 4
      %s185 = scalar_lea.vmem %s3, %s184
      %p186 = scmp.lt.s32.totalorder %s18, 1
      %s187 = scalar_select %p186, %s18, 1
      %p188 = scmp.lt.s32.totalorder %s19, 0
      %s189 = scalar_select %p188, %s19, 0
      %s190 = smul.addr %s187, 2
      %s191 = sadd.s32 %s189, %s190
      %s192 = smul.addr %s191, 4
      %s193 = scalar_lea.vmem %s0, %s192
      %p194 = scmp.lt.s32.totalorder %s18, 1
      %s195 = scalar_select %p194, %s18, 1
      %p196 = scmp.lt.s32.totalorder %s19, 0
      %s197 = scalar_select %p196, %s19, 0
      %s198 = smul.addr %s195, 2
      %s199 = sadd.s32 %s197, %s198
      %s200 = smul.addr %s199, 4
      %s201 = scalar_lea.vmem %s3, %s200
      %v202 = vld [vmem:[%s193] sm:$0xf]
      %v203 = vld [vmem:[%s193 + $0x4] sm:$0xf]
      %v204 = vunpack.c.l.bf16 %v202
      %v205 = vunpack.c.l.bf16 %v203
      %v206 = vld [vmem:[%s1] sm:$0xff]
      %v207 = vld [vmem:[%s1 + $0x8] sm:$0xff]
      %209 = vset.pattern.permute.xlu0 0
      %210 = vperm.xlu0 %209, %v206
      %v211 = vpop.permute.xlu0 %210
      %214 = vset.pattern.permute.xlu0 0
      %215 = vperm.xlu0 %214, %v207
      %v216 = vpop.permute.xlu0 %215
      %v218 = vmul.f32 %v204, %v211
      %v219 = vmul.f32 %v205, %v216
      %v220 = vld [vmem:[%s2] sm:$0xff]
      %v221 = vld [vmem:[%s2 + $0x8] sm:$0xff]
      %223 = vset.pattern.permute.xlu0 0
      %224 = vperm.xlu0 %223, %v220
      %v225 = vpop.permute.xlu0 %224
      %228 = vset.pattern.permute.xlu0 0
      %229 = vperm.xlu0 %228, %v221
      %v230 = vpop.permute.xlu0 %229
      %v232 = vadd.f32 %v218, %v225
      %v233 = vadd.f32 %v219, %v230
      %vm234 = vcmp.ge.f32.partialorder %v232, 0.0
      %vm235 = vcmp.ge.f32.partialorder %v233, 0.0
      %v236 = vmul.f32 %v232, 0.2
      %v237 = vmul.f32 %v233, 0.2
      %v238 = vsel %vm234, %v232, %v236
      %v239 = vsel %vm235, %v233, %v237
      %v240 = vpack.c.bf16 %v238, %v238
      %v241 = vpack.c.bf16 %v239, %v239
      %242 = vst [vmem:[%s201] sm:$0xf] %v240
      %243 = vst [vmem:[%s201 + $0x4] sm:$0xf] %v241
      %p244 = scmp.lt.s32.totalorder %s18, 1
      %s245 = scalar_select %p244, %s18, 1
      %p246 = scmp.lt.s32.totalorder %s19, 0
      %s247 = scalar_select %p246, %s19, 0
      %s248 = smul.addr %s245, 2
      %s249 = sadd.s32 %s247, %s248
      %s250 = smul.addr %s249, 4
      %s251 = scalar_lea.vmem %s3, %s250
      // Predicated region
      $region33: #{forward.12} parent=31 // pred_check
        %p252 = pneg %p116
      $region34: #{forward.12} parent=31 // pred_check_branch
        %254 = sbr.rel (%p252) target = $region36
      $region35: #{forward.12} parent=31 // pred_region
        _
      $region36: #{forward.12} parent=31 // pred_fallthru
        _
    $region32: #{forward.12} parent=5 // pred_fallthru
      _
    %p255 = scmp.le.s32.totalorder 2, %s9
    // Predicated region
    $region37: #{forward.12} parent=5 // pred_check
      %p256 = pneg %p255
    $region38: #{forward.12} parent=5 // pred_check_branch
      %258 = sbr.rel (%p256) target = $region40
    $region39: #{forward.12} parent=5 // pred_region
      %s259 = ssub.s32 %s9, 2
      // Predicated region
      $region41: #{forward.12} parent=39 // pred_check
        %p260 = pneg %p122
      $region42: #{forward.12} parent=39 // pred_check_branch
        %262 = sbr.rel (%p260) target = $region44
      $region43: #{forward.12} parent=39 // pred_region
        %p263 = scmp.lt.s32.totalorder %s20, 1
        %s264 = scalar_select %p263, %s20, 1
        %p265 = scmp.lt.s32.totalorder %s21, 0
        %s266 = scalar_select %p265, %s21, 0
        %s267 = smul.addr %s264, 2
        %s268 = sadd.s32 %s266, %s267
        %s269 = smul.addr %s268, 4
        %s270 = scalar_lea.vmem %s3, %s269
      $region44: #{forward.12} parent=39 // pred_fallthru
        _
    $region40: #{forward.12} parent=5 // pred_fallthru
      _
  $region6: #{forward.12} parent=0 // loop_footer
    %s13 = sadd.s32 1, %s9
  $region7: #{forward.12} parent=0 // loop_footer_branch
    %8 = sbr.rel target = $region3
  $region8: #{forward.12} parent=0 // loop_exit
    _

// kernel: forward.14
$region0: #{forward.14}
  #allocation0 [shape = 'u32[]', space=smem, size = 0x4, offset = 0x4, fixed_abs, tag = 'smem constant byte address 0x4 - core index']
  #allocation1 [shape = 'u32[72,128]{1,0:T(1,128)}', space=vmem, size = 0x9000, scoped, tag = 'internal scratch']
  %s0 = inlined_call_operand.vmem [shape: bf16[2,32,128], index: 0, kind: input, shape index: {}]
  %s1 = inlined_call_operand.vmem [shape: f32[32,1], index: 1, kind: input, shape index: {}]
  %s2 = inlined_call_operand.vmem [shape: f32[32,1], index: 2, kind: input, shape index: {}]
  %s3 = inlined_call_operand.vmem [shape: bf16[2,32,128], index: 3, kind: output, shape index: {}]
  %s4 = sld [smem:[#allocation0]]
  $region45: #{forward.14} parent=0
    _
  %s6 = ssub.s32 1, %s4
  %s7 = scalar_select 0, %s6, %s4
  loop: start=0, step=1, limit=4
  $region2: #{forward.14} parent=0 // loop_pre_header
    _
  $region3: #{forward.14} parent=0 // loop_header
    %s9 = sphi 0, %s13
    %p10 = scmp.ge.s32.totalorder %s9, 4
    %s16 = sphi 0, %s28
    %s17 = sphi 0, %s24
    %s18 = sphi 0, %s16
    %s19 = sphi 0, %s17
    %s20 = sphi 0, %s18
    %s21 = sphi 0, %s19
    %s33 = sphi 0, %s35
    %s36 = sphi 0, %s33
    %s37 = sphi 0, %s36
    %s53 = sphi 0, %s37
    %s57 = sphi 0, %s57
    %s59 = sphi 0, %s57
    %s60 = sphi 0, %s59
    %s74 = sphi 0, %s60
    %s78 = sphi 0, %s78
    %s80 = sphi 0, %s78
    %s81 = sphi 0, %s80
    %s95 = sphi 0, %s81
    %s103 = sphi 0, %s105
    %s106 = sphi 0, %s103
    %s107 = sphi 0, %s106
    %s123 = sphi 0, %s107
  $region4: #{forward.14} parent=0 // loop_header_branch
    %12 = sbr.rel (%p10) target = $region8
  $region5: #{forward.14} parent=0 // loop_body
    %s14 = ssub.s32 %s9, 1
    %s15 = ssub.s32 %s9, 2
    %s22 = sadd.s32 1, %s17
    %p23 = scmp.ge.s32.totalorder %s22, 1
    %s24 = scalar_select %p23, 0, %s22
    %s25 = sadd.s32 1, %s16
    %s26 = scalar_select %p23, %s25, %s16
    %p27 = scmp.ge.s32.totalorder %s26, 2
    %s28 = scalar_select %p27, 0, %s26
    %s29 = ssub.s32 %s16, %s28
    %s30 = ssub.s32 %s17, %s24
    %s31 = sor.u32 %s29, %s30
    %p32 = scmp.eq.s32.totalorder %s31, 0
    %s34 = sadd.s32 %s33, 1
    %s35 = scalar_select %p32, %s33, %s34
    %p38 = pneg %p32
    %p39 = scmp.eq.s32.totalorder %s9, 1
    %p40 = por %p38, %p39
    %p41 = scmp.ne.s32.totalorder %s33, %s36
    %p42 = scmp.eq.s32.totalorder %s9, 0
    %p43 = por %p41, %p42
    %p44 = scmp.ne.s32.totalorder %s33, %s36
    %p45 = scmp.eq.s32.totalorder %s14, 1
    %p46 = por %p44, %p45
    %p47 = scmp.ne.s32.totalorder %s36, %s37
    %p48 = scmp.eq.s32.totalorder %s14, 0
    %p49 = por %p47, %p48
    %p50 = scmp.ne.s32.totalorder %s36, %s37
    %p51 = scmp.eq.s32.totalorder %s15, 1
    %p52 = por %p50, %p51
    %p54 = scmp.ne.s32.totalorder %s37, %s53
    %p55 = scmp.eq.s32.totalorder %s15, 0
    %p56 = por %p54, %p55
    %s58 = sadd.s32 %s57, 1
    %p61 = scmp.eq.s32.totalorder %s9, 1
    %p62 = scmp.ne.s32.totalorder %s57, %s59
    %p63 = scmp.eq.s32.totalorder %s9, 0
    %p64 = por %p62, %p63
    %p65 = scmp.ne.s32.totalorder %s57, %s59
    %p66 = scmp.eq.s32.totalorder %s14, 1
    %p67 = por %p65, %p66
    %p68 = scmp.ne.s32.totalorder %s59, %s60
    %p69 = scmp.eq.s32.totalorder %s14, 0
    %p70 = por %p68, %p69
    %p71 = scmp.ne.s32.totalorder %s59, %s60
    %p72 = scmp.eq.s32.totalorder %s15, 1
    %p73 = por %p71, %p72
    %p75 = scmp.ne.s32.totalorder %s60, %s74
    %p76 = scmp.eq.s32.totalorder %s15, 0
    %p77 = por %p75, %p76
    %s79 = sadd.s32 %s78, 1
    %p82 = scmp.eq.s32.totalorder %s9, 1
    %p83 = scmp.ne.s32.totalorder %s78, %s80
    %p84 = scmp.eq.s32.totalorder %s9, 0
    %p85 = por %p83, %p84
    %p86 = scmp.ne.s32.totalorder %s78, %s80
    %p87 = scmp.eq.s32.totalorder %s14, 1
    %p88 = por %p86, %p87
    %p89 = scmp.ne.s32.totalorder %s80, %s81
    %p90 = scmp.eq.s32.totalorder %s14, 0
    %p91 = por %p89, %p90
    %p92 = scmp.ne.s32.totalorder %s80, %s81
    %p93 = scmp.eq.s32.totalorder %s15, 1
    %p94 = por %p92, %p93
    %p96 = scmp.ne.s32.totalorder %s81, %s95
    %p97 = scmp.eq.s32.totalorder %s15, 0
    %p98 = por %p96, %p97
    %s99 = ssub.s32 %s16, %s28
    %s100 = ssub.s32 %s17, %s24
    %s101 = sor.u32 %s99, %s100
    %p102 = scmp.eq.s32.totalorder %s101, 0
    %s104 = sadd.s32 %s103, 1
    %s105 = scalar_select %p102, %s103, %s104
    %p108 = pneg %p102
    %p109 = scmp.eq.s32.totalorder %s9, 1
    %p110 = por %p108, %p109
    %p111 = scmp.ne.s32.totalorder %s103, %s106
    %p112 = scmp.eq.s32.totalorder %s9, 0
    %p113 = por %p111, %p112
    %p114 = scmp.ne.s32.totalorder %s103, %s106
    %p115 = scmp.eq.s32.totalorder %s14, 1
    %p116 = por %p114, %p115
    %p117 = scmp.ne.s32.totalorder %s106, %s107
    %p118 = scmp.eq.s32.totalorder %s14, 0
    %p119 = por %p117, %p118
    %p120 = scmp.ne.s32.totalorder %s106, %s107
    %p121 = scmp.eq.s32.totalorder %s15, 1
    %p122 = por %p120, %p121
    %p124 = scmp.ne.s32.totalorder %s107, %s123
    %p125 = scmp.eq.s32.totalorder %s15, 0
    %p126 = por %p124, %p125
    %p127 = scmp.le.s32.totalorder 1, %s9
    %p128 = scmp.lt.s32.totalorder %s9, 3
    %p129 = pnand %p127, %p128
    %p130 = pneg %p129
    // Predicated region
    $region9: #{forward.14} parent=5 // pred_check
      _
    $region10: #{forward.14} parent=5 // pred_check_branch
      %132 = sbr.rel (%p129) target = $region12
    $region11: #{forward.14} parent=5 // pred_region
      %s133 = ssub.s32 %s9, 1
      // Predicated region
      $region13: #{forward.14} parent=11 // pred_check
        %p134 = pneg %p70
      $region14: #{forward.14} parent=11 // pred_check_branch
        %136 = sbr.rel (%p134) target = $region16
      $region15: #{forward.14} parent=11 // pred_region
        _
      $region16: #{forward.14} parent=11 // pred_fallthru
        _
      // Predicated region
      $region17: #{forward.14} parent=11 // pred_check
        %p137 = pneg %p91
      $region18: #{forward.14} parent=11 // pred_check_branch
        %139 = sbr.rel (%p137) target = $region20
      $region19: #{forward.14} parent=11 // pred_region
        _
      $region20: #{forward.14} parent=11 // pred_fallthru
        _
    $region12: #{forward.14} parent=5 // pred_fallthru
      _
    %p140 = scmp.lt.s32.totalorder %s9, 2
    // Predicated region
    $region21: #{forward.14} parent=5 // pred_check
      %p141 = pneg %p140
    $region22: #{forward.14} parent=5 // pred_check_branch
      %143 = sbr.rel (%p141) target = $region24
    $region23: #{forward.14} parent=5 // pred_region
      // Predicated region
      $region25: #{forward.14} parent=23 // pred_check
        %p144 = pneg %p43
      $region26: #{forward.14} parent=23 // pred_check_branch
        %146 = sbr.rel (%p144) target = $region28
      $region27: #{forward.14} parent=23 // pred_region
        %p147 = scmp.lt.s32.totalorder %s16, 1
        %s148 = scalar_select %p147, %s16, 1
        %p149 = scmp.lt.s32.totalorder %s17, 0
        %s150 = scalar_select %p149, %s17, 0
        %s151 = smul.addr %s148, 4
        %s152 = sadd.s32 %s150, %s151
        %s153 = smul.addr %s152, 4
        %s154 = scalar_lea.vmem %s0, %s153
      $region28: #{forward.14} parent=23 // pred_fallthru
        _
    $region24: #{forward.14} parent=5 // pred_fallthru
      _
    %p155 = scmp.le.s32.totalorder 1, %s9
    %p156 = scmp.lt.s32.totalorder %s9, 3
    %p157 = pnand %p155, %p156
    %p158 = pneg %p157
    // Predicated region
    $region29: #{forward.14} parent=5 // pred_check
      _
    $region30: #{forward.14} parent=5 // pred_check_branch
      %160 = sbr.rel (%p157) target = $region32
    $region31: #{forward.14} parent=5 // pred_region
      %s161 = ssub.s32 %s9, 1
      %p162 = scmp.lt.s32.totalorder %s18, 1
      %s163 = scalar_select %p162, %s18, 1
      %p164 = scmp.lt.s32.totalorder %s19, 0
      %s165 = scalar_select %p164, %s19, 0
      %s166 = smul.addr %s163, 4
      %s167 = sadd.s32 %s165, %s166
      %s168 = smul.addr %s167, 4
      %s169 = scalar_lea.vmem %s0, %s168
      %p170 = pneg %p49
      %p171 = pneg %p46
      %p172 = pneg %p70
      %p173 = pneg %p67
      %p174 = pneg %p91
      %p175 = pneg %p88
      %p176 = pneg %p119
      %p177 = pneg %p116
      %p178 = scmp.lt.s32.totalorder %s18, 1
      %s179 = scalar_select %p178, %s18, 1
      %p180 = scmp.lt.s32.totalorder %s19, 0
      %s181 = scalar_select %p180, %s19, 0
      %s182 = smul.addr %s179, 4
      %s183 = sadd.s32 %s181, %s182
      %s184 = smul.addr %s183, 4
      %s185 = scalar_lea.vmem %s3, %s184
      %p186 = scmp.lt.s32.totalorder %s18, 1
      %s187 = scalar_select %p186, %s18, 1
      %p188 = scmp.lt.s32.totalorder %s19, 0
      %s189 = scalar_select %p188, %s19, 0
      %s190 = smul.addr %s187, 4
      %s191 = sadd.s32 %s189, %s190
      %s192 = smul.addr %s191, 4
      %s193 = scalar_lea.vmem %s0, %s192
      %p194 = scmp.lt.s32.totalorder %s18, 1
      %s195 = scalar_select %p194, %s18, 1
      %p196 = scmp.lt.s32.totalorder %s19, 0
      %s197 = scalar_select %p196, %s19, 0
      %s198 = smul.addr %s195, 4
      %s199 = sadd.s32 %s197, %s198
      %s200 = smul.addr %s199, 4
      %s201 = scalar_lea.vmem %s3, %s200
      %v202 = vld [vmem:[%s193] sm:$0xf]
      %v203 = vld [vmem:[%s193 + $0x4] sm:$0xf]
      %v204 = vld [vmem:[%s193 + $0x8] sm:$0xf]
      %v205 = vld [vmem:[%s193 + $0xc] sm:$0xf]
      %v206 = vunpack.c.l.bf16 %v202
      %v207 = vunpack.c.l.bf16 %v203
      %v208 = vunpack.c.l.bf16 %v204
      %v209 = vunpack.c.l.bf16 %v205
      %v210 = vld [vmem:[%s1] sm:$0xff]
      %v211 = vld [vmem:[%s1 + $0x8] sm:$0xff]
      %v212 = vld [vmem:[%s1 + $0x10] sm:$0xff]
      %v213 = vld [vmem:[%s1 + $0x18] sm:$0xff]
      %215 = vset.pattern.permute.xlu0 0
      %216 = vperm.xlu0 %215, %v210
      %v217 = vpop.permute.xlu0 %216
      %220 = vset.pattern.permute.xlu0 0
      %221 = vperm.xlu0 %220, %v211
      %v222 = vpop.permute.xlu0 %221
      %225 = vset.pattern.permute.xlu0 0
      %226 = vperm.xlu0 %225, %v212
      %v227 = vpop.permute.xlu0 %226
      %230 = vset.pattern.permute.xlu0 0
      %231 = vperm.xlu0 %230, %v213
      %v232 = vpop.permute.xlu0 %231
      %v234 = vmul.f32 %v206, %v217
      %v235 = vmul.f32 %v207, %v222
      %v236 = vmul.f32 %v208, %v227
      %v237 = vmul.f32 %v209, %v232
      %v238 = vld [vmem:[%s2] sm:$0xff]
      %v239 = vld [vmem:[%s2 + $0x8] sm:$0xff]
      %v240 = vld [vmem:[%s2 + $0x10] sm:$0xff]
      %v241 = vld [vmem:[%s2 + $0x18] sm:$0xff]
      %243 = vset.pattern.permute.xlu0 0
      %244 = vperm.xlu0 %243, %v238
      %v245 = vpop.permute.xlu0 %244
      %248 = vset.pattern.permute.xlu0 0
      %249 = vperm.xlu0 %248, %v239
      %v250 = vpop.permute.xlu0 %249
      %253 = vset.pattern.permute.xlu0 0
      %254 = vperm.xlu0 %253, %v240
      %v255 = vpop.permute.xlu0 %254
      %258 = vset.pattern.permute.xlu0 0
      %259 = vperm.xlu0 %258, %v241
      %v260 = vpop.permute.xlu0 %259
      %v262 = vadd.f32 %v234, %v245
      %v263 = vadd.f32 %v235, %v250
      %v264 = vadd.f32 %v236, %v255
      %v265 = vadd.f32 %v237, %v260
      %vm266 = vcmp.ge.f32.partialorder %v262, 0.0
      %vm267 = vcmp.ge.f32.partialorder %v263, 0.0
      %vm268 = vcmp.ge.f32.partialorder %v264, 0.0
      %vm269 = vcmp.ge.f32.partialorder %v265, 0.0
      %v270 = vmul.f32 %v262, 0.2
      %v271 = vmul.f32 %v263, 0.2
      %v272 = vmul.f32 %v264, 0.2
      %v273 = vmul.f32 %v265, 0.2
      %v274 = vsel %vm266, %v262, %v270
      %v275 = vsel %vm267, %v263, %v271
      %v276 = vsel %vm268, %v264, %v272
      %v277 = vsel %vm269, %v265, %v273
      %v278 = vpack.c.bf16 %v274, %v274
      %v279 = vpack.c.bf16 %v275, %v275
      %v280 = vpack.c.bf16 %v276, %v276
      %v281 = vpack.c.bf16 %v277, %v277
      %282 = vst [vmem:[%s201] sm:$0xf] %v278
      %283 = vst [vmem:[%s201 + $0x4] sm:$0xf] %v279
      %284 = vst [vmem:[%s201 + $0x8] sm:$0xf] %v280
      %285 = vst [vmem:[%s201 + $0xc] sm:$0xf] %v281
      %p286 = scmp.lt.s32.totalorder %s18, 1
      %s287 = scalar_select %p286, %s18, 1
      %p288 = scmp.lt.s32.totalorder %s19, 0
      %s289 = scalar_select %p288, %s19, 0
      %s290 = smul.addr %s287, 4
      %s291 = sadd.s32 %s289, %s290
      %s292 = smul.addr %s291, 4
      %s293 = scalar_lea.vmem %s3, %s292
      // Predicated region
      $region33: #{forward.14} parent=31 // pred_check
        %p294 = pneg %p116
      $region34: #{forward.14} parent=31 // pred_check_branch
        %296 = sbr.rel (%p294) target = $region36
      $region35: #{forward.14} parent=31 // pred_region
        _
      $region36: #{forward.14} parent=31 // pred_fallthru
        _
    $region32: #{forward.14} parent=5 // pred_fallthru
      _
    %p297 = scmp.le.s32.totalorder 2, %s9
    // Predicated region
    $region37: #{forward.14} parent=5 // pred_check
      %p298 = pneg %p297
    $region38: #{forward.14} parent=5 // pred_check_branch
      %300 = sbr.rel (%p298) target = $region40
    $region39: #{forward.14} parent=5 // pred_region
      %s301 = ssub.s32 %s9, 2
      // Predicated region
      $region41: #{forward.14} parent=39 // pred_check
        %p302 = pneg %p122
      $region42: #{forward.14} parent=39 // pred_check_branch
        %304 = sbr.rel (%p302) target = $region44
      $region43: #{forward.14} parent=39 // pred_region
        %p305 = scmp.lt.s32.totalorder %s20, 1
        %s306 = scalar_select %p305, %s20, 1
        %p307 = scmp.lt.s32.totalorder %s21, 0
        %s308 = scalar_select %p307, %s21, 0
        %s309 = smul.addr %s306, 4
        %s310 = sadd.s32 %s308, %s309
        %s311 = smul.addr %s310, 4
        %s312 = scalar_lea.vmem %s3, %s311
      $region44: #{forward.14} parent=39 // pred_fallthru
        _
    $region40: #{forward.14} parent=5 // pred_fallthru
      _
  $region6: #{forward.14} parent=0 // loop_footer
    %s13 = sadd.s32 1, %s9
  $region7: #{forward.14} parent=0 // loop_footer_branch
    %8 = sbr.rel target = $region3
  $region8: #{forward.14} parent=0 // loop_exit
    _

// kernel: forward.13
$region0: #{forward.13}
  #allocation0 [shape = 'u32[]', space=smem, size = 0x4, offset = 0x4, fixed_abs, tag = 'smem constant byte address 0x4 - core index']
  #allocation1 [shape = 'u32[72,128]{1,0:T(1,128)}', space=vmem, size = 0x9000, scoped, tag = 'internal scratch']
  %s0 = inlined_call_operand.vmem [shape: bf16[2,64,256], index: 0, kind: input, shape index: {}, may-alias: {0,1}]
  %s1 = inlined_call_operand.vmem [shape: bf16[2,64,256], index: 1, kind: input, shape index: {}, may-alias: {0,1}]
  %s2 = inlined_call_operand.vmem [shape: bf16[3,32,64], index: 2, kind: input, shape index: {}]
  %s3 = inlined_call_operand.vmem [shape: f32[32,1], index: 3, kind: input, shape index: {}]
  %s4 = inlined_call_operand.vmem [shape: bf16[2,32,128], index: 4, kind: output, shape index: {0}]
  %s5 = inlined_call_operand.vmem [shape: f32[2,1,32,2], index: 5, kind: output, shape index: {1}]
  %6 = xla_tuple %s4, %s5
  %s7 = sld [smem:[#allocation0]]
  $region139: #{forward.13} parent=0
    _
  %s9 = ssub.s32 1, %s7
  %s10 = scalar_select 0, %s9, %s7
  $region1: #{forward.13} parent=0
    #allocation2 [shape = 'u8[32768]{0}', space=vmem, size = 0x8000, scoped, tag = 'input window, operand 0']
    #allocation3 [shape = 'u8[32768]{0}', space=vmem, size = 0x8000, scoped, tag = 'input window, operand 1']
    loop: start=0, step=1, limit=4
    $region2: #{forward.13} parent=1 // loop_pre_header
      _
    $region3: #{forward.13} parent=1 // loop_header
      %s12 = sphi 0, %s16
      %p13 = scmp.ge.s32.totalorder %s12, 4
      %s19 = sphi 0, %s31
      %s20 = sphi 0, %s27
      %s21 = sphi 0, %s19
      %s22 = sphi 0, %s20
      %s23 = sphi 0, %s21
      %s24 = sphi 0, %s22
      %s36 = sphi 0, %s38
      %s39 = sphi 0, %s36
      %s40 = sphi 0, %s39
      %s56 = sphi 0, %s40
      %s66 = sphi 0, %s68
      %s69 = sphi 0, %s66
      %s70 = sphi 0, %s69
      %s86 = sphi 0, %s70
      %s90 = sphi 0, %s90
      %s92 = sphi 0, %s90
      %s93 = sphi 0, %s92
      %s107 = sphi 0, %s93
      %s111 = sphi 0, %s111
      %s113 = sphi 0, %s111
      %s114 = sphi 0, %s113
      %s128 = sphi 0, %s114
      %s136 = sphi 0, %s138
      %s139 = sphi 0, %s136
      %s140 = sphi 0, %s139
      %s156 = sphi 0, %s140
      %s164 = sphi 0, %s166
      %s167 = sphi 0, %s164
      %s168 = sphi 0, %s167
      %s184 = sphi 0, %s168
    $region4: #{forward.13} parent=1 // loop_header_branch
      %15 = sbr.rel (%p13) target = $region8
    $region5: #{forward.13} parent=1 // loop_body
      %s17 = ssub.s32 %s12, 1
      %s18 = ssub.s32 %s12, 2
      %s25 = sadd.s32 1, %s20
      %p26 = scmp.ge.s32.totalorder %s25, 1
      %s27 = scalar_select %p26, 0, %s25
      %s28 = sadd.s32 1, %s19
      %s29 = scalar_select %p26, %s28, %s19
      %p30 = scmp.ge.s32.totalorder %s29, 2
      %s31 = scalar_select %p30, 0, %s29
      %s32 = ssub.s32 %s19, %s31
      %s33 = ssub.s32 %s20, %s27
      %s34 = sor.u32 %s32, %s33
      %p35 = scmp.eq.s32.totalorder %s34, 0
      %s37 = sadd.s32 %s36, 1
      %s38 = scalar_select %p35, %s36, %s37
      %p41 = pneg %p35
      %p42 = scmp.eq.s32.totalorder %s12, 1
      %p43 = por %p41, %p42
      %p44 = scmp.ne.s32.totalorder %s36, %s39
      %p45 = scmp.eq.s32.totalorder %s12, 0
      %p46 = por %p44, %p45
      %p47 = scmp.ne.s32.totalorder %s36, %s39
      %p48 = scmp.eq.s32.totalorder %s17, 1
      %p49 = por %p47, %p48
      %p50 = scmp.ne.s32.totalorder %s39, %s40
      %p51 = scmp.eq.s32.totalorder %s17, 0
      %p52 = por %p50, %p51
      %p53 = scmp.ne.s32.totalorder %s39, %s40
      %p54 = scmp.eq.s32.totalorder %s18, 1
      %p55 = por %p53, %p54
      %p57 = scmp.ne.s32.totalorder %s40, %s56
      %p58 = scmp.eq.s32.totalorder %s18, 0
      %p59 = por %p57, %p58
      %s60 = sadd.s32 %s20, 1
      %s61 = sadd.s32 %s27, 1
      %s62 = ssub.s32 %s19, %s31
      %s63 = ssub.s32 %s60, %s61
      %s64 = sor.u32 %s62, %s63
      %p65 = scmp.eq.s32.totalorder %s64, 0
      %s67 = sadd.s32 %s66, 1
      %s68 = scalar_select %p65, %s66, %s67
      %p71 = pneg %p65
      %p72 = scmp.eq.s32.totalorder %s12, 1
      %p73 = por %p71, %p72
      %p74 = scmp.ne.s32.totalorder %s66, %s69
      %p75 = scmp.eq.s32.totalorder %s12, 0
      %p76 = por %p74, %p75
      %p77 = scmp.ne.s32.totalorder %s66, %s69
      %p78 = scmp.eq.s32.totalorder %s17, 1
      %p79 = por %p77, %p78
      %p80 = scmp.ne.s32.totalorder %s69, %s70
      %p81 = scmp.eq.s32.totalorder %s17, 0
      %p82 = por %p80, %p81
      %p83 = scmp.ne.s32.totalorder %s69, %s70
      %p84 = scmp.eq.s32.totalorder %s18, 1
      %p85 = por %p83, %p84
      %p87 = scmp.ne.s32.totalorder %s70, %s86
      %p88 = scmp.eq.s32.totalorder %s18, 0
      %p89 = por %p87, %p88
      %s91 = sadd.s32 %s90, 1
      %p94 = scmp.eq.s32.totalorder %s12, 1
      %p95 = scmp.ne.s32.totalorder %s90, %s92
      %p96 = scmp.eq.s32.totalorder %s12, 0
      %p97 = por %p95, %p96
      %p98 = scmp.ne.s32.totalorder %s90, %s92
      %p99 = scmp.eq.s32.totalorder %s17, 1
      %p100 = por %p98, %p99
      %p101 = scmp.ne.s32.totalorder %s92, %s93
      %p102 = scmp.eq.s32.totalorder %s17, 0
      %p103 = por %p101, %p102
      %p104 = scmp.ne.s32.totalorder %s92, %s93
      %p105 = scmp.eq.s32.totalorder %s18, 1
      %p106 = por %p104, %p105
      %p108 = scmp.ne.s32.totalorder %s93, %s107
      %p109 = scmp.eq.s32.totalorder %s18, 0
      %p110 = por %p108, %p109
      %s112 = sadd.s32 %s111, 1
      %p115 = scmp.eq.s32.totalorder %s12, 1
      %p116 = scmp.ne.s32.totalorder %s111, %s113
      %p117 = scmp.eq.s32.totalorder %s12, 0
      %p118 = por %p116, %p117
      %p119 = scmp.ne.s32.totalorder %s111, %s113
      %p120 = scmp.eq.s32.totalorder %s17, 1
      %p121 = por %p119, %p120
      %p122 = scmp.ne.s32.totalorder %s113, %s114
      %p123 = scmp.eq.s32.totalorder %s17, 0
      %p124 = por %p122, %p123
      %p125 = scmp.ne.s32.totalorder %s113, %s114
      %p126 = scmp.eq.s32.totalorder %s18, 1
      %p127 = por %p125, %p126
      %p129 = scmp.ne.s32.totalorder %s114, %s128
      %p130 = scmp.eq.s32.totalorder %s18, 0
      %p131 = por %p129, %p130
      %s132 = ssub.s32 %s19, %s31
      %s133 = ssub.s32 %s20, %s27
      %s134 = sor.u32 %s132, %s133
      %p135 = scmp.eq.s32.totalorder %s134, 0
      %s137 = sadd.s32 %s136, 1
      %s138 = scalar_select %p135, %s136, %s137
      %p141 = pneg %p135
      %p142 = scmp.eq.s32.totalorder %s12, 1
      %p143 = por %p141, %p142
      %p144 = scmp.ne.s32.totalorder %s136, %s139
      %p145 = scmp.eq.s32.totalorder %s12, 0
      %p146 = por %p144, %p145
      %p147 = scmp.ne.s32.totalorder %s136, %s139
      %p148 = scmp.eq.s32.totalorder %s17, 1
      %p149 = por %p147, %p148
      %p150 = scmp.ne.s32.totalorder %s139, %s140
      %p151 = scmp.eq.s32.totalorder %s17, 0
      %p152 = por %p150, %p151
      %p153 = scmp.ne.s32.totalorder %s139, %s140
      %p154 = scmp.eq.s32.totalorder %s18, 1
      %p155 = por %p153, %p154
      %p157 = scmp.ne.s32.totalorder %s140, %s156
      %p158 = scmp.eq.s32.totalorder %s18, 0
      %p159 = por %p157, %p158
      %s160 = ssub.s32 %s19, %s31
      %s161 = ssub.s32 %s20, %s27
      %s162 = sor.u32 %s160, %s161
      %p163 = scmp.eq.s32.totalorder %s162, 0
      %s165 = sadd.s32 %s164, 1
      %s166 = scalar_select %p163, %s164, %s165
      %p169 = pneg %p163
      %p170 = scmp.eq.s32.totalorder %s12, 1
      %p171 = por %p169, %p170
      %p172 = scmp.ne.s32.totalorder %s164, %s167
      %p173 = scmp.eq.s32.totalorder %s12, 0
      %p174 = por %p172, %p173
      %p175 = scmp.ne.s32.totalorder %s164, %s167
      %p176 = scmp.eq.s32.totalorder %s17, 1
      %p177 = por %p175, %p176
      %p178 = scmp.ne.s32.totalorder %s167, %s168
      %p179 = scmp.eq.s32.totalorder %s17, 0
      %p180 = por %p178, %p179
      %p181 = scmp.ne.s32.totalorder %s167, %s168
      %p182 = scmp.eq.s32.totalorder %s18, 1
      %p183 = por %p181, %p182
      %p185 = scmp.ne.s32.totalorder %s168, %s184
      %p186 = scmp.eq.s32.totalorder %s18, 0
      %p187 = por %p185, %p186
      %p188 = scmp.le.s32.totalorder 1, %s12
      %p189 = scmp.lt.s32.totalorder %s12, 3
      %p190 = pnand %p188, %p189
      %p191 = pneg %p190
      // Predicated region
      $region9: #{forward.13} parent=5 // pred_check
        _
      $region10: #{forward.13} parent=5 // pred_check_branch
        %193 = sbr.rel (%p190) target = $region12
      $region11: #{forward.13} parent=5 // pred_region
        %s194 = ssub.s32 %s12, 1
        // Predicated region
        $region13: #{forward.13} parent=11 // pred_check
          %p195 = pneg %p103
        $region14: #{forward.13} parent=11 // pred_check_branch
          %197 = sbr.rel (%p195) target = $region16
        $region15: #{forward.13} parent=11 // pred_region
          _
        $region16: #{forward.13} parent=11 // pred_fallthru
          _
        // Predicated region
        $region17: #{forward.13} parent=11 // pred_check
          %p198 = pneg %p124
        $region18: #{forward.13} parent=11 // pred_check_branch
          %200 = sbr.rel (%p198) target = $region20
        $region19: #{forward.13} parent=11 // pred_region
          _
        $region20: #{forward.13} parent=11 // pred_fallthru
          _
      $region12: #{forward.13} parent=5 // pred_fallthru
        _
      %p201 = scmp.lt.s32.totalorder %s12, 2
      // Predicated region
      $region21: #{forward.13} parent=5 // pred_check
        %p202 = pneg %p201
      $region22: #{forward.13} parent=5 // pred_check_branch
        %204 = sbr.rel (%p202) target = $region24
      $region23: #{forward.13} parent=5 // pred_region
        // Predicated region
        $region25: #{forward.13} parent=23 // pred_check
          %p205 = pneg %p46
        $region26: #{forward.13} parent=23 // pred_check_branch
          %207 = sbr.rel (%p205) target = $region28
        $region27: #{forward.13} parent=23 // pred_region
          %s208 = sand.u32 %s36, 1
          %s209 = sand.u32 %s36, 1
          %s210 = smul.addr %s209, 32
          %s211 = scalar_lea.vmem [#allocation2], %s210
          %s212 = smul.addr %s19, 16
          %s213 = sadd.s32 %s20, %s212
          %s214 = smul.addr %s213, 4
          %s215 = scalar_lea.vmem %s0, %s214
          // Predicated region
          $region29: #{forward.13} parent=27 // pred_check
            _
          $region30: #{forward.13} parent=27 // pred_check_branch
            %217 = sbr.rel (0) target = $region32
          $region31: #{forward.13} parent=27 // pred_region
            // Predicated region
            $region33: #{forward.13} parent=31 // pred_check
              _
            $region34: #{forward.13} parent=31 // pred_check_branch
              %219 = sbr.rel target = $region36
            $region35: #{forward.13} parent=31 // pred_region
              // Predicated region
              $region48: #{forward.13} parent=35 // pred_check
                _
              $region49: #{forward.13} parent=35 // pred_check_branch
                %249 = sbr.rel (0) target = $region51
              $region50: #{forward.13} parent=35 // pred_region
                loop: start=0, step=1, limit=1
                $region52: #{forward.13} parent=50 // loop_pre_header
                  _
                $region53: #{forward.13} parent=50 // loop_header
                  %s251 = sphi 0, %s255
                  %p252 = scmp.ge.s32.totalorder %s251, 1
                  %s256 = sphi %s215, %s215
                  %s257 = sphi %s211, %s211
                $region54: #{forward.13} parent=50 // loop_header_branch
                  %254 = sbr.rel (%p252) target = $region58
                $region55: #{forward.13} parent=50 // loop_body
                  _
                $region56: #{forward.13} parent=50 // loop_footer
                  %s255 = sadd.s32 1, %s251
                $region57: #{forward.13} parent=50 // loop_footer_branch
                  %250 = sbr.rel target = $region53
                $region58: #{forward.13} parent=50 // loop_exit
                  _
                %s259 = ssub.s32 16, 1
                loop: start=0, step=1, limit=1
                $region59: #{forward.13} parent=50 // loop_pre_header
                  _
                $region60: #{forward.13} parent=50 // loop_header
                  %s261 = sphi 0, %s265
                  %p262 = scmp.ge.s32.totalorder %s261, 1
                  %s266 = sphi %s215, %s215
                  %s267 = sphi %s211, %s211
                $region61: #{forward.13} parent=50 // loop_header_branch
                  %264 = sbr.rel (%p262) target = $region65
                $region62: #{forward.13} parent=50 // loop_body
                  %v268 = vld [vmem:[%s266] sm:%s259]
                  %269 = vst [vmem:[%s267] sm:%s259] %v268
                  %v270 = vld [vmem:[%s266 + $0x8] sm:%s259]
                  %271 = vst [vmem:[%s267 + $0x4] sm:%s259] %v270
                  %v272 = vld [vmem:[%s266 + $0x10] sm:%s259]
                  %273 = vst [vmem:[%s267 + $0x8] sm:%s259] %v272
                  %v274 = vld [vmem:[%s266 + $0x18] sm:%s259]
                  %275 = vst [vmem:[%s267 + $0xc] sm:%s259] %v274
                  %v276 = vld [vmem:[%s266 + $0x20] sm:%s259]
                  %277 = vst [vmem:[%s267 + $0x10] sm:%s259] %v276
                  %v278 = vld [vmem:[%s266 + $0x28] sm:%s259]
                  %279 = vst [vmem:[%s267 + $0x14] sm:%s259] %v278
                  %v280 = vld [vmem:[%s266 + $0x30] sm:%s259]
                  %281 = vst [vmem:[%s267 + $0x18] sm:%s259] %v280
                  %v282 = vld [vmem:[%s266 + $0x38] sm:%s259]
                  %283 = vst [vmem:[%s267 + $0x1c] sm:%s259] %v282
                $region63: #{forward.13} parent=50 // loop_footer
                  %s265 = sadd.s32 1, %s261
                $region64: #{forward.13} parent=50 // loop_footer_branch
                  %260 = sbr.rel target = $region60
                $region65: #{forward.13} parent=50 // loop_exit
                  _
              $region51: #{forward.13} parent=35 // pred_fallthru
                _
            $region36: #{forward.13} parent=31 // pred_fallthru
              _
            // Predicated region
            $region37: #{forward.13} parent=31 // pred_check
              _
            $region38: #{forward.13} parent=31 // pred_check_branch
              %221 = sbr.rel (0) target = $region40
            $region39: #{forward.13} parent=31 // pred_region
              %s223 = ssub.s32 16, 1
              loop: start=0, step=1, limit=1
              $region41: #{forward.13} parent=39 // loop_pre_header
                _
              $region42: #{forward.13} parent=39 // loop_header
                %s225 = sphi 0, %s229
                %p226 = scmp.ge.s32.totalorder %s225, 1
                %s230 = sphi %s215, %s215
                %s231 = sphi %s211, %s211
              $region43: #{forward.13} parent=39 // loop_header_branch
                %228 = sbr.rel (%p226) target = $region47
              $region44: #{forward.13} parent=39 // loop_body
                %v232 = vld [vmem:[%s230] sm:%s223]
                %233 = vst [vmem:[%s231] sm:%s223] %v232
                %v234 = vld [vmem:[%s230 + $0x8] sm:%s223]
                %235 = vst [vmem:[%s231 + $0x4] sm:%s223] %v234
                %v236 = vld [vmem:[%s230 + $0x10] sm:%s223]
                %237 = vst [vmem:[%s231 + $0x8] sm:%s223] %v236
                %v238 = vld [vmem:[%s230 + $0x18] sm:%s223]
                %239 = vst [vmem:[%s231 + $0xc] sm:%s223] %v238
                %v240 = vld [vmem:[%s230 + $0x20] sm:%s223]
                %241 = vst [vmem:[%s231 + $0x10] sm:%s223] %v240
                %v242 = vld [vmem:[%s230 + $0x28] sm:%s223]
                %243 = vst [vmem:[%s231 + $0x14] sm:%s223] %v242
                %v244 = vld [vmem:[%s230 + $0x30] sm:%s223]
                %245 = vst [vmem:[%s231 + $0x18] sm:%s223] %v244
                %v246 = vld [vmem:[%s230 + $0x38] sm:%s223]
                %247 = vst [vmem:[%s231 + $0x1c] sm:%s223] %v246
              $region45: #{forward.13} parent=39 // loop_footer
                %s229 = sadd.s32 1, %s225
              $region46: #{forward.13} parent=39 // loop_footer_branch
                %224 = sbr.rel target = $region42
              $region47: #{forward.13} parent=39 // loop_exit
                _
            $region40: #{forward.13} parent=31 // pred_fallthru
              _
          $region32: #{forward.13} parent=27 // pred_fallthru
            _
          %284 = vnop
        $region28: #{forward.13} parent=23 // pred_fallthru
          _
        // Predicated region
        $region66: #{forward.13} parent=23 // pred_check
          %p285 = pneg %p76
        $region67: #{forward.13} parent=23 // pred_check_branch
          %287 = sbr.rel (%p285) target = $region69
        $region68: #{forward.13} parent=23 // pred_region
          %s288 = sand.u32 %s66, 1
          %s289 = sand.u32 %s66, 1
          %s290 = smul.addr %s289, 32
          %s291 = scalar_lea.vmem [#allocation3], %s290
          %s292 = sadd.s32 %s20, 1
          %s293 = smul.addr %s19, 16
          %s294 = sadd.s32 %s292, %s293
          %s295 = smul.addr %s294, 4
          %s296 = scalar_lea.vmem %s1, %s295
          // Predicated region
          $region70: #{forward.13} parent=68 // pred_check
            _
          $region71: #{forward.13} parent=68 // pred_check_branch
            %298 = sbr.rel (0) target = $region73
          $region72: #{forward.13} parent=68 // pred_region
            // Predicated region
            $region74: #{forward.13} parent=72 // pred_check
              _
            $region75: #{forward.13} parent=72 // pred_check_branch
              %300 = sbr.rel target = $region77
            $region76: #{forward.13} parent=72 // pred_region
              // Predicated region
              $region89: #{forward.13} parent=76 // pred_check
                _
              $region90: #{forward.13} parent=76 // pred_check_branch
                %330 = sbr.rel (0) target = $region92
              $region91: #{forward.13} parent=76 // pred_region
                loop: start=0, step=1, limit=1
                $region93: #{forward.13} parent=91 // loop_pre_header
                  _
                $region94: #{forward.13} parent=91 // loop_header
                  %s332 = sphi 0, %s336
                  %p333 = scmp.ge.s32.totalorder %s332, 1
                  %s337 = sphi %s296, %s296
                  %s338 = sphi %s291, %s291
                $region95: #{forward.13} parent=91 // loop_header_branch
                  %335 = sbr.rel (%p333) target = $region99
                $region96: #{forward.13} parent=91 // loop_body
                  _
                $region97: #{forward.13} parent=91 // loop_footer
                  %s336 = sadd.s32 1, %s332
                $region98: #{forward.13} parent=91 // loop_footer_branch
                  %331 = sbr.rel target = $region94
                $region99: #{forward.13} parent=91 // loop_exit
                  _
                %s340 = ssub.s32 16, 1
                loop: start=0, step=1, limit=1
                $region100: #{forward.13} parent=91 // loop_pre_header
                  _
                $region101: #{forward.13} parent=91 // loop_header
                  %s342 = sphi 0, %s346
                  %p343 = scmp.ge.s32.totalorder %s342, 1
                  %s347 = sphi %s296, %s296
                  %s348 = sphi %s291, %s291
                $region102: #{forward.13} parent=91 // loop_header_branch
                  %345 = sbr.rel (%p343) target = $region106
                $region103: #{forward.13} parent=91 // loop_body
                  %v349 = vld [vmem:[%s347] sm:%s340]
                  %350 = vst [vmem:[%s348] sm:%s340] %v349
                  %v351 = vld [vmem:[%s347 + $0x8] sm:%s340]
                  %352 = vst [vmem:[%s348 + $0x4] sm:%s340] %v351
                  %v353 = vld [vmem:[%s347 + $0x10] sm:%s340]
                  %354 = vst [vmem:[%s348 + $0x8] sm:%s340] %v353
                  %v355 = vld [vmem:[%s347 + $0x18] sm:%s340]
                  %356 = vst [vmem:[%s348 + $0xc] sm:%s340] %v355
                  %v357 = vld [vmem:[%s347 + $0x20] sm:%s340]
                  %358 = vst [vmem:[%s348 + $0x10] sm:%s340] %v357
                  %v359 = vld [vmem:[%s347 + $0x28] sm:%s340]
                  %360 = vst [vmem:[%s348 + $0x14] sm:%s340] %v359
                  %v361 = vld [vmem:[%s347 + $0x30] sm:%s340]
                  %362 = vst [vmem:[%s348 + $0x18] sm:%s340] %v361
                  %v363 = vld [vmem:[%s347 + $0x38] sm:%s340]
                  %364 = vst [vmem:[%s348 + $0x1c] sm:%s340] %v363
                $region104: #{forward.13} parent=91 // loop_footer
                  %s346 = sadd.s32 1, %s342
                $region105: #{forward.13} parent=91 // loop_footer_branch
                  %341 = sbr.rel target = $region101
                $region106: #{forward.13} parent=91 // loop_exit
                  _
              $region92: #{forward.13} parent=76 // pred_fallthru
                _
            $region77: #{forward.13} parent=72 // pred_fallthru
              _
            // Predicated region
            $region78: #{forward.13} parent=72 // pred_check
              _
            $region79: #{forward.13} parent=72 // pred_check_branch
              %302 = sbr.rel (0) target = $region81
            $region80: #{forward.13} parent=72 // pred_region
              %s304 = ssub.s32 16, 1
              loop: start=0, step=1, limit=1
              $region82: #{forward.13} parent=80 // loop_pre_header
                _
              $region83: #{forward.13} parent=80 // loop_header
                %s306 = sphi 0, %s310
                %p307 = scmp.ge.s32.totalorder %s306, 1
                %s311 = sphi %s296, %s296
                %s312 = sphi %s291, %s291
              $region84: #{forward.13} parent=80 // loop_header_branch
                %309 = sbr.rel (%p307) target = $region88
              $region85: #{forward.13} parent=80 // loop_body
                %v313 = vld [vmem:[%s311] sm:%s304]
                %314 = vst [vmem:[%s312] sm:%s304] %v313
                %v315 = vld [vmem:[%s311 + $0x8] sm:%s304]
                %316 = vst [vmem:[%s312 + $0x4] sm:%s304] %v315
                %v317 = vld [vmem:[%s311 + $0x10] sm:%s304]
                %318 = vst [vmem:[%s312 + $0x8] sm:%s304] %v317
                %v319 = vld [vmem:[%s311 + $0x18] sm:%s304]
                %320 = vst [vmem:[%s312 + $0xc] sm:%s304] %v319
                %v321 = vld [vmem:[%s311 + $0x20] sm:%s304]
                %322 = vst [vmem:[%s312 + $0x10] sm:%s304] %v321
                %v323 = vld [vmem:[%s311 + $0x28] sm:%s304]
                %324 = vst [vmem:[%s312 + $0x14] sm:%s304] %v323
                %v325 = vld [vmem:[%s311 + $0x30] sm:%s304]
                %326 = vst [vmem:[%s312 + $0x18] sm:%s304] %v325
                %v327 = vld [vmem:[%s311 + $0x38] sm:%s304]
                %328 = vst [vmem:[%s312 + $0x1c] sm:%s304] %v327
              $region86: #{forward.13} parent=80 // loop_footer
                %s310 = sadd.s32 1, %s306
              $region87: #{forward.13} parent=80 // loop_footer_branch
                %305 = sbr.rel target = $region83
              $region88: #{forward.13} parent=80 // loop_exit
                _
            $region81: #{forward.13} parent=72 // pred_fallthru
              _
          $region73: #{forward.13} parent=68 // pred_fallthru
            _
          %365 = vnop
        $region69: #{forward.13} parent=23 // pred_fallthru
          _
      $region24: #{forward.13} parent=5 // pred_fallthru
        _
      %p366 = scmp.le.s32.totalorder 1, %s12
      %p367 = scmp.lt.s32.totalorder %s12, 3
      %p368 = pnand %p366, %p367
      %p369 = pneg %p368
      // Predicated region
      $region107: #{forward.13} parent=5 // pred_check
        _
      $region108: #{forward.13} parent=5 // pred_check_branch
        %371 = sbr.rel (%p368) target = $region110
      $region109: #{forward.13} parent=5 // pred_region
        %s372 = ssub.s32 %s12, 1
        %s373 = sand.u32 %s39, 1
        %s374 = sand.u32 %s39, 1
        %s375 = smul.addr %s374, 32
        %s376 = scalar_lea.vmem [#allocation2], %s375
        // Predicated region
        $region111: #{forward.13} parent=109 // pred_check
          %p377 = pneg %p52
        $region112: #{forward.13} parent=109 // pred_check_branch
          %379 = sbr.rel (%p377) target = $region114
        $region113: #{forward.13} parent=109 // pred_region
          _
        $region114: #{forward.13} parent=109 // pred_fallthru
          _
        %s380 = sand.u32 %s69, 1
        %s381 = sand.u32 %s69, 1
        %s382 = smul.addr %s381, 32
        %s383 = scalar_lea.vmem [#allocation3], %s382
        // Predicated region
        $region115: #{forward.13} parent=109 // pred_check
          %p384 = pneg %p82
        $region116: #{forward.13} parent=109 // pred_check_branch
          %386 = sbr.rel (%p384) target = $region118
        $region117: #{forward.13} parent=109 // pred_region
          _
        $region118: #{forward.13} parent=109 // pred_fallthru
          _
        %s387 = sand.u32 %s39, 1
        %s388 = sand.u32 %s39, 1
        %s389 = smul.addr %s388, 32
        %s390 = scalar_lea.vmem [#allocation2], %s389
        %p391 = pneg %p52
        %p392 = pneg %p49
        %s393 = sand.u32 %s69, 1
        %s394 = sand.u32 %s69, 1
        %s395 = smul.addr %s394, 32
        %s396 = scalar_lea.vmem [#allocation3], %s395
        %p397 = pneg %p82
        %p398 = pneg %p79
        %p399 = pneg %p103
        %p400 = pneg %p100
        %p401 = pneg %p124
        %p402 = pneg %p121
        %p403 = pneg %p152
        %p404 = pneg %p149
        %p405 = scmp.lt.s32.totalorder %s21, 1
        %s406 = scalar_select %p405, %s21, 1
        %p407 = scmp.lt.s32.totalorder %s22, 0
        %s408 = scalar_select %p407, %s22, 0
        %s409 = smul.addr %s406, 4
        %s410 = sadd.s32 %s408, %s409
        %s411 = smul.addr %s410, 4
        %s412 = scalar_lea.vmem %s4, %s411
        %p413 = pneg %p180
        %p414 = pneg %p177
        %p415 = scmp.lt.s32.totalorder %s21, 1
        %s416 = scalar_select %p415, %s21, 1
        %p417 = scmp.lt.s32.totalorder %s22, 0
        %s418 = scalar_select %p417, %s22, 0
        %s419 = smul.addr %s418, 4
        %s420 = smul.addr %s416, 4
        %s421 = sadd.s32 %s419, %s420
        %s422 = smul.addr %s421, 8
        %s423 = scalar_lea.vmem %s5, %s422
        %s424 = sadd.s32 %s22, 1
        %p425 = scmp.lt.s32.totalorder %s21, 1
        %s426 = scalar_select %p425, %s21, 1
        %p427 = scmp.lt.s32.totalorder %s22, 0
        %s428 = scalar_select %p427, %s22, 0
        %s429 = smul.addr %s426, 4
        %s430 = sadd.s32 %s428, %s429
        %s431 = smul.addr %s430, 4
        %s432 = scalar_lea.vmem %s4, %s431
        %p433 = scmp.lt.s32.totalorder %s21, 1
        %s434 = scalar_select %p433, %s21, 1
        %p435 = scmp.lt.s32.totalorder %s22, 0
        %s436 = scalar_select %p435, %s22, 0
        %s437 = smul.addr %s436, 4
        %s438 = smul.addr %s434, 4
        %s439 = sadd.s32 %s437, %s438
        %s440 = smul.addr %s439, 8
        %s441 = scalar_lea.vmem %s5, %s440
        %v443 = vld [vmem:[%s376] sm:$0xf]
        %v444 = vld [vmem:[%s376 + $0x4] sm:$0xf]
        %v445 = vld [vmem:[%s376 + $0x8] sm:$0xf]
        %v446 = vld [vmem:[%s376 + $0xc] sm:$0xf]
        %v447 = vld [vmem:[%s376 + $0x10] sm:$0xf]
        %v448 = vld [vmem:[%s376 + $0x14] sm:$0xf]
        %v449 = vld [vmem:[%s376 + $0x18] sm:$0xf]
        %v450 = vld [vmem:[%s376 + $0x1c] sm:$0xf]
        %v451 = vld [vmem:[%s383] sm:$0xf]
        %v452 = vld [vmem:[%s383 + $0x4] sm:$0xf]
        %v453 = vld [vmem:[%s383 + $0x8] sm:$0xf]
        %v454 = vld [vmem:[%s383 + $0xc] sm:$0xf]
        %v455 = vld [vmem:[%s383 + $0x10] sm:$0xf]
        %v456 = vld [vmem:[%s383 + $0x14] sm:$0xf]
        %v457 = vld [vmem:[%s383 + $0x18] sm:$0xf]
        %v458 = vld [vmem:[%s383 + $0x1c] sm:$0xf]
        %v467 = vunpack.c.l.b16 %v443
        %v468 = vunpack.c.l.b16 %v444
        %v469 = vunpack.c.l.b16 %v445
        %v470 = vunpack.c.l.b16 %v446
        %v471 = vunpack.c.l.b16 %v447
        %v472 = vunpack.c.l.b16 %v448
        %v473 = vunpack.c.l.b16 %v449
        %v474 = vunpack.c.l.b16 %v450
        %v475 = vpack.c.b16 %v468, %v467
        %v476 = vpack.c.b16 %v470, %v469
        %v477 = vpack.c.b16 %v472, %v471
        %v478 = vpack.c.b16 %v474, %v473
        %v491 = vunpack.c.l.b16 %v451
        %v492 = vunpack.c.l.b16 %v452
        %v493 = vunpack.c.l.b16 %v453
        %v494 = vunpack.c.l.b16 %v454
        %v495 = vunpack.c.l.b16 %v455
        %v496 = vunpack.c.l.b16 %v456
        %v497 = vunpack.c.l.b16 %v457
        %v498 = vunpack.c.l.b16 %v458
        %v499 = vpack.c.b16 %v492, %v491
        %v500 = vpack.c.b16 %v494, %v493
        %v501 = vpack.c.b16 %v496, %v495
        %v502 = vpack.c.b16 %v498, %v497
        %v503 = vld [vmem:[%s2] sm:$0xf]
        %v504 = vld [vmem:[%s2 + $0x4] sm:$0xf]
        %v505 = vld [vmem:[%s2 + $0x8] sm:$0xf]
        %v506 = vld [vmem:[%s2 + $0xc] sm:$0xf]
        %s507 = scalar_lea.vmem %s2, 16
        %v508 = vld [vmem:[%s507] sm:$0xf]
        %v509 = vld [vmem:[%s507 + $0x4] sm:$0xf]
        %v510 = vld [vmem:[%s507 + $0x8] sm:$0xf]
        %v511 = vld [vmem:[%s507 + $0xc] sm:$0xf]
        %v516 = vunpack.c.l.b16 %v508
        %v517 = vunpack.c.l.b16 %v509
        %v518 = vunpack.c.l.b16 %v510
        %v519 = vunpack.c.l.b16 %v511
        %v520 = vpack.c.b16 %v517, %v516
        %v521 = vpack.c.b16 %v519, %v518
        %522 = vrot.lane.b32.xlu0 %v475, 127
        %v523 = vpop.permute.xlu0 %522
        %524 = vrot.lane.b32.xlu0 %v499, 127
        %v525 = vpop.permute.xlu0 %524
        %526 = vrot.lane.b32.xlu0 %v476, 127
        %v527 = vpop.permute.xlu0 %526
        %528 = vrot.lane.b32.xlu0 %v500, 127
        %v529 = vpop.permute.xlu0 %528
        %530 = vrot.lane.b32.xlu0 %v477, 127
        %v531 = vpop.permute.xlu0 %530
        %532 = vrot.lane.b32.xlu0 %v501, 127
        %v533 = vpop.permute.xlu0 %532
        %534 = vrot.lane.b32.xlu0 %v478, 127
        %v535 = vpop.permute.xlu0 %534
        %536 = vrot.lane.b32.xlu0 %v502, 127
        %v537 = vpop.permute.xlu0 %536
        %vm538 = vcmask 1039360
        %v539 = vsel %vm538, %v523, %v525
        %v540 = vsel %vm538, %v527, %v529
        %v541 = vsel %vm538, %v531, %v533
        %v542 = vsel %vm538, %v535, %v537
        %vm547 = vcmask 523264
        %v549 = vsel %vm547, %v520, 0
        %v552 = vsel %vm547, %v521, 0
        %554 = vmatpush.bf16.msra.mxu0 0
        %555 = vmatpush.bf16.msra.mxu0 0
        %556 = vmatpush.bf16.msra.mxu0 0
        %557 = vmatpush.bf16.msra.mxu0 0
        %558 = vmatpush.bf16.msra.mxu0 %v542
        %559 = vmatpush.bf16.msra.mxu0 %v541
        %560 = vmatpush.bf16.msra.mxu0 %v540
        %561 = vmatpush.bf16.msra.mxu0 %v539
        %562 = vmatmul.bf16.gmra.mxu0 %v549
        %v563 = vpop.f32.mrf.mxu0
        %v564 = vadd.f32 0.0, %v563
        %v565 = vpop.f32.mrf.mxu0
        %v566 = vadd.f32 0.0, %v565
        %567 = vmatmul.bf16.gmra.mxu0 %v552
        %v568 = vpop.f32.mrf.mxu0
        %v569 = vadd.f32 0.0, %v568
        %v570 = vpop.f32.mrf.mxu0
        %v571 = vadd.f32 0.0, %v570
        %572 = vdwg.mxu0
        %v577 = vunpack.c.l.b16 %v503
        %v578 = vunpack.c.l.b16 %v504
        %v579 = vunpack.c.l.b16 %v505
        %v580 = vunpack.c.l.b16 %v506
        %v581 = vpack.c.b16 %v578, %v577
        %v582 = vpack.c.b16 %v580, %v579
        %v584 = vsel %vm547, %v581, 0
        %v587 = vsel %vm547, %v582, 0
        %589 = vmatpush.bf16.msra.mxu0 0
        %590 = vmatpush.bf16.msra.mxu0 0
        %591 = vmatpush.bf16.msra.mxu0 0
        %592 = vmatpush.bf16.msra.mxu0 0
        %593 = vmatpush.bf16.msra.mxu0 %v478
        %594 = vmatpush.bf16.msra.mxu0 %v477
        %595 = vmatpush.bf16.msra.mxu0 %v476
        %596 = vmatpush.bf16.msra.mxu0 %v475
        %597 = vmatmul.bf16.gmra.mxu0 %v584
        %v598 = vpop.f32.mrf.mxu0
        %v599 = vadd.f32 %v564, %v598
        %v600 = vpop.f32.mrf.mxu0
        %v601 = vadd.f32 %v566, %v600
        %602 = vmatmul.bf16.gmra.mxu0 %v587
        %v603 = vpop.f32.mrf.mxu0
        %v604 = vadd.f32 %v569, %v603
        %v605 = vpop.f32.mrf.mxu0
        %v606 = vadd.f32 %v571, %v605
        %607 = vdwg.mxu0
        %s608 = scalar_lea.vmem %s2, 32
        %v609 = vld [vmem:[%s608] sm:$0xf]
        %v610 = vld [vmem:[%s608 + $0x4] sm:$0xf]
        %v611 = vld [vmem:[%s608 + $0x8] sm:$0xf]
        %v612 = vld [vmem:[%s608 + $0xc] sm:$0xf]
        %v617 = vunpack.c.l.b16 %v609
        %v618 = vunpack.c.l.b16 %v610
        %v619 = vunpack.c.l.b16 %v611
        %v620 = vunpack.c.l.b16 %v612
        %v621 = vpack.c.b16 %v618, %v617
        %v622 = vpack.c.b16 %v620, %v619
        %623 = vrot.lane.b32.xlu0 %v475, 126
        %v624 = vpop.permute.xlu0 %623
        %625 = vrot.lane.b32.xlu0 %v499, 126
        %v626 = vpop.permute.xlu0 %625
        %vm627 = vcmask 1031168
        %v628 = vsel %vm627, %v624, %v626
        %vm630 = vcmask 130048
        %v632 = vsel %vm630, %v621, 0
        %v635 = vsel %vm630, %v622, 0
        %637 = vmatpush.bf16.msra.mxu0 0
        %638 = vmatpush.bf16.msra.mxu0 0
        %639 = vmatpush.bf16.msra.mxu0 0
        %640 = vmatpush.bf16.msra.mxu0 0
        %641 = vmatpush.bf16.msra.mxu0 0
        %642 = vmatpush.bf16.msra.mxu0 0
        %643 = vmatpush.bf16.msra.mxu0 0
        %644 = vmatpush.bf16.msra.mxu0 %v628
        %645 = vmatmul.bf16.gmra.mxu0 %v632
        %v646 = vpop.f32.mrf.mxu0
        %v647 = vadd.f32 0.0, %v646
        %v648 = vpop.f32.mrf.mxu0
        %v649 = vadd.f32 0.0, %v648
        %650 = vmatmul.bf16.gmra.mxu0 %v635
        %v651 = vpop.f32.mrf.mxu0
        %v652 = vadd.f32 0.0, %v651
        %v653 = vpop.f32.mrf.mxu0
        %v654 = vadd.f32 0.0, %v653
        %655 = vdwg.mxu0
        %v656 = vadd.f32 %v599, %v647
        %v657 = vadd.f32 %v601, %v649
        %v658 = vadd.f32 %v604, %v652
        %v659 = vadd.f32 %v606, %v654
        %v660 = vld [vmem:[%s3] sm:$0xff]
        %v661 = vld [vmem:[%s3 + $0x8] sm:$0xff]
        %v662 = vld [vmem:[%s3 + $0x10] sm:$0xff]
        %v663 = vld [vmem:[%s3 + $0x18] sm:$0xff]
        %665 = vset.pattern.permute.xlu0 0
        %666 = vperm.xlu0 %665, %v660
        %v667 = vpop.permute.xlu0 %666
        %670 = vset.pattern.permute.xlu0 0
        %671 = vperm.xlu0 %670, %v661
        %v672 = vpop.permute.xlu0 %671
        %675 = vset.pattern.permute.xlu0 0
        %676 = vperm.xlu0 %675, %v662
        %v677 = vpop.permute.xlu0 %676
        %680 = vset.pattern.permute.xlu0 0
        %681 = vperm.xlu0 %680, %v663
        %v682 = vpop.permute.xlu0 %681
        %v684 = vadd.f32 %v656, %v667
        %v685 = vadd.f32 %v657, %v672
        %v686 = vadd.f32 %v658, %v677
        %v687 = vadd.f32 %v659, %v682
        %v688 = vpack.c.bf16 %v684, %v684
        %v689 = vpack.c.bf16 %v685, %v685
        %v690 = vpack.c.bf16 %v686, %v686
        %v691 = vpack.c.bf16 %v687, %v687
        %692 = vst [vmem:[%s432] sm:$0xf] %v688
        %693 = vst [vmem:[%s432 + $0x4] sm:$0xf] %v689
        %694 = vst [vmem:[%s432 + $0x8] sm:$0xf] %v690
        %695 = vst [vmem:[%s432 + $0xc] sm:$0xf] %v691
        %v696 = vlaneseq
        %v697 = vand.u32 %v696, 127
        %s698 = smul.u32 %s22, 128
        %v699 = vstv %s698
        %v700 = vadd.s32 %v697, %v699
        %vm701 = vcmp.lt.s32.totalorder %v700, 8
        %v702 = vsel %vm701, 1, 0
        %vm703 = vcmp.eq.s32.totalorder %v702, 1
        %v704 = vsel %vm703, %v684, 0.0
        %v705 = vsel %vm703, %v685, 0.0
        %v706 = vsel %vm703, %v686, 0.0
        %v707 = vsel %vm703, %v687, 0.0
        %708 = vadd.xlane.f32.xlu0 %v704
        %v709 = vpop.xlane.xlu0 %708
        %710 = vadd.xlane.f32.xlu0 %v705
        %v711 = vpop.xlane.xlu0 %710
        %712 = vadd.xlane.f32.xlu0 %v706
        %v713 = vpop.xlane.xlu0 %712
        %714 = vadd.xlane.f32.xlu0 %v707
        %v715 = vpop.xlane.xlu0 %714
        %v716 = vmul.f32 %v704, %v704
        %v717 = vmul.f32 %v705, %v705
        %v718 = vmul.f32 %v706, %v706
        %v719 = vmul.f32 %v707, %v707
        %720 = vadd.xlane.f32.xlu0 %v716
        %v721 = vpop.xlane.xlu0 %720
        %722 = vadd.xlane.f32.xlu0 %v717
        %v723 = vpop.xlane.xlu0 %722
        %724 = vadd.xlane.f32.xlu0 %v718
        %v725 = vpop.xlane.xlu0 %724
        %726 = vadd.xlane.f32.xlu0 %v719
        %v727 = vpop.xlane.xlu0 %726
        %vm728 = vcmask 7168
        %v729 = vsel %vm728, %v709, %v721
        %v730 = vsel %vm728, %v711, %v723
        %v731 = vsel %vm728, %v713, %v725
        %v732 = vsel %vm728, %v715, %v727
        %vm733 = vcmask 15360
        %734 = vst.msk [vmem:[%s441] sm:$0xff] %vm733, %v729
        %735 = vst.msk [vmem:[%s441 + $0x8] sm:$0xff] %vm733, %v730
        %736 = vst.msk [vmem:[%s441 + $0x10] sm:$0xff] %vm733, %v731
        %737 = vst.msk [vmem:[%s441 + $0x18] sm:$0xff] %vm733, %v732
        %p738 = scmp.lt.s32.totalorder %s21, 1
        %s739 = scalar_select %p738, %s21, 1
        %p740 = scmp.lt.s32.totalorder %s22, 0
        %s741 = scalar_select %p740, %s22, 0
        %s742 = smul.addr %s739, 4
        %s743 = sadd.s32 %s741, %s742
        %s744 = smul.addr %s743, 4
        %s745 = scalar_lea.vmem %s4, %s744
        %p746 = scmp.lt.s32.totalorder %s21, 1
        %s747 = scalar_select %p746, %s21, 1
        %p748 = scmp.lt.s32.totalorder %s22, 0
        %s749 = scalar_select %p748, %s22, 0
        %s750 = smul.addr %s749, 4
        %s751 = smul.addr %s747, 4
        %s752 = sadd.s32 %s750, %s751
        %s753 = smul.addr %s752, 8
        %s754 = scalar_lea.vmem %s5, %s753
        // Predicated region
        $region119: #{forward.13} parent=109 // pred_check
          %p755 = pneg %p149
        $region120: #{forward.13} parent=109 // pred_check_branch
          %757 = sbr.rel (%p755) target = $region122
        $region121: #{forward.13} parent=109 // pred_region
          _
        $region122: #{forward.13} parent=109 // pred_fallthru
          _
        // Predicated region
        $region123: #{forward.13} parent=109 // pred_check
          %p758 = pneg %p177
        $region124: #{forward.13} parent=109 // pred_check_branch
          %760 = sbr.rel (%p758) target = $region126
        $region125: #{forward.13} parent=109 // pred_region
          _
        $region126: #{forward.13} parent=109 // pred_fallthru
          _
      $region110: #{forward.13} parent=5 // pred_fallthru
        _
      %p761 = scmp.le.s32.totalorder 2, %s12
      // Predicated region
      $region127: #{forward.13} parent=5 // pred_check
        %p762 = pneg %p761
      $region128: #{forward.13} parent=5 // pred_check_branch
        %764 = sbr.rel (%p762) target = $region130
      $region129: #{forward.13} parent=5 // pred_region
        %s765 = ssub.s32 %s12, 2
        // Predicated region
        $region131: #{forward.13} parent=129 // pred_check
          %p766 = pneg %p155
        $region132: #{forward.13} parent=129 // pred_check_branch
          %768 = sbr.rel (%p766) target = $region134
        $region133: #{forward.13} parent=129 // pred_region
          %p769 = scmp.lt.s32.totalorder %s23, 1
          %s770 = scalar_select %p769, %s23, 1
          %p771 = scmp.lt.s32.totalorder %s24, 0
          %s772 = scalar_select %p771, %s24, 0
          %s773 = smul.addr %s770, 4
          %s774 = sadd.s32 %s772, %s773
          %s775 = smul.addr %s774, 4
          %s776 = scalar_lea.vmem %s4, %s775
        $region134: #{forward.13} parent=129 // pred_fallthru
          _
        // Predicated region
        $region135: #{forward.13} parent=129 // pred_check
          %p777 = pneg %p183
        $region136: #{forward.13} parent=129 // pred_check_branch
          %779 = sbr.rel (%p777) target = $region138
        $region137: #{forward.13} parent=129 // pred_region
          %p780 = scmp.lt.s32.totalorder %s23, 1
          %s781 = scalar_select %p780, %s23, 1
          %p782 = scmp.lt.s32.totalorder %s24, 0
          %s783 = scalar_select %p782, %s24, 0
          %s784 = smul.addr %s783, 4
          %s785 = smul.addr %s781, 4
          %s786 = sadd.s32 %s784, %s785
          %s787 = smul.addr %s786, 8
          %s788 = scalar_lea.vmem %s5, %s787
        $region138: #{forward.13} parent=129 // pred_fallthru
          _
      $region130: #{forward.13} parent=5 // pred_fallthru
        _
    $region6: #{forward.13} parent=1 // loop_footer
      %s16 = sadd.s32 1, %s12
    $region7: #{forward.13} parent=1 // loop_footer_branch
      %11 = sbr.rel target = $region3
    $region8: #{forward.13} parent=1 // loop_exit
      _

// kernel: forward.15
$region0: #{forward.15}
  #allocation0 [shape = 'u32[]', space=smem, size = 0x4, offset = 0x4, fixed_abs, tag = 'smem constant byte address 0x4 - core index']
  #allocation1 [shape = 'u32[72,128]{1,0:T(1,128)}', space=vmem, size = 0x9000, scoped, tag = 'internal scratch']
  %s0 = inlined_call_operand.vmem [shape: bf16[2,128,256], index: 0, kind: input, shape index: {}, may-alias: {0,1}]
  %s1 = inlined_call_operand.vmem [shape: bf16[2,128,256], index: 1, kind: input, shape index: {}, may-alias: {0,1}]
  %s2 = inlined_call_operand.vmem [shape: bf16[3,64,128], index: 2, kind: input, shape index: {}]
  %s3 = inlined_call_operand.vmem [shape: f32[64,1], index: 3, kind: input, shape index: {}]
  %s4 = inlined_call_operand.vmem [shape: bf16[2,64,128], index: 4, kind: output, shape index: {0}]
  %s5 = inlined_call_operand.vmem [shape: f32[2,1,64,2], index: 5, kind: output, shape index: {1}]
  %6 = xla_tuple %s4, %s5
  %s7 = sld [smem:[#allocation0]]
  $region139: #{forward.15} parent=0
    _
  %s9 = ssub.s32 1, %s7
  %s10 = scalar_select 0, %s9, %s7
  $region1: #{forward.15} parent=0
    #allocation2 [shape = 'u8[65536]{0}', space=vmem, size = 0x10000, scoped, tag = 'input window, operand 0']
    #allocation3 [shape = 'u8[65536]{0}', space=vmem, size = 0x10000, scoped, tag = 'input window, operand 1']
    loop: start=0, step=1, limit=4
    $region2: #{forward.15} parent=1 // loop_pre_header
      _
    $region3: #{forward.15} parent=1 // loop_header
      %s12 = sphi 0, %s16
      %p13 = scmp.ge.s32.totalorder %s12, 4
      %s19 = sphi 0, %s31
      %s20 = sphi 0, %s27
      %s21 = sphi 0, %s19
      %s22 = sphi 0, %s20
      %s23 = sphi 0, %s21
      %s24 = sphi 0, %s22
      %s36 = sphi 0, %s38
      %s39 = sphi 0, %s36
      %s40 = sphi 0, %s39
      %s56 = sphi 0, %s40
      %s66 = sphi 0, %s68
      %s69 = sphi 0, %s66
      %s70 = sphi 0, %s69
      %s86 = sphi 0, %s70
      %s90 = sphi 0, %s90
      %s92 = sphi 0, %s90
      %s93 = sphi 0, %s92
      %s107 = sphi 0, %s93
      %s111 = sphi 0, %s111
      %s113 = sphi 0, %s111
      %s114 = sphi 0, %s113
      %s128 = sphi 0, %s114
      %s136 = sphi 0, %s138
      %s139 = sphi 0, %s136
      %s140 = sphi 0, %s139
      %s156 = sphi 0, %s140
      %s164 = sphi 0, %s166
      %s167 = sphi 0, %s164
      %s168 = sphi 0, %s167
      %s184 = sphi 0, %s168
    $region4: #{forward.15} parent=1 // loop_header_branch
      %15 = sbr.rel (%p13) target = $region8
    $region5: #{forward.15} parent=1 // loop_body
      %s17 = ssub.s32 %s12, 1
      %s18 = ssub.s32 %s12, 2
      %s25 = sadd.s32 1, %s20
      %p26 = scmp.ge.s32.totalorder %s25, 1
      %s27 = scalar_select %p26, 0, %s25
      %s28 = sadd.s32 1, %s19
      %s29 = scalar_select %p26, %s28, %s19
      %p30 = scmp.ge.s32.totalorder %s29, 2
      %s31 = scalar_select %p30, 0, %s29
      %s32 = ssub.s32 %s19, %s31
      %s33 = ssub.s32 %s20, %s27
      %s34 = sor.u32 %s32, %s33
      %p35 = scmp.eq.s32.totalorder %s34, 0
      %s37 = sadd.s32 %s36, 1
      %s38 = scalar_select %p35, %s36, %s37
      %p41 = pneg %p35
      %p42 = scmp.eq.s32.totalorder %s12, 1
      %p43 = por %p41, %p42
      %p44 = scmp.ne.s32.totalorder %s36, %s39
      %p45 = scmp.eq.s32.totalorder %s12, 0
      %p46 = por %p44, %p45
      %p47 = scmp.ne.s32.totalorder %s36, %s39
      %p48 = scmp.eq.s32.totalorder %s17, 1
      %p49 = por %p47, %p48
      %p50 = scmp.ne.s32.totalorder %s39, %s40
      %p51 = scmp.eq.s32.totalorder %s17, 0
      %p52 = por %p50, %p51
      %p53 = scmp.ne.s32.totalorder %s39, %s40
      %p54 = scmp.eq.s32.totalorder %s18, 1
      %p55 = por %p53, %p54
      %p57 = scmp.ne.s32.totalorder %s40, %s56
      %p58 = scmp.eq.s32.totalorder %s18, 0
      %p59 = por %p57, %p58
      %s60 = sadd.s32 %s20, 1
      %s61 = sadd.s32 %s27, 1
      %s62 = ssub.s32 %s19, %s31
      %s63 = ssub.s32 %s60, %s61
      %s64 = sor.u32 %s62, %s63
      %p65 = scmp.eq.s32.totalorder %s64, 0
      %s67 = sadd.s32 %s66, 1
      %s68 = scalar_select %p65, %s66, %s67
      %p71 = pneg %p65
      %p72 = scmp.eq.s32.totalorder %s12, 1
      %p73 = por %p71, %p72
      %p74 = scmp.ne.s32.totalorder %s66, %s69
      %p75 = scmp.eq.s32.totalorder %s12, 0
      %p76 = por %p74, %p75
      %p77 = scmp.ne.s32.totalorder %s66, %s69
      %p78 = scmp.eq.s32.totalorder %s17, 1
      %p79 = por %p77, %p78
      %p80 = scmp.ne.s32.totalorder %s69, %s70
      %p81 = scmp.eq.s32.totalorder %s17, 0
      %p82 = por %p80, %p81
      %p83 = scmp.ne.s32.totalorder %s69, %s70
      %p84 = scmp.eq.s32.totalorder %s18, 1
      %p85 = por %p83, %p84
      %p87 = scmp.ne.s32.totalorder %s70, %s86
      %p88 = scmp.eq.s32.totalorder %s18, 0
      %p89 = por %p87, %p88
      %s91 = sadd.s32 %s90, 1
      %p94 = scmp.eq.s32.totalorder %s12, 1
      %p95 = scmp.ne.s32.totalorder %s90, %s92
      %p96 = scmp.eq.s32.totalorder %s12, 0
      %p97 = por %p95, %p96
      %p98 = scmp.ne.s32.totalorder %s90, %s92
      %p99 = scmp.eq.s32.totalorder %s17, 1
      %p100 = por %p98, %p99
      %p101 = scmp.ne.s32.totalorder %s92, %s93
      %p102 = scmp.eq.s32.totalorder %s17, 0
      %p103 = por %p101, %p102
      %p104 = scmp.ne.s32.totalorder %s92, %s93
      %p105 = scmp.eq.s32.totalorder %s18, 1
      %p106 = por %p104, %p105
      %p108 = scmp.ne.s32.totalorder %s93, %s107
      %p109 = scmp.eq.s32.totalorder %s18, 0
      %p110 = por %p108, %p109
      %s112 = sadd.s32 %s111, 1
      %p115 = scmp.eq.s32.totalorder %s12, 1
      %p116 = scmp.ne.s32.totalorder %s111, %s113
      %p117 = scmp.eq.s32.totalorder %s12, 0
      %p118 = por %p116, %p117
      %p119 = scmp.ne.s32.totalorder %s111, %s113
      %p120 = scmp.eq.s32.totalorder %s17, 1
      %p121 = por %p119, %p120
      %p122 = scmp.ne.s32.totalorder %s113, %s114
      %p123 = scmp.eq.s32.totalorder %s17, 0
      %p124 = por %p122, %p123
      %p125 = scmp.ne.s32.totalorder %s113, %s114
      %p126 = scmp.eq.s32.totalorder %s18, 1
      %p127 = por %p125, %p126
      %p129 = scmp.ne.s32.totalorder %s114, %s128
      %p130 = scmp.eq.s32.totalorder %s18, 0
      %p131 = por %p129, %p130
      %s132 = ssub.s32 %s19, %s31
      %s133 = ssub.s32 %s20, %s27
      %s134 = sor.u32 %s132, %s133
      %p135 = scmp.eq.s32.totalorder %s134, 0
      %s137 = sadd.s32 %s136, 1
      %s138 = scalar_select %p135, %s136, %s137
      %p141 = pneg %p135
      %p142 = scmp.eq.s32.totalorder %s12, 1
      %p143 = por %p141, %p142
      %p144 = scmp.ne.s32.totalorder %s136, %s139
      %p145 = scmp.eq.s32.totalorder %s12, 0
      %p146 = por %p144, %p145
      %p147 = scmp.ne.s32.totalorder %s136, %s139
      %p148 = scmp.eq.s32.totalorder %s17, 1
      %p149 = por %p147, %p148
      %p150 = scmp.ne.s32.totalorder %s139, %s140
      %p151 = scmp.eq.s32.totalorder %s17, 0
      %p152 = por %p150, %p151
      %p153 = scmp.ne.s32.totalorder %s139, %s140
      %p154 = scmp.eq.s32.totalorder %s18, 1
      %p155 = por %p153, %p154
      %p157 = scmp.ne.s32.totalorder %s140, %s156
      %p158 = scmp.eq.s32.totalorder %s18, 0
      %p159 = por %p157, %p158
      %s160 = ssub.s32 %s19, %s31
      %s161 = ssub.s32 %s20, %s27
      %s162 = sor.u32 %s160, %s161
      %p163 = scmp.eq.s32.totalorder %s162, 0
      %s165 = sadd.s32 %s164, 1
      %s166 = scalar_select %p163, %s164, %s165
      %p169 = pneg %p163
      %p170 = scmp.eq.s32.totalorder %s12, 1
      %p171 = por %p169, %p170
      %p172 = scmp.ne.s32.totalorder %s164, %s167
      %p173 = scmp.eq.s32.totalorder %s12, 0
      %p174 = por %p172, %p173
      %p175 = scmp.ne.s32.totalorder %s164, %s167
      %p176 = scmp.eq.s32.totalorder %s17, 1
      %p177 = por %p175, %p176
      %p178 = scmp.ne.s32.totalorder %s167, %s168
      %p179 = scmp.eq.s32.totalorder %s17, 0
      %p180 = por %p178, %p179
      %p181 = scmp.ne.s32.totalorder %s167, %s168
      %p182 = scmp.eq.s32.totalorder %s18, 1
      %p183 = por %p181, %p182
      %p185 = scmp.ne.s32.totalorder %s168, %s184
      %p186 = scmp.eq.s32.totalorder %s18, 0
      %p187 = por %p185, %p186
      %p188 = scmp.le.s32.totalorder 1, %s12
      %p189 = scmp.lt.s32.totalorder %s12, 3
      %p190 = pnand %p188, %p189
      %p191 = pneg %p190
      // Predicated region
      $region9: #{forward.15} parent=5 // pred_check
        _
      $region10: #{forward.15} parent=5 // pred_check_branch
        %193 = sbr.rel (%p190) target = $region12
      $region11: #{forward.15} parent=5 // pred_region
        %s194 = ssub.s32 %s12, 1
        // Predicated region
        $region13: #{forward.15} parent=11 // pred_check
          %p195 = pneg %p103
        $region14: #{forward.15} parent=11 // pred_check_branch
          %197 = sbr.rel (%p195) target = $region16
        $region15: #{forward.15} parent=11 // pred_region
          _
        $region16: #{forward.15} parent=11 // pred_fallthru
          _
        // Predicated region
        $region17: #{forward.15} parent=11 // pred_check
          %p198 = pneg %p124
        $region18: #{forward.15} parent=11 // pred_check_branch
          %200 = sbr.rel (%p198) target = $region20
        $region19: #{forward.15} parent=11 // pred_region
          _
        $region20: #{forward.15} parent=11 // pred_fallthru
          _
      $region12: #{forward.15} parent=5 // pred_fallthru
        _
      %p201 = scmp.lt.s32.totalorder %s12, 2
      // Predicated region
      $region21: #{forward.15} parent=5 // pred_check
        %p202 = pneg %p201
      $region22: #{forward.15} parent=5 // pred_check_branch
        %204 = sbr.rel (%p202) target = $region24
      $region23: #{forward.15} parent=5 // pred_region
        // Predicated region
        $region25: #{forward.15} parent=23 // pred_check
          %p205 = pneg %p46
        $region26: #{forward.15} parent=23 // pred_check_branch
          %207 = sbr.rel (%p205) target = $region28
        $region27: #{forward.15} parent=23 // pred_region
          %s208 = sand.u32 %s36, 1
          %s209 = sand.u32 %s36, 1
          %s210 = smul.addr %s209, 64
          %s211 = scalar_lea.vmem [#allocation2], %s210
          %s212 = smul.addr %s19, 32
          %s213 = sadd.s32 %s20, %s212
          %s214 = smul.addr %s213, 4
          %s215 = scalar_lea.vmem %s0, %s214
          // Predicated region
          $region29: #{forward.15} parent=27 // pred_check
            _
          $region30: #{forward.15} parent=27 // pred_check_branch
            %217 = sbr.rel (0) target = $region32
          $region31: #{forward.15} parent=27 // pred_region
            // Predicated region
            $region33: #{forward.15} parent=31 // pred_check
              _
            $region34: #{forward.15} parent=31 // pred_check_branch
              %219 = sbr.rel target = $region36
            $region35: #{forward.15} parent=31 // pred_region
              // Predicated region
              $region48: #{forward.15} parent=35 // pred_check
                _
              $region49: #{forward.15} parent=35 // pred_check_branch
                %265 = sbr.rel (0) target = $region51
              $region50: #{forward.15} parent=35 // pred_region
                loop: start=0, step=1, limit=1
                $region52: #{forward.15} parent=50 // loop_pre_header
                  _
                $region53: #{forward.15} parent=50 // loop_header
                  %s267 = sphi 0, %s271
                  %p268 = scmp.ge.s32.totalorder %s267, 1
                  %s272 = sphi %s215, %s215
                  %s273 = sphi %s211, %s211
                $region54: #{forward.15} parent=50 // loop_header_branch
                  %270 = sbr.rel (%p268) target = $region58
                $region55: #{forward.15} parent=50 // loop_body
                  _
                $region56: #{forward.15} parent=50 // loop_footer
                  %s271 = sadd.s32 1, %s267
                $region57: #{forward.15} parent=50 // loop_footer_branch
                  %266 = sbr.rel target = $region53
                $region58: #{forward.15} parent=50 // loop_exit
                  _
                %s275 = ssub.s32 16, 1
                loop: start=0, step=1, limit=1
                $region59: #{forward.15} parent=50 // loop_pre_header
                  _
                $region60: #{forward.15} parent=50 // loop_header
                  %s277 = sphi 0, %s281
                  %p278 = scmp.ge.s32.totalorder %s277, 1
                  %s282 = sphi %s215, %s215
                  %s283 = sphi %s211, %s211
                $region61: #{forward.15} parent=50 // loop_header_branch
                  %280 = sbr.rel (%p278) target = $region65
                $region62: #{forward.15} parent=50 // loop_body
                  %v284 = vld [vmem:[%s282] sm:%s275]
                  %285 = vst [vmem:[%s283] sm:%s275] %v284
                  %v286 = vld [vmem:[%s282 + $0x8] sm:%s275]
                  %287 = vst [vmem:[%s283 + $0x4] sm:%s275] %v286
                  %v288 = vld [vmem:[%s282 + $0x10] sm:%s275]
                  %289 = vst [vmem:[%s283 + $0x8] sm:%s275] %v288
                  %v290 = vld [vmem:[%s282 + $0x18] sm:%s275]
                  %291 = vst [vmem:[%s283 + $0xc] sm:%s275] %v290
                  %v292 = vld [vmem:[%s282 + $0x20] sm:%s275]
                  %293 = vst [vmem:[%s283 + $0x10] sm:%s275] %v292
                  %v294 = vld [vmem:[%s282 + $0x28] sm:%s275]
                  %295 = vst [vmem:[%s283 + $0x14] sm:%s275] %v294
                  %v296 = vld [vmem:[%s282 + $0x30] sm:%s275]
                  %297 = vst [vmem:[%s283 + $0x18] sm:%s275] %v296
                  %v298 = vld [vmem:[%s282 + $0x38] sm:%s275]
                  %299 = vst [vmem:[%s283 + $0x1c] sm:%s275] %v298
                  %v300 = vld [vmem:[%s282 + $0x40] sm:%s275]
                  %301 = vst [vmem:[%s283 + $0x20] sm:%s275] %v300
                  %v302 = vld [vmem:[%s282 + $0x48] sm:%s275]
                  %303 = vst [vmem:[%s283 + $0x24] sm:%s275] %v302
                  %v304 = vld [vmem:[%s282 + $0x50] sm:%s275]
                  %305 = vst [vmem:[%s283 + $0x28] sm:%s275] %v304
                  %v306 = vld [vmem:[%s282 + $0x58] sm:%s275]
                  %307 = vst [vmem:[%s283 + $0x2c] sm:%s275] %v306
                  %v308 = vld [vmem:[%s282 + $0x60] sm:%s275]
                  %309 = vst [vmem:[%s283 + $0x30] sm:%s275] %v308
                  %v310 = vld [vmem:[%s282 + $0x68] sm:%s275]
                  %311 = vst [vmem:[%s283 + $0x34] sm:%s275] %v310
                  %v312 = vld [vmem:[%s282 + $0x70] sm:%s275]
                  %313 = vst [vmem:[%s283 + $0x38] sm:%s275] %v312
                  %v314 = vld [vmem:[%s282 + $0x78] sm:%s275]
                  %315 = vst [vmem:[%s283 + $0x3c] sm:%s275] %v314
                $region63: #{forward.15} parent=50 // loop_footer
                  %s281 = sadd.s32 1, %s277
                $region64: #{forward.15} parent=50 // loop_footer_branch
                  %276 = sbr.rel target = $region60
                $region65: #{forward.15} parent=50 // loop_exit
                  _
              $region51: #{forward.15} parent=35 // pred_fallthru
                _
            $region36: #{forward.15} parent=31 // pred_fallthru
              _
            // Predicated region
            $region37: #{forward.15} parent=31 // pred_check
              _
            $region38: #{forward.15} parent=31 // pred_check_branch
              %221 = sbr.rel (0) target = $region40
            $region39: #{forward.15} parent=31 // pred_region
              %s223 = ssub.s32 16, 1
              loop: start=0, step=1, limit=1
              $region41: #{forward.15} parent=39 // loop_pre_header
                _
              $region42: #{forward.15} parent=39 // loop_header
                %s225 = sphi 0, %s229
                %p226 = scmp.ge.s32.totalorder %s225, 1
                %s230 = sphi %s215, %s215
                %s231 = sphi %s211, %s211
              $region43: #{forward.15} parent=39 // loop_header_branch
                %228 = sbr.rel (%p226) target = $region47
              $region44: #{forward.15} parent=39 // loop_body
                %v232 = vld [vmem:[%s230] sm:%s223]
                %233 = vst [vmem:[%s231] sm:%s223] %v232
                %v234 = vld [vmem:[%s230 + $0x8] sm:%s223]
                %235 = vst [vmem:[%s231 + $0x4] sm:%s223] %v234
                %v236 = vld [vmem:[%s230 + $0x10] sm:%s223]
                %237 = vst [vmem:[%s231 + $0x8] sm:%s223] %v236
                %v238 = vld [vmem:[%s230 + $0x18] sm:%s223]
                %239 = vst [vmem:[%s231 + $0xc] sm:%s223] %v238
                %v240 = vld [vmem:[%s230 + $0x20] sm:%s223]
                %241 = vst [vmem:[%s231 + $0x10] sm:%s223] %v240
                %v242 = vld [vmem:[%s230 + $0x28] sm:%s223]
                %243 = vst [vmem:[%s231 + $0x14] sm:%s223] %v242
                %v244 = vld [vmem:[%s230 + $0x30] sm:%s223]
                %245 = vst [vmem:[%s231 + $0x18] sm:%s223] %v244
                %v246 = vld [vmem:[%s230 + $0x38] sm:%s223]
                %247 = vst [vmem:[%s231 + $0x1c] sm:%s223] %v246
                %v248 = vld [vmem:[%s230 + $0x40] sm:%s223]
                %249 = vst [vmem:[%s231 + $0x20] sm:%s223] %v248
                %v250 = vld [vmem:[%s230 + $0x48] sm:%s223]
                %251 = vst [vmem:[%s231 + $0x24] sm:%s223] %v250
                %v252 = vld [vmem:[%s230 + $0x50] sm:%s223]
                %253 = vst [vmem:[%s231 + $0x28] sm:%s223] %v252
                %v254 = vld [vmem:[%s230 + $0x58] sm:%s223]
                %255 = vst [vmem:[%s231 + $0x2c] sm:%s223] %v254
                %v256 = vld [vmem:[%s230 + $0x60] sm:%s223]
                %257 = vst [vmem:[%s231 + $0x30] sm:%s223] %v256
                %v258 = vld [vmem:[%s230 + $0x68] sm:%s223]
                %259 = vst [vmem:[%s231 + $0x34] sm:%s223] %v258
                %v260 = vld [vmem:[%s230 + $0x70] sm:%s223]
                %261 = vst [vmem:[%s231 + $0x38] sm:%s223] %v260
                %v262 = vld [vmem:[%s230 + $0x78] sm:%s223]
                %263 = vst [vmem:[%s231 + $0x3c] sm:%s223] %v262
              $region45: #{forward.15} parent=39 // loop_footer
                %s229 = sadd.s32 1, %s225
              $region46: #{forward.15} parent=39 // loop_footer_branch
                %224 = sbr.rel target = $region42
              $region47: #{forward.15} parent=39 // loop_exit
                _
            $region40: #{forward.15} parent=31 // pred_fallthru
              _
          $region32: #{forward.15} parent=27 // pred_fallthru
            _
          %316 = vnop
        $region28: #{forward.15} parent=23 // pred_fallthru
          _
        // Predicated region
        $region66: #{forward.15} parent=23 // pred_check
          %p317 = pneg %p76
        $region67: #{forward.15} parent=23 // pred_check_branch
          %319 = sbr.rel (%p317) target = $region69
        $region68: #{forward.15} parent=23 // pred_region
          %s320 = sand.u32 %s66, 1
          %s321 = sand.u32 %s66, 1
          %s322 = smul.addr %s321, 64
          %s323 = scalar_lea.vmem [#allocation3], %s322
          %s324 = sadd.s32 %s20, 1
          %s325 = smul.addr %s19, 32
          %s326 = sadd.s32 %s324, %s325
          %s327 = smul.addr %s326, 4
          %s328 = scalar_lea.vmem %s1, %s327
          // Predicated region
          $region70: #{forward.15} parent=68 // pred_check
            _
          $region71: #{forward.15} parent=68 // pred_check_branch
            %330 = sbr.rel (0) target = $region73
          $region72: #{forward.15} parent=68 // pred_region
            // Predicated region
            $region74: #{forward.15} parent=72 // pred_check
              _
            $region75: #{forward.15} parent=72 // pred_check_branch
              %332 = sbr.rel target = $region77
            $region76: #{forward.15} parent=72 // pred_region
              // Predicated region
              $region89: #{forward.15} parent=76 // pred_check
                _
              $region90: #{forward.15} parent=76 // pred_check_branch
                %378 = sbr.rel (0) target = $region92
              $region91: #{forward.15} parent=76 // pred_region
                loop: start=0, step=1, limit=1
                $region93: #{forward.15} parent=91 // loop_pre_header
                  _
                $region94: #{forward.15} parent=91 // loop_header
                  %s380 = sphi 0, %s384
                  %p381 = scmp.ge.s32.totalorder %s380, 1
                  %s385 = sphi %s328, %s328
                  %s386 = sphi %s323, %s323
                $region95: #{forward.15} parent=91 // loop_header_branch
                  %383 = sbr.rel (%p381) target = $region99
                $region96: #{forward.15} parent=91 // loop_body
                  _
                $region97: #{forward.15} parent=91 // loop_footer
                  %s384 = sadd.s32 1, %s380
                $region98: #{forward.15} parent=91 // loop_footer_branch
                  %379 = sbr.rel target = $region94
                $region99: #{forward.15} parent=91 // loop_exit
                  _
                %s388 = ssub.s32 16, 1
                loop: start=0, step=1, limit=1
                $region100: #{forward.15} parent=91 // loop_pre_header
                  _
                $region101: #{forward.15} parent=91 // loop_header
                  %s390 = sphi 0, %s394
                  %p391 = scmp.ge.s32.totalorder %s390, 1
                  %s395 = sphi %s328, %s328
                  %s396 = sphi %s323, %s323
                $region102: #{forward.15} parent=91 // loop_header_branch
                  %393 = sbr.rel (%p391) target = $region106
                $region103: #{forward.15} parent=91 // loop_body
                  %v397 = vld [vmem:[%s395] sm:%s388]
                  %398 = vst [vmem:[%s396] sm:%s388] %v397
                  %v399 = vld [vmem:[%s395 + $0x8] sm:%s388]
                  %400 = vst [vmem:[%s396 + $0x4] sm:%s388] %v399
                  %v401 = vld [vmem:[%s395 + $0x10] sm:%s388]
                  %402 = vst [vmem:[%s396 + $0x8] sm:%s388] %v401
                  %v403 = vld [vmem:[%s395 + $0x18] sm:%s388]
                  %404 = vst [vmem:[%s396 + $0xc] sm:%s388] %v403
                  %v405 = vld [vmem:[%s395 + $0x20] sm:%s388]
                  %406 = vst [vmem:[%s396 + $0x10] sm:%s388] %v405
                  %v407 = vld [vmem:[%s395 + $0x28] sm:%s388]
                  %408 = vst [vmem:[%s396 + $0x14] sm:%s388] %v407
                  %v409 = vld [vmem:[%s395 + $0x30] sm:%s388]
                  %410 = vst [vmem:[%s396 + $0x18] sm:%s388] %v409
                  %v411 = vld [vmem:[%s395 + $0x38] sm:%s388]
                  %412 = vst [vmem:[%s396 + $0x1c] sm:%s388] %v411
                  %v413 = vld [vmem:[%s395 + $0x40] sm:%s388]
                  %414 = vst [vmem:[%s396 + $0x20] sm:%s388] %v413
                  %v415 = vld [vmem:[%s395 + $0x48] sm:%s388]
                  %416 = vst [vmem:[%s396 + $0x24] sm:%s388] %v415
                  %v417 = vld [vmem:[%s395 + $0x50] sm:%s388]
                  %418 = vst [vmem:[%s396 + $0x28] sm:%s388] %v417
                  %v419 = vld [vmem:[%s395 + $0x58] sm:%s388]
                  %420 = vst [vmem:[%s396 + $0x2c] sm:%s388] %v419
                  %v421 = vld [vmem:[%s395 + $0x60] sm:%s388]
                  %422 = vst [vmem:[%s396 + $0x30] sm:%s388] %v421
                  %v423 = vld [vmem:[%s395 + $0x68] sm:%s388]
                  %424 = vst [vmem:[%s396 + $0x34] sm:%s388] %v423
                  %v425 = vld [vmem:[%s395 + $0x70] sm:%s388]
                  %426 = vst [vmem:[%s396 + $0x38] sm:%s388] %v425
                  %v427 = vld [vmem:[%s395 + $0x78] sm:%s388]
                  %428 = vst [vmem:[%s396 + $0x3c] sm:%s388] %v427
                $region104: #{forward.15} parent=91 // loop_footer
                  %s394 = sadd.s32 1, %s390
                $region105: #{forward.15} parent=91 // loop_footer_branch
                  %389 = sbr.rel target = $region101
                $region106: #{forward.15} parent=91 // loop_exit
                  _
              $region92: #{forward.15} parent=76 // pred_fallthru
                _
            $region77: #{forward.15} parent=72 // pred_fallthru
              _
            // Predicated region
            $region78: #{forward.15} parent=72 // pred_check
              _
            $region79: #{forward.15} parent=72 // pred_check_branch
              %334 = sbr.rel (0) target = $region81
            $region80: #{forward.15} parent=72 // pred_region
              %s336 = ssub.s32 16, 1
              loop: start=0, step=1, limit=1
              $region82: #{forward.15} parent=80 // loop_pre_header
                _
              $region83: #{forward.15} parent=80 // loop_header
                %s338 = sphi 0, %s342
                %p339 = scmp.ge.s32.totalorder %s338, 1
                %s343 = sphi %s328, %s328
                %s344 = sphi %s323, %s323
              $region84: #{forward.15} parent=80 // loop_header_branch
                %341 = sbr.rel (%p339) target = $region88
              $region85: #{forward.15} parent=80 // loop_body
                %v345 = vld [vmem:[%s343] sm:%s336]
                %346 = vst [vmem:[%s344] sm:%s336] %v345
                %v347 = vld [vmem:[%s343 + $0x8] sm:%s336]
                %348 = vst [vmem:[%s344 + $0x4] sm:%s336] %v347
                %v349 = vld [vmem:[%s343 + $0x10] sm:%s336]
                %350 = vst [vmem:[%s344 + $0x8] sm:%s336] %v349
                %v351 = vld [vmem:[%s343 + $0x18] sm:%s336]
                %352 = vst [vmem:[%s344 + $0xc] sm:%s336] %v351
                %v353 = vld [vmem:[%s343 + $0x20] sm:%s336]
                %354 = vst [vmem:[%s344 + $0x10] sm:%s336] %v353
                %v355 = vld [vmem:[%s343 + $0x28] sm:%s336]
                %356 = vst [vmem:[%s344 + $0x14] sm:%s336] %v355
                %v357 = vld [vmem:[%s343 + $0x30] sm:%s336]
                %358 = vst [vmem:[%s344 + $0x18] sm:%s336] %v357
                %v359 = vld [vmem:[%s343 + $0x38] sm:%s336]
                %360 = vst [vmem:[%s344 + $0x1c] sm:%s336] %v359
                %v361 = vld [vmem:[%s343 + $0x40] sm:%s336]
                %362 = vst [vmem:[%s344 + $0x20] sm:%s336] %v361
                %v363 = vld [vmem:[%s343 + $0x48] sm:%s336]
                %364 = vst [vmem:[%s344 + $0x24] sm:%s336] %v363
                %v365 = vld [vmem:[%s343 + $0x50] sm:%s336]
                %366 = vst [vmem:[%s344 + $0x28] sm:%s336] %v365
                %v367 = vld [vmem:[%s343 + $0x58] sm:%s336]
                %368 = vst [vmem:[%s344 + $0x2c] sm:%s336] %v367
                %v369 = vld [vmem:[%s343 + $0x60] sm:%s336]
                %370 = vst [vmem:[%s344 + $0x30] sm:%s336] %v369
                %v371 = vld [vmem:[%s343 + $0x68] sm:%s336]
                %372 = vst [vmem:[%s344 + $0x34] sm:%s336] %v371
                %v373 = vld [vmem:[%s343 + $0x70] sm:%s336]
                %374 = vst [vmem:[%s344 + $0x38] sm:%s336] %v373
                %v375 = vld [vmem:[%s343 + $0x78] sm:%s336]
                %376 = vst [vmem:[%s344 + $0x3c] sm:%s336] %v375
              $region86: #{forward.15} parent=80 // loop_footer
                %s342 = sadd.s32 1, %s338
              $region87: #{forward.15} parent=80 // loop_footer_branch
                %337 = sbr.rel target = $region83
              $region88: #{forward.15} parent=80 // loop_exit
                _
            $region81: #{forward.15} parent=72 // pred_fallthru
              _
          $region73: #{forward.15} parent=68 // pred_fallthru
            _
          %429 = vnop
        $region69: #{forward.15} parent=23 // pred_fallthru
          _
      $region24: #{forward.15} parent=5 // pred_fallthru
        _
      %p430 = scmp.le.s32.totalorder 1, %s12
      %p431 = scmp.lt.s32.totalorder %s12, 3
      %p432 = pnand %p430, %p431
      %p433 = pneg %p432
      // Predicated region
      $region107: #{forward.15} parent=5 // pred_check
        _
      $region108: #{forward.15} parent=5 // pred_check_branch
        %435 = sbr.rel (%p432) target = $region110
      $region109: #{forward.15} parent=5 // pred_region
        %s436 = ssub.s32 %s12, 1
        %s437 = sand.u32 %s39, 1
        %s438 = sand.u32 %s39, 1
        %s439 = smul.addr %s438, 64
        %s440 = scalar_lea.vmem [#allocation2], %s439
        // Predicated region
        $region111: #{forward.15} parent=109 // pred_check
          %p441 = pneg %p52
        $region112: #{forward.15} parent=109 // pred_check_branch
          %443 = sbr.rel (%p441) target = $region114
        $region113: #{forward.15} parent=109 // pred_region
          _
        $region114: #{forward.15} parent=109 // pred_fallthru
          _
        %s444 = sand.u32 %s69, 1
        %s445 = sand.u32 %s69, 1
        %s446 = smul.addr %s445, 64
        %s447 = scalar_lea.vmem [#allocation3], %s446
        // Predicated region
        $region115: #{forward.15} parent=109 // pred_check
          %p448 = pneg %p82
        $region116: #{forward.15} parent=109 // pred_check_branch
          %450 = sbr.rel (%p448) target = $region118
        $region117: #{forward.15} parent=109 // pred_region
          _
        $region118: #{forward.15} parent=109 // pred_fallthru
          _
        %s451 = sand.u32 %s39, 1
        %s452 = sand.u32 %s39, 1
        %s453 = smul.addr %s452, 64
        %s454 = scalar_lea.vmem [#allocation2], %s453
        %p455 = pneg %p52
        %p456 = pneg %p49
        %s457 = sand.u32 %s69, 1
        %s458 = sand.u32 %s69, 1
        %s459 = smul.addr %s458, 64
        %s460 = scalar_lea.vmem [#allocation3], %s459
        %p461 = pneg %p82
        %p462 = pneg %p79
        %p463 = pneg %p103
        %p464 = pneg %p100
        %p465 = pneg %p124
        %p466 = pneg %p121
        %p467 = pneg %p152
        %p468 = pneg %p149
        %p469 = scmp.lt.s32.totalorder %s21, 1
        %s470 = scalar_select %p469, %s21, 1
        %p471 = scmp.lt.s32.totalorder %s22, 0
        %s472 = scalar_select %p471, %s22, 0
        %s473 = smul.addr %s470, 8
        %s474 = sadd.s32 %s472, %s473
        %s475 = smul.addr %s474, 4
        %s476 = scalar_lea.vmem %s4, %s475
        %p477 = pneg %p180
        %p478 = pneg %p177
        %p479 = scmp.lt.s32.totalorder %s21, 1
        %s480 = scalar_select %p479, %s21, 1
        %p481 = scmp.lt.s32.totalorder %s22, 0
        %s482 = scalar_select %p481, %s22, 0
        %s483 = smul.addr %s482, 8
        %s484 = smul.addr %s480, 8
        %s485 = sadd.s32 %s483, %s484
        %s486 = smul.addr %s485, 8
        %s487 = scalar_lea.vmem %s5, %s486
        %s488 = sadd.s32 %s22, 1
        %p489 = scmp.lt.s32.totalorder %s21, 1
        %s490 = scalar_select %p489, %s21, 1
        %p491 = scmp.lt.s32.totalorder %s22, 0
        %s492 = scalar_select %p491, %s22, 0
        %s493 = smul.addr %s490, 8
        %s494 = sadd.s32 %s492, %s493
        %s495 = smul.addr %s494, 4
        %s496 = scalar_lea.vmem %s4, %s495
        %p497 = scmp.lt.s32.totalorder %s21, 1
        %s498 = scalar_select %p497, %s21, 1
        %p499 = scmp.lt.s32.totalorder %s22, 0
        %s500 = scalar_select %p499, %s22, 0
        %s501 = smul.addr %s500, 8
        %s502 = smul.addr %s498, 8
        %s503 = sadd.s32 %s501, %s502
        %s504 = smul.addr %s503, 8
        %s505 = scalar_lea.vmem %s5, %s504
        %v507 = vld [vmem:[%s440] sm:$0xf]
        %v508 = vld [vmem:[%s440 + $0x4] sm:$0xf]
        %v509 = vld [vmem:[%s440 + $0x8] sm:$0xf]
        %v510 = vld [vmem:[%s440 + $0xc] sm:$0xf]
        %v511 = vld [vmem:[%s440 + $0x10] sm:$0xf]
        %v512 = vld [vmem:[%s440 + $0x14] sm:$0xf]
        %v513 = vld [vmem:[%s440 + $0x18] sm:$0xf]
        %v514 = vld [vmem:[%s440 + $0x1c] sm:$0xf]
        %v515 = vld [vmem:[%s440 + $0x20] sm:$0xf]
        %v516 = vld [vmem:[%s440 + $0x24] sm:$0xf]
        %v517 = vld [vmem:[%s440 + $0x28] sm:$0xf]
        %v518 = vld [vmem:[%s440 + $0x2c] sm:$0xf]
        %v519 = vld [vmem:[%s440 + $0x30] sm:$0xf]
        %v520 = vld [vmem:[%s440 + $0x34] sm:$0xf]
        %v521 = vld [vmem:[%s440 + $0x38] sm:$0xf]
        %v522 = vld [vmem:[%s440 + $0x3c] sm:$0xf]
        %v523 = vld [vmem:[%s447] sm:$0xf]
        %v524 = vld [vmem:[%s447 + $0x4] sm:$0xf]
        %v525 = vld [vmem:[%s447 + $0x8] sm:$0xf]
        %v526 = vld [vmem:[%s447 + $0xc] sm:$0xf]
        %v527 = vld [vmem:[%s447 + $0x10] sm:$0xf]
        %v528 = vld [vmem:[%s447 + $0x14] sm:$0xf]
        %v529 = vld [vmem:[%s447 + $0x18] sm:$0xf]
        %v530 = vld [vmem:[%s447 + $0x1c] sm:$0xf]
        %v531 = vld [vmem:[%s447 + $0x20] sm:$0xf]
        %v532 = vld [vmem:[%s447 + $0x24] sm:$0xf]
        %v533 = vld [vmem:[%s447 + $0x28] sm:$0xf]
        %v534 = vld [vmem:[%s447 + $0x2c] sm:$0xf]
        %v535 = vld [vmem:[%s447 + $0x30] sm:$0xf]
        %v536 = vld [vmem:[%s447 + $0x34] sm:$0xf]
        %v537 = vld [vmem:[%s447 + $0x38] sm:$0xf]
        %v538 = vld [vmem:[%s447 + $0x3c] sm:$0xf]
        %v555 = vunpack.c.l.b16 %v507
        %v556 = vunpack.c.l.b16 %v508
        %v557 = vunpack.c.l.b16 %v509
        %v558 = vunpack.c.l.b16 %v510
        %v559 = vunpack.c.l.b16 %v511
        %v560 = vunpack.c.l.b16 %v512
        %v561 = vunpack.c.l.b16 %v513
        %v562 = vunpack.c.l.b16 %v514
        %v563 = vunpack.c.l.b16 %v515
        %v564 = vunpack.c.l.b16 %v516
        %v565 = vunpack.c.l.b16 %v517
        %v566 = vunpack.c.l.b16 %v518
        %v567 = vunpack.c.l.b16 %v519
        %v568 = vunpack.c.l.b16 %v520
        %v569 = vunpack.c.l.b16 %v521
        %v570 = vunpack.c.l.b16 %v522
        %v571 = vpack.c.b16 %v556, %v555
        %v572 = vpack.c.b16 %v558, %v557
        %v573 = vpack.c.b16 %v560, %v559
        %v574 = vpack.c.b16 %v562, %v561
        %v575 = vpack.c.b16 %v564, %v563
        %v576 = vpack.c.b16 %v566, %v565
        %v577 = vpack.c.b16 %v568, %v567
        %v578 = vpack.c.b16 %v570, %v569
        %v603 = vunpack.c.l.b16 %v523
        %v604 = vunpack.c.l.b16 %v524
        %v605 = vunpack.c.l.b16 %v525
        %v606 = vunpack.c.l.b16 %v526
        %v607 = vunpack.c.l.b16 %v527
        %v608 = vunpack.c.l.b16 %v528
        %v609 = vunpack.c.l.b16 %v529
        %v610 = vunpack.c.l.b16 %v530
        %v611 = vunpack.c.l.b16 %v531
        %v612 = vunpack.c.l.b16 %v532
        %v613 = vunpack.c.l.b16 %v533
        %v614 = vunpack.c.l.b16 %v534
        %v615 = vunpack.c.l.b16 %v535
        %v616 = vunpack.c.l.b16 %v536
        %v617 = vunpack.c.l.b16 %v537
        %v618 = vunpack.c.l.b16 %v538
        %v619 = vpack.c.b16 %v604, %v603
        %v620 = vpack.c.b16 %v606, %v605
        %v621 = vpack.c.b16 %v608, %v607
        %v622 = vpack.c.b16 %v610, %v609
        %v623 = vpack.c.b16 %v612, %v611
        %v624 = vpack.c.b16 %v614, %v613
        %v625 = vpack.c.b16 %v616, %v615
        %v626 = vpack.c.b16 %v618, %v617
        %v627 = vld [vmem:[%s2] sm:$0xf]
        %v628 = vld [vmem:[%s2 + $0x4] sm:$0xf]
        %v629 = vld [vmem:[%s2 + $0x8] sm:$0xf]
        %v630 = vld [vmem:[%s2 + $0xc] sm:$0xf]
        %v631 = vld [vmem:[%s2 + $0x10] sm:$0xf]
        %v632 = vld [vmem:[%s2 + $0x14] sm:$0xf]
        %v633 = vld [vmem:[%s2 + $0x18] sm:$0xf]
        %v634 = vld [vmem:[%s2 + $0x1c] sm:$0xf]
        %s635 = scalar_lea.vmem %s2, 32
        %v636 = vld [vmem:[%s635] sm:$0xf]
        %v637 = vld [vmem:[%s635 + $0x4] sm:$0xf]
        %v638 = vld [vmem:[%s635 + $0x8] sm:$0xf]
        %v639 = vld [vmem:[%s635 + $0xc] sm:$0xf]
        %v640 = vld [vmem:[%s635 + $0x10] sm:$0xf]
        %v641 = vld [vmem:[%s635 + $0x14] sm:$0xf]
        %v642 = vld [vmem:[%s635 + $0x18] sm:$0xf]
        %v643 = vld [vmem:[%s635 + $0x1c] sm:$0xf]
        %v652 = vunpack.c.l.b16 %v636
        %v653 = vunpack.c.l.b16 %v637
        %v654 = vunpack.c.l.b16 %v638
        %v655 = vunpack.c.l.b16 %v639
        %v656 = vunpack.c.l.b16 %v640
        %v657 = vunpack.c.l.b16 %v641
        %v658 = vunpack.c.l.b16 %v642
        %v659 = vunpack.c.l.b16 %v643
        %v660 = vpack.c.b16 %v653, %v652
        %v661 = vpack.c.b16 %v655, %v654
        %v662 = vpack.c.b16 %v657, %v656
        %v663 = vpack.c.b16 %v659, %v658
        %668 = vrot.lane.b32.xlu0 %v571, 127
        %v669 = vpop.permute.xlu0 %668
        %670 = vrot.lane.b32.xlu0 %v619, 127
        %v671 = vpop.permute.xlu0 %670
        %672 = vrot.lane.b32.xlu0 %v572, 127
        %v673 = vpop.permute.xlu0 %672
        %674 = vrot.lane.b32.xlu0 %v620, 127
        %v675 = vpop.permute.xlu0 %674
        %676 = vrot.lane.b32.xlu0 %v573, 127
        %v677 = vpop.permute.xlu0 %676
        %678 = vrot.lane.b32.xlu0 %v621, 127
        %v679 = vpop.permute.xlu0 %678
        %680 = vrot.lane.b32.xlu0 %v574, 127
        %v681 = vpop.permute.xlu0 %680
        %682 = vrot.lane.b32.xlu0 %v622, 127
        %v683 = vpop.permute.xlu0 %682
        %684 = vrot.lane.b32.xlu0 %v575, 127
        %v685 = vpop.permute.xlu0 %684
        %686 = vrot.lane.b32.xlu0 %v623, 127
        %v687 = vpop.permute.xlu0 %686
        %688 = vrot.lane.b32.xlu0 %v576, 127
        %v689 = vpop.permute.xlu0 %688
        %690 = vrot.lane.b32.xlu0 %v624, 127
        %v691 = vpop.permute.xlu0 %690
        %692 = vrot.lane.b32.xlu0 %v577, 127
        %v693 = vpop.permute.xlu0 %692
        %694 = vrot.lane.b32.xlu0 %v625, 127
        %v695 = vpop.permute.xlu0 %694
        %696 = vrot.lane.b32.xlu0 %v578, 127
        %v697 = vpop.permute.xlu0 %696
        %698 = vrot.lane.b32.xlu0 %v626, 127
        %v699 = vpop.permute.xlu0 %698
        %vm700 = vcmask 1039360
        %v701 = vsel %vm700, %v669, %v671
        %v702 = vsel %vm700, %v673, %v675
        %v703 = vsel %vm700, %v677, %v679
        %v704 = vsel %vm700, %v681, %v683
        %v705 = vsel %vm700, %v685, %v687
        %v706 = vsel %vm700, %v689, %v691
        %v707 = vsel %vm700, %v693, %v695
        %v708 = vsel %vm700, %v697, %v699
        %717 = vmatpush.bf16.msra.mxu0 %v708
        %718 = vmatpush.bf16.msra.mxu0 %v707
        %719 = vmatpush.bf16.msra.mxu0 %v706
        %720 = vmatpush.bf16.msra.mxu0 %v705
        %721 = vmatpush.bf16.msra.mxu0 %v704
        %722 = vmatpush.bf16.msra.mxu0 %v703
        %723 = vmatpush.bf16.msra.mxu0 %v702
        %724 = vmatpush.bf16.msra.mxu0 %v701
        %725 = vmatmul.bf16.gmra.mxu0 %v660
        %v726 = vpop.f32.mrf.mxu0
        %v727 = vadd.f32 0.0, %v726
        %v728 = vpop.f32.mrf.mxu0
        %v729 = vadd.f32 0.0, %v728
        %730 = vmatmul.bf16.gmra.mxu0 %v661
        %v731 = vpop.f32.mrf.mxu0
        %v732 = vadd.f32 0.0, %v731
        %v733 = vpop.f32.mrf.mxu0
        %v734 = vadd.f32 0.0, %v733
        %735 = vmatmul.bf16.gmra.mxu0 %v662
        %v736 = vpop.f32.mrf.mxu0
        %v737 = vadd.f32 0.0, %v736
        %v738 = vpop.f32.mrf.mxu0
        %v739 = vadd.f32 0.0, %v738
        %740 = vmatmul.bf16.gmra.mxu0 %v663
        %v741 = vpop.f32.mrf.mxu0
        %v742 = vadd.f32 0.0, %v741
        %v743 = vpop.f32.mrf.mxu0
        %v744 = vadd.f32 0.0, %v743
        %745 = vdwg.mxu0
        %v754 = vunpack.c.l.b16 %v627
        %v755 = vunpack.c.l.b16 %v628
        %v756 = vunpack.c.l.b16 %v629
        %v757 = vunpack.c.l.b16 %v630
        %v758 = vunpack.c.l.b16 %v631
        %v759 = vunpack.c.l.b16 %v632
        %v760 = vunpack.c.l.b16 %v633
        %v761 = vunpack.c.l.b16 %v634
        %v762 = vpack.c.b16 %v755, %v754
        %v763 = vpack.c.b16 %v757, %v756
        %v764 = vpack.c.b16 %v759, %v758
        %v765 = vpack.c.b16 %v761, %v760
        %770 = vmatpush.bf16.msra.mxu0 %v578
        %771 = vmatpush.bf16.msra.mxu0 %v577
        %772 = vmatpush.bf16.msra.mxu0 %v576
        %773 = vmatpush.bf16.msra.mxu0 %v575
        %774 = vmatpush.bf16.msra.mxu0 %v574
        %775 = vmatpush.bf16.msra.mxu0 %v573
        %776 = vmatpush.bf16.msra.mxu0 %v572
        %777 = vmatpush.bf16.msra.mxu0 %v571
        %778 = vmatmul.bf16.gmra.mxu0 %v762
        %v779 = vpop.f32.mrf.mxu0
        %v780 = vadd.f32 %v727, %v779
        %v781 = vpop.f32.mrf.mxu0
        %v782 = vadd.f32 %v729, %v781
        %783 = vmatmul.bf16.gmra.mxu0 %v763
        %v784 = vpop.f32.mrf.mxu0
        %v785 = vadd.f32 %v732, %v784
        %v786 = vpop.f32.mrf.mxu0
        %v787 = vadd.f32 %v734, %v786
        %788 = vmatmul.bf16.gmra.mxu0 %v764
        %v789 = vpop.f32.mrf.mxu0
        %v790 = vadd.f32 %v737, %v789
        %v791 = vpop.f32.mrf.mxu0
        %v792 = vadd.f32 %v739, %v791
        %793 = vmatmul.bf16.gmra.mxu0 %v765
        %v794 = vpop.f32.mrf.mxu0
        %v795 = vadd.f32 %v742, %v794
        %v796 = vpop.f32.mrf.mxu0
        %v797 = vadd.f32 %v744, %v796
        %798 = vdwg.mxu0
        %s799 = scalar_lea.vmem %s2, 64
        %v800 = vld [vmem:[%s799] sm:$0xf]
        %v801 = vld [vmem:[%s799 + $0x4] sm:$0xf]
        %v802 = vld [vmem:[%s799 + $0x8] sm:$0xf]
        %v803 = vld [vmem:[%s799 + $0xc] sm:$0xf]
        %v804 = vld [vmem:[%s799 + $0x10] sm:$0xf]
        %v805 = vld [vmem:[%s799 + $0x14] sm:$0xf]
        %v806 = vld [vmem:[%s799 + $0x18] sm:$0xf]
        %v807 = vld [vmem:[%s799 + $0x1c] sm:$0xf]
        %v816 = vunpack.c.l.b16 %v800
        %v817 = vunpack.c.l.b16 %v801
        %v818 = vunpack.c.l.b16 %v802
        %v819 = vunpack.c.l.b16 %v803
        %v820 = vunpack.c.l.b16 %v804
        %v821 = vunpack.c.l.b16 %v805
        %v822 = vunpack.c.l.b16 %v806
        %v823 = vunpack.c.l.b16 %v807
        %v824 = vpack.c.b16 %v817, %v816
        %v825 = vpack.c.b16 %v819, %v818
        %v826 = vpack.c.b16 %v821, %v820
        %v827 = vpack.c.b16 %v823, %v822
        %828 = vrot.lane.b32.xlu0 %v571, 126
        %v829 = vpop.permute.xlu0 %828
        %830 = vrot.lane.b32.xlu0 %v619, 126
        %v831 = vpop.permute.xlu0 %830
        %832 = vrot.lane.b32.xlu0 %v572, 126
        %v833 = vpop.permute.xlu0 %832
        %834 = vrot.lane.b32.xlu0 %v620, 126
        %v835 = vpop.permute.xlu0 %834
        %vm836 = vcmask 1031168
        %v837 = vsel %vm836, %v829, %v831
        %v838 = vsel %vm836, %v833, %v835
        %vm841 = vcmask 261120
        %v843 = vsel %vm841, %v824, 0
        %v846 = vsel %vm841, %v825, 0
        %v849 = vsel %vm841, %v826, 0
        %v852 = vsel %vm841, %v827, 0
        %854 = vmatpush.bf16.msra.mxu0 0
        %855 = vmatpush.bf16.msra.mxu0 0
        %856 = vmatpush.bf16.msra.mxu0 0
        %857 = vmatpush.bf16.msra.mxu0 0
        %858 = vmatpush.bf16.msra.mxu0 0
        %859 = vmatpush.bf16.msra.mxu0 0
        %860 = vmatpush.bf16.msra.mxu0 %v838
        %861 = vmatpush.bf16.msra.mxu0 %v837
        %862 = vmatmul.bf16.gmra.mxu0 %v843
        %v863 = vpop.f32.mrf.mxu0
        %v864 = vadd.f32 0.0, %v863
        %v865 = vpop.f32.mrf.mxu0
        %v866 = vadd.f32 0.0, %v865
        %867 = vmatmul.bf16.gmra.mxu0 %v846
        %v868 = vpop.f32.mrf.mxu0
        %v869 = vadd.f32 0.0, %v868
        %v870 = vpop.f32.mrf.mxu0
        %v871 = vadd.f32 0.0, %v870
        %872 = vmatmul.bf16.gmra.mxu0 %v849
        %v873 = vpop.f32.mrf.mxu0
        %v874 = vadd.f32 0.0, %v873
        %v875 = vpop.f32.mrf.mxu0
        %v876 = vadd.f32 0.0, %v875
        %877 = vmatmul.bf16.gmra.mxu0 %v852
        %v878 = vpop.f32.mrf.mxu0
        %v879 = vadd.f32 0.0, %v878
        %v880 = vpop.f32.mrf.mxu0
        %v881 = vadd.f32 0.0, %v880
        %882 = vdwg.mxu0
        %v883 = vadd.f32 %v780, %v864
        %v884 = vadd.f32 %v782, %v866
        %v885 = vadd.f32 %v785, %v869
        %v886 = vadd.f32 %v787, %v871
        %v887 = vadd.f32 %v790, %v874
        %v888 = vadd.f32 %v792, %v876
        %v889 = vadd.f32 %v795, %v879
        %v890 = vadd.f32 %v797, %v881
        %v891 = vld [vmem:[%s3] sm:$0xff]
        %v892 = vld [vmem:[%s3 + $0x8] sm:$0xff]
        %v893 = vld [vmem:[%s3 + $0x10] sm:$0xff]
        %v894 = vld [vmem:[%s3 + $0x18] sm:$0xff]
        %v895 = vld [vmem:[%s3 + $0x20] sm:$0xff]
        %v896 = vld [vmem:[%s3 + $0x28] sm:$0xff]
        %v897 = vld [vmem:[%s3 + $0x30] sm:$0xff]
        %v898 = vld [vmem:[%s3 + $0x38] sm:$0xff]
        %900 = vset.pattern.permute.xlu0 0
        %901 = vperm.xlu0 %900, %v891
        %v902 = vpop.permute.xlu0 %901
        %905 = vset.pattern.permute.xlu0 0
        %906 = vperm.xlu0 %905, %v892
        %v907 = vpop.permute.xlu0 %906
        %910 = vset.pattern.permute.xlu0 0
        %911 = vperm.xlu0 %910, %v893
        %v912 = vpop.permute.xlu0 %911
        %915 = vset.pattern.permute.xlu0 0
        %916 = vperm.xlu0 %915, %v894
        %v917 = vpop.permute.xlu0 %916
        %920 = vset.pattern.permute.xlu0 0
        %921 = vperm.xlu0 %920, %v895
        %v922 = vpop.permute.xlu0 %921
        %925 = vset.pattern.permute.xlu0 0
        %926 = vperm.xlu0 %925, %v896
        %v927 = vpop.permute.xlu0 %926
        %930 = vset.pattern.permute.xlu0 0
        %931 = vperm.xlu0 %930, %v897
        %v932 = vpop.permute.xlu0 %931
        %935 = vset.pattern.permute.xlu0 0
        %936 = vperm.xlu0 %935, %v898
        %v937 = vpop.permute.xlu0 %936
        %v939 = vadd.f32 %v883, %v902
        %v940 = vadd.f32 %v884, %v907
        %v941 = vadd.f32 %v885, %v912
        %v942 = vadd.f32 %v886, %v917
        %v943 = vadd.f32 %v887, %v922
        %v944 = vadd.f32 %v888, %v927
        %v945 = vadd.f32 %v889, %v932
        %v946 = vadd.f32 %v890, %v937
        %v947 = vpack.c.bf16 %v939, %v939
        %v948 = vpack.c.bf16 %v940, %v940
        %v949 = vpack.c.bf16 %v941, %v941
        %v950 = vpack.c.bf16 %v942, %v942
        %v951 = vpack.c.bf16 %v943, %v943
        %v952 = vpack.c.bf16 %v944, %v944
        %v953 = vpack.c.bf16 %v945, %v945
        %v954 = vpack.c.bf16 %v946, %v946
        %955 = vst [vmem:[%s496] sm:$0xf] %v947
        %956 = vst [vmem:[%s496 + $0x4] sm:$0xf] %v948
        %957 = vst [vmem:[%s496 + $0x8] sm:$0xf] %v949
        %958 = vst [vmem:[%s496 + $0xc] sm:$0xf] %v950
        %959 = vst [vmem:[%s496 + $0x10] sm:$0xf] %v951
        %960 = vst [vmem:[%s496 + $0x14] sm:$0xf] %v952
        %961 = vst [vmem:[%s496 + $0x18] sm:$0xf] %v953
        %962 = vst [vmem:[%s496 + $0x1c] sm:$0xf] %v954
        %v963 = vlaneseq
        %v964 = vand.u32 %v963, 127
        %s965 = smul.u32 %s22, 128
        %v966 = vstv %s965
        %v967 = vadd.s32 %v964, %v966
        %vm968 = vcmp.lt.s32.totalorder %v967, 2
        %v969 = vsel %vm968, 1, 0
        %vm970 = vcmp.eq.s32.totalorder %v969, 1
        %v971 = vsel %vm970, %v939, 0.0
        %v972 = vsel %vm970, %v940, 0.0
        %v973 = vsel %vm970, %v941, 0.0
        %v974 = vsel %vm970, %v942, 0.0
        %v975 = vsel %vm970, %v943, 0.0
        %v976 = vsel %vm970, %v944, 0.0
        %v977 = vsel %vm970, %v945, 0.0
        %v978 = vsel %vm970, %v946, 0.0
        %979 = vadd.xlane.f32.xlu0 %v971
        %v980 = vpop.xlane.xlu0 %979
        %981 = vadd.xlane.f32.xlu0 %v972
        %v982 = vpop.xlane.xlu0 %981
        %983 = vadd.xlane.f32.xlu0 %v973
        %v984 = vpop.xlane.xlu0 %983
        %985 = vadd.xlane.f32.xlu0 %v974
        %v986 = vpop.xlane.xlu0 %985
        %987 = vadd.xlane.f32.xlu0 %v975
        %v988 = vpop.xlane.xlu0 %987
        %989 = vadd.xlane.f32.xlu0 %v976
        %v990 = vpop.xlane.xlu0 %989
        %991 = vadd.xlane.f32.xlu0 %v977
        %v992 = vpop.xlane.xlu0 %991
        %993 = vadd.xlane.f32.xlu0 %v978
        %v994 = vpop.xlane.xlu0 %993
        %v995 = vmul.f32 %v971, %v971
        %v996 = vmul.f32 %v972, %v972
        %v997 = vmul.f32 %v973, %v973
        %v998 = vmul.f32 %v974, %v974
        %v999 = vmul.f32 %v975, %v975
        %v1000 = vmul.f32 %v976, %v976
        %v1001 = vmul.f32 %v977, %v977
        %v1002 = vmul.f32 %v978, %v978
        %1003 = vadd.xlane.f32.xlu0 %v995
        %v1004 = vpop.xlane.xlu0 %1003
        %1005 = vadd.xlane.f32.xlu0 %v996
        %v1006 = vpop.xlane.xlu0 %1005
        %1007 = vadd.xlane.f32.xlu0 %v997
        %v1008 = vpop.xlane.xlu0 %1007
        %1009 = vadd.xlane.f32.xlu0 %v998
        %v1010 = vpop.xlane.xlu0 %1009
        %1011 = vadd.xlane.f32.xlu0 %v999
        %v1012 = vpop.xlane.xlu0 %1011
        %1013 = vadd.xlane.f32.xlu0 %v1000
        %v1014 = vpop.xlane.xlu0 %1013
        %1015 = vadd.xlane.f32.xlu0 %v1001
        %v1016 = vpop.xlane.xlu0 %1015
        %1017 = vadd.xlane.f32.xlu0 %v1002
        %v1018 = vpop.xlane.xlu0 %1017
        %vm1019 = vcmask 7168
        %v1020 = vsel %vm1019, %v980, %v1004
        %v1021 = vsel %vm1019, %v982, %v1006
        %v1022 = vsel %vm1019, %v984, %v1008
        %v1023 = vsel %vm1019, %v986, %v1010
        %v1024 = vsel %vm1019, %v988, %v1012
        %v1025 = vsel %vm1019, %v990, %v1014
        %v1026 = vsel %vm1019, %v992, %v1016
        %v1027 = vsel %vm1019, %v994, %v1018
        %vm1028 = vcmask 15360
        %1029 = vst.msk [vmem:[%s505] sm:$0xff] %vm1028, %v1020
        %1030 = vst.msk [vmem:[%s505 + $0x8] sm:$0xff] %vm1028, %v1021
        %1031 = vst.msk [vmem:[%s505 + $0x10] sm:$0xff] %vm1028, %v1022
        %1032 = vst.msk [vmem:[%s505 + $0x18] sm:$0xff] %vm1028, %v1023
        %1033 = vst.msk [vmem:[%s505 + $0x20] sm:$0xff] %vm1028, %v1024
        %1034 = vst.msk [vmem:[%s505 + $0x28] sm:$0xff] %vm1028, %v1025
        %1035 = vst.msk [vmem:[%s505 + $0x30] sm:$0xff] %vm1028, %v1026
        %1036 = vst.msk [vmem:[%s505 + $0x38] sm:$0xff] %vm1028, %v1027
        %p1037 = scmp.lt.s32.totalorder %s21, 1
        %s1038 = scalar_select %p1037, %s21, 1
        %p1039 = scmp.lt.s32.totalorder %s22, 0
        %s1040 = scalar_select %p1039, %s22, 0
        %s1041 = smul.addr %s1038, 8
        %s1042 = sadd.s32 %s1040, %s1041
        %s1043 = smul.addr %s1042, 4
        %s1044 = scalar_lea.vmem %s4, %s1043
        %p1045 = scmp.lt.s32.totalorder %s21, 1
        %s1046 = scalar_select %p1045, %s21, 1
        %p1047 = scmp.lt.s32.totalorder %s22, 0
        %s1048 = scalar_select %p1047, %s22, 0
        %s1049 = smul.addr %s1048, 8
        %s1050 = smul.addr %s1046, 8
        %s1051 = sadd.s32 %s1049, %s1050
        %s1052 = smul.addr %s1051, 8
        %s1053 = scalar_lea.vmem %s5, %s1052
        // Predicated region
        $region119: #{forward.15} parent=109 // pred_check
          %p1054 = pneg %p149
        $region120: #{forward.15} parent=109 // pred_check_branch
          %1056 = sbr.rel (%p1054) target = $region122
        $region121: #{forward.15} parent=109 // pred_region
          _
        $region122: #{forward.15} parent=109 // pred_fallthru
          _
        // Predicated region
        $region123: #{forward.15} parent=109 // pred_check
          %p1057 = pneg %p177
        $region124: #{forward.15} parent=109 // pred_check_branch
          %1059 = sbr.rel (%p1057) target = $region126
        $region125: #{forward.15} parent=109 // pred_region
          _
        $region126: #{forward.15} parent=109 // pred_fallthru
          _
      $region110: #{forward.15} parent=5 // pred_fallthru
        _
      %p1060 = scmp.le.s32.totalorder 2, %s12
      // Predicated region
      $region127: #{forward.15} parent=5 // pred_check
        %p1061 = pneg %p1060
      $region128: #{forward.15} parent=5 // pred_check_branch
        %1063 = sbr.rel (%p1061) target = $region130
      $region129: #{forward.15} parent=5 // pred_region
        %s1064 = ssub.s32 %s12, 2
        // Predicated region
        $region131: #{forward.15} parent=129 // pred_check
          %p1065 = pneg %p155
        $region132: #{forward.15} parent=129 // pred_check_branch
          %1067 = sbr.rel (%p1065) target = $region134
        $region133: #{forward.15} parent=129 // pred_region
          %p1068 = scmp.lt.s32.totalorder %s23, 1
          %s1069 = scalar_select %p1068, %s23, 1
          %p1070 = scmp.lt.s32.totalorder %s24, 0
          %s1071 = scalar_select %p1070, %s24, 0
          %s1072 = smul.addr %s1069, 8
          %s1073 = sadd.s32 %s1071, %s1072
          %s1074 = smul.addr %s1073, 4
          %s1075 = scalar_lea.vmem %s4, %s1074
        $region134: #{forward.15} parent=129 // pred_fallthru
          _
        // Predicated region
        $region135: #{forward.15} parent=129 // pred_check
          %p1076 = pneg %p183
        $region136: #{forward.15} parent=129 // pred_check_branch
          %1078 = sbr.rel (%p1076) target = $region138
        $region137: #{forward.15} parent=129 // pred_region
          %p1079 = scmp.lt.s32.totalorder %s23, 1
          %s1080 = scalar_select %p1079, %s23, 1
          %p1081 = scmp.lt.s32.totalorder %s24, 0
          %s1082 = scalar_select %p1081, %s24, 0
          %s1083 = smul.addr %s1082, 8
          %s1084 = smul.addr %s1080, 8
          %s1085 = sadd.s32 %s1083, %s1084
          %s1086 = smul.addr %s1085, 8
          %s1087 = scalar_lea.vmem %s5, %s1086
        $region138: #{forward.15} parent=129 // pred_fallthru
          _
      $region130: #{forward.15} parent=5 // pred_fallthru
        _
    $region6: #{forward.15} parent=1 // loop_footer
      %s16 = sadd.s32 1, %s12
    $region7: #{forward.15} parent=1 // loop_footer_branch
      %11 = sbr.rel target = $region3
    $region8: #{forward.15} parent=1 // loop_exit
      _

// kernel: forward.16
$region0: #{forward.16}
  #allocation0 [shape = 'u32[]', space=smem, size = 0x4, offset = 0x4, fixed_abs, tag = 'smem constant byte address 0x4 - core index']
  #allocation1 [shape = 'u32[72,128]{1,0:T(1,128)}', space=vmem, size = 0x9000, scoped, tag = 'internal scratch']
  %s0 = inlined_call_operand.vmem [shape: bf16[2,64,128], index: 0, kind: input, shape index: {}]
  %s1 = inlined_call_operand.vmem [shape: f32[64,1], index: 1, kind: input, shape index: {}]
  %s2 = inlined_call_operand.vmem [shape: f32[64,1], index: 2, kind: input, shape index: {}]
  %s3 = inlined_call_operand.vmem [shape: bf16[2,64,128], index: 3, kind: output, shape index: {}]
  %s4 = sld [smem:[#allocation0]]
  $region45: #{forward.16} parent=0
    _
  %s6 = ssub.s32 1, %s4
  %s7 = scalar_select 0, %s6, %s4
  loop: start=0, step=1, limit=4
  $region2: #{forward.16} parent=0 // loop_pre_header
    _
  $region3: #{forward.16} parent=0 // loop_header
    %s9 = sphi 0, %s13
    %p10 = scmp.ge.s32.totalorder %s9, 4
    %s16 = sphi 0, %s28
    %s17 = sphi 0, %s24
    %s18 = sphi 0, %s16
    %s19 = sphi 0, %s17
    %s20 = sphi 0, %s18
    %s21 = sphi 0, %s19
    %s33 = sphi 0, %s35
    %s36 = sphi 0, %s33
    %s37 = sphi 0, %s36
    %s53 = sphi 0, %s37
    %s57 = sphi 0, %s57
    %s59 = sphi 0, %s57
    %s60 = sphi 0, %s59
    %s74 = sphi 0, %s60
    %s78 = sphi 0, %s78
    %s80 = sphi 0, %s78
    %s81 = sphi 0, %s80
    %s95 = sphi 0, %s81
    %s103 = sphi 0, %s105
    %s106 = sphi 0, %s103
    %s107 = sphi 0, %s106
    %s123 = sphi 0, %s107
  $region4: #{forward.16} parent=0 // loop_header_branch
    %12 = sbr.rel (%p10) target = $region8
  $region5: #{forward.16} parent=0 // loop_body
    %s14 = ssub.s32 %s9, 1
    %s15 = ssub.s32 %s9, 2
    %s22 = sadd.s32 1, %s17
    %p23 = scmp.ge.s32.totalorder %s22, 1
    %s24 = scalar_select %p23, 0, %s22
    %s25 = sadd.s32 1, %s16
    %s26 = scalar_select %p23, %s25, %s16
    %p27 = scmp.ge.s32.totalorder %s26, 2
    %s28 = scalar_select %p27, 0, %s26
    %s29 = ssub.s32 %s16, %s28
    %s30 = ssub.s32 %s17, %s24
    %s31 = sor.u32 %s29, %s30
    %p32 = scmp.eq.s32.totalorder %s31, 0
    %s34 = sadd.s32 %s33, 1
    %s35 = scalar_select %p32, %s33, %s34
    %p38 = pneg %p32
    %p39 = scmp.eq.s32.totalorder %s9, 1
    %p40 = por %p38, %p39
    %p41 = scmp.ne.s32.totalorder %s33, %s36
    %p42 = scmp.eq.s32.totalorder %s9, 0
    %p43 = por %p41, %p42
    %p44 = scmp.ne.s32.totalorder %s33, %s36
    %p45 = scmp.eq.s32.totalorder %s14, 1
    %p46 = por %p44, %p45
    %p47 = scmp.ne.s32.totalorder %s36, %s37
    %p48 = scmp.eq.s32.totalorder %s14, 0
    %p49 = por %p47, %p48
    %p50 = scmp.ne.s32.totalorder %s36, %s37
    %p51 = scmp.eq.s32.totalorder %s15, 1
    %p52 = por %p50, %p51
    %p54 = scmp.ne.s32.totalorder %s37, %s53
    %p55 = scmp.eq.s32.totalorder %s15, 0
    %p56 = por %p54, %p55
    %s58 = sadd.s32 %s57, 1
    %p61 = scmp.eq.s32.totalorder %s9, 1
    %p62 = scmp.ne.s32.totalorder %s57, %s59
    %p63 = scmp.eq.s32.totalorder %s9, 0
    %p64 = por %p62, %p63
    %p65 = scmp.ne.s32.totalorder %s57, %s59
    %p66 = scmp.eq.s32.totalorder %s14, 1
    %p67 = por %p65, %p66
    %p68 = scmp.ne.s32.totalorder %s59, %s60
    %p69 = scmp.eq.s32.totalorder %s14, 0
    %p70 = por %p68, %p69
    %p71 = scmp.ne.s32.totalorder %s59, %s60
    %p72 = scmp.eq.s32.totalorder %s15, 1
    %p73 = por %p71, %p72
    %p75 = scmp.ne.s32.totalorder %s60, %s74
    %p76 = scmp.eq.s32.totalorder %s15, 0
    %p77 = por %p75, %p76
    %s79 = sadd.s32 %s78, 1
    %p82 = scmp.eq.s32.totalorder %s9, 1
    %p83 = scmp.ne.s32.totalorder %s78, %s80
    %p84 = scmp.eq.s32.totalorder %s9, 0
    %p85 = por %p83, %p84
    %p86 = scmp.ne.s32.totalorder %s78, %s80
    %p87 = scmp.eq.s32.totalorder %s14, 1
    %p88 = por %p86, %p87
    %p89 = scmp.ne.s32.totalorder %s80, %s81
    %p90 = scmp.eq.s32.totalorder %s14, 0
    %p91 = por %p89, %p90
    %p92 = scmp.ne.s32.totalorder %s80, %s81
    %p93 = scmp.eq.s32.totalorder %s15, 1
    %p94 = por %p92, %p93
    %p96 = scmp.ne.s32.totalorder %s81, %s95
    %p97 = scmp.eq.s32.totalorder %s15, 0
    %p98 = por %p96, %p97
    %s99 = ssub.s32 %s16, %s28
    %s100 = ssub.s32 %s17, %s24
    %s101 = sor.u32 %s99, %s100
    %p102 = scmp.eq.s32.totalorder %s101, 0
    %s104 = sadd.s32 %s103, 1
    %s105 = scalar_select %p102, %s103, %s104
    %p108 = pneg %p102
    %p109 = scmp.eq.s32.totalorder %s9, 1
    %p110 = por %p108, %p109
    %p111 = scmp.ne.s32.totalorder %s103, %s106
    %p112 = scmp.eq.s32.totalorder %s9, 0
    %p113 = por %p111, %p112
    %p114 = scmp.ne.s32.totalorder %s103, %s106
    %p115 = scmp.eq.s32.totalorder %s14, 1
    %p116 = por %p114, %p115
    %p117 = scmp.ne.s32.totalorder %s106, %s107
    %p118 = scmp.eq.s32.totalorder %s14, 0
    %p119 = por %p117, %p118
    %p120 = scmp.ne.s32.totalorder %s106, %s107
    %p121 = scmp.eq.s32.totalorder %s15, 1
    %p122 = por %p120, %p121
    %p124 = scmp.ne.s32.totalorder %s107, %s123
    %p125 = scmp.eq.s32.totalorder %s15, 0
    %p126 = por %p124, %p125
    %p127 = scmp.le.s32.totalorder 1, %s9
    %p128 = scmp.lt.s32.totalorder %s9, 3
    %p129 = pnand %p127, %p128
    %p130 = pneg %p129
    // Predicated region
    $region9: #{forward.16} parent=5 // pred_check
      _
    $region10: #{forward.16} parent=5 // pred_check_branch
      %132 = sbr.rel (%p129) target = $region12
    $region11: #{forward.16} parent=5 // pred_region
      %s133 = ssub.s32 %s9, 1
      // Predicated region
      $region13: #{forward.16} parent=11 // pred_check
        %p134 = pneg %p70
      $region14: #{forward.16} parent=11 // pred_check_branch
        %136 = sbr.rel (%p134) target = $region16
      $region15: #{forward.16} parent=11 // pred_region
        _
      $region16: #{forward.16} parent=11 // pred_fallthru
        _
      // Predicated region
      $region17: #{forward.16} parent=11 // pred_check
        %p137 = pneg %p91
      $region18: #{forward.16} parent=11 // pred_check_branch
        %139 = sbr.rel (%p137) target = $region20
      $region19: #{forward.16} parent=11 // pred_region
        _
      $region20: #{forward.16} parent=11 // pred_fallthru
        _
    $region12: #{forward.16} parent=5 // pred_fallthru
      _
    %p140 = scmp.lt.s32.totalorder %s9, 2
    // Predicated region
    $region21: #{forward.16} parent=5 // pred_check
      %p141 = pneg %p140
    $region22: #{forward.16} parent=5 // pred_check_branch
      %143 = sbr.rel (%p141) target = $region24
    $region23: #{forward.16} parent=5 // pred_region
      // Predicated region
      $region25: #{forward.16} parent=23 // pred_check
        %p144 = pneg %p43
      $region26: #{forward.16} parent=23 // pred_check_branch
        %146 = sbr.rel (%p144) target = $region28
      $region27: #{forward.16} parent=23 // pred_region
        %p147 = scmp.lt.s32.totalorder %s16, 1
        %s148 = scalar_select %p147, %s16, 1
        %p149 = scmp.lt.s32.totalorder %s17, 0
        %s150 = scalar_select %p149, %s17, 0
        %s151 = smul.addr %s148, 8
        %s152 = sadd.s32 %s150, %s151
        %s153 = smul.addr %s152, 4
        %s154 = scalar_lea.vmem %s0, %s153
      $region28: #{forward.16} parent=23 // pred_fallthru
        _
    $region24: #{forward.16} parent=5 // pred_fallthru
      _
    %p155 = scmp.le.s32.totalorder 1, %s9
    %p156 = scmp.lt.s32.totalorder %s9, 3
    %p157 = pnand %p155, %p156
    %p158 = pneg %p157
    // Predicated region
    $region29: #{forward.16} parent=5 // pred_check
      _
    $region30: #{forward.16} parent=5 // pred_check_branch
      %160 = sbr.rel (%p157) target = $region32
    $region31: #{forward.16} parent=5 // pred_region
      %s161 = ssub.s32 %s9, 1
      %p162 = scmp.lt.s32.totalorder %s18, 1
      %s163 = scalar_select %p162, %s18, 1
      %p164 = scmp.lt.s32.totalorder %s19, 0
      %s165 = scalar_select %p164, %s19, 0
      %s166 = smul.addr %s163, 8
      %s167 = sadd.s32 %s165, %s166
      %s168 = smul.addr %s167, 4
      %s169 = scalar_lea.vmem %s0, %s168
      %p170 = pneg %p49
      %p171 = pneg %p46
      %p172 = pneg %p70
      %p173 = pneg %p67
      %p174 = pneg %p91
      %p175 = pneg %p88
      %p176 = pneg %p119
      %p177 = pneg %p116
      %p178 = scmp.lt.s32.totalorder %s18, 1
      %s179 = scalar_select %p178, %s18, 1
      %p180 = scmp.lt.s32.totalorder %s19, 0
      %s181 = scalar_select %p180, %s19, 0
      %s182 = smul.addr %s179, 8
      %s183 = sadd.s32 %s181, %s182
      %s184 = smul.addr %s183, 4
      %s185 = scalar_lea.vmem %s3, %s184
      %p186 = scmp.lt.s32.totalorder %s18, 1
      %s187 = scalar_select %p186, %s18, 1
      %p188 = scmp.lt.s32.totalorder %s19, 0
      %s189 = scalar_select %p188, %s19, 0
      %s190 = smul.addr %s187, 8
      %s191 = sadd.s32 %s189, %s190
      %s192 = smul.addr %s191, 4
      %s193 = scalar_lea.vmem %s0, %s192
      %p194 = scmp.lt.s32.totalorder %s18, 1
      %s195 = scalar_select %p194, %s18, 1
      %p196 = scmp.lt.s32.totalorder %s19, 0
      %s197 = scalar_select %p196, %s19, 0
      %s198 = smul.addr %s195, 8
      %s199 = sadd.s32 %s197, %s198
      %s200 = smul.addr %s199, 4
      %s201 = scalar_lea.vmem %s3, %s200
      %v202 = vld [vmem:[%s193] sm:$0xf]
      %v203 = vld [vmem:[%s193 + $0x4] sm:$0xf]
      %v204 = vld [vmem:[%s193 + $0x8] sm:$0xf]
      %v205 = vld [vmem:[%s193 + $0xc] sm:$0xf]
      %v206 = vld [vmem:[%s193 + $0x10] sm:$0xf]
      %v207 = vld [vmem:[%s193 + $0x14] sm:$0xf]
      %v208 = vld [vmem:[%s193 + $0x18] sm:$0xf]
      %v209 = vld [vmem:[%s193 + $0x1c] sm:$0xf]
      %v210 = vunpack.c.l.bf16 %v202
      %v211 = vunpack.c.l.bf16 %v203
      %v212 = vunpack.c.l.bf16 %v204
      %v213 = vunpack.c.l.bf16 %v205
      %v214 = vunpack.c.l.bf16 %v206
      %v215 = vunpack.c.l.bf16 %v207
      %v216 = vunpack.c.l.bf16 %v208
      %v217 = vunpack.c.l.bf16 %v209
      %v218 = vld [vmem:[%s1] sm:$0xff]
      %v219 = vld [vmem:[%s1 + $0x8] sm:$0xff]
      %v220 = vld [vmem:[%s1 + $0x10] sm:$0xff]
      %v221 = vld [vmem:[%s1 + $0x18] sm:$0xff]
      %v222 = vld [vmem:[%s1 + $0x20] sm:$0xff]
      %v223 = vld [vmem:[%s1 + $0x28] sm:$0xff]
      %v224 = vld [vmem:[%s1 + $0x30] sm:$0xff]
      %v225 = vld [vmem:[%s1 + $0x38] sm:$0xff]
      %227 = vset.pattern.permute.xlu0 0
      %228 = vperm.xlu0 %227, %v218
      %v229 = vpop.permute.xlu0 %228
      %232 = vset.pattern.permute.xlu0 0
      %233 = vperm.xlu0 %232, %v219
      %v234 = vpop.permute.xlu0 %233
      %237 = vset.pattern.permute.xlu0 0
      %238 = vperm.xlu0 %237, %v220
      %v239 = vpop.permute.xlu0 %238
      %242 = vset.pattern.permute.xlu0 0
      %243 = vperm.xlu0 %242, %v221
      %v244 = vpop.permute.xlu0 %243
      %247 = vset.pattern.permute.xlu0 0
      %248 = vperm.xlu0 %247, %v222
      %v249 = vpop.permute.xlu0 %248
      %252 = vset.pattern.permute.xlu0 0
      %253 = vperm.xlu0 %252, %v223
      %v254 = vpop.permute.xlu0 %253
      %257 = vset.pattern.permute.xlu0 0
      %258 = vperm.xlu0 %257, %v224
      %v259 = vpop.permute.xlu0 %258
      %262 = vset.pattern.permute.xlu0 0
      %263 = vperm.xlu0 %262, %v225
      %v264 = vpop.permute.xlu0 %263
      %v266 = vmul.f32 %v210, %v229
      %v267 = vmul.f32 %v211, %v234
      %v268 = vmul.f32 %v212, %v239
      %v269 = vmul.f32 %v213, %v244
      %v270 = vmul.f32 %v214, %v249
      %v271 = vmul.f32 %v215, %v254
      %v272 = vmul.f32 %v216, %v259
      %v273 = vmul.f32 %v217, %v264
      %v274 = vld [vmem:[%s2] sm:$0xff]
      %v275 = vld [vmem:[%s2 + $0x8] sm:$0xff]
      %v276 = vld [vmem:[%s2 + $0x10] sm:$0xff]
      %v277 = vld [vmem:[%s2 + $0x18] sm:$0xff]
      %v278 = vld [vmem:[%s2 + $0x20] sm:$0xff]
      %v279 = vld [vmem:[%s2 + $0x28] sm:$0xff]
      %v280 = vld [vmem:[%s2 + $0x30] sm:$0xff]
      %v281 = vld [vmem:[%s2 + $0x38] sm:$0xff]
      %283 = vset.pattern.permute.xlu0 0
      %284 = vperm.xlu0 %283, %v274
      %v285 = vpop.permute.xlu0 %284
      %288 = vset.pattern.permute.xlu0 0
      %289 = vperm.xlu0 %288, %v275
      %v290 = vpop.permute.xlu0 %289
      %293 = vset.pattern.permute.xlu0 0
      %294 = vperm.xlu0 %293, %v276
      %v295 = vpop.permute.xlu0 %294
      %298 = vset.pattern.permute.xlu0 0
      %299 = vperm.xlu0 %298, %v277
      %v300 = vpop.permute.xlu0 %299
      %303 = vset.pattern.permute.xlu0 0
      %304 = vperm.xlu0 %303, %v278
      %v305 = vpop.permute.xlu0 %304
      %308 = vset.pattern.permute.xlu0 0
      %309 = vperm.xlu0 %308, %v279
      %v310 = vpop.permute.xlu0 %309
      %313 = vset.pattern.permute.xlu0 0
      %314 = vperm.xlu0 %313, %v280
      %v315 = vpop.permute.xlu0 %314
      %318 = vset.pattern.permute.xlu0 0
      %319 = vperm.xlu0 %318, %v281
      %v320 = vpop.permute.xlu0 %319
      %v322 = vadd.f32 %v266, %v285
      %v323 = vadd.f32 %v267, %v290
      %v324 = vadd.f32 %v268, %v295
      %v325 = vadd.f32 %v269, %v300
      %v326 = vadd.f32 %v270, %v305
      %v327 = vadd.f32 %v271, %v310
      %v328 = vadd.f32 %v272, %v315
      %v329 = vadd.f32 %v273, %v320
      %vm330 = vcmp.ge.f32.partialorder %v322, 0.0
      %vm331 = vcmp.ge.f32.partialorder %v323, 0.0
      %vm332 = vcmp.ge.f32.partialorder %v324, 0.0
      %vm333 = vcmp.ge.f32.partialorder %v325, 0.0
      %vm334 = vcmp.ge.f32.partialorder %v326, 0.0
      %vm335 = vcmp.ge.f32.partialorder %v327, 0.0
      %vm336 = vcmp.ge.f32.partialorder %v328, 0.0
      %vm337 = vcmp.ge.f32.partialorder %v329, 0.0
      %v338 = vmul.f32 %v322, 0.2
      %v339 = vmul.f32 %v323, 0.2
      %v340 = vmul.f32 %v324, 0.2
      %v341 = vmul.f32 %v325, 0.2
      %v342 = vmul.f32 %v326, 0.2
      %v343 = vmul.f32 %v327, 0.2
      %v344 = vmul.f32 %v328, 0.2
      %v345 = vmul.f32 %v329, 0.2
      %v346 = vsel %vm330, %v322, %v338
      %v347 = vsel %vm331, %v323, %v339
      %v348 = vsel %vm332, %v324, %v340
      %v349 = vsel %vm333, %v325, %v341
      %v350 = vsel %vm334, %v326, %v342
      %v351 = vsel %vm335, %v327, %v343
      %v352 = vsel %vm336, %v328, %v344
      %v353 = vsel %vm337, %v329, %v345
      %v354 = vpack.c.bf16 %v346, %v346
      %v355 = vpack.c.bf16 %v347, %v347
      %v356 = vpack.c.bf16 %v348, %v348
      %v357 = vpack.c.bf16 %v349, %v349
      %v358 = vpack.c.bf16 %v350, %v350
      %v359 = vpack.c.bf16 %v351, %v351
      %v360 = vpack.c.bf16 %v352, %v352
      %v361 = vpack.c.bf16 %v353, %v353
      %362 = vst [vmem:[%s201] sm:$0xf] %v354
      %363 = vst [vmem:[%s201 + $0x4] sm:$0xf] %v355
      %364 = vst [vmem:[%s201 + $0x8] sm:$0xf] %v356
      %365 = vst [vmem:[%s201 + $0xc] sm:$0xf] %v357
      %366 = vst [vmem:[%s201 + $0x10] sm:$0xf] %v358
      %367 = vst [vmem:[%s201 + $0x14] sm:$0xf] %v359
      %368 = vst [vmem:[%s201 + $0x18] sm:$0xf] %v360
      %369 = vst [vmem:[%s201 + $0x1c] sm:$0xf] %v361
      %p370 = scmp.lt.s32.totalorder %s18, 1
      %s371 = scalar_select %p370, %s18, 1
      %p372 = scmp.lt.s32.totalorder %s19, 0
      %s373 = scalar_select %p372, %s19, 0
      %s374 = smul.addr %s371, 8
      %s375 = sadd.s32 %s373, %s374
      %s376 = smul.addr %s375, 4
      %s377 = scalar_lea.vmem %s3, %s376
      // Predicated region
      $region33: #{forward.16} parent=31 // pred_check
        %p378 = pneg %p116
      $region34: #{forward.16} parent=31 // pred_check_branch
        %380 = sbr.rel (%p378) target = $region36
      $region35: #{forward.16} parent=31 // pred_region
        _
      $region36: #{forward.16} parent=31 // pred_fallthru
        _
    $region32: #{forward.16} parent=5 // pred_fallthru
      _
    %p381 = scmp.le.s32.totalorder 2, %s9
    // Predicated region
    $region37: #{forward.16} parent=5 // pred_check
      %p382 = pneg %p381
    $region38: #{forward.16} parent=5 // pred_check_branch
      %384 = sbr.rel (%p382) target = $region40
    $region39: #{forward.16} parent=5 // pred_region
      %s385 = ssub.s32 %s9, 2
      // Predicated region
      $region41: #{forward.16} parent=39 // pred_check
        %p386 = pneg %p122
      $region42: #{forward.16} parent=39 // pred_check_branch
        %388 = sbr.rel (%p386) target = $region44
      $region43: #{forward.16} parent=39 // pred_region
        %p389 = scmp.lt.s32.totalorder %s20, 1
        %s390 = scalar_select %p389, %s20, 1
        %p391 = scmp.lt.s32.totalorder %s21, 0
        %s392 = scalar_select %p391, %s21, 0
        %s393 = smul.addr %s390, 8
        %s394 = sadd.s32 %s392, %s393
        %s395 = smul.addr %s394, 4
        %s396 = scalar_lea.vmem %s3, %s395
      $region44: #{forward.16} parent=39 // pred_fallthru
        _
    $region40: #{forward.16} parent=5 // pred_fallthru
      _
  $region6: #{forward.16} parent=0 // loop_footer
    %s13 = sadd.s32 1, %s9
  $region7: #{forward.16} parent=0 // loop_footer_branch
    %8 = sbr.rel target = $region3
  $region8: #{forward.16} parent=0 // loop_exit
    _

// kernel: forward.17
$region0: #{forward.17}
  #allocation0 [shape = 'u32[]', space=smem, size = 0x4, offset = 0x4, fixed_abs, tag = 'smem constant byte address 0x4 - core index']
  #allocation1 [shape = 'u32[72,128]{1,0:T(1,128)}', space=vmem, size = 0x9000, scoped, tag = 'internal scratch']
  %s0 = inlined_call_operand.vmem [shape: bf16[2,128,256], index: 0, kind: input, shape index: {}, may-alias: {0,1}]
  %s1 = inlined_call_operand.vmem [shape: bf16[2,128,256], index: 1, kind: input, shape index: {}, may-alias: {0,1}]
  %s2 = inlined_call_operand.vmem [shape: bf16[3,128,128], index: 2, kind: input, shape index: {}]
  %s3 = inlined_call_operand.vmem [shape: f32[128,1], index: 3, kind: input, shape index: {}]
  %s4 = inlined_call_operand.vmem [shape: bf16[2,128,128], index: 4, kind: output, shape index: {0}]
  %s5 = inlined_call_operand.vmem [shape: f32[2,1,128,2], index: 5, kind: output, shape index: {1}]
  %6 = xla_tuple %s4, %s5
  %s7 = sld [smem:[#allocation0]]
  $region139: #{forward.17} parent=0
    _
  %s9 = ssub.s32 1, %s7
  %s10 = scalar_select 0, %s9, %s7
  $region1: #{forward.17} parent=0
    #allocation2 [shape = 'u8[65536]{0}', space=vmem, size = 0x10000, scoped, tag = 'input window, operand 0']
    #allocation3 [shape = 'u8[65536]{0}', space=vmem, size = 0x10000, scoped, tag = 'input window, operand 1']
    loop: start=0, step=1, limit=4
    $region2: #{forward.17} parent=1 // loop_pre_header
      _
    $region3: #{forward.17} parent=1 // loop_header
      %s12 = sphi 0, %s16
      %p13 = scmp.ge.s32.totalorder %s12, 4
      %s19 = sphi 0, %s31
      %s20 = sphi 0, %s27
      %s21 = sphi 0, %s19
      %s22 = sphi 0, %s20
      %s23 = sphi 0, %s21
      %s24 = sphi 0, %s22
      %s36 = sphi 0, %s38
      %s39 = sphi 0, %s36
      %s40 = sphi 0, %s39
      %s56 = sphi 0, %s40
      %s66 = sphi 0, %s68
      %s69 = sphi 0, %s66
      %s70 = sphi 0, %s69
      %s86 = sphi 0, %s70
      %s90 = sphi 0, %s90
      %s92 = sphi 0, %s90
      %s93 = sphi 0, %s92
      %s107 = sphi 0, %s93
      %s111 = sphi 0, %s111
      %s113 = sphi 0, %s111
      %s114 = sphi 0, %s113
      %s128 = sphi 0, %s114
      %s136 = sphi 0, %s138
      %s139 = sphi 0, %s136
      %s140 = sphi 0, %s139
      %s156 = sphi 0, %s140
      %s164 = sphi 0, %s166
      %s167 = sphi 0, %s164
      %s168 = sphi 0, %s167
      %s184 = sphi 0, %s168
    $region4: #{forward.17} parent=1 // loop_header_branch
      %15 = sbr.rel (%p13) target = $region8
    $region5: #{forward.17} parent=1 // loop_body
      %s17 = ssub.s32 %s12, 1
      %s18 = ssub.s32 %s12, 2
      %s25 = sadd.s32 1, %s20
      %p26 = scmp.ge.s32.totalorder %s25, 1
      %s27 = scalar_select %p26, 0, %s25
      %s28 = sadd.s32 1, %s19
      %s29 = scalar_select %p26, %s28, %s19
      %p30 = scmp.ge.s32.totalorder %s29, 2
      %s31 = scalar_select %p30, 0, %s29
      %s32 = ssub.s32 %s19, %s31
      %s33 = ssub.s32 %s20, %s27
      %s34 = sor.u32 %s32, %s33
      %p35 = scmp.eq.s32.totalorder %s34, 0
      %s37 = sadd.s32 %s36, 1
      %s38 = scalar_select %p35, %s36, %s37
      %p41 = pneg %p35
      %p42 = scmp.eq.s32.totalorder %s12, 1
      %p43 = por %p41, %p42
      %p44 = scmp.ne.s32.totalorder %s36, %s39
      %p45 = scmp.eq.s32.totalorder %s12, 0
      %p46 = por %p44, %p45
      %p47 = scmp.ne.s32.totalorder %s36, %s39
      %p48 = scmp.eq.s32.totalorder %s17, 1
      %p49 = por %p47, %p48
      %p50 = scmp.ne.s32.totalorder %s39, %s40
      %p51 = scmp.eq.s32.totalorder %s17, 0
      %p52 = por %p50, %p51
      %p53 = scmp.ne.s32.totalorder %s39, %s40
      %p54 = scmp.eq.s32.totalorder %s18, 1
      %p55 = por %p53, %p54
      %p57 = scmp.ne.s32.totalorder %s40, %s56
      %p58 = scmp.eq.s32.totalorder %s18, 0
      %p59 = por %p57, %p58
      %s60 = sadd.s32 %s20, 1
      %s61 = sadd.s32 %s27, 1
      %s62 = ssub.s32 %s19, %s31
      %s63 = ssub.s32 %s60, %s61
      %s64 = sor.u32 %s62, %s63
      %p65 = scmp.eq.s32.totalorder %s64, 0
      %s67 = sadd.s32 %s66, 1
      %s68 = scalar_select %p65, %s66, %s67
      %p71 = pneg %p65
      %p72 = scmp.eq.s32.totalorder %s12, 1
      %p73 = por %p71, %p72
      %p74 = scmp.ne.s32.totalorder %s66, %s69
      %p75 = scmp.eq.s32.totalorder %s12, 0
      %p76 = por %p74, %p75
      %p77 = scmp.ne.s32.totalorder %s66, %s69
      %p78 = scmp.eq.s32.totalorder %s17, 1
      %p79 = por %p77, %p78
      %p80 = scmp.ne.s32.totalorder %s69, %s70
      %p81 = scmp.eq.s32.totalorder %s17, 0
      %p82 = por %p80, %p81
      %p83 = scmp.ne.s32.totalorder %s69, %s70
      %p84 = scmp.eq.s32.totalorder %s18, 1
      %p85 = por %p83, %p84
      %p87 = scmp.ne.s32.totalorder %s70, %s86
      %p88 = scmp.eq.s32.totalorder %s18, 0
      %p89 = por %p87, %p88
      %s91 = sadd.s32 %s90, 1
      %p94 = scmp.eq.s32.totalorder %s12, 1
      %p95 = scmp.ne.s32.totalorder %s90, %s92
      %p96 = scmp.eq.s32.totalorder %s12, 0
      %p97 = por %p95, %p96
      %p98 = scmp.ne.s32.totalorder %s90, %s92
      %p99 = scmp.eq.s32.totalorder %s17, 1
      %p100 = por %p98, %p99
      %p101 = scmp.ne.s32.totalorder %s92, %s93
      %p102 = scmp.eq.s32.totalorder %s17, 0
      %p103 = por %p101, %p102
      %p104 = scmp.ne.s32.totalorder %s92, %s93
      %p105 = scmp.eq.s32.totalorder %s18, 1
      %p106 = por %p104, %p105
      %p108 = scmp.ne.s32.totalorder %s93, %s107
      %p109 = scmp.eq.s32.totalorder %s18, 0
      %p110 = por %p108, %p109
      %s112 = sadd.s32 %s111, 1
      %p115 = scmp.eq.s32.totalorder %s12, 1
      %p116 = scmp.ne.s32.totalorder %s111, %s113
      %p117 = scmp.eq.s32.totalorder %s12, 0
      %p118 = por %p116, %p117
      %p119 = scmp.ne.s32.totalorder %s111, %s113
      %p120 = scmp.eq.s32.totalorder %s17, 1
      %p121 = por %p119, %p120
      %p122 = scmp.ne.s32.totalorder %s113, %s114
      %p123 = scmp.eq.s32.totalorder %s17, 0
      %p124 = por %p122, %p123
      %p125 = scmp.ne.s32.totalorder %s113, %s114
      %p126 = scmp.eq.s32.totalorder %s18, 1
      %p127 = por %p125, %p126
      %p129 = scmp.ne.s32.totalorder %s114, %s128
      %p130 = scmp.eq.s32.totalorder %s18, 0
      %p131 = por %p129, %p130
      %s132 = ssub.s32 %s19, %s31
      %s133 = ssub.s32 %s20, %s27
      %s134 = sor.u32 %s132, %s133
      %p135 = scmp.eq.s32.totalorder %s134, 0
      %s137 = sadd.s32 %s136, 1
      %s138 = scalar_select %p135, %s136, %s137
      %p141 = pneg %p135
      %p142 = scmp.eq.s32.totalorder %s12, 1
      %p143 = por %p141, %p142
      %p144 = scmp.ne.s32.totalorder %s136, %s139
      %p145 = scmp.eq.s32.totalorder %s12, 0
      %p146 = por %p144, %p145
      %p147 = scmp.ne.s32.totalorder %s136, %s139
      %p148 = scmp.eq.s32.totalorder %s17, 1
      %p149 = por %p147, %p148
      %p150 = scmp.ne.s32.totalorder %s139, %s140
      %p151 = scmp.eq.s32.totalorder %s17, 0
      %p152 = por %p150, %p151
      %p153 = scmp.ne.s32.totalorder %s139, %s140
      %p154 = scmp.eq.s32.totalorder %s18, 1
      %p155 = por %p153, %p154
      %p157 = scmp.ne.s32.totalorder %s140, %s156
      %p158 = scmp.eq.s32.totalorder %s18, 0
      %p159 = por %p157, %p158
      %s160 = ssub.s32 %s19, %s31
      %s161 = ssub.s32 %s20, %s27
      %s162 = sor.u32 %s160, %s161
      %p163 = scmp.eq.s32.totalorder %s162, 0
      %s165 = sadd.s32 %s164, 1
      %s166 = scalar_select %p163, %s164, %s165
      %p169 = pneg %p163
      %p170 = scmp.eq.s32.totalorder %s12, 1
      %p171 = por %p169, %p170
      %p172 = scmp.ne.s32.totalorder %s164, %s167
      %p173 = scmp.eq.s32.totalorder %s12, 0
      %p174 = por %p172, %p173
      %p175 = scmp.ne.s32.totalorder %s164, %s167
      %p176 = scmp.eq.s32.totalorder %s17, 1
      %p177 = por %p175, %p176
      %p178 = scmp.ne.s32.totalorder %s167, %s168
      %p179 = scmp.eq.s32.totalorder %s17, 0
      %p180 = por %p178, %p179
      %p181 = scmp.ne.s32.totalorder %s167, %s168
      %p182 = scmp.eq.s32.totalorder %s18, 1
      %p183 = por %p181, %p182
      %p185 = scmp.ne.s32.totalorder %s168, %s184
      %p186 = scmp.eq.s32.totalorder %s18, 0
      %p187 = por %p185, %p186
      %p188 = scmp.le.s32.totalorder 1, %s12
      %p189 = scmp.lt.s32.totalorder %s12, 3
      %p190 = pnand %p188, %p189
      %p191 = pneg %p190
      // Predicated region
      $region9: #{forward.17} parent=5 // pred_check
        _
      $region10: #{forward.17} parent=5 // pred_check_branch
        %193 = sbr.rel (%p190) target = $region12
      $region11: #{forward.17} parent=5 // pred_region
        %s194 = ssub.s32 %s12, 1
        // Predicated region
        $region13: #{forward.17} parent=11 // pred_check
          %p195 = pneg %p103
        $region14: #{forward.17} parent=11 // pred_check_branch
          %197 = sbr.rel (%p195) target = $region16
        $region15: #{forward.17} parent=11 // pred_region
          _
        $region16: #{forward.17} parent=11 // pred_fallthru
          _
        // Predicated region
        $region17: #{forward.17} parent=11 // pred_check
          %p198 = pneg %p124
        $region18: #{forward.17} parent=11 // pred_check_branch
          %200 = sbr.rel (%p198) target = $region20
        $region19: #{forward.17} parent=11 // pred_region
          _
        $region20: #{forward.17} parent=11 // pred_fallthru
          _
      $region12: #{forward.17} parent=5 // pred_fallthru
        _
      %p201 = scmp.lt.s32.totalorder %s12, 2
      // Predicated region
      $region21: #{forward.17} parent=5 // pred_check
        %p202 = pneg %p201
      $region22: #{forward.17} parent=5 // pred_check_branch
        %204 = sbr.rel (%p202) target = $region24
      $region23: #{forward.17} parent=5 // pred_region
        // Predicated region
        $region25: #{forward.17} parent=23 // pred_check
          %p205 = pneg %p46
        $region26: #{forward.17} parent=23 // pred_check_branch
          %207 = sbr.rel (%p205) target = $region28
        $region27: #{forward.17} parent=23 // pred_region
          %s208 = sand.u32 %s36, 1
          %s209 = sand.u32 %s36, 1
          %s210 = smul.addr %s209, 64
          %s211 = scalar_lea.vmem [#allocation2], %s210
          %s212 = smul.addr %s19, 32
          %s213 = sadd.s32 %s20, %s212
          %s214 = smul.addr %s213, 4
          %s215 = scalar_lea.vmem %s0, %s214
          // Predicated region
          $region29: #{forward.17} parent=27 // pred_check
            _
          $region30: #{forward.17} parent=27 // pred_check_branch
            %217 = sbr.rel (0) target = $region32
          $region31: #{forward.17} parent=27 // pred_region
            // Predicated region
            $region33: #{forward.17} parent=31 // pred_check
              _
            $region34: #{forward.17} parent=31 // pred_check_branch
              %219 = sbr.rel target = $region36
            $region35: #{forward.17} parent=31 // pred_region
              // Predicated region
              $region48: #{forward.17} parent=35 // pred_check
                _
              $region49: #{forward.17} parent=35 // pred_check_branch
                %265 = sbr.rel (0) target = $region51
              $region50: #{forward.17} parent=35 // pred_region
                loop: start=0, step=1, limit=1
                $region52: #{forward.17} parent=50 // loop_pre_header
                  _
                $region53: #{forward.17} parent=50 // loop_header
                  %s267 = sphi 0, %s271
                  %p268 = scmp.ge.s32.totalorder %s267, 1
                  %s272 = sphi %s215, %s215
                  %s273 = sphi %s211, %s211
                $region54: #{forward.17} parent=50 // loop_header_branch
                  %270 = sbr.rel (%p268) target = $region58
                $region55: #{forward.17} parent=50 // loop_body
                  _
                $region56: #{forward.17} parent=50 // loop_footer
                  %s271 = sadd.s32 1, %s267
                $region57: #{forward.17} parent=50 // loop_footer_branch
                  %266 = sbr.rel target = $region53
                $region58: #{forward.17} parent=50 // loop_exit
                  _
                %s275 = ssub.s32 16, 1
                loop: start=0, step=1, limit=1
                $region59: #{forward.17} parent=50 // loop_pre_header
                  _
                $region60: #{forward.17} parent=50 // loop_header
                  %s277 = sphi 0, %s281
                  %p278 = scmp.ge.s32.totalorder %s277, 1
                  %s282 = sphi %s215, %s215
                  %s283 = sphi %s211, %s211
                $region61: #{forward.17} parent=50 // loop_header_branch
                  %280 = sbr.rel (%p278) target = $region65
                $region62: #{forward.17} parent=50 // loop_body
                  %v284 = vld [vmem:[%s282] sm:%s275]
                  %285 = vst [vmem:[%s283] sm:%s275] %v284
                  %v286 = vld [vmem:[%s282 + $0x8] sm:%s275]
                  %287 = vst [vmem:[%s283 + $0x4] sm:%s275] %v286
                  %v288 = vld [vmem:[%s282 + $0x10] sm:%s275]
                  %289 = vst [vmem:[%s283 + $0x8] sm:%s275] %v288
                  %v290 = vld [vmem:[%s282 + $0x18] sm:%s275]
                  %291 = vst [vmem:[%s283 + $0xc] sm:%s275] %v290
                  %v292 = vld [vmem:[%s282 + $0x20] sm:%s275]
                  %293 = vst [vmem:[%s283 + $0x10] sm:%s275] %v292
                  %v294 = vld [vmem:[%s282 + $0x28] sm:%s275]
                  %295 = vst [vmem:[%s283 + $0x14] sm:%s275] %v294
                  %v296 = vld [vmem:[%s282 + $0x30] sm:%s275]
                  %297 = vst [vmem:[%s283 + $0x18] sm:%s275] %v296
                  %v298 = vld [vmem:[%s282 + $0x38] sm:%s275]
                  %299 = vst [vmem:[%s283 + $0x1c] sm:%s275] %v298
                  %v300 = vld [vmem:[%s282 + $0x40] sm:%s275]
                  %301 = vst [vmem:[%s283 + $0x20] sm:%s275] %v300
                  %v302 = vld [vmem:[%s282 + $0x48] sm:%s275]
                  %303 = vst [vmem:[%s283 + $0x24] sm:%s275] %v302
                  %v304 = vld [vmem:[%s282 + $0x50] sm:%s275]
                  %305 = vst [vmem:[%s283 + $0x28] sm:%s275] %v304
                  %v306 = vld [vmem:[%s282 + $0x58] sm:%s275]
                  %307 = vst [vmem:[%s283 + $0x2c] sm:%s275] %v306
                  %v308 = vld [vmem:[%s282 + $0x60] sm:%s275]
                  %309 = vst [vmem:[%s283 + $0x30] sm:%s275] %v308
                  %v310 = vld [vmem:[%s282 + $0x68] sm:%s275]
                  %311 = vst [vmem:[%s283 + $0x34] sm:%s275] %v310
                  %v312 = vld [vmem:[%s282 + $0x70] sm:%s275]
                  %313 = vst [vmem:[%s283 + $0x38] sm:%s275] %v312
                  %v314 = vld [vmem:[%s282 + $0x78] sm:%s275]
                  %315 = vst [vmem:[%s283 + $0x3c] sm:%s275] %v314
                $region63: #{forward.17} parent=50 // loop_footer
                  %s281 = sadd.s32 1, %s277
                $region64: #{forward.17} parent=50 // loop_footer_branch
                  %276 = sbr.rel target = $region60
                $region65: #{forward.17} parent=50 // loop_exit
                  _
              $region51: #{forward.17} parent=35 // pred_fallthru
                _
            $region36: #{forward.17} parent=31 // pred_fallthru
              _
            // Predicated region
            $region37: #{forward.17} parent=31 // pred_check
              _
            $region38: #{forward.17} parent=31 // pred_check_branch
              %221 = sbr.rel (0) target = $region40
            $region39: #{forward.17} parent=31 // pred_region
              %s223 = ssub.s32 16, 1
              loop: start=0, step=1, limit=1
              $region41: #{forward.17} parent=39 // loop_pre_header
                _
              $region42: #{forward.17} parent=39 // loop_header
                %s225 = sphi 0, %s229
                %p226 = scmp.ge.s32.totalorder %s225, 1
                %s230 = sphi %s215, %s215
                %s231 = sphi %s211, %s211
              $region43: #{forward.17} parent=39 // loop_header_branch
                %228 = sbr.rel (%p226) target = $region47
              $region44: #{forward.17} parent=39 // loop_body
                %v232 = vld [vmem:[%s230] sm:%s223]
                %233 = vst [vmem:[%s231] sm:%s223] %v232
                %v234 = vld [vmem:[%s230 + $0x8] sm:%s223]
                %235 = vst [vmem:[%s231 + $0x4] sm:%s223] %v234
                %v236 = vld [vmem:[%s230 + $0x10] sm:%s223]
                %237 = vst [vmem:[%s231 + $0x8] sm:%s223] %v236
                %v238 = vld [vmem:[%s230 + $0x18] sm:%s223]
                %239 = vst [vmem:[%s231 + $0xc] sm:%s223] %v238
                %v240 = vld [vmem:[%s230 + $0x20] sm:%s223]
                %241 = vst [vmem:[%s231 + $0x10] sm:%s223] %v240
                %v242 = vld [vmem:[%s230 + $0x28] sm:%s223]
                %243 = vst [vmem:[%s231 + $0x14] sm:%s223] %v242
                %v244 = vld [vmem:[%s230 + $0x30] sm:%s223]
                %245 = vst [vmem:[%s231 + $0x18] sm:%s223] %v244
                %v246 = vld [vmem:[%s230 + $0x38] sm:%s223]
                %247 = vst [vmem:[%s231 + $0x1c] sm:%s223] %v246
                %v248 = vld [vmem:[%s230 + $0x40] sm:%s223]
                %249 = vst [vmem:[%s231 + $0x20] sm:%s223] %v248
                %v250 = vld [vmem:[%s230 + $0x48] sm:%s223]
                %251 = vst [vmem:[%s231 + $0x24] sm:%s223] %v250
                %v252 = vld [vmem:[%s230 + $0x50] sm:%s223]
                %253 = vst [vmem:[%s231 + $0x28] sm:%s223] %v252
                %v254 = vld [vmem:[%s230 + $0x58] sm:%s223]
                %255 = vst [vmem:[%s231 + $0x2c] sm:%s223] %v254
                %v256 = vld [vmem:[%s230 + $0x60] sm:%s223]
                %257 = vst [vmem:[%s231 + $0x30] sm:%s223] %v256
                %v258 = vld [vmem:[%s230 + $0x68] sm:%s223]
                %259 = vst [vmem:[%s231 + $0x34] sm:%s223] %v258
                %v260 = vld [vmem:[%s230 + $0x70] sm:%s223]
                %261 = vst [vmem:[%s231 + $0x38] sm:%s223] %v260
                %v262 = vld [vmem:[%s230 + $0x78] sm:%s223]
                %263 = vst [vmem:[%s231 + $0x3c] sm:%s223] %v262
              $region45: #{forward.17} parent=39 // loop_footer
                %s229 = sadd.s32 1, %s225
              $region46: #{forward.17} parent=39 // loop_footer_branch
                %224 = sbr.rel target = $region42
              $region47: #{forward.17} parent=39 // loop_exit
                _
            $region40: #{forward.17} parent=31 // pred_fallthru
              _
          $region32: #{forward.17} parent=27 // pred_fallthru
            _
          %316 = vnop
        $region28: #{forward.17} parent=23 // pred_fallthru
          _
        // Predicated region
        $region66: #{forward.17} parent=23 // pred_check
          %p317 = pneg %p76
        $region67: #{forward.17} parent=23 // pred_check_branch
          %319 = sbr.rel (%p317) target = $region69
        $region68: #{forward.17} parent=23 // pred_region
          %s320 = sand.u32 %s66, 1
          %s321 = sand.u32 %s66, 1
          %s322 = smul.addr %s321, 64
          %s323 = scalar_lea.vmem [#allocation3], %s322
          %s324 = sadd.s32 %s20, 1
          %s325 = smul.addr %s19, 32
          %s326 = sadd.s32 %s324, %s325
          %s327 = smul.addr %s326, 4
          %s328 = scalar_lea.vmem %s1, %s327
          // Predicated region
          $region70: #{forward.17} parent=68 // pred_check
            _
          $region71: #{forward.17} parent=68 // pred_check_branch
            %330 = sbr.rel (0) target = $region73
          $region72: #{forward.17} parent=68 // pred_region
            // Predicated region
            $region74: #{forward.17} parent=72 // pred_check
              _
            $region75: #{forward.17} parent=72 // pred_check_branch
              %332 = sbr.rel target = $region77
            $region76: #{forward.17} parent=72 // pred_region
              // Predicated region
              $region89: #{forward.17} parent=76 // pred_check
                _
              $region90: #{forward.17} parent=76 // pred_check_branch
                %378 = sbr.rel (0) target = $region92
              $region91: #{forward.17} parent=76 // pred_region
                loop: start=0, step=1, limit=1
                $region93: #{forward.17} parent=91 // loop_pre_header
                  _
                $region94: #{forward.17} parent=91 // loop_header
                  %s380 = sphi 0, %s384
                  %p381 = scmp.ge.s32.totalorder %s380, 1
                  %s385 = sphi %s328, %s328
                  %s386 = sphi %s323, %s323
                $region95: #{forward.17} parent=91 // loop_header_branch
                  %383 = sbr.rel (%p381) target = $region99
                $region96: #{forward.17} parent=91 // loop_body
                  _
                $region97: #{forward.17} parent=91 // loop_footer
                  %s384 = sadd.s32 1, %s380
                $region98: #{forward.17} parent=91 // loop_footer_branch
                  %379 = sbr.rel target = $region94
                $region99: #{forward.17} parent=91 // loop_exit
                  _
                %s388 = ssub.s32 16, 1
                loop: start=0, step=1, limit=1
                $region100: #{forward.17} parent=91 // loop_pre_header
                  _
                $region101: #{forward.17} parent=91 // loop_header
                  %s390 = sphi 0, %s394
                  %p391 = scmp.ge.s32.totalorder %s390, 1
                  %s395 = sphi %s328, %s328
                  %s396 = sphi %s323, %s323
                $region102: #{forward.17} parent=91 // loop_header_branch
                  %393 = sbr.rel (%p391) target = $region106
                $region103: #{forward.17} parent=91 // loop_body
                  %v397 = vld [vmem:[%s395] sm:%s388]
                  %398 = vst [vmem:[%s396] sm:%s388] %v397
                  %v399 = vld [vmem:[%s395 + $0x8] sm:%s388]
                  %400 = vst [vmem:[%s396 + $0x4] sm:%s388] %v399
                  %v401 = vld [vmem:[%s395 + $0x10] sm:%s388]
                  %402 = vst [vmem:[%s396 + $0x8] sm:%s388] %v401
                  %v403 = vld [vmem:[%s395 + $0x18] sm:%s388]
                  %404 = vst [vmem:[%s396 + $0xc] sm:%s388] %v403
                  %v405 = vld [vmem:[%s395 + $0x20] sm:%s388]
                  %406 = vst [vmem:[%s396 + $0x10] sm:%s388] %v405
                  %v407 = vld [vmem:[%s395 + $0x28] sm:%s388]
                  %408 = vst [vmem:[%s396 + $0x14] sm:%s388] %v407
                  %v409 = vld [vmem:[%s395 + $0x30] sm:%s388]
                  %410 = vst [vmem:[%s396 + $0x18] sm:%s388] %v409
                  %v411 = vld [vmem:[%s395 + $0x38] sm:%s388]
                  %412 = vst [vmem:[%s396 + $0x1c] sm:%s388] %v411
                  %v413 = vld [vmem:[%s395 + $0x40] sm:%s388]
                  %414 = vst [vmem:[%s396 + $0x20] sm:%s388] %v413
                  %v415 = vld [vmem:[%s395 + $0x48] sm:%s388]
                  %416 = vst [vmem:[%s396 + $0x24] sm:%s388] %v415
                  %v417 = vld [vmem:[%s395 + $0x50] sm:%s388]
                  %418 = vst [vmem:[%s396 + $0x28] sm:%s388] %v417
                  %v419 = vld [vmem:[%s395 + $0x58] sm:%s388]
                  %420 = vst [vmem:[%s396 + $0x2c] sm:%s388] %v419
                  %v421 = vld [vmem:[%s395 + $0x60] sm:%s388]
                  %422 = vst [vmem:[%s396 + $0x30] sm:%s388] %v421
                  %v423 = vld [vmem:[%s395 + $0x68] sm:%s388]
                  %424 = vst [vmem:[%s396 + $0x34] sm:%s388] %v423
                  %v425 = vld [vmem:[%s395 + $0x70] sm:%s388]
                  %426 = vst [vmem:[%s396 + $0x38] sm:%s388] %v425
                  %v427 = vld [vmem:[%s395 + $0x78] sm:%s388]
                  %428 = vst [vmem:[%s396 + $0x3c] sm:%s388] %v427
                $region104: #{forward.17} parent=91 // loop_footer
                  %s394 = sadd.s32 1, %s390
                $region105: #{forward.17} parent=91 // loop_footer_branch
                  %389 = sbr.rel target = $region101
                $region106: #{forward.17} parent=91 // loop_exit
                  _
              $region92: #{forward.17} parent=76 // pred_fallthru
                _
            $region77: #{forward.17} parent=72 // pred_fallthru
              _
            // Predicated region
            $region78: #{forward.17} parent=72 // pred_check
              _
            $region79: #{forward.17} parent=72 // pred_check_branch
              %334 = sbr.rel (0) target = $region81
            $region80: #{forward.17} parent=72 // pred_region
              %s336 = ssub.s32 16, 1
              loop: start=0, step=1, limit=1
              $region82: #{forward.17} parent=80 // loop_pre_header
                _
              $region83: #{forward.17} parent=80 // loop_header
                %s338 = sphi 0, %s342
                %p339 = scmp.ge.s32.totalorder %s338, 1
                %s343 = sphi %s328, %s328
                %s344 = sphi %s323, %s323
              $region84: #{forward.17} parent=80 // loop_header_branch
                %341 = sbr.rel (%p339) target = $region88
              $region85: #{forward.17} parent=80 // loop_body
                %v345 = vld [vmem:[%s343] sm:%s336]
                %346 = vst [vmem:[%s344] sm:%s336] %v345
                %v347 = vld [vmem:[%s343 + $0x8] sm:%s336]
                %348 = vst [vmem:[%s344 + $0x4] sm:%s336] %v347
                %v349 = vld [vmem:[%s343 + $0x10] sm:%s336]
                %350 = vst [vmem:[%s344 + $0x8] sm:%s336] %v349
                %v351 = vld [vmem:[%s343 + $0x18] sm:%s336]
                %352 = vst [vmem:[%s344 + $0xc] sm:%s336] %v351
                %v353 = vld [vmem:[%s343 + $0x20] sm:%s336]
                %354 = vst [vmem:[%s344 + $0x10] sm:%s336] %v353
                %v355 = vld [vmem:[%s343 + $0x28] sm:%s336]
                %356 = vst [vmem:[%s344 + $0x14] sm:%s336] %v355
                %v357 = vld [vmem:[%s343 + $0x30] sm:%s336]
                %358 = vst [vmem:[%s344 + $0x18] sm:%s336] %v357
                %v359 = vld [vmem:[%s343 + $0x38] sm:%s336]
                %360 = vst [vmem:[%s344 + $0x1c] sm:%s336] %v359
                %v361 = vld [vmem:[%s343 + $0x40] sm:%s336]
                %362 = vst [vmem:[%s344 + $0x20] sm:%s336] %v361
                %v363 = vld [vmem:[%s343 + $0x48] sm:%s336]
                %364 = vst [vmem:[%s344 + $0x24] sm:%s336] %v363
                %v365 = vld [vmem:[%s343 + $0x50] sm:%s336]
                %366 = vst [vmem:[%s344 + $0x28] sm:%s336] %v365
                %v367 = vld [vmem:[%s343 + $0x58] sm:%s336]
                %368 = vst [vmem:[%s344 + $0x2c] sm:%s336] %v367
                %v369 = vld [vmem:[%s343 + $0x60] sm:%s336]
                %370 = vst [vmem:[%s344 + $0x30] sm:%s336] %v369
                %v371 = vld [vmem:[%s343 + $0x68] sm:%s336]
                %372 = vst [vmem:[%s344 + $0x34] sm:%s336] %v371
                %v373 = vld [vmem:[%s343 + $0x70] sm:%s336]
                %374 = vst [vmem:[%s344 + $0x38] sm:%s336] %v373
                %v375 = vld [vmem:[%s343 + $0x78] sm:%s336]
                %376 = vst [vmem:[%s344 + $0x3c] sm:%s336] %v375
              $region86: #{forward.17} parent=80 // loop_footer
                %s342 = sadd.s32 1, %s338
              $region87: #{forward.17} parent=80 // loop_footer_branch
                %337 = sbr.rel target = $region83
              $region88: #{forward.17} parent=80 // loop_exit
                _
            $region81: #{forward.17} parent=72 // pred_fallthru
              _
          $region73: #{forward.17} parent=68 // pred_fallthru
            _
          %429 = vnop
        $region69: #{forward.17} parent=23 // pred_fallthru
          _
      $region24: #{forward.17} parent=5 // pred_fallthru
        _
      %p430 = scmp.le.s32.totalorder 1, %s12
      %p431 = scmp.lt.s32.totalorder %s12, 3
      %p432 = pnand %p430, %p431
      %p433 = pneg %p432
      // Predicated region
      $region107: #{forward.17} parent=5 // pred_check
        _
      $region108: #{forward.17} parent=5 // pred_check_branch
        %435 = sbr.rel (%p432) target = $region110
      $region109: #{forward.17} parent=5 // pred_region
        %s436 = ssub.s32 %s12, 1
        %s437 = sand.u32 %s39, 1
        %s438 = sand.u32 %s39, 1
        %s439 = smul.addr %s438, 64
        %s440 = scalar_lea.vmem [#allocation2], %s439
        // Predicated region
        $region111: #{forward.17} parent=109 // pred_check
          %p441 = pneg %p52
        $region112: #{forward.17} parent=109 // pred_check_branch
          %443 = sbr.rel (%p441) target = $region114
        $region113: #{forward.17} parent=109 // pred_region
          _
        $region114: #{forward.17} parent=109 // pred_fallthru
          _
        %s444 = sand.u32 %s69, 1
        %s445 = sand.u32 %s69, 1
        %s446 = smul.addr %s445, 64
        %s447 = scalar_lea.vmem [#allocation3], %s446
        // Predicated region
        $region115: #{forward.17} parent=109 // pred_check
          %p448 = pneg %p82
        $region116: #{forward.17} parent=109 // pred_check_branch
          %450 = sbr.rel (%p448) target = $region118
        $region117: #{forward.17} parent=109 // pred_region
          _
        $region118: #{forward.17} parent=109 // pred_fallthru
          _
        %s451 = sand.u32 %s39, 1
        %s452 = sand.u32 %s39, 1
        %s453 = smul.addr %s452, 64
        %s454 = scalar_lea.vmem [#allocation2], %s453
        %p455 = pneg %p52
        %p456 = pneg %p49
        %s457 = sand.u32 %s69, 1
        %s458 = sand.u32 %s69, 1
        %s459 = smul.addr %s458, 64
        %s460 = scalar_lea.vmem [#allocation3], %s459
        %p461 = pneg %p82
        %p462 = pneg %p79
        %p463 = pneg %p103
        %p464 = pneg %p100
        %p465 = pneg %p124
        %p466 = pneg %p121
        %p467 = pneg %p152
        %p468 = pneg %p149
        %p469 = scmp.lt.s32.totalorder %s21, 1
        %s470 = scalar_select %p469, %s21, 1
        %p471 = scmp.lt.s32.totalorder %s22, 0
        %s472 = scalar_select %p471, %s22, 0
        %s473 = smul.addr %s470, 16
        %s474 = sadd.s32 %s472, %s473
        %s475 = smul.addr %s474, 4
        %s476 = scalar_lea.vmem %s4, %s475
        %p477 = pneg %p180
        %p478 = pneg %p177
        %p479 = scmp.lt.s32.totalorder %s21, 1
        %s480 = scalar_select %p479, %s21, 1
        %p481 = scmp.lt.s32.totalorder %s22, 0
        %s482 = scalar_select %p481, %s22, 0
        %s483 = smul.addr %s482, 16
        %s484 = smul.addr %s480, 16
        %s485 = sadd.s32 %s483, %s484
        %s486 = smul.addr %s485, 8
        %s487 = scalar_lea.vmem %s5, %s486
        %s488 = sadd.s32 %s22, 1
        %p489 = scmp.lt.s32.totalorder %s21, 1
        %s490 = scalar_select %p489, %s21, 1
        %p491 = scmp.lt.s32.totalorder %s22, 0
        %s492 = scalar_select %p491, %s22, 0
        %s493 = smul.addr %s490, 16
        %s494 = sadd.s32 %s492, %s493
        %s495 = smul.addr %s494, 4
        %s496 = scalar_lea.vmem %s4, %s495
        %p497 = scmp.lt.s32.totalorder %s21, 1
        %s498 = scalar_select %p497, %s21, 1
        %p499 = scmp.lt.s32.totalorder %s22, 0
        %s500 = scalar_select %p499, %s22, 0
        %s501 = smul.addr %s500, 16
        %s502 = smul.addr %s498, 16
        %s503 = sadd.s32 %s501, %s502
        %s504 = smul.addr %s503, 8
        %s505 = scalar_lea.vmem %s5, %s504
        %v507 = vld [vmem:[%s440] sm:$0xf]
        %v508 = vld [vmem:[%s440 + $0x4] sm:$0xf]
        %v509 = vld [vmem:[%s440 + $0x8] sm:$0xf]
        %v510 = vld [vmem:[%s440 + $0xc] sm:$0xf]
        %v511 = vld [vmem:[%s440 + $0x10] sm:$0xf]
        %v512 = vld [vmem:[%s440 + $0x14] sm:$0xf]
        %v513 = vld [vmem:[%s440 + $0x18] sm:$0xf]
        %v514 = vld [vmem:[%s440 + $0x1c] sm:$0xf]
        %v515 = vld [vmem:[%s440 + $0x20] sm:$0xf]
        %v516 = vld [vmem:[%s440 + $0x24] sm:$0xf]
        %v517 = vld [vmem:[%s440 + $0x28] sm:$0xf]
        %v518 = vld [vmem:[%s440 + $0x2c] sm:$0xf]
        %v519 = vld [vmem:[%s440 + $0x30] sm:$0xf]
        %v520 = vld [vmem:[%s440 + $0x34] sm:$0xf]
        %v521 = vld [vmem:[%s440 + $0x38] sm:$0xf]
        %v522 = vld [vmem:[%s440 + $0x3c] sm:$0xf]
        %v523 = vld [vmem:[%s447] sm:$0xf]
        %v524 = vld [vmem:[%s447 + $0x4] sm:$0xf]
        %v525 = vld [vmem:[%s447 + $0x8] sm:$0xf]
        %v526 = vld [vmem:[%s447 + $0xc] sm:$0xf]
        %v527 = vld [vmem:[%s447 + $0x10] sm:$0xf]
        %v528 = vld [vmem:[%s447 + $0x14] sm:$0xf]
        %v529 = vld [vmem:[%s447 + $0x18] sm:$0xf]
        %v530 = vld [vmem:[%s447 + $0x1c] sm:$0xf]
        %v531 = vld [vmem:[%s447 + $0x20] sm:$0xf]
        %v532 = vld [vmem:[%s447 + $0x24] sm:$0xf]
        %v533 = vld [vmem:[%s447 + $0x28] sm:$0xf]
        %v534 = vld [vmem:[%s447 + $0x2c] sm:$0xf]
        %v535 = vld [vmem:[%s447 + $0x30] sm:$0xf]
        %v536 = vld [vmem:[%s447 + $0x34] sm:$0xf]
        %v537 = vld [vmem:[%s447 + $0x38] sm:$0xf]
        %v538 = vld [vmem:[%s447 + $0x3c] sm:$0xf]
        %v555 = vunpack.c.l.b16 %v507
        %v556 = vunpack.c.l.b16 %v508
        %v557 = vunpack.c.l.b16 %v509
        %v558 = vunpack.c.l.b16 %v510
        %v559 = vunpack.c.l.b16 %v511
        %v560 = vunpack.c.l.b16 %v512
        %v561 = vunpack.c.l.b16 %v513
        %v562 = vunpack.c.l.b16 %v514
        %v563 = vunpack.c.l.b16 %v515
        %v564 = vunpack.c.l.b16 %v516
        %v565 = vunpack.c.l.b16 %v517
        %v566 = vunpack.c.l.b16 %v518
        %v567 = vunpack.c.l.b16 %v519
        %v568 = vunpack.c.l.b16 %v520
        %v569 = vunpack.c.l.b16 %v521
        %v570 = vunpack.c.l.b16 %v522
        %v571 = vpack.c.b16 %v556, %v555
        %v572 = vpack.c.b16 %v558, %v557
        %v573 = vpack.c.b16 %v560, %v559
        %v574 = vpack.c.b16 %v562, %v561
        %v575 = vpack.c.b16 %v564, %v563
        %v576 = vpack.c.b16 %v566, %v565
        %v577 = vpack.c.b16 %v568, %v567
        %v578 = vpack.c.b16 %v570, %v569
        %v603 = vunpack.c.l.b16 %v523
        %v604 = vunpack.c.l.b16 %v524
        %v605 = vunpack.c.l.b16 %v525
        %v606 = vunpack.c.l.b16 %v526
        %v607 = vunpack.c.l.b16 %v527
        %v608 = vunpack.c.l.b16 %v528
        %v609 = vunpack.c.l.b16 %v529
        %v610 = vunpack.c.l.b16 %v530
        %v611 = vunpack.c.l.b16 %v531
        %v612 = vunpack.c.l.b16 %v532
        %v613 = vunpack.c.l.b16 %v533
        %v614 = vunpack.c.l.b16 %v534
        %v615 = vunpack.c.l.b16 %v535
        %v616 = vunpack.c.l.b16 %v536
        %v617 = vunpack.c.l.b16 %v537
        %v618 = vunpack.c.l.b16 %v538
        %v619 = vpack.c.b16 %v604, %v603
        %v620 = vpack.c.b16 %v606, %v605
        %v621 = vpack.c.b16 %v608, %v607
        %v622 = vpack.c.b16 %v610, %v609
        %v623 = vpack.c.b16 %v612, %v611
        %v624 = vpack.c.b16 %v614, %v613
        %v625 = vpack.c.b16 %v616, %v615
        %v626 = vpack.c.b16 %v618, %v617
        %v627 = vld [vmem:[%s2] sm:$0xf]
        %v628 = vld [vmem:[%s2 + $0x4] sm:$0xf]
        %v629 = vld [vmem:[%s2 + $0x8] sm:$0xf]
        %v630 = vld [vmem:[%s2 + $0xc] sm:$0xf]
        %v631 = vld [vmem:[%s2 + $0x10] sm:$0xf]
        %v632 = vld [vmem:[%s2 + $0x14] sm:$0xf]
        %v633 = vld [vmem:[%s2 + $0x18] sm:$0xf]
        %v634 = vld [vmem:[%s2 + $0x1c] sm:$0xf]
        %v635 = vld [vmem:[%s2 + $0x20] sm:$0xf]
        %v636 = vld [vmem:[%s2 + $0x24] sm:$0xf]
        %v637 = vld [vmem:[%s2 + $0x28] sm:$0xf]
        %v638 = vld [vmem:[%s2 + $0x2c] sm:$0xf]
        %v639 = vld [vmem:[%s2 + $0x30] sm:$0xf]
        %v640 = vld [vmem:[%s2 + $0x34] sm:$0xf]
        %v641 = vld [vmem:[%s2 + $0x38] sm:$0xf]
        %v642 = vld [vmem:[%s2 + $0x3c] sm:$0xf]
        %s643 = scalar_lea.vmem %s2, 64
        %v644 = vld [vmem:[%s643] sm:$0xf]
        %v645 = vld [vmem:[%s643 + $0x4] sm:$0xf]
        %v646 = vld [vmem:[%s643 + $0x8] sm:$0xf]
        %v647 = vld [vmem:[%s643 + $0xc] sm:$0xf]
        %v648 = vld [vmem:[%s643 + $0x10] sm:$0xf]
        %v649 = vld [vmem:[%s643 + $0x14] sm:$0xf]
        %v650 = vld [vmem:[%s643 + $0x18] sm:$0xf]
        %v651 = vld [vmem:[%s643 + $0x1c] sm:$0xf]
        %v652 = vld [vmem:[%s643 + $0x20] sm:$0xf]
        %v653 = vld [vmem:[%s643 + $0x24] sm:$0xf]
        %v654 = vld [vmem:[%s643 + $0x28] sm:$0xf]
        %v655 = vld [vmem:[%s643 + $0x2c] sm:$0xf]
        %v656 = vld [vmem:[%s643 + $0x30] sm:$0xf]
        %v657 = vld [vmem:[%s643 + $0x34] sm:$0xf]
        %v658 = vld [vmem:[%s643 + $0x38] sm:$0xf]
        %v659 = vld [vmem:[%s643 + $0x3c] sm:$0xf]
        %v676 = vunpack.c.l.b16 %v644
        %v677 = vunpack.c.l.b16 %v645
        %v678 = vunpack.c.l.b16 %v646
        %v679 = vunpack.c.l.b16 %v647
        %v680 = vunpack.c.l.b16 %v648
        %v681 = vunpack.c.l.b16 %v649
        %v682 = vunpack.c.l.b16 %v650
        %v683 = vunpack.c.l.b16 %v651
        %v684 = vunpack.c.l.b16 %v652
        %v685 = vunpack.c.l.b16 %v653
        %v686 = vunpack.c.l.b16 %v654
        %v687 = vunpack.c.l.b16 %v655
        %v688 = vunpack.c.l.b16 %v656
        %v689 = vunpack.c.l.b16 %v657
        %v690 = vunpack.c.l.b16 %v658
        %v691 = vunpack.c.l.b16 %v659
        %v692 = vpack.c.b16 %v677, %v676
        %v693 = vpack.c.b16 %v679, %v678
        %v694 = vpack.c.b16 %v681, %v680
        %v695 = vpack.c.b16 %v683, %v682
        %v696 = vpack.c.b16 %v685, %v684
        %v697 = vpack.c.b16 %v687, %v686
        %v698 = vpack.c.b16 %v689, %v688
        %v699 = vpack.c.b16 %v691, %v690
        %708 = vrot.lane.b32.xlu0 %v571, 127
        %v709 = vpop.permute.xlu0 %708
        %710 = vrot.lane.b32.xlu0 %v619, 127
        %v711 = vpop.permute.xlu0 %710
        %712 = vrot.lane.b32.xlu0 %v572, 127
        %v713 = vpop.permute.xlu0 %712
        %714 = vrot.lane.b32.xlu0 %v620, 127
        %v715 = vpop.permute.xlu0 %714
        %716 = vrot.lane.b32.xlu0 %v573, 127
        %v717 = vpop.permute.xlu0 %716
        %718 = vrot.lane.b32.xlu0 %v621, 127
        %v719 = vpop.permute.xlu0 %718
        %720 = vrot.lane.b32.xlu0 %v574, 127
        %v721 = vpop.permute.xlu0 %720
        %722 = vrot.lane.b32.xlu0 %v622, 127
        %v723 = vpop.permute.xlu0 %722
        %724 = vrot.lane.b32.xlu0 %v575, 127
        %v725 = vpop.permute.xlu0 %724
        %726 = vrot.lane.b32.xlu0 %v623, 127
        %v727 = vpop.permute.xlu0 %726
        %728 = vrot.lane.b32.xlu0 %v576, 127
        %v729 = vpop.permute.xlu0 %728
        %730 = vrot.lane.b32.xlu0 %v624, 127
        %v731 = vpop.permute.xlu0 %730
        %732 = vrot.lane.b32.xlu0 %v577, 127
        %v733 = vpop.permute.xlu0 %732
        %734 = vrot.lane.b32.xlu0 %v625, 127
        %v735 = vpop.permute.xlu0 %734
        %736 = vrot.lane.b32.xlu0 %v578, 127
        %v737 = vpop.permute.xlu0 %736
        %738 = vrot.lane.b32.xlu0 %v626, 127
        %v739 = vpop.permute.xlu0 %738
        %vm740 = vcmask 1039360
        %v741 = vsel %vm740, %v709, %v711
        %v742 = vsel %vm740, %v713, %v715
        %v743 = vsel %vm740, %v717, %v719
        %v744 = vsel %vm740, %v721, %v723
        %v745 = vsel %vm740, %v725, %v727
        %v746 = vsel %vm740, %v729, %v731
        %v747 = vsel %vm740, %v733, %v735
        %v748 = vsel %vm740, %v737, %v739
        %757 = vmatpush.bf16.msra.mxu0 %v748
        %758 = vmatpush.bf16.msra.mxu0 %v747
        %759 = vmatpush.bf16.msra.mxu0 %v746
        %760 = vmatpush.bf16.msra.mxu0 %v745
        %761 = vmatpush.bf16.msra.mxu0 %v744
        %762 = vmatpush.bf16.msra.mxu0 %v743
        %763 = vmatpush.bf16.msra.mxu0 %v742
        %764 = vmatpush.bf16.msra.mxu0 %v741
        %765 = vmatmul.bf16.gmra.mxu0 %v692
        %v766 = vpop.f32.mrf.mxu0
        %v767 = vadd.f32 0.0, %v766
        %v768 = vpop.f32.mrf.mxu0
        %v769 = vadd.f32 0.0, %v768
        %770 = vmatmul.bf16.gmra.mxu0 %v693
        %v771 = vpop.f32.mrf.mxu0
        %v772 = vadd.f32 0.0, %v771
        %v773 = vpop.f32.mrf.mxu0
        %v774 = vadd.f32 0.0, %v773
        %775 = vmatmul.bf16.gmra.mxu0 %v694
        %v776 = vpop.f32.mrf.mxu0
        %v777 = vadd.f32 0.0, %v776
        %v778 = vpop.f32.mrf.mxu0
        %v779 = vadd.f32 0.0, %v778
        %780 = vmatmul.bf16.gmra.mxu0 %v695
        %v781 = vpop.f32.mrf.mxu0
        %v782 = vadd.f32 0.0, %v781
        %v783 = vpop.f32.mrf.mxu0
        %v784 = vadd.f32 0.0, %v783
        %785 = vmatmul.bf16.gmra.mxu0 %v696
        %v786 = vpop.f32.mrf.mxu0
        %v787 = vadd.f32 0.0, %v786
        %v788 = vpop.f32.mrf.mxu0
        %v789 = vadd.f32 0.0, %v788
        %790 = vmatmul.bf16.gmra.mxu0 %v697
        %v791 = vpop.f32.mrf.mxu0
        %v792 = vadd.f32 0.0, %v791
        %v793 = vpop.f32.mrf.mxu0
        %v794 = vadd.f32 0.0, %v793
        %795 = vmatmul.bf16.gmra.mxu0 %v698
        %v796 = vpop.f32.mrf.mxu0
        %v797 = vadd.f32 0.0, %v796
        %v798 = vpop.f32.mrf.mxu0
        %v799 = vadd.f32 0.0, %v798
        %800 = vmatmul.bf16.gmra.mxu0 %v699
        %v801 = vpop.f32.mrf.mxu0
        %v802 = vadd.f32 0.0, %v801
        %v803 = vpop.f32.mrf.mxu0
        %v804 = vadd.f32 0.0, %v803
        %805 = vdwg.mxu0
        %v822 = vunpack.c.l.b16 %v627
        %v823 = vunpack.c.l.b16 %v628
        %v824 = vunpack.c.l.b16 %v629
        %v825 = vunpack.c.l.b16 %v630
        %v826 = vunpack.c.l.b16 %v631
        %v827 = vunpack.c.l.b16 %v632
        %v828 = vunpack.c.l.b16 %v633
        %v829 = vunpack.c.l.b16 %v634
        %v830 = vunpack.c.l.b16 %v635
        %v831 = vunpack.c.l.b16 %v636
        %v832 = vunpack.c.l.b16 %v637
        %v833 = vunpack.c.l.b16 %v638
        %v834 = vunpack.c.l.b16 %v639
        %v835 = vunpack.c.l.b16 %v640
        %v836 = vunpack.c.l.b16 %v641
        %v837 = vunpack.c.l.b16 %v642
        %v838 = vpack.c.b16 %v823, %v822
        %v839 = vpack.c.b16 %v825, %v824
        %v840 = vpack.c.b16 %v827, %v826
        %v841 = vpack.c.b16 %v829, %v828
        %v842 = vpack.c.b16 %v831, %v830
        %v843 = vpack.c.b16 %v833, %v832
        %v844 = vpack.c.b16 %v835, %v834
        %v845 = vpack.c.b16 %v837, %v836
        %854 = vmatpush.bf16.msra.mxu0 %v578
        %855 = vmatpush.bf16.msra.mxu0 %v577
        %856 = vmatpush.bf16.msra.mxu0 %v576
        %857 = vmatpush.bf16.msra.mxu0 %v575
        %858 = vmatpush.bf16.msra.mxu0 %v574
        %859 = vmatpush.bf16.msra.mxu0 %v573
        %860 = vmatpush.bf16.msra.mxu0 %v572
        %861 = vmatpush.bf16.msra.mxu0 %v571
        %862 = vmatmul.bf16.gmra.mxu0 %v838
        %v863 = vpop.f32.mrf.mxu0
        %v864 = vadd.f32 %v767, %v863
        %v865 = vpop.f32.mrf.mxu0
        %v866 = vadd.f32 %v769, %v865
        %867 = vmatmul.bf16.gmra.mxu0 %v839
        %v868 = vpop.f32.mrf.mxu0
        %v869 = vadd.f32 %v772, %v868
        %v870 = vpop.f32.mrf.mxu0
        %v871 = vadd.f32 %v774, %v870
        %872 = vmatmul.bf16.gmra.mxu0 %v840
        %v873 = vpop.f32.mrf.mxu0
        %v874 = vadd.f32 %v777, %v873
        %v875 = vpop.f32.mrf.mxu0
        %v876 = vadd.f32 %v779, %v875
        %877 = vmatmul.bf16.gmra.mxu0 %v841
        %v878 = vpop.f32.mrf.mxu0
        %v879 = vadd.f32 %v782, %v878
        %v880 = vpop.f32.mrf.mxu0
        %v881 = vadd.f32 %v784, %v880
        %882 = vmatmul.bf16.gmra.mxu0 %v842
        %v883 = vpop.f32.mrf.mxu0
        %v884 = vadd.f32 %v787, %v883
        %v885 = vpop.f32.mrf.mxu0
        %v886 = vadd.f32 %v789, %v885
        %887 = vmatmul.bf16.gmra.mxu0 %v843
        %v888 = vpop.f32.mrf.mxu0
        %v889 = vadd.f32 %v792, %v888
        %v890 = vpop.f32.mrf.mxu0
        %v891 = vadd.f32 %v794, %v890
        %892 = vmatmul.bf16.gmra.mxu0 %v844
        %v893 = vpop.f32.mrf.mxu0
        %v894 = vadd.f32 %v797, %v893
        %v895 = vpop.f32.mrf.mxu0
        %v896 = vadd.f32 %v799, %v895
        %897 = vmatmul.bf16.gmra.mxu0 %v845
        %v898 = vpop.f32.mrf.mxu0
        %v899 = vadd.f32 %v802, %v898
        %v900 = vpop.f32.mrf.mxu0
        %v901 = vadd.f32 %v804, %v900
        %902 = vdwg.mxu0
        %s903 = scalar_lea.vmem %s2, 128
        %v904 = vld [vmem:[%s903] sm:$0xf]
        %v905 = vld [vmem:[%s903 + $0x4] sm:$0xf]
        %v906 = vld [vmem:[%s903 + $0x8] sm:$0xf]
        %v907 = vld [vmem:[%s903 + $0xc] sm:$0xf]
        %v908 = vld [vmem:[%s903 + $0x10] sm:$0xf]
        %v909 = vld [vmem:[%s903 + $0x14] sm:$0xf]
        %v910 = vld [vmem:[%s903 + $0x18] sm:$0xf]
        %v911 = vld [vmem:[%s903 + $0x1c] sm:$0xf]
        %v912 = vld [vmem:[%s903 + $0x20] sm:$0xf]
        %v913 = vld [vmem:[%s903 + $0x24] sm:$0xf]
        %v914 = vld [vmem:[%s903 + $0x28] sm:$0xf]
        %v915 = vld [vmem:[%s903 + $0x2c] sm:$0xf]
        %v916 = vld [vmem:[%s903 + $0x30] sm:$0xf]
        %v917 = vld [vmem:[%s903 + $0x34] sm:$0xf]
        %v918 = vld [vmem:[%s903 + $0x38] sm:$0xf]
        %v919 = vld [vmem:[%s903 + $0x3c] sm:$0xf]
        %v936 = vunpack.c.l.b16 %v904
        %v937 = vunpack.c.l.b16 %v905
        %v938 = vunpack.c.l.b16 %v906
        %v939 = vunpack.c.l.b16 %v907
        %v940 = vunpack.c.l.b16 %v908
        %v941 = vunpack.c.l.b16 %v909
        %v942 = vunpack.c.l.b16 %v910
        %v943 = vunpack.c.l.b16 %v911
        %v944 = vunpack.c.l.b16 %v912
        %v945 = vunpack.c.l.b16 %v913
        %v946 = vunpack.c.l.b16 %v914
        %v947 = vunpack.c.l.b16 %v915
        %v948 = vunpack.c.l.b16 %v916
        %v949 = vunpack.c.l.b16 %v917
        %v950 = vunpack.c.l.b16 %v918
        %v951 = vunpack.c.l.b16 %v919
        %v952 = vpack.c.b16 %v937, %v936
        %v953 = vpack.c.b16 %v939, %v938
        %v954 = vpack.c.b16 %v941, %v940
        %v955 = vpack.c.b16 %v943, %v942
        %v956 = vpack.c.b16 %v945, %v944
        %v957 = vpack.c.b16 %v947, %v946
        %v958 = vpack.c.b16 %v949, %v948
        %v959 = vpack.c.b16 %v951, %v950
        %960 = vrot.lane.b32.xlu0 %v571, 126
        %v961 = vpop.permute.xlu0 %960
        %962 = vrot.lane.b32.xlu0 %v619, 126
        %v963 = vpop.permute.xlu0 %962
        %964 = vrot.lane.b32.xlu0 %v572, 126
        %v965 = vpop.permute.xlu0 %964
        %966 = vrot.lane.b32.xlu0 %v620, 126
        %v967 = vpop.permute.xlu0 %966
        %968 = vrot.lane.b32.xlu0 %v573, 126
        %v969 = vpop.permute.xlu0 %968
        %970 = vrot.lane.b32.xlu0 %v621, 126
        %v971 = vpop.permute.xlu0 %970
        %972 = vrot.lane.b32.xlu0 %v574, 126
        %v973 = vpop.permute.xlu0 %972
        %974 = vrot.lane.b32.xlu0 %v622, 126
        %v975 = vpop.permute.xlu0 %974
        %vm976 = vcmask 1031168
        %v977 = vsel %vm976, %v961, %v963
        %v978 = vsel %vm976, %v965, %v967
        %v979 = vsel %vm976, %v969, %v971
        %v980 = vsel %vm976, %v973, %v975
        %vm985 = vcmask 523264
        %v987 = vsel %vm985, %v952, 0
        %v990 = vsel %vm985, %v953, 0
        %v993 = vsel %vm985, %v954, 0
        %v996 = vsel %vm985, %v955, 0
        %v999 = vsel %vm985, %v956, 0
        %v1002 = vsel %vm985, %v957, 0
        %v1005 = vsel %vm985, %v958, 0
        %v1008 = vsel %vm985, %v959, 0
        %1010 = vmatpush.bf16.msra.mxu0 0
        %1011 = vmatpush.bf16.msra.mxu0 0
        %1012 = vmatpush.bf16.msra.mxu0 0
        %1013 = vmatpush.bf16.msra.mxu0 0
        %1014 = vmatpush.bf16.msra.mxu0 %v980
        %1015 = vmatpush.bf16.msra.mxu0 %v979
        %1016 = vmatpush.bf16.msra.mxu0 %v978
        %1017 = vmatpush.bf16.msra.mxu0 %v977
        %1018 = vmatmul.bf16.gmra.mxu0 %v987
        %v1019 = vpop.f32.mrf.mxu0
        %v1020 = vadd.f32 0.0, %v1019
        %v1021 = vpop.f32.mrf.mxu0
        %v1022 = vadd.f32 0.0, %v1021
        %1023 = vmatmul.bf16.gmra.mxu0 %v990
        %v1024 = vpop.f32.mrf.mxu0
        %v1025 = vadd.f32 0.0, %v1024
        %v1026 = vpop.f32.mrf.mxu0
        %v1027 = vadd.f32 0.0, %v1026
        %1028 = vmatmul.bf16.gmra.mxu0 %v993
        %v1029 = vpop.f32.mrf.mxu0
        %v1030 = vadd.f32 0.0, %v1029
        %v1031 = vpop.f32.mrf.mxu0
        %v1032 = vadd.f32 0.0, %v1031
        %1033 = vmatmul.bf16.gmra.mxu0 %v996
        %v1034 = vpop.f32.mrf.mxu0
        %v1035 = vadd.f32 0.0, %v1034
        %v1036 = vpop.f32.mrf.mxu0
        %v1037 = vadd.f32 0.0, %v1036
        %1038 = vmatmul.bf16.gmra.mxu0 %v999
        %v1039 = vpop.f32.mrf.mxu0
        %v1040 = vadd.f32 0.0, %v1039
        %v1041 = vpop.f32.mrf.mxu0
        %v1042 = vadd.f32 0.0, %v1041
        %1043 = vmatmul.bf16.gmra.mxu0 %v1002
        %v1044 = vpop.f32.mrf.mxu0
        %v1045 = vadd.f32 0.0, %v1044
        %v1046 = vpop.f32.mrf.mxu0
        %v1047 = vadd.f32 0.0, %v1046
        %1048 = vmatmul.bf16.gmra.mxu0 %v1005
        %v1049 = vpop.f32.mrf.mxu0
        %v1050 = vadd.f32 0.0, %v1049
        %v1051 = vpop.f32.mrf.mxu0
        %v1052 = vadd.f32 0.0, %v1051
        %1053 = vmatmul.bf16.gmra.mxu0 %v1008
        %v1054 = vpop.f32.mrf.mxu0
        %v1055 = vadd.f32 0.0, %v1054
        %v1056 = vpop.f32.mrf.mxu0
        %v1057 = vadd.f32 0.0, %v1056
        %1058 = vdwg.mxu0
        %v1059 = vadd.f32 %v864, %v1020
        %v1060 = vadd.f32 %v866, %v1022
        %v1061 = vadd.f32 %v869, %v1025
        %v1062 = vadd.f32 %v871, %v1027
        %v1063 = vadd.f32 %v874, %v1030
        %v1064 = vadd.f32 %v876, %v1032
        %v1065 = vadd.f32 %v879, %v1035
        %v1066 = vadd.f32 %v881, %v1037
        %v1067 = vadd.f32 %v884, %v1040
        %v1068 = vadd.f32 %v886, %v1042
        %v1069 = vadd.f32 %v889, %v1045
        %v1070 = vadd.f32 %v891, %v1047
        %v1071 = vadd.f32 %v894, %v1050
        %v1072 = vadd.f32 %v896, %v1052
        %v1073 = vadd.f32 %v899, %v1055
        %v1074 = vadd.f32 %v901, %v1057
        %v1075 = vld [vmem:[%s3] sm:$0xff]
        %v1076 = vld [vmem:[%s3 + $0x8] sm:$0xff]
        %v1077 = vld [vmem:[%s3 + $0x10] sm:$0xff]
        %v1078 = vld [vmem:[%s3 + $0x18] sm:$0xff]
        %v1079 = vld [vmem:[%s3 + $0x20] sm:$0xff]
        %v1080 = vld [vmem:[%s3 + $0x28] sm:$0xff]
        %v1081 = vld [vmem:[%s3 + $0x30] sm:$0xff]
        %v1082 = vld [vmem:[%s3 + $0x38] sm:$0xff]
        %v1083 = vld [vmem:[%s3 + $0x40] sm:$0xff]
        %v1084 = vld [vmem:[%s3 + $0x48] sm:$0xff]
        %v1085 = vld [vmem:[%s3 + $0x50] sm:$0xff]
        %v1086 = vld [vmem:[%s3 + $0x58] sm:$0xff]
        %v1087 = vld [vmem:[%s3 + $0x60] sm:$0xff]
        %v1088 = vld [vmem:[%s3 + $0x68] sm:$0xff]
        %v1089 = vld [vmem:[%s3 + $0x70] sm:$0xff]
        %v1090 = vld [vmem:[%s3 + $0x78] sm:$0xff]
        %1092 = vset.pattern.permute.xlu0 0
        %1093 = vperm.xlu0 %1092, %v1075
        %v1094 = vpop.permute.xlu0 %1093
        %1097 = vset.pattern.permute.xlu0 0
        %1098 = vperm.xlu0 %1097, %v1076
        %v1099 = vpop.permute.xlu0 %1098
        %1102 = vset.pattern.permute.xlu0 0
        %1103 = vperm.xlu0 %1102, %v1077
        %v1104 = vpop.permute.xlu0 %1103
        %1107 = vset.pattern.permute.xlu0 0
        %1108 = vperm.xlu0 %1107, %v1078
        %v1109 = vpop.permute.xlu0 %1108
        %1112 = vset.pattern.permute.xlu0 0
        %1113 = vperm.xlu0 %1112, %v1079
        %v1114 = vpop.permute.xlu0 %1113
        %1117 = vset.pattern.permute.xlu0 0
        %1118 = vperm.xlu0 %1117, %v1080
        %v1119 = vpop.permute.xlu0 %1118
        %1122 = vset.pattern.permute.xlu0 0
        %1123 = vperm.xlu0 %1122, %v1081
        %v1124 = vpop.permute.xlu0 %1123
        %1127 = vset.pattern.permute.xlu0 0
        %1128 = vperm.xlu0 %1127, %v1082
        %v1129 = vpop.permute.xlu0 %1128
        %1132 = vset.pattern.permute.xlu0 0
        %1133 = vperm.xlu0 %1132, %v1083
        %v1134 = vpop.permute.xlu0 %1133
        %1137 = vset.pattern.permute.xlu0 0
        %1138 = vperm.xlu0 %1137, %v1084
        %v1139 = vpop.permute.xlu0 %1138
        %1142 = vset.pattern.permute.xlu0 0
        %1143 = vperm.xlu0 %1142, %v1085
        %v1144 = vpop.permute.xlu0 %1143
        %1147 = vset.pattern.permute.xlu0 0
        %1148 = vperm.xlu0 %1147, %v1086
        %v1149 = vpop.permute.xlu0 %1148
        %1152 = vset.pattern.permute.xlu0 0
        %1153 = vperm.xlu0 %1152, %v1087
        %v1154 = vpop.permute.xlu0 %1153
        %1157 = vset.pattern.permute.xlu0 0
        %1158 = vperm.xlu0 %1157, %v1088
        %v1159 = vpop.permute.xlu0 %1158
        %1162 = vset.pattern.permute.xlu0 0
        %1163 = vperm.xlu0 %1162, %v1089
        %v1164 = vpop.permute.xlu0 %1163
        %1167 = vset.pattern.permute.xlu0 0
        %1168 = vperm.xlu0 %1167, %v1090
        %v1169 = vpop.permute.xlu0 %1168
        %v1171 = vadd.f32 %v1059, %v1094
        %v1172 = vadd.f32 %v1060, %v1099
        %v1173 = vadd.f32 %v1061, %v1104
        %v1174 = vadd.f32 %v1062, %v1109
        %v1175 = vadd.f32 %v1063, %v1114
        %v1176 = vadd.f32 %v1064, %v1119
        %v1177 = vadd.f32 %v1065, %v1124
        %v1178 = vadd.f32 %v1066, %v1129
        %v1179 = vadd.f32 %v1067, %v1134
        %v1180 = vadd.f32 %v1068, %v1139
        %v1181 = vadd.f32 %v1069, %v1144
        %v1182 = vadd.f32 %v1070, %v1149
        %v1183 = vadd.f32 %v1071, %v1154
        %v1184 = vadd.f32 %v1072, %v1159
        %v1185 = vadd.f32 %v1073, %v1164
        %v1186 = vadd.f32 %v1074, %v1169
        %v1187 = vpack.c.bf16 %v1171, %v1171
        %v1188 = vpack.c.bf16 %v1172, %v1172
        %v1189 = vpack.c.bf16 %v1173, %v1173
        %v1190 = vpack.c.bf16 %v1174, %v1174
        %v1191 = vpack.c.bf16 %v1175, %v1175
        %v1192 = vpack.c.bf16 %v1176, %v1176
        %v1193 = vpack.c.bf16 %v1177, %v1177
        %v1194 = vpack.c.bf16 %v1178, %v1178
        %v1195 = vpack.c.bf16 %v1179, %v1179
        %v1196 = vpack.c.bf16 %v1180, %v1180
        %v1197 = vpack.c.bf16 %v1181, %v1181
        %v1198 = vpack.c.bf16 %v1182, %v1182
        %v1199 = vpack.c.bf16 %v1183, %v1183
        %v1200 = vpack.c.bf16 %v1184, %v1184
        %v1201 = vpack.c.bf16 %v1185, %v1185
        %v1202 = vpack.c.bf16 %v1186, %v1186
        %1203 = vst [vmem:[%s496] sm:$0xf] %v1187
        %1204 = vst [vmem:[%s496 + $0x4] sm:$0xf] %v1188
        %1205 = vst [vmem:[%s496 + $0x8] sm:$0xf] %v1189
        %1206 = vst [vmem:[%s496 + $0xc] sm:$0xf] %v1190
        %1207 = vst [vmem:[%s496 + $0x10] sm:$0xf] %v1191
        %1208 = vst [vmem:[%s496 + $0x14] sm:$0xf] %v1192
        %1209 = vst [vmem:[%s496 + $0x18] sm:$0xf] %v1193
        %1210 = vst [vmem:[%s496 + $0x1c] sm:$0xf] %v1194
        %1211 = vst [vmem:[%s496 + $0x20] sm:$0xf] %v1195
        %1212 = vst [vmem:[%s496 + $0x24] sm:$0xf] %v1196
        %1213 = vst [vmem:[%s496 + $0x28] sm:$0xf] %v1197
        %1214 = vst [vmem:[%s496 + $0x2c] sm:$0xf] %v1198
        %1215 = vst [vmem:[%s496 + $0x30] sm:$0xf] %v1199
        %1216 = vst [vmem:[%s496 + $0x34] sm:$0xf] %v1200
        %1217 = vst [vmem:[%s496 + $0x38] sm:$0xf] %v1201
        %1218 = vst [vmem:[%s496 + $0x3c] sm:$0xf] %v1202
        %v1219 = vlaneseq
        %v1220 = vand.u32 %v1219, 127
        %s1221 = smul.u32 %s22, 128
        %v1222 = vstv %s1221
        %v1223 = vadd.s32 %v1220, %v1222
        %vm1224 = vcmp.lt.s32.totalorder %v1223, 1
        %v1225 = vsel %vm1224, 1, 0
        %vm1226 = vcmp.eq.s32.totalorder %v1225, 1
        %v1227 = vsel %vm1226, %v1171, 0.0
        %v1228 = vsel %vm1226, %v1172, 0.0
        %v1229 = vsel %vm1226, %v1173, 0.0
        %v1230 = vsel %vm1226, %v1174, 0.0
        %v1231 = vsel %vm1226, %v1175, 0.0
        %v1232 = vsel %vm1226, %v1176, 0.0
        %v1233 = vsel %vm1226, %v1177, 0.0
        %v1234 = vsel %vm1226, %v1178, 0.0
        %v1235 = vsel %vm1226, %v1179, 0.0
        %v1236 = vsel %vm1226, %v1180, 0.0
        %v1237 = vsel %vm1226, %v1181, 0.0
        %v1238 = vsel %vm1226, %v1182, 0.0
        %v1239 = vsel %vm1226, %v1183, 0.0
        %v1240 = vsel %vm1226, %v1184, 0.0
        %v1241 = vsel %vm1226, %v1185, 0.0
        %v1242 = vsel %vm1226, %v1186, 0.0
        %1243 = vadd.xlane.f32.xlu0 %v1227
        %v1244 = vpop.xlane.xlu0 %1243
        %1245 = vadd.xlane.f32.xlu0 %v1228
        %v1246 = vpop.xlane.xlu0 %1245
        %1247 = vadd.xlane.f32.xlu0 %v1229
        %v1248 = vpop.xlane.xlu0 %1247
        %1249 = vadd.xlane.f32.xlu0 %v1230
        %v1250 = vpop.xlane.xlu0 %1249
        %1251 = vadd.xlane.f32.xlu0 %v1231
        %v1252 = vpop.xlane.xlu0 %1251
        %1253 = vadd.xlane.f32.xlu0 %v1232
        %v1254 = vpop.xlane.xlu0 %1253
        %1255 = vadd.xlane.f32.xlu0 %v1233
        %v1256 = vpop.xlane.xlu0 %1255
        %1257 = vadd.xlane.f32.xlu0 %v1234
        %v1258 = vpop.xlane.xlu0 %1257
        %1259 = vadd.xlane.f32.xlu0 %v1235
        %v1260 = vpop.xlane.xlu0 %1259
        %1261 = vadd.xlane.f32.xlu0 %v1236
        %v1262 = vpop.xlane.xlu0 %1261
        %1263 = vadd.xlane.f32.xlu0 %v1237
        %v1264 = vpop.xlane.xlu0 %1263
        %1265 = vadd.xlane.f32.xlu0 %v1238
        %v1266 = vpop.xlane.xlu0 %1265
        %1267 = vadd.xlane.f32.xlu0 %v1239
        %v1268 = vpop.xlane.xlu0 %1267
        %1269 = vadd.xlane.f32.xlu0 %v1240
        %v1270 = vpop.xlane.xlu0 %1269
        %1271 = vadd.xlane.f32.xlu0 %v1241
        %v1272 = vpop.xlane.xlu0 %1271
        %1273 = vadd.xlane.f32.xlu0 %v1242
        %v1274 = vpop.xlane.xlu0 %1273
        %v1275 = vmul.f32 %v1227, %v1227
        %v1276 = vmul.f32 %v1228, %v1228
        %v1277 = vmul.f32 %v1229, %v1229
        %v1278 = vmul.f32 %v1230, %v1230
        %v1279 = vmul.f32 %v1231, %v1231
        %v1280 = vmul.f32 %v1232, %v1232
        %v1281 = vmul.f32 %v1233, %v1233
        %v1282 = vmul.f32 %v1234, %v1234
        %v1283 = vmul.f32 %v1235, %v1235
        %v1284 = vmul.f32 %v1236, %v1236
        %v1285 = vmul.f32 %v1237, %v1237
        %v1286 = vmul.f32 %v1238, %v1238
        %v1287 = vmul.f32 %v1239, %v1239
        %v1288 = vmul.f32 %v1240, %v1240
        %v1289 = vmul.f32 %v1241, %v1241
        %v1290 = vmul.f32 %v1242, %v1242
        %1291 = vadd.xlane.f32.xlu0 %v1275
        %v1292 = vpop.xlane.xlu0 %1291
        %1293 = vadd.xlane.f32.xlu0 %v1276
        %v1294 = vpop.xlane.xlu0 %1293
        %1295 = vadd.xlane.f32.xlu0 %v1277
        %v1296 = vpop.xlane.xlu0 %1295
        %1297 = vadd.xlane.f32.xlu0 %v1278
        %v1298 = vpop.xlane.xlu0 %1297
        %1299 = vadd.xlane.f32.xlu0 %v1279
        %v1300 = vpop.xlane.xlu0 %1299
        %1301 = vadd.xlane.f32.xlu0 %v1280
        %v1302 = vpop.xlane.xlu0 %1301
        %1303 = vadd.xlane.f32.xlu0 %v1281
        %v1304 = vpop.xlane.xlu0 %1303
        %1305 = vadd.xlane.f32.xlu0 %v1282
        %v1306 = vpop.xlane.xlu0 %1305
        %1307 = vadd.xlane.f32.xlu0 %v1283
        %v1308 = vpop.xlane.xlu0 %1307
        %1309 = vadd.xlane.f32.xlu0 %v1284
        %v1310 = vpop.xlane.xlu0 %1309
        %1311 = vadd.xlane.f32.xlu0 %v1285
        %v1312 = vpop.xlane.xlu0 %1311
        %1313 = vadd.xlane.f32.xlu0 %v1286
        %v1314 = vpop.xlane.xlu0 %1313
        %1315 = vadd.xlane.f32.xlu0 %v1287
        %v1316 = vpop.xlane.xlu0 %1315
        %1317 = vadd.xlane.f32.xlu0 %v1288
        %v1318 = vpop.xlane.xlu0 %1317
        %1319 = vadd.xlane.f32.xlu0 %v1289
        %v1320 = vpop.xlane.xlu0 %1319
        %1321 = vadd.xlane.f32.xlu0 %v1290
        %v1322 = vpop.xlane.xlu0 %1321
        %vm1323 = vcmask 7168
        %v1324 = vsel %vm1323, %v1244, %v1292
        %v1325 = vsel %vm1323, %v1246, %v1294
        %v1326 = vsel %vm1323, %v1248, %v1296
        %v1327 = vsel %vm1323, %v1250, %v1298
        %v1328 = vsel %vm1323, %v1252, %v1300
        %v1329 = vsel %vm1323, %v1254, %v1302
        %v1330 = vsel %vm1323, %v1256, %v1304
        %v1331 = vsel %vm1323, %v1258, %v1306
        %v1332 = vsel %vm1323, %v1260, %v1308
        %v1333 = vsel %vm1323, %v1262, %v1310
        %v1334 = vsel %vm1323, %v1264, %v1312
        %v1335 = vsel %vm1323, %v1266, %v1314
        %v1336 = vsel %vm1323, %v1268, %v1316
        %v1337 = vsel %vm1323, %v1270, %v1318
        %v1338 = vsel %vm1323, %v1272, %v1320
        %v1339 = vsel %vm1323, %v1274, %v1322
        %vm1340 = vcmask 15360
        %1341 = vst.msk [vmem:[%s505] sm:$0xff] %vm1340, %v1324
        %1342 = vst.msk [vmem:[%s505 + $0x8] sm:$0xff] %vm1340, %v1325
        %1343 = vst.msk [vmem:[%s505 + $0x10] sm:$0xff] %vm1340, %v1326
        %1344 = vst.msk [vmem:[%s505 + $0x18] sm:$0xff] %vm1340, %v1327
        %1345 = vst.msk [vmem:[%s505 + $0x20] sm:$0xff] %vm1340, %v1328
        %1346 = vst.msk [vmem:[%s505 + $0x28] sm:$0xff] %vm1340, %v1329
        %1347 = vst.msk [vmem:[%s505 + $0x30] sm:$0xff] %vm1340, %v1330
        %1348 = vst.msk [vmem:[%s505 + $0x38] sm:$0xff] %vm1340, %v1331
        %1349 = vst.msk [vmem:[%s505 + $0x40] sm:$0xff] %vm1340, %v1332
        %1350 = vst.msk [vmem:[%s505 + $0x48] sm:$0xff] %vm1340, %v1333
        %1351 = vst.msk [vmem:[%s505 + $0x50] sm:$0xff] %vm1340, %v1334
        %1352 = vst.msk [vmem:[%s505 + $0x58] sm:$0xff] %vm1340, %v1335
        %1353 = vst.msk [vmem:[%s505 + $0x60] sm:$0xff] %vm1340, %v1336
        %1354 = vst.msk [vmem:[%s505 + $0x68] sm:$0xff] %vm1340, %v1337
        %1355 = vst.msk [vmem:[%s505 + $0x70] sm:$0xff] %vm1340, %v1338
        %1356 = vst.msk [vmem:[%s505 + $0x78] sm:$0xff] %vm1340, %v1339
        %p1357 = scmp.lt.s32.totalorder %s21, 1
        %s1358 = scalar_select %p1357, %s21, 1
        %p1359 = scmp.lt.s32.totalorder %s22, 0
        %s1360 = scalar_select %p1359, %s22, 0
        %s1361 = smul.addr %s1358, 16
        %s1362 = sadd.s32 %s1360, %s1361
        %s1363 = smul.addr %s1362, 4
        %s1364 = scalar_lea.vmem %s4, %s1363
        %p1365 = scmp.lt.s32.totalorder %s21, 1
        %s1366 = scalar_select %p1365, %s21, 1
        %p1367 = scmp.lt.s32.totalorder %s22, 0
        %s1368 = scalar_select %p1367, %s22, 0
        %s1369 = smul.addr %s1368, 16
        %s1370 = smul.addr %s1366, 16
        %s1371 = sadd.s32 %s1369, %s1370
        %s1372 = smul.addr %s1371, 8
        %s1373 = scalar_lea.vmem %s5, %s1372
        // Predicated region
        $region119: #{forward.17} parent=109 // pred_check
          %p1374 = pneg %p149
        $region120: #{forward.17} parent=109 // pred_check_branch
          %1376 = sbr.rel (%p1374) target = $region122
        $region121: #{forward.17} parent=109 // pred_region
          _
        $region122: #{forward.17} parent=109 // pred_fallthru
          _
        // Predicated region
        $region123: #{forward.17} parent=109 // pred_check
          %p1377 = pneg %p177
        $region124: #{forward.17} parent=109 // pred_check_branch
          %1379 = sbr.rel (%p1377) target = $region126
        $region125: #{forward.17} parent=109 // pred_region
          _
        $region126: #{forward.17} parent=109 // pred_fallthru
          _
      $region110: #{forward.17} parent=5 // pred_fallthru
        _
      %p1380 = scmp.le.s32.totalorder 2, %s12
      // Predicated region
      $region127: #{forward.17} parent=5 // pred_check
        %p1381 = pneg %p1380
      $region128: #{forward.17} parent=5 // pred_check_branch
        %1383 = sbr.rel (%p1381) target = $region130
      $region129: #{forward.17} parent=5 // pred_region
        %s1384 = ssub.s32 %s12, 2
        // Predicated region
        $region131: #{forward.17} parent=129 // pred_check
          %p1385 = pneg %p155
        $region132: #{forward.17} parent=129 // pred_check_branch
          %1387 = sbr.rel (%p1385) target = $region134
        $region133: #{forward.17} parent=129 // pred_region
          %p1388 = scmp.lt.s32.totalorder %s23, 1
          %s1389 = scalar_select %p1388, %s23, 1
          %p1390 = scmp.lt.s32.totalorder %s24, 0
          %s1391 = scalar_select %p1390, %s24, 0
          %s1392 = smul.addr %s1389, 16
          %s1393 = sadd.s32 %s1391, %s1392
          %s1394 = smul.addr %s1393, 4
          %s1395 = scalar_lea.vmem %s4, %s1394
        $region134: #{forward.17} parent=129 // pred_fallthru
          _
        // Predicated region
        $region135: #{forward.17} parent=129 // pred_check
          %p1396 = pneg %p183
        $region136: #{forward.17} parent=129 // pred_check_branch
          %1398 = sbr.rel (%p1396) target = $region138
        $region137: #{forward.17} parent=129 // pred_region
          %p1399 = scmp.lt.s32.totalorder %s23, 1
          %s1400 = scalar_select %p1399, %s23, 1
          %p1401 = scmp.lt.s32.totalorder %s24, 0
          %s1402 = scalar_select %p1401, %s24, 0
          %s1403 = smul.addr %s1402, 16
          %s1404 = smul.addr %s1400, 16
          %s1405 = sadd.s32 %s1403, %s1404
          %s1406 = smul.addr %s1405, 8
          %s1407 = scalar_lea.vmem %s5, %s1406
        $region138: #{forward.17} parent=129 // pred_fallthru
          _
      $region130: #{forward.17} parent=5 // pred_fallthru
        _
    $region6: #{forward.17} parent=1 // loop_footer
      %s16 = sadd.s32 1, %s12
    $region7: #{forward.17} parent=1 // loop_footer_branch
      %11 = sbr.rel target = $region3
    $region8: #{forward.17} parent=1 // loop_exit
      _

// kernel: forward.18
$region0: #{forward.18}
  #allocation0 [shape = 'u32[]', space=smem, size = 0x4, offset = 0x4, fixed_abs, tag = 'smem constant byte address 0x4 - core index']
  #allocation1 [shape = 'u32[72,128]{1,0:T(1,128)}', space=vmem, size = 0x9000, scoped, tag = 'internal scratch']
  %s0 = inlined_call_operand.vmem [shape: bf16[2,128,128], index: 0, kind: input, shape index: {}]
  %s1 = inlined_call_operand.vmem [shape: f32[128,1], index: 1, kind: input, shape index: {}]
  %s2 = inlined_call_operand.vmem [shape: f32[128,1], index: 2, kind: input, shape index: {}]
  %s3 = inlined_call_operand.vmem [shape: bf16[2,128,128], index: 3, kind: output, shape index: {}]
  %s4 = sld [smem:[#allocation0]]
  $region45: #{forward.18} parent=0
    _
  %s6 = ssub.s32 1, %s4
  %s7 = scalar_select 0, %s6, %s4
  loop: start=0, step=1, limit=4
  $region2: #{forward.18} parent=0 // loop_pre_header
    _
  $region3: #{forward.18} parent=0 // loop_header
    %s9 = sphi 0, %s13
    %p10 = scmp.ge.s32.totalorder %s9, 4
    %s16 = sphi 0, %s28
    %s17 = sphi 0, %s24
    %s18 = sphi 0, %s16
    %s19 = sphi 0, %s17
    %s20 = sphi 0, %s18
    %s21 = sphi 0, %s19
    %s33 = sphi 0, %s35
    %s36 = sphi 0, %s33
    %s37 = sphi 0, %s36
    %s53 = sphi 0, %s37
    %s57 = sphi 0, %s57
    %s59 = sphi 0, %s57
    %s60 = sphi 0, %s59
    %s74 = sphi 0, %s60
    %s78 = sphi 0, %s78
    %s80 = sphi 0, %s78
    %s81 = sphi 0, %s80
    %s95 = sphi 0, %s81
    %s103 = sphi 0, %s105
    %s106 = sphi 0, %s103
    %s107 = sphi 0, %s106
    %s123 = sphi 0, %s107
  $region4: #{forward.18} parent=0 // loop_header_branch
    %12 = sbr.rel (%p10) target = $region8
  $region5: #{forward.18} parent=0 // loop_body
    %s14 = ssub.s32 %s9, 1
    %s15 = ssub.s32 %s9, 2
    %s22 = sadd.s32 1, %s17
    %p23 = scmp.ge.s32.totalorder %s22, 1
    %s24 = scalar_select %p23, 0, %s22
    %s25 = sadd.s32 1, %s16
    %s26 = scalar_select %p23, %s25, %s16
    %p27 = scmp.ge.s32.totalorder %s26, 2
    %s28 = scalar_select %p27, 0, %s26
    %s29 = ssub.s32 %s16, %s28
    %s30 = ssub.s32 %s17, %s24
    %s31 = sor.u32 %s29, %s30
    %p32 = scmp.eq.s32.totalorder %s31, 0
    %s34 = sadd.s32 %s33, 1
    %s35 = scalar_select %p32, %s33, %s34
    %p38 = pneg %p32
    %p39 = scmp.eq.s32.totalorder %s9, 1
    %p40 = por %p38, %p39
    %p41 = scmp.ne.s32.totalorder %s33, %s36
    %p42 = scmp.eq.s32.totalorder %s9, 0
    %p43 = por %p41, %p42
    %p44 = scmp.ne.s32.totalorder %s33, %s36
    %p45 = scmp.eq.s32.totalorder %s14, 1
    %p46 = por %p44, %p45
    %p47 = scmp.ne.s32.totalorder %s36, %s37
    %p48 = scmp.eq.s32.totalorder %s14, 0
    %p49 = por %p47, %p48
    %p50 = scmp.ne.s32.totalorder %s36, %s37
    %p51 = scmp.eq.s32.totalorder %s15, 1
    %p52 = por %p50, %p51
    %p54 = scmp.ne.s32.totalorder %s37, %s53
    %p55 = scmp.eq.s32.totalorder %s15, 0
    %p56 = por %p54, %p55
    %s58 = sadd.s32 %s57, 1
    %p61 = scmp.eq.s32.totalorder %s9, 1
    %p62 = scmp.ne.s32.totalorder %s57, %s59
    %p63 = scmp.eq.s32.totalorder %s9, 0
    %p64 = por %p62, %p63
    %p65 = scmp.ne.s32.totalorder %s57, %s59
    %p66 = scmp.eq.s32.totalorder %s14, 1
    %p67 = por %p65, %p66
    %p68 = scmp.ne.s32.totalorder %s59, %s60
    %p69 = scmp.eq.s32.totalorder %s14, 0
    %p70 = por %p68, %p69
    %p71 = scmp.ne.s32.totalorder %s59, %s60
    %p72 = scmp.eq.s32.totalorder %s15, 1
    %p73 = por %p71, %p72
    %p75 = scmp.ne.s32.totalorder %s60, %s74
    %p76 = scmp.eq.s32.totalorder %s15, 0
    %p77 = por %p75, %p76
    %s79 = sadd.s32 %s78, 1
    %p82 = scmp.eq.s32.totalorder %s9, 1
    %p83 = scmp.ne.s32.totalorder %s78, %s80
    %p84 = scmp.eq.s32.totalorder %s9, 0
    %p85 = por %p83, %p84
    %p86 = scmp.ne.s32.totalorder %s78, %s80
    %p87 = scmp.eq.s32.totalorder %s14, 1
    %p88 = por %p86, %p87
    %p89 = scmp.ne.s32.totalorder %s80, %s81
    %p90 = scmp.eq.s32.totalorder %s14, 0
    %p91 = por %p89, %p90
    %p92 = scmp.ne.s32.totalorder %s80, %s81
    %p93 = scmp.eq.s32.totalorder %s15, 1
    %p94 = por %p92, %p93
    %p96 = scmp.ne.s32.totalorder %s81, %s95
    %p97 = scmp.eq.s32.totalorder %s15, 0
    %p98 = por %p96, %p97
    %s99 = ssub.s32 %s16, %s28
    %s100 = ssub.s32 %s17, %s24
    %s101 = sor.u32 %s99, %s100
    %p102 = scmp.eq.s32.totalorder %s101, 0
    %s104 = sadd.s32 %s103, 1
    %s105 = scalar_select %p102, %s103, %s104
    %p108 = pneg %p102
    %p109 = scmp.eq.s32.totalorder %s9, 1
    %p110 = por %p108, %p109
    %p111 = scmp.ne.s32.totalorder %s103, %s106
    %p112 = scmp.eq.s32.totalorder %s9, 0
    %p113 = por %p111, %p112
    %p114 = scmp.ne.s32.totalorder %s103, %s106
    %p115 = scmp.eq.s32.totalorder %s14, 1
    %p116 = por %p114, %p115
    %p117 = scmp.ne.s32.totalorder %s106, %s107
    %p118 = scmp.eq.s32.totalorder %s14, 0
    %p119 = por %p117, %p118
    %p120 = scmp.ne.s32.totalorder %s106, %s107
    %p121 = scmp.eq.s32.totalorder %s15, 1
    %p122 = por %p120, %p121
    %p124 = scmp.ne.s32.totalorder %s107, %s123
    %p125 = scmp.eq.s32.totalorder %s15, 0
    %p126 = por %p124, %p125
    %p127 = scmp.le.s32.totalorder 1, %s9
    %p128 = scmp.lt.s32.totalorder %s9, 3
    %p129 = pnand %p127, %p128
    %p130 = pneg %p129
    // Predicated region
    $region9: #{forward.18} parent=5 // pred_check
      _
    $region10: #{forward.18} parent=5 // pred_check_branch
      %132 = sbr.rel (%p129) target = $region12
    $region11: #{forward.18} parent=5 // pred_region
      %s133 = ssub.s32 %s9, 1
      // Predicated region
      $region13: #{forward.18} parent=11 // pred_check
        %p134 = pneg %p70
      $region14: #{forward.18} parent=11 // pred_check_branch
        %136 = sbr.rel (%p134) target = $region16
      $region15: #{forward.18} parent=11 // pred_region
        _
      $region16: #{forward.18} parent=11 // pred_fallthru
        _
      // Predicated region
      $region17: #{forward.18} parent=11 // pred_check
        %p137 = pneg %p91
      $region18: #{forward.18} parent=11 // pred_check_branch
        %139 = sbr.rel (%p137) target = $region20
      $region19: #{forward.18} parent=11 // pred_region
        _
      $region20: #{forward.18} parent=11 // pred_fallthru
        _
    $region12: #{forward.18} parent=5 // pred_fallthru
      _
    %p140 = scmp.lt.s32.totalorder %s9, 2
    // Predicated region
    $region21: #{forward.18} parent=5 // pred_check
      %p141 = pneg %p140
    $region22: #{forward.18} parent=5 // pred_check_branch
      %143 = sbr.rel (%p141) target = $region24
    $region23: #{forward.18} parent=5 // pred_region
      // Predicated region
      $region25: #{forward.18} parent=23 // pred_check
        %p144 = pneg %p43
      $region26: #{forward.18} parent=23 // pred_check_branch
        %146 = sbr.rel (%p144) target = $region28
      $region27: #{forward.18} parent=23 // pred_region
        %p147 = scmp.lt.s32.totalorder %s16, 1
        %s148 = scalar_select %p147, %s16, 1
        %p149 = scmp.lt.s32.totalorder %s17, 0
        %s150 = scalar_select %p149, %s17, 0
        %s151 = smul.addr %s148, 16
        %s152 = sadd.s32 %s150, %s151
        %s153 = smul.addr %s152, 4
        %s154 = scalar_lea.vmem %s0, %s153
      $region28: #{forward.18} parent=23 // pred_fallthru
        _
    $region24: #{forward.18} parent=5 // pred_fallthru
      _
    %p155 = scmp.le.s32.totalorder 1, %s9
    %p156 = scmp.lt.s32.totalorder %s9, 3
    %p157 = pnand %p155, %p156
    %p158 = pneg %p157
    // Predicated region
    $region29: #{forward.18} parent=5 // pred_check
      _
    $region30: #{forward.18} parent=5 // pred_check_branch
      %160 = sbr.rel (%p157) target = $region32
    $region31: #{forward.18} parent=5 // pred_region
      %s161 = ssub.s32 %s9, 1
      %p162 = scmp.lt.s32.totalorder %s18, 1
      %s163 = scalar_select %p162, %s18, 1
      %p164 = scmp.lt.s32.totalorder %s19, 0
      %s165 = scalar_select %p164, %s19, 0
      %s166 = smul.addr %s163, 16
      %s167 = sadd.s32 %s165, %s166
      %s168 = smul.addr %s167, 4
      %s169 = scalar_lea.vmem %s0, %s168
      %p170 = pneg %p49
      %p171 = pneg %p46
      %p172 = pneg %p70
      %p173 = pneg %p67
      %p174 = pneg %p91
      %p175 = pneg %p88
      %p176 = pneg %p119
      %p177 = pneg %p116
      %p178 = scmp.lt.s32.totalorder %s18, 1
      %s179 = scalar_select %p178, %s18, 1
      %p180 = scmp.lt.s32.totalorder %s19, 0
      %s181 = scalar_select %p180, %s19, 0
      %s182 = smul.addr %s179, 16
      %s183 = sadd.s32 %s181, %s182
      %s184 = smul.addr %s183, 4
      %s185 = scalar_lea.vmem %s3, %s184
      %p186 = scmp.lt.s32.totalorder %s18, 1
      %s187 = scalar_select %p186, %s18, 1
      %p188 = scmp.lt.s32.totalorder %s19, 0
      %s189 = scalar_select %p188, %s19, 0
      %s190 = smul.addr %s187, 16
      %s191 = sadd.s32 %s189, %s190
      %s192 = smul.addr %s191, 4
      %s193 = scalar_lea.vmem %s0, %s192
      %p194 = scmp.lt.s32.totalorder %s18, 1
      %s195 = scalar_select %p194, %s18, 1
      %p196 = scmp.lt.s32.totalorder %s19, 0
      %s197 = scalar_select %p196, %s19, 0
      %s198 = smul.addr %s195, 16
      %s199 = sadd.s32 %s197, %s198
      %s200 = smul.addr %s199, 4
      %s201 = scalar_lea.vmem %s3, %s200
      %v202 = vld [vmem:[%s193] sm:$0xf]
      %v203 = vld [vmem:[%s193 + $0x4] sm:$0xf]
      %v204 = vld [vmem:[%s193 + $0x8] sm:$0xf]
      %v205 = vld [vmem:[%s193 + $0xc] sm:$0xf]
      %v206 = vld [vmem:[%s193 + $0x10] sm:$0xf]
      %v207 = vld [vmem:[%s193 + $0x14] sm:$0xf]
      %v208 = vld [vmem:[%s193 + $0x18] sm:$0xf]
      %v209 = vld [vmem:[%s193 + $0x1c] sm:$0xf]
      %v210 = vld [vmem:[%s193 + $0x20] sm:$0xf]
      %v211 = vld [vmem:[%s193 + $0x24] sm:$0xf]
      %v212 = vld [vmem:[%s193 + $0x28] sm:$0xf]
      %v213 = vld [vmem:[%s193 + $0x2c] sm:$0xf]
      %v214 = vld [vmem:[%s193 + $0x30] sm:$0xf]
      %v215 = vld [vmem:[%s193 + $0x34] sm:$0xf]
      %v216 = vld [vmem:[%s193 + $0x38] sm:$0xf]
      %v217 = vld [vmem:[%s193 + $0x3c] sm:$0xf]
      %v218 = vunpack.c.l.bf16 %v202
      %v219 = vunpack.c.l.bf16 %v203
      %v220 = vunpack.c.l.bf16 %v204
      %v221 = vunpack.c.l.bf16 %v205
      %v222 = vunpack.c.l.bf16 %v206
      %v223 = vunpack.c.l.bf16 %v207
      %v224 = vunpack.c.l.bf16 %v208
      %v225 = vunpack.c.l.bf16 %v209
      %v226 = vunpack.c.l.bf16 %v210
      %v227 = vunpack.c.l.bf16 %v211
      %v228 = vunpack.c.l.bf16 %v212
      %v229 = vunpack.c.l.bf16 %v213
      %v230 = vunpack.c.l.bf16 %v214
      %v231 = vunpack.c.l.bf16 %v215
      %v232 = vunpack.c.l.bf16 %v216
      %v233 = vunpack.c.l.bf16 %v217
      %v234 = vld [vmem:[%s1] sm:$0xff]
      %v235 = vld [vmem:[%s1 + $0x8] sm:$0xff]
      %v236 = vld [vmem:[%s1 + $0x10] sm:$0xff]
      %v237 = vld [vmem:[%s1 + $0x18] sm:$0xff]
      %v238 = vld [vmem:[%s1 + $0x20] sm:$0xff]
      %v239 = vld [vmem:[%s1 + $0x28] sm:$0xff]
      %v240 = vld [vmem:[%s1 + $0x30] sm:$0xff]
      %v241 = vld [vmem:[%s1 + $0x38] sm:$0xff]
      %v242 = vld [vmem:[%s1 + $0x40] sm:$0xff]
      %v243 = vld [vmem:[%s1 + $0x48] sm:$0xff]
      %v244 = vld [vmem:[%s1 + $0x50] sm:$0xff]
      %v245 = vld [vmem:[%s1 + $0x58] sm:$0xff]
      %v246 = vld [vmem:[%s1 + $0x60] sm:$0xff]
      %v247 = vld [vmem:[%s1 + $0x68] sm:$0xff]
      %v248 = vld [vmem:[%s1 + $0x70] sm:$0xff]
      %v249 = vld [vmem:[%s1 + $0x78] sm:$0xff]
      %251 = vset.pattern.permute.xlu0 0
      %252 = vperm.xlu0 %251, %v234
      %v253 = vpop.permute.xlu0 %252
      %256 = vset.pattern.permute.xlu0 0
      %257 = vperm.xlu0 %256, %v235
      %v258 = vpop.permute.xlu0 %257
      %261 = vset.pattern.permute.xlu0 0
      %262 = vperm.xlu0 %261, %v236
      %v263 = vpop.permute.xlu0 %262
      %266 = vset.pattern.permute.xlu0 0
      %267 = vperm.xlu0 %266, %v237
      %v268 = vpop.permute.xlu0 %267
      %271 = vset.pattern.permute.xlu0 0
      %272 = vperm.xlu0 %271, %v238
      %v273 = vpop.permute.xlu0 %272
      %276 = vset.pattern.permute.xlu0 0
      %277 = vperm.xlu0 %276, %v239
      %v278 = vpop.permute.xlu0 %277
      %281 = vset.pattern.permute.xlu0 0
      %282 = vperm.xlu0 %281, %v240
      %v283 = vpop.permute.xlu0 %282
      %286 = vset.pattern.permute.xlu0 0
      %287 = vperm.xlu0 %286, %v241
      %v288 = vpop.permute.xlu0 %287
      %291 = vset.pattern.permute.xlu0 0
      %292 = vperm.xlu0 %291, %v242
      %v293 = vpop.permute.xlu0 %292
      %296 = vset.pattern.permute.xlu0 0
      %297 = vperm.xlu0 %296, %v243
      %v298 = vpop.permute.xlu0 %297
      %301 = vset.pattern.permute.xlu0 0
      %302 = vperm.xlu0 %301, %v244
      %v303 = vpop.permute.xlu0 %302
      %306 = vset.pattern.permute.xlu0 0
      %307 = vperm.xlu0 %306, %v245
      %v308 = vpop.permute.xlu0 %307
      %311 = vset.pattern.permute.xlu0 0
      %312 = vperm.xlu0 %311, %v246
      %v313 = vpop.permute.xlu0 %312
      %316 = vset.pattern.permute.xlu0 0
      %317 = vperm.xlu0 %316, %v247
      %v318 = vpop.permute.xlu0 %317
      %321 = vset.pattern.permute.xlu0 0
      %322 = vperm.xlu0 %321, %v248
      %v323 = vpop.permute.xlu0 %322
      %326 = vset.pattern.permute.xlu0 0
      %327 = vperm.xlu0 %326, %v249
      %v328 = vpop.permute.xlu0 %327
      %v330 = vmul.f32 %v218, %v253
      %v331 = vmul.f32 %v219, %v258
      %v332 = vmul.f32 %v220, %v263
      %v333 = vmul.f32 %v221, %v268
      %v334 = vmul.f32 %v222, %v273
      %v335 = vmul.f32 %v223, %v278
      %v336 = vmul.f32 %v224, %v283
      %v337 = vmul.f32 %v225, %v288
      %v338 = vmul.f32 %v226, %v293
      %v339 = vmul.f32 %v227, %v298
      %v340 = vmul.f32 %v228, %v303
      %v341 = vmul.f32 %v229, %v308
      %v342 = vmul.f32 %v230, %v313
      %v343 = vmul.f32 %v231, %v318
      %v344 = vmul.f32 %v232, %v323
      %v345 = vmul.f32 %v233, %v328
      %v346 = vld [vmem:[%s2] sm:$0xff]
      %v347 = vld [vmem:[%s2 + $0x8] sm:$0xff]
      %v348 = vld [vmem:[%s2 + $0x10] sm:$0xff]
      %v349 = vld [vmem:[%s2 + $0x18] sm:$0xff]
      %v350 = vld [vmem:[%s2 + $0x20] sm:$0xff]
      %v351 = vld [vmem:[%s2 + $0x28] sm:$0xff]
      %v352 = vld [vmem:[%s2 + $0x30] sm:$0xff]
      %v353 = vld [vmem:[%s2 + $0x38] sm:$0xff]
      %v354 = vld [vmem:[%s2 + $0x40] sm:$0xff]
      %v355 = vld [vmem:[%s2 + $0x48] sm:$0xff]
      %v356 = vld [vmem:[%s2 + $0x50] sm:$0xff]
      %v357 = vld [vmem:[%s2 + $0x58] sm:$0xff]
      %v358 = vld [vmem:[%s2 + $0x60] sm:$0xff]
      %v359 = vld [vmem:[%s2 + $0x68] sm:$0xff]
      %v360 = vld [vmem:[%s2 + $0x70] sm:$0xff]
      %v361 = vld [vmem:[%s2 + $0x78] sm:$0xff]
      %363 = vset.pattern.permute.xlu0 0
      %364 = vperm.xlu0 %363, %v346
      %v365 = vpop.permute.xlu0 %364
      %368 = vset.pattern.permute.xlu0 0
      %369 = vperm.xlu0 %368, %v347
      %v370 = vpop.permute.xlu0 %369
      %373 = vset.pattern.permute.xlu0 0
      %374 = vperm.xlu0 %373, %v348
      %v375 = vpop.permute.xlu0 %374
      %378 = vset.pattern.permute.xlu0 0
      %379 = vperm.xlu0 %378, %v349
      %v380 = vpop.permute.xlu0 %379
      %383 = vset.pattern.permute.xlu0 0
      %384 = vperm.xlu0 %383, %v350
      %v385 = vpop.permute.xlu0 %384
      %388 = vset.pattern.permute.xlu0 0
      %389 = vperm.xlu0 %388, %v351
      %v390 = vpop.permute.xlu0 %389
      %393 = vset.pattern.permute.xlu0 0
      %394 = vperm.xlu0 %393, %v352
      %v395 = vpop.permute.xlu0 %394
      %398 = vset.pattern.permute.xlu0 0
      %399 = vperm.xlu0 %398, %v353
      %v400 = vpop.permute.xlu0 %399
      %403 = vset.pattern.permute.xlu0 0
      %404 = vperm.xlu0 %403, %v354
      %v405 = vpop.permute.xlu0 %404
      %408 = vset.pattern.permute.xlu0 0
      %409 = vperm.xlu0 %408, %v355
      %v410 = vpop.permute.xlu0 %409
      %413 = vset.pattern.permute.xlu0 0
      %414 = vperm.xlu0 %413, %v356
      %v415 = vpop.permute.xlu0 %414
      %418 = vset.pattern.permute.xlu0 0
      %419 = vperm.xlu0 %418, %v357
      %v420 = vpop.permute.xlu0 %419
      %423 = vset.pattern.permute.xlu0 0
      %424 = vperm.xlu0 %423, %v358
      %v425 = vpop.permute.xlu0 %424
      %428 = vset.pattern.permute.xlu0 0
      %429 = vperm.xlu0 %428, %v359
      %v430 = vpop.permute.xlu0 %429
      %433 = vset.pattern.permute.xlu0 0
      %434 = vperm.xlu0 %433, %v360
      %v435 = vpop.permute.xlu0 %434
      %438 = vset.pattern.permute.xlu0 0
      %439 = vperm.xlu0 %438, %v361
      %v440 = vpop.permute.xlu0 %439
      %v442 = vadd.f32 %v330, %v365
      %v443 = vadd.f32 %v331, %v370
      %v444 = vadd.f32 %v332, %v375
      %v445 = vadd.f32 %v333, %v380
      %v446 = vadd.f32 %v334, %v385
      %v447 = vadd.f32 %v335, %v390
      %v448 = vadd.f32 %v336, %v395
      %v449 = vadd.f32 %v337, %v400
      %v450 = vadd.f32 %v338, %v405
      %v451 = vadd.f32 %v339, %v410
      %v452 = vadd.f32 %v340, %v415
      %v453 = vadd.f32 %v341, %v420
      %v454 = vadd.f32 %v342, %v425
      %v455 = vadd.f32 %v343, %v430
      %v456 = vadd.f32 %v344, %v435
      %v457 = vadd.f32 %v345, %v440
      %vm458 = vcmp.ge.f32.partialorder %v442, 0.0
      %vm459 = vcmp.ge.f32.partialorder %v443, 0.0
      %vm460 = vcmp.ge.f32.partialorder %v444, 0.0
      %vm461 = vcmp.ge.f32.partialorder %v445, 0.0
      %vm462 = vcmp.ge.f32.partialorder %v446, 0.0
      %vm463 = vcmp.ge.f32.partialorder %v447, 0.0
      %vm464 = vcmp.ge.f32.partialorder %v448, 0.0
      %vm465 = vcmp.ge.f32.partialorder %v449, 0.0
      %vm466 = vcmp.ge.f32.partialorder %v450, 0.0
      %vm467 = vcmp.ge.f32.partialorder %v451, 0.0
      %vm468 = vcmp.ge.f32.partialorder %v452, 0.0
      %vm469 = vcmp.ge.f32.partialorder %v453, 0.0
      %vm470 = vcmp.ge.f32.partialorder %v454, 0.0
      %vm471 = vcmp.ge.f32.partialorder %v455, 0.0
      %vm472 = vcmp.ge.f32.partialorder %v456, 0.0
      %vm473 = vcmp.ge.f32.partialorder %v457, 0.0
      %v474 = vmul.f32 %v442, 0.2
      %v475 = vmul.f32 %v443, 0.2
      %v476 = vmul.f32 %v444, 0.2
      %v477 = vmul.f32 %v445, 0.2
      %v478 = vmul.f32 %v446, 0.2
      %v479 = vmul.f32 %v447, 0.2
      %v480 = vmul.f32 %v448, 0.2
      %v481 = vmul.f32 %v449, 0.2
      %v482 = vmul.f32 %v450, 0.2
      %v483 = vmul.f32 %v451, 0.2
      %v484 = vmul.f32 %v452, 0.2
      %v485 = vmul.f32 %v453, 0.2
      %v486 = vmul.f32 %v454, 0.2
      %v487 = vmul.f32 %v455, 0.2
      %v488 = vmul.f32 %v456, 0.2
      %v489 = vmul.f32 %v457, 0.2
      %v490 = vsel %vm458, %v442, %v474
      %v491 = vsel %vm459, %v443, %v475
      %v492 = vsel %vm460, %v444, %v476
      %v493 = vsel %vm461, %v445, %v477
      %v494 = vsel %vm462, %v446, %v478
      %v495 = vsel %vm463, %v447, %v479
      %v496 = vsel %vm464, %v448, %v480
      %v497 = vsel %vm465, %v449, %v481
      %v498 = vsel %vm466, %v450, %v482
      %v499 = vsel %vm467, %v451, %v483
      %v500 = vsel %vm468, %v452, %v484
      %v501 = vsel %vm469, %v453, %v485
      %v502 = vsel %vm470, %v454, %v486
      %v503 = vsel %vm471, %v455, %v487
      %v504 = vsel %vm472, %v456, %v488
      %v505 = vsel %vm473, %v457, %v489
      %v506 = vpack.c.bf16 %v490, %v490
      %v507 = vpack.c.bf16 %v491, %v491
      %v508 = vpack.c.bf16 %v492, %v492
      %v509 = vpack.c.bf16 %v493, %v493
      %v510 = vpack.c.bf16 %v494, %v494
      %v511 = vpack.c.bf16 %v495, %v495
      %v512 = vpack.c.bf16 %v496, %v496
      %v513 = vpack.c.bf16 %v497, %v497
      %v514 = vpack.c.bf16 %v498, %v498
      %v515 = vpack.c.bf16 %v499, %v499
      %v516 = vpack.c.bf16 %v500, %v500
      %v517 = vpack.c.bf16 %v501, %v501
      %v518 = vpack.c.bf16 %v502, %v502
      %v519 = vpack.c.bf16 %v503, %v503
      %v520 = vpack.c.bf16 %v504, %v504
      %v521 = vpack.c.bf16 %v505, %v505
      %522 = vst [vmem:[%s201] sm:$0xf] %v506
      %523 = vst [vmem:[%s201 + $0x4] sm:$0xf] %v507
      %524 = vst [vmem:[%s201 + $0x8] sm:$0xf] %v508
      %525 = vst [vmem:[%s201 + $0xc] sm:$0xf] %v509
      %526 = vst [vmem:[%s201 + $0x10] sm:$0xf] %v510
      %527 = vst [vmem:[%s201 + $0x14] sm:$0xf] %v511
      %528 = vst [vmem:[%s201 + $0x18] sm:$0xf] %v512
      %529 = vst [vmem:[%s201 + $0x1c] sm:$0xf] %v513
      %530 = vst [vmem:[%s201 + $0x20] sm:$0xf] %v514
      %531 = vst [vmem:[%s201 + $0x24] sm:$0xf] %v515
      %532 = vst [vmem:[%s201 + $0x28] sm:$0xf] %v516
      %533 = vst [vmem:[%s201 + $0x2c] sm:$0xf] %v517
      %534 = vst [vmem:[%s201 + $0x30] sm:$0xf] %v518
      %535 = vst [vmem:[%s201 + $0x34] sm:$0xf] %v519
      %536 = vst [vmem:[%s201 + $0x38] sm:$0xf] %v520
      %537 = vst [vmem:[%s201 + $0x3c] sm:$0xf] %v521
      %p538 = scmp.lt.s32.totalorder %s18, 1
      %s539 = scalar_select %p538, %s18, 1
      %p540 = scmp.lt.s32.totalorder %s19, 0
      %s541 = scalar_select %p540, %s19, 0
      %s542 = smul.addr %s539, 16
      %s543 = sadd.s32 %s541, %s542
      %s544 = smul.addr %s543, 4
      %s545 = scalar_lea.vmem %s3, %s544
      // Predicated region
      $region33: #{forward.18} parent=31 // pred_check
        %p546 = pneg %p116
      $region34: #{forward.18} parent=31 // pred_check_branch
        %548 = sbr.rel (%p546) target = $region36
      $region35: #{forward.18} parent=31 // pred_region
        _
      $region36: #{forward.18} parent=31 // pred_fallthru
        _
    $region32: #{forward.18} parent=5 // pred_fallthru
      _
    %p549 = scmp.le.s32.totalorder 2, %s9
    // Predicated region
    $region37: #{forward.18} parent=5 // pred_check
      %p550 = pneg %p549
    $region38: #{forward.18} parent=5 // pred_check_branch
      %552 = sbr.rel (%p550) target = $region40
    $region39: #{forward.18} parent=5 // pred_region
      %s553 = ssub.s32 %s9, 2
      // Predicated region
      $region41: #{forward.18} parent=39 // pred_check
        %p554 = pneg %p122
      $region42: #{forward.18} parent=39 // pred_check_branch
        %556 = sbr.rel (%p554) target = $region44
      $region43: #{forward.18} parent=39 // pred_region
        %p557 = scmp.lt.s32.totalorder %s20, 1
        %s558 = scalar_select %p557, %s20, 1
        %p559 = scmp.lt.s32.totalorder %s21, 0
        %s560 = scalar_select %p559, %s21, 0
        %s561 = smul.addr %s558, 16
        %s562 = sadd.s32 %s560, %s561
        %s563 = smul.addr %s562, 4
        %s564 = scalar_lea.vmem %s3, %s563
      $region44: #{forward.18} parent=39 // pred_fallthru
        _
    $region40: #{forward.18} parent=5 // pred_fallthru
      _
  $region6: #{forward.18} parent=0 // loop_footer
    %s13 = sadd.s32 1, %s9
  $region7: #{forward.18} parent=0 // loop_footer_branch
    %8 = sbr.rel target = $region3
  $region8: #{forward.18} parent=0 // loop_exit
    _

// kernel: forward.19
$region0: #{forward.19}
  #allocation0 [shape = 'u32[]', space=smem, size = 0x4, offset = 0x4, fixed_abs, tag = 'smem constant byte address 0x4 - core index']
  #allocation1 [shape = 'u32[72,128]{1,0:T(1,128)}', space=vmem, size = 0x9000, scoped, tag = 'internal scratch']
  %s0 = inlined_call_operand.vmem [shape: bf16[2,128,256], index: 0, kind: input, shape index: {}, may-alias: {0,1}]
  %s1 = inlined_call_operand.vmem [shape: bf16[2,128,256], index: 1, kind: input, shape index: {}, may-alias: {0,1}]
  %s2 = inlined_call_operand.vmem [shape: bf16[5,32,128], index: 2, kind: input, shape index: {}]
  %s3 = inlined_call_operand.vmem [shape: f32[32,1], index: 3, kind: input, shape index: {}]
  %s4 = inlined_call_operand.vmem [shape: f32[2,32,128], index: 4, kind: output, shape index: {}]
  %s5 = sld [smem:[#allocation0]]
  $region131: #{forward.19} parent=0
    _
  %s7 = ssub.s32 1, %s5
  %s8 = scalar_select 0, %s7, %s5
  $region1: #{forward.19} parent=0
    #allocation2 [shape = 'u8[65536]{0}', space=vmem, size = 0x10000, scoped, tag = 'input window, operand 0']
    #allocation3 [shape = 'u8[65536]{0}', space=vmem, size = 0x10000, scoped, tag = 'input window, operand 1']
    loop: start=0, step=1, limit=4
    $region2: #{forward.19} parent=1 // loop_pre_header
      _
    $region3: #{forward.19} parent=1 // loop_header
      %s10 = sphi 0, %s14
      %p11 = scmp.ge.s32.totalorder %s10, 4
      %s17 = sphi 0, %s29
      %s18 = sphi 0, %s25
      %s19 = sphi 0, %s17
      %s20 = sphi 0, %s18
      %s21 = sphi 0, %s19
      %s22 = sphi 0, %s20
      %s34 = sphi 0, %s36
      %s37 = sphi 0, %s34
      %s38 = sphi 0, %s37
      %s54 = sphi 0, %s38
      %s64 = sphi 0, %s66
      %s67 = sphi 0, %s64
      %s68 = sphi 0, %s67
      %s84 = sphi 0, %s68
      %s88 = sphi 0, %s88
      %s90 = sphi 0, %s88
      %s91 = sphi 0, %s90
      %s105 = sphi 0, %s91
      %s109 = sphi 0, %s109
      %s111 = sphi 0, %s109
      %s112 = sphi 0, %s111
      %s126 = sphi 0, %s112
      %s134 = sphi 0, %s136
      %s137 = sphi 0, %s134
      %s138 = sphi 0, %s137
      %s154 = sphi 0, %s138
    $region4: #{forward.19} parent=1 // loop_header_branch
      %13 = sbr.rel (%p11) target = $region8
    $region5: #{forward.19} parent=1 // loop_body
      %s15 = ssub.s32 %s10, 1
      %s16 = ssub.s32 %s10, 2
      %s23 = sadd.s32 1, %s18
      %p24 = scmp.ge.s32.totalorder %s23, 1
      %s25 = scalar_select %p24, 0, %s23
      %s26 = sadd.s32 1, %s17
      %s27 = scalar_select %p24, %s26, %s17
      %p28 = scmp.ge.s32.totalorder %s27, 2
      %s29 = scalar_select %p28, 0, %s27
      %s30 = ssub.s32 %s17, %s29
      %s31 = ssub.s32 %s18, %s25
      %s32 = sor.u32 %s30, %s31
      %p33 = scmp.eq.s32.totalorder %s32, 0
      %s35 = sadd.s32 %s34, 1
      %s36 = scalar_select %p33, %s34, %s35
      %p39 = pneg %p33
      %p40 = scmp.eq.s32.totalorder %s10, 1
      %p41 = por %p39, %p40
      %p42 = scmp.ne.s32.totalorder %s34, %s37
      %p43 = scmp.eq.s32.totalorder %s10, 0
      %p44 = por %p42, %p43
      %p45 = scmp.ne.s32.totalorder %s34, %s37
      %p46 = scmp.eq.s32.totalorder %s15, 1
      %p47 = por %p45, %p46
      %p48 = scmp.ne.s32.totalorder %s37, %s38
      %p49 = scmp.eq.s32.totalorder %s15, 0
      %p50 = por %p48, %p49
      %p51 = scmp.ne.s32.totalorder %s37, %s38
      %p52 = scmp.eq.s32.totalorder %s16, 1
      %p53 = por %p51, %p52
      %p55 = scmp.ne.s32.totalorder %s38, %s54
      %p56 = scmp.eq.s32.totalorder %s16, 0
      %p57 = por %p55, %p56
      %s58 = sadd.s32 %s18, 1
      %s59 = sadd.s32 %s25, 1
      %s60 = ssub.s32 %s17, %s29
      %s61 = ssub.s32 %s58, %s59
      %s62 = sor.u32 %s60, %s61
      %p63 = scmp.eq.s32.totalorder %s62, 0
      %s65 = sadd.s32 %s64, 1
      %s66 = scalar_select %p63, %s64, %s65
      %p69 = pneg %p63
      %p70 = scmp.eq.s32.totalorder %s10, 1
      %p71 = por %p69, %p70
      %p72 = scmp.ne.s32.totalorder %s64, %s67
      %p73 = scmp.eq.s32.totalorder %s10, 0
      %p74 = por %p72, %p73
      %p75 = scmp.ne.s32.totalorder %s64, %s67
      %p76 = scmp.eq.s32.totalorder %s15, 1
      %p77 = por %p75, %p76
      %p78 = scmp.ne.s32.totalorder %s67, %s68
      %p79 = scmp.eq.s32.totalorder %s15, 0
      %p80 = por %p78, %p79
      %p81 = scmp.ne.s32.totalorder %s67, %s68
      %p82 = scmp.eq.s32.totalorder %s16, 1
      %p83 = por %p81, %p82
      %p85 = scmp.ne.s32.totalorder %s68, %s84
      %p86 = scmp.eq.s32.totalorder %s16, 0
      %p87 = por %p85, %p86
      %s89 = sadd.s32 %s88, 1
      %p92 = scmp.eq.s32.totalorder %s10, 1
      %p93 = scmp.ne.s32.totalorder %s88, %s90
      %p94 = scmp.eq.s32.totalorder %s10, 0
      %p95 = por %p93, %p94
      %p96 = scmp.ne.s32.totalorder %s88, %s90
      %p97 = scmp.eq.s32.totalorder %s15, 1
      %p98 = por %p96, %p97
      %p99 = scmp.ne.s32.totalorder %s90, %s91
      %p100 = scmp.eq.s32.totalorder %s15, 0
      %p101 = por %p99, %p100
      %p102 = scmp.ne.s32.totalorder %s90, %s91
      %p103 = scmp.eq.s32.totalorder %s16, 1
      %p104 = por %p102, %p103
      %p106 = scmp.ne.s32.totalorder %s91, %s105
      %p107 = scmp.eq.s32.totalorder %s16, 0
      %p108 = por %p106, %p107
      %s110 = sadd.s32 %s109, 1
      %p113 = scmp.eq.s32.totalorder %s10, 1
      %p114 = scmp.ne.s32.totalorder %s109, %s111
      %p115 = scmp.eq.s32.totalorder %s10, 0
      %p116 = por %p114, %p115
      %p117 = scmp.ne.s32.totalorder %s109, %s111
      %p118 = scmp.eq.s32.totalorder %s15, 1
      %p119 = por %p117, %p118
      %p120 = scmp.ne.s32.totalorder %s111, %s112
      %p121 = scmp.eq.s32.totalorder %s15, 0
      %p122 = por %p120, %p121
      %p123 = scmp.ne.s32.totalorder %s111, %s112
      %p124 = scmp.eq.s32.totalorder %s16, 1
      %p125 = por %p123, %p124
      %p127 = scmp.ne.s32.totalorder %s112, %s126
      %p128 = scmp.eq.s32.totalorder %s16, 0
      %p129 = por %p127, %p128
      %s130 = ssub.s32 %s17, %s29
      %s131 = ssub.s32 %s18, %s25
      %s132 = sor.u32 %s130, %s131
      %p133 = scmp.eq.s32.totalorder %s132, 0
      %s135 = sadd.s32 %s134, 1
      %s136 = scalar_select %p133, %s134, %s135
      %p139 = pneg %p133
      %p140 = scmp.eq.s32.totalorder %s10, 1
      %p141 = por %p139, %p140
      %p142 = scmp.ne.s32.totalorder %s134, %s137
      %p143 = scmp.eq.s32.totalorder %s10, 0
      %p144 = por %p142, %p143
      %p145 = scmp.ne.s32.totalorder %s134, %s137
      %p146 = scmp.eq.s32.totalorder %s15, 1
      %p147 = por %p145, %p146
      %p148 = scmp.ne.s32.totalorder %s137, %s138
      %p149 = scmp.eq.s32.totalorder %s15, 0
      %p150 = por %p148, %p149
      %p151 = scmp.ne.s32.totalorder %s137, %s138
      %p152 = scmp.eq.s32.totalorder %s16, 1
      %p153 = por %p151, %p152
      %p155 = scmp.ne.s32.totalorder %s138, %s154
      %p156 = scmp.eq.s32.totalorder %s16, 0
      %p157 = por %p155, %p156
      %p158 = scmp.le.s32.totalorder 1, %s10
      %p159 = scmp.lt.s32.totalorder %s10, 3
      %p160 = pnand %p158, %p159
      %p161 = pneg %p160
      // Predicated region
      $region9: #{forward.19} parent=5 // pred_check
        _
      $region10: #{forward.19} parent=5 // pred_check_branch
        %163 = sbr.rel (%p160) target = $region12
      $region11: #{forward.19} parent=5 // pred_region
        %s164 = ssub.s32 %s10, 1
        // Predicated region
        $region13: #{forward.19} parent=11 // pred_check
          %p165 = pneg %p101
        $region14: #{forward.19} parent=11 // pred_check_branch
          %167 = sbr.rel (%p165) target = $region16
        $region15: #{forward.19} parent=11 // pred_region
          _
        $region16: #{forward.19} parent=11 // pred_fallthru
          _
        // Predicated region
        $region17: #{forward.19} parent=11 // pred_check
          %p168 = pneg %p122
        $region18: #{forward.19} parent=11 // pred_check_branch
          %170 = sbr.rel (%p168) target = $region20
        $region19: #{forward.19} parent=11 // pred_region
          _
        $region20: #{forward.19} parent=11 // pred_fallthru
          _
      $region12: #{forward.19} parent=5 // pred_fallthru
        _
      %p171 = scmp.lt.s32.totalorder %s10, 2
      // Predicated region
      $region21: #{forward.19} parent=5 // pred_check
        %p172 = pneg %p171
      $region22: #{forward.19} parent=5 // pred_check_branch
        %174 = sbr.rel (%p172) target = $region24
      $region23: #{forward.19} parent=5 // pred_region
        // Predicated region
        $region25: #{forward.19} parent=23 // pred_check
          %p175 = pneg %p44
        $region26: #{forward.19} parent=23 // pred_check_branch
          %177 = sbr.rel (%p175) target = $region28
        $region27: #{forward.19} parent=23 // pred_region
          %s178 = sand.u32 %s34, 1
          %s179 = sand.u32 %s34, 1
          %s180 = smul.addr %s179, 64
          %s181 = scalar_lea.vmem [#allocation2], %s180
          %s182 = smul.addr %s17, 32
          %s183 = sadd.s32 %s18, %s182
          %s184 = smul.addr %s183, 4
          %s185 = scalar_lea.vmem %s0, %s184
          // Predicated region
          $region29: #{forward.19} parent=27 // pred_check
            _
          $region30: #{forward.19} parent=27 // pred_check_branch
            %187 = sbr.rel (0) target = $region32
          $region31: #{forward.19} parent=27 // pred_region
            // Predicated region
            $region33: #{forward.19} parent=31 // pred_check
              _
            $region34: #{forward.19} parent=31 // pred_check_branch
              %189 = sbr.rel target = $region36
            $region35: #{forward.19} parent=31 // pred_region
              // Predicated region
              $region48: #{forward.19} parent=35 // pred_check
                _
              $region49: #{forward.19} parent=35 // pred_check_branch
                %235 = sbr.rel (0) target = $region51
              $region50: #{forward.19} parent=35 // pred_region
                loop: start=0, step=1, limit=1
                $region52: #{forward.19} parent=50 // loop_pre_header
                  _
                $region53: #{forward.19} parent=50 // loop_header
                  %s237 = sphi 0, %s241
                  %p238 = scmp.ge.s32.totalorder %s237, 1
                  %s242 = sphi %s185, %s185
                  %s243 = sphi %s181, %s181
                $region54: #{forward.19} parent=50 // loop_header_branch
                  %240 = sbr.rel (%p238) target = $region58
                $region55: #{forward.19} parent=50 // loop_body
                  _
                $region56: #{forward.19} parent=50 // loop_footer
                  %s241 = sadd.s32 1, %s237
                $region57: #{forward.19} parent=50 // loop_footer_branch
                  %236 = sbr.rel target = $region53
                $region58: #{forward.19} parent=50 // loop_exit
                  _
                %s245 = ssub.s32 16, 1
                loop: start=0, step=1, limit=1
                $region59: #{forward.19} parent=50 // loop_pre_header
                  _
                $region60: #{forward.19} parent=50 // loop_header
                  %s247 = sphi 0, %s251
                  %p248 = scmp.ge.s32.totalorder %s247, 1
                  %s252 = sphi %s185, %s185
                  %s253 = sphi %s181, %s181
                $region61: #{forward.19} parent=50 // loop_header_branch
                  %250 = sbr.rel (%p248) target = $region65
                $region62: #{forward.19} parent=50 // loop_body
                  %v254 = vld [vmem:[%s252] sm:%s245]
                  %255 = vst [vmem:[%s253] sm:%s245] %v254
                  %v256 = vld [vmem:[%s252 + $0x8] sm:%s245]
                  %257 = vst [vmem:[%s253 + $0x4] sm:%s245] %v256
                  %v258 = vld [vmem:[%s252 + $0x10] sm:%s245]
                  %259 = vst [vmem:[%s253 + $0x8] sm:%s245] %v258
                  %v260 = vld [vmem:[%s252 + $0x18] sm:%s245]
                  %261 = vst [vmem:[%s253 + $0xc] sm:%s245] %v260
                  %v262 = vld [vmem:[%s252 + $0x20] sm:%s245]
                  %263 = vst [vmem:[%s253 + $0x10] sm:%s245] %v262
                  %v264 = vld [vmem:[%s252 + $0x28] sm:%s245]
                  %265 = vst [vmem:[%s253 + $0x14] sm:%s245] %v264
                  %v266 = vld [vmem:[%s252 + $0x30] sm:%s245]
                  %267 = vst [vmem:[%s253 + $0x18] sm:%s245] %v266
                  %v268 = vld [vmem:[%s252 + $0x38] sm:%s245]
                  %269 = vst [vmem:[%s253 + $0x1c] sm:%s245] %v268
                  %v270 = vld [vmem:[%s252 + $0x40] sm:%s245]
                  %271 = vst [vmem:[%s253 + $0x20] sm:%s245] %v270
                  %v272 = vld [vmem:[%s252 + $0x48] sm:%s245]
                  %273 = vst [vmem:[%s253 + $0x24] sm:%s245] %v272
                  %v274 = vld [vmem:[%s252 + $0x50] sm:%s245]
                  %275 = vst [vmem:[%s253 + $0x28] sm:%s245] %v274
                  %v276 = vld [vmem:[%s252 + $0x58] sm:%s245]
                  %277 = vst [vmem:[%s253 + $0x2c] sm:%s245] %v276
                  %v278 = vld [vmem:[%s252 + $0x60] sm:%s245]
                  %279 = vst [vmem:[%s253 + $0x30] sm:%s245] %v278
                  %v280 = vld [vmem:[%s252 + $0x68] sm:%s245]
                  %281 = vst [vmem:[%s253 + $0x34] sm:%s245] %v280
                  %v282 = vld [vmem:[%s252 + $0x70] sm:%s245]
                  %283 = vst [vmem:[%s253 + $0x38] sm:%s245] %v282
                  %v284 = vld [vmem:[%s252 + $0x78] sm:%s245]
                  %285 = vst [vmem:[%s253 + $0x3c] sm:%s245] %v284
                $region63: #{forward.19} parent=50 // loop_footer
                  %s251 = sadd.s32 1, %s247
                $region64: #{forward.19} parent=50 // loop_footer_branch
                  %246 = sbr.rel target = $region60
                $region65: #{forward.19} parent=50 // loop_exit
                  _
              $region51: #{forward.19} parent=35 // pred_fallthru
                _
            $region36: #{forward.19} parent=31 // pred_fallthru
              _
            // Predicated region
            $region37: #{forward.19} parent=31 // pred_check
              _
            $region38: #{forward.19} parent=31 // pred_check_branch
              %191 = sbr.rel (0) target = $region40
            $region39: #{forward.19} parent=31 // pred_region
              %s193 = ssub.s32 16, 1
              loop: start=0, step=1, limit=1
              $region41: #{forward.19} parent=39 // loop_pre_header
                _
              $region42: #{forward.19} parent=39 // loop_header
                %s195 = sphi 0, %s199
                %p196 = scmp.ge.s32.totalorder %s195, 1
                %s200 = sphi %s185, %s185
                %s201 = sphi %s181, %s181
              $region43: #{forward.19} parent=39 // loop_header_branch
                %198 = sbr.rel (%p196) target = $region47
              $region44: #{forward.19} parent=39 // loop_body
                %v202 = vld [vmem:[%s200] sm:%s193]
                %203 = vst [vmem:[%s201] sm:%s193] %v202
                %v204 = vld [vmem:[%s200 + $0x8] sm:%s193]
                %205 = vst [vmem:[%s201 + $0x4] sm:%s193] %v204
                %v206 = vld [vmem:[%s200 + $0x10] sm:%s193]
                %207 = vst [vmem:[%s201 + $0x8] sm:%s193] %v206
                %v208 = vld [vmem:[%s200 + $0x18] sm:%s193]
                %209 = vst [vmem:[%s201 + $0xc] sm:%s193] %v208
                %v210 = vld [vmem:[%s200 + $0x20] sm:%s193]
                %211 = vst [vmem:[%s201 + $0x10] sm:%s193] %v210
                %v212 = vld [vmem:[%s200 + $0x28] sm:%s193]
                %213 = vst [vmem:[%s201 + $0x14] sm:%s193] %v212
                %v214 = vld [vmem:[%s200 + $0x30] sm:%s193]
                %215 = vst [vmem:[%s201 + $0x18] sm:%s193] %v214
                %v216 = vld [vmem:[%s200 + $0x38] sm:%s193]
                %217 = vst [vmem:[%s201 + $0x1c] sm:%s193] %v216
                %v218 = vld [vmem:[%s200 + $0x40] sm:%s193]
                %219 = vst [vmem:[%s201 + $0x20] sm:%s193] %v218
                %v220 = vld [vmem:[%s200 + $0x48] sm:%s193]
                %221 = vst [vmem:[%s201 + $0x24] sm:%s193] %v220
                %v222 = vld [vmem:[%s200 + $0x50] sm:%s193]
                %223 = vst [vmem:[%s201 + $0x28] sm:%s193] %v222
                %v224 = vld [vmem:[%s200 + $0x58] sm:%s193]
                %225 = vst [vmem:[%s201 + $0x2c] sm:%s193] %v224
                %v226 = vld [vmem:[%s200 + $0x60] sm:%s193]
                %227 = vst [vmem:[%s201 + $0x30] sm:%s193] %v226
                %v228 = vld [vmem:[%s200 + $0x68] sm:%s193]
                %229 = vst [vmem:[%s201 + $0x34] sm:%s193] %v228
                %v230 = vld [vmem:[%s200 + $0x70] sm:%s193]
                %231 = vst [vmem:[%s201 + $0x38] sm:%s193] %v230
                %v232 = vld [vmem:[%s200 + $0x78] sm:%s193]
                %233 = vst [vmem:[%s201 + $0x3c] sm:%s193] %v232
              $region45: #{forward.19} parent=39 // loop_footer
                %s199 = sadd.s32 1, %s195
              $region46: #{forward.19} parent=39 // loop_footer_branch
                %194 = sbr.rel target = $region42
              $region47: #{forward.19} parent=39 // loop_exit
                _
            $region40: #{forward.19} parent=31 // pred_fallthru
              _
          $region32: #{forward.19} parent=27 // pred_fallthru
            _
          %286 = vnop
        $region28: #{forward.19} parent=23 // pred_fallthru
          _
        // Predicated region
        $region66: #{forward.19} parent=23 // pred_check
          %p287 = pneg %p74
        $region67: #{forward.19} parent=23 // pred_check_branch
          %289 = sbr.rel (%p287) target = $region69
        $region68: #{forward.19} parent=23 // pred_region
          %s290 = sand.u32 %s64, 1
          %s291 = sand.u32 %s64, 1
          %s292 = smul.addr %s291, 64
          %s293 = scalar_lea.vmem [#allocation3], %s292
          %s294 = sadd.s32 %s18, 1
          %s295 = smul.addr %s17, 32
          %s296 = sadd.s32 %s294, %s295
          %s297 = smul.addr %s296, 4
          %s298 = scalar_lea.vmem %s1, %s297
          // Predicated region
          $region70: #{forward.19} parent=68 // pred_check
            _
          $region71: #{forward.19} parent=68 // pred_check_branch
            %300 = sbr.rel (0) target = $region73
          $region72: #{forward.19} parent=68 // pred_region
            // Predicated region
            $region74: #{forward.19} parent=72 // pred_check
              _
            $region75: #{forward.19} parent=72 // pred_check_branch
              %302 = sbr.rel target = $region77
            $region76: #{forward.19} parent=72 // pred_region
              // Predicated region
              $region89: #{forward.19} parent=76 // pred_check
                _
              $region90: #{forward.19} parent=76 // pred_check_branch
                %348 = sbr.rel (0) target = $region92
              $region91: #{forward.19} parent=76 // pred_region
                loop: start=0, step=1, limit=1
                $region93: #{forward.19} parent=91 // loop_pre_header
                  _
                $region94: #{forward.19} parent=91 // loop_header
                  %s350 = sphi 0, %s354
                  %p351 = scmp.ge.s32.totalorder %s350, 1
                  %s355 = sphi %s298, %s298
                  %s356 = sphi %s293, %s293
                $region95: #{forward.19} parent=91 // loop_header_branch
                  %353 = sbr.rel (%p351) target = $region99
                $region96: #{forward.19} parent=91 // loop_body
                  _
                $region97: #{forward.19} parent=91 // loop_footer
                  %s354 = sadd.s32 1, %s350
                $region98: #{forward.19} parent=91 // loop_footer_branch
                  %349 = sbr.rel target = $region94
                $region99: #{forward.19} parent=91 // loop_exit
                  _
                %s358 = ssub.s32 16, 1
                loop: start=0, step=1, limit=1
                $region100: #{forward.19} parent=91 // loop_pre_header
                  _
                $region101: #{forward.19} parent=91 // loop_header
                  %s360 = sphi 0, %s364
                  %p361 = scmp.ge.s32.totalorder %s360, 1
                  %s365 = sphi %s298, %s298
                  %s366 = sphi %s293, %s293
                $region102: #{forward.19} parent=91 // loop_header_branch
                  %363 = sbr.rel (%p361) target = $region106
                $region103: #{forward.19} parent=91 // loop_body
                  %v367 = vld [vmem:[%s365] sm:%s358]
                  %368 = vst [vmem:[%s366] sm:%s358] %v367
                  %v369 = vld [vmem:[%s365 + $0x8] sm:%s358]
                  %370 = vst [vmem:[%s366 + $0x4] sm:%s358] %v369
                  %v371 = vld [vmem:[%s365 + $0x10] sm:%s358]
                  %372 = vst [vmem:[%s366 + $0x8] sm:%s358] %v371
                  %v373 = vld [vmem:[%s365 + $0x18] sm:%s358]
                  %374 = vst [vmem:[%s366 + $0xc] sm:%s358] %v373
                  %v375 = vld [vmem:[%s365 + $0x20] sm:%s358]
                  %376 = vst [vmem:[%s366 + $0x10] sm:%s358] %v375
                  %v377 = vld [vmem:[%s365 + $0x28] sm:%s358]
                  %378 = vst [vmem:[%s366 + $0x14] sm:%s358] %v377
                  %v379 = vld [vmem:[%s365 + $0x30] sm:%s358]
                  %380 = vst [vmem:[%s366 + $0x18] sm:%s358] %v379
                  %v381 = vld [vmem:[%s365 + $0x38] sm:%s358]
                  %382 = vst [vmem:[%s366 + $0x1c] sm:%s358] %v381
                  %v383 = vld [vmem:[%s365 + $0x40] sm:%s358]
                  %384 = vst [vmem:[%s366 + $0x20] sm:%s358] %v383
                  %v385 = vld [vmem:[%s365 + $0x48] sm:%s358]
                  %386 = vst [vmem:[%s366 + $0x24] sm:%s358] %v385
                  %v387 = vld [vmem:[%s365 + $0x50] sm:%s358]
                  %388 = vst [vmem:[%s366 + $0x28] sm:%s358] %v387
                  %v389 = vld [vmem:[%s365 + $0x58] sm:%s358]
                  %390 = vst [vmem:[%s366 + $0x2c] sm:%s358] %v389
                  %v391 = vld [vmem:[%s365 + $0x60] sm:%s358]
                  %392 = vst [vmem:[%s366 + $0x30] sm:%s358] %v391
                  %v393 = vld [vmem:[%s365 + $0x68] sm:%s358]
                  %394 = vst [vmem:[%s366 + $0x34] sm:%s358] %v393
                  %v395 = vld [vmem:[%s365 + $0x70] sm:%s358]
                  %396 = vst [vmem:[%s366 + $0x38] sm:%s358] %v395
                  %v397 = vld [vmem:[%s365 + $0x78] sm:%s358]
                  %398 = vst [vmem:[%s366 + $0x3c] sm:%s358] %v397
                $region104: #{forward.19} parent=91 // loop_footer
                  %s364 = sadd.s32 1, %s360
                $region105: #{forward.19} parent=91 // loop_footer_branch
                  %359 = sbr.rel target = $region101
                $region106: #{forward.19} parent=91 // loop_exit
                  _
              $region92: #{forward.19} parent=76 // pred_fallthru
                _
            $region77: #{forward.19} parent=72 // pred_fallthru
              _
            // Predicated region
            $region78: #{forward.19} parent=72 // pred_check
              _
            $region79: #{forward.19} parent=72 // pred_check_branch
              %304 = sbr.rel (0) target = $region81
            $region80: #{forward.19} parent=72 // pred_region
              %s306 = ssub.s32 16, 1
              loop: start=0, step=1, limit=1
              $region82: #{forward.19} parent=80 // loop_pre_header
                _
              $region83: #{forward.19} parent=80 // loop_header
                %s308 = sphi 0, %s312
                %p309 = scmp.ge.s32.totalorder %s308, 1
                %s313 = sphi %s298, %s298
                %s314 = sphi %s293, %s293
              $region84: #{forward.19} parent=80 // loop_header_branch
                %311 = sbr.rel (%p309) target = $region88
              $region85: #{forward.19} parent=80 // loop_body
                %v315 = vld [vmem:[%s313] sm:%s306]
                %316 = vst [vmem:[%s314] sm:%s306] %v315
                %v317 = vld [vmem:[%s313 + $0x8] sm:%s306]
                %318 = vst [vmem:[%s314 + $0x4] sm:%s306] %v317
                %v319 = vld [vmem:[%s313 + $0x10] sm:%s306]
                %320 = vst [vmem:[%s314 + $0x8] sm:%s306] %v319
                %v321 = vld [vmem:[%s313 + $0x18] sm:%s306]
                %322 = vst [vmem:[%s314 + $0xc] sm:%s306] %v321
                %v323 = vld [vmem:[%s313 + $0x20] sm:%s306]
                %324 = vst [vmem:[%s314 + $0x10] sm:%s306] %v323
                %v325 = vld [vmem:[%s313 + $0x28] sm:%s306]
                %326 = vst [vmem:[%s314 + $0x14] sm:%s306] %v325
                %v327 = vld [vmem:[%s313 + $0x30] sm:%s306]
                %328 = vst [vmem:[%s314 + $0x18] sm:%s306] %v327
                %v329 = vld [vmem:[%s313 + $0x38] sm:%s306]
                %330 = vst [vmem:[%s314 + $0x1c] sm:%s306] %v329
                %v331 = vld [vmem:[%s313 + $0x40] sm:%s306]
                %332 = vst [vmem:[%s314 + $0x20] sm:%s306] %v331
                %v333 = vld [vmem:[%s313 + $0x48] sm:%s306]
                %334 = vst [vmem:[%s314 + $0x24] sm:%s306] %v333
                %v335 = vld [vmem:[%s313 + $0x50] sm:%s306]
                %336 = vst [vmem:[%s314 + $0x28] sm:%s306] %v335
                %v337 = vld [vmem:[%s313 + $0x58] sm:%s306]
                %338 = vst [vmem:[%s314 + $0x2c] sm:%s306] %v337
                %v339 = vld [vmem:[%s313 + $0x60] sm:%s306]
                %340 = vst [vmem:[%s314 + $0x30] sm:%s306] %v339
                %v341 = vld [vmem:[%s313 + $0x68] sm:%s306]
                %342 = vst [vmem:[%s314 + $0x34] sm:%s306] %v341
                %v343 = vld [vmem:[%s313 + $0x70] sm:%s306]
                %344 = vst [vmem:[%s314 + $0x38] sm:%s306] %v343
                %v345 = vld [vmem:[%s313 + $0x78] sm:%s306]
                %346 = vst [vmem:[%s314 + $0x3c] sm:%s306] %v345
              $region86: #{forward.19} parent=80 // loop_footer
                %s312 = sadd.s32 1, %s308
              $region87: #{forward.19} parent=80 // loop_footer_branch
                %307 = sbr.rel target = $region83
              $region88: #{forward.19} parent=80 // loop_exit
                _
            $region81: #{forward.19} parent=72 // pred_fallthru
              _
          $region73: #{forward.19} parent=68 // pred_fallthru
            _
          %399 = vnop
        $region69: #{forward.19} parent=23 // pred_fallthru
          _
      $region24: #{forward.19} parent=5 // pred_fallthru
        _
      %p400 = scmp.le.s32.totalorder 1, %s10
      %p401 = scmp.lt.s32.totalorder %s10, 3
      %p402 = pnand %p400, %p401
      %p403 = pneg %p402
      // Predicated region
      $region107: #{forward.19} parent=5 // pred_check
        _
      $region108: #{forward.19} parent=5 // pred_check_branch
        %405 = sbr.rel (%p402) target = $region110
      $region109: #{forward.19} parent=5 // pred_region
        %s406 = ssub.s32 %s10, 1
        %s407 = sand.u32 %s37, 1
        %s408 = sand.u32 %s37, 1
        %s409 = smul.addr %s408, 64
        %s410 = scalar_lea.vmem [#allocation2], %s409
        // Predicated region
        $region111: #{forward.19} parent=109 // pred_check
          %p411 = pneg %p50
        $region112: #{forward.19} parent=109 // pred_check_branch
          %413 = sbr.rel (%p411) target = $region114
        $region113: #{forward.19} parent=109 // pred_region
          _
        $region114: #{forward.19} parent=109 // pred_fallthru
          _
        %s414 = sand.u32 %s67, 1
        %s415 = sand.u32 %s67, 1
        %s416 = smul.addr %s415, 64
        %s417 = scalar_lea.vmem [#allocation3], %s416
        // Predicated region
        $region115: #{forward.19} parent=109 // pred_check
          %p418 = pneg %p80
        $region116: #{forward.19} parent=109 // pred_check_branch
          %420 = sbr.rel (%p418) target = $region118
        $region117: #{forward.19} parent=109 // pred_region
          _
        $region118: #{forward.19} parent=109 // pred_fallthru
          _
        %s421 = sand.u32 %s37, 1
        %s422 = sand.u32 %s37, 1
        %s423 = smul.addr %s422, 64
        %s424 = scalar_lea.vmem [#allocation2], %s423
        %p425 = pneg %p50
        %p426 = pneg %p47
        %s427 = sand.u32 %s67, 1
        %s428 = sand.u32 %s67, 1
        %s429 = smul.addr %s428, 64
        %s430 = scalar_lea.vmem [#allocation3], %s429
        %p431 = pneg %p80
        %p432 = pneg %p77
        %p433 = pneg %p101
        %p434 = pneg %p98
        %p435 = pneg %p122
        %p436 = pneg %p119
        %p437 = pneg %p150
        %p438 = pneg %p147
        %p439 = scmp.lt.s32.totalorder %s19, 1
        %s440 = scalar_select %p439, %s19, 1
        %p441 = scmp.lt.s32.totalorder %s20, 0
        %s442 = scalar_select %p441, %s20, 0
        %s443 = smul.addr %s440, 4
        %s444 = sadd.s32 %s442, %s443
        %s445 = smul.addr %s444, 8
        %s446 = scalar_lea.vmem %s4, %s445
        %s447 = sadd.s32 %s20, 1
        %p448 = scmp.lt.s32.totalorder %s19, 1
        %s449 = scalar_select %p448, %s19, 1
        %p450 = scmp.lt.s32.totalorder %s20, 0
        %s451 = scalar_select %p450, %s20, 0
        %s452 = smul.addr %s449, 4
        %s453 = sadd.s32 %s451, %s452
        %s454 = smul.addr %s453, 8
        %s455 = scalar_lea.vmem %s4, %s454
        %v456 = vld [vmem:[%s410] sm:$0xf]
        %v457 = vld [vmem:[%s410 + $0x4] sm:$0xf]
        %v458 = vld [vmem:[%s410 + $0x8] sm:$0xf]
        %v459 = vld [vmem:[%s410 + $0xc] sm:$0xf]
        %v460 = vld [vmem:[%s410 + $0x10] sm:$0xf]
        %v461 = vld [vmem:[%s410 + $0x14] sm:$0xf]
        %v462 = vld [vmem:[%s410 + $0x18] sm:$0xf]
        %v463 = vld [vmem:[%s410 + $0x1c] sm:$0xf]
        %v464 = vld [vmem:[%s410 + $0x20] sm:$0xf]
        %v465 = vld [vmem:[%s410 + $0x24] sm:$0xf]
        %v466 = vld [vmem:[%s410 + $0x28] sm:$0xf]
        %v467 = vld [vmem:[%s410 + $0x2c] sm:$0xf]
        %v468 = vld [vmem:[%s410 + $0x30] sm:$0xf]
        %v469 = vld [vmem:[%s410 + $0x34] sm:$0xf]
        %v470 = vld [vmem:[%s410 + $0x38] sm:$0xf]
        %v471 = vld [vmem:[%s410 + $0x3c] sm:$0xf]
        %v472 = vld [vmem:[%s417] sm:$0xf]
        %v473 = vld [vmem:[%s417 + $0x4] sm:$0xf]
        %v474 = vld [vmem:[%s417 + $0x8] sm:$0xf]
        %v475 = vld [vmem:[%s417 + $0xc] sm:$0xf]
        %v476 = vld [vmem:[%s417 + $0x10] sm:$0xf]
        %v477 = vld [vmem:[%s417 + $0x14] sm:$0xf]
        %v478 = vld [vmem:[%s417 + $0x18] sm:$0xf]
        %v479 = vld [vmem:[%s417 + $0x1c] sm:$0xf]
        %v480 = vld [vmem:[%s417 + $0x20] sm:$0xf]
        %v481 = vld [vmem:[%s417 + $0x24] sm:$0xf]
        %v482 = vld [vmem:[%s417 + $0x28] sm:$0xf]
        %v483 = vld [vmem:[%s417 + $0x2c] sm:$0xf]
        %v484 = vld [vmem:[%s417 + $0x30] sm:$0xf]
        %v485 = vld [vmem:[%s417 + $0x34] sm:$0xf]
        %v486 = vld [vmem:[%s417 + $0x38] sm:$0xf]
        %v487 = vld [vmem:[%s417 + $0x3c] sm:$0xf]
        %v504 = vunpack.c.l.b16 %v456
        %v505 = vunpack.c.l.b16 %v457
        %v506 = vunpack.c.l.b16 %v458
        %v507 = vunpack.c.l.b16 %v459
        %v508 = vunpack.c.l.b16 %v460
        %v509 = vunpack.c.l.b16 %v461
        %v510 = vunpack.c.l.b16 %v462
        %v511 = vunpack.c.l.b16 %v463
        %v512 = vunpack.c.l.b16 %v464
        %v513 = vunpack.c.l.b16 %v465
        %v514 = vunpack.c.l.b16 %v466
        %v515 = vunpack.c.l.b16 %v467
        %v516 = vunpack.c.l.b16 %v468
        %v517 = vunpack.c.l.b16 %v469
        %v518 = vunpack.c.l.b16 %v470
        %v519 = vunpack.c.l.b16 %v471
        %v520 = vpack.c.b16 %v505, %v504
        %v521 = vpack.c.b16 %v507, %v506
        %v522 = vpack.c.b16 %v509, %v508
        %v523 = vpack.c.b16 %v511, %v510
        %v524 = vpack.c.b16 %v513, %v512
        %v525 = vpack.c.b16 %v515, %v514
        %v526 = vpack.c.b16 %v517, %v516
        %v527 = vpack.c.b16 %v519, %v518
        %v552 = vunpack.c.l.b16 %v472
        %v553 = vunpack.c.l.b16 %v473
        %v554 = vunpack.c.l.b16 %v474
        %v555 = vunpack.c.l.b16 %v475
        %v556 = vunpack.c.l.b16 %v476
        %v557 = vunpack.c.l.b16 %v477
        %v558 = vunpack.c.l.b16 %v478
        %v559 = vunpack.c.l.b16 %v479
        %v560 = vunpack.c.l.b16 %v480
        %v561 = vunpack.c.l.b16 %v481
        %v562 = vunpack.c.l.b16 %v482
        %v563 = vunpack.c.l.b16 %v483
        %v564 = vunpack.c.l.b16 %v484
        %v565 = vunpack.c.l.b16 %v485
        %v566 = vunpack.c.l.b16 %v486
        %v567 = vunpack.c.l.b16 %v487
        %v568 = vpack.c.b16 %v553, %v552
        %v569 = vpack.c.b16 %v555, %v554
        %v570 = vpack.c.b16 %v557, %v556
        %v571 = vpack.c.b16 %v559, %v558
        %v572 = vpack.c.b16 %v561, %v560
        %v573 = vpack.c.b16 %v563, %v562
        %v574 = vpack.c.b16 %v565, %v564
        %v575 = vpack.c.b16 %v567, %v566
        %v576 = vld [vmem:[%s2] sm:$0xf]
        %v577 = vld [vmem:[%s2 + $0x4] sm:$0xf]
        %v578 = vld [vmem:[%s2 + $0x8] sm:$0xf]
        %v579 = vld [vmem:[%s2 + $0xc] sm:$0xf]
        %s580 = scalar_lea.vmem %s2, 16
        %v581 = vld [vmem:[%s580] sm:$0xf]
        %v582 = vld [vmem:[%s580 + $0x4] sm:$0xf]
        %v583 = vld [vmem:[%s580 + $0x8] sm:$0xf]
        %v584 = vld [vmem:[%s580 + $0xc] sm:$0xf]
        %v589 = vunpack.c.l.b16 %v581
        %v590 = vunpack.c.l.b16 %v582
        %v591 = vunpack.c.l.b16 %v583
        %v592 = vunpack.c.l.b16 %v584
        %v593 = vpack.c.b16 %v590, %v589
        %v594 = vpack.c.b16 %v592, %v591
        %597 = vrot.lane.b32.xlu0 %v520, 127
        %v598 = vpop.permute.xlu0 %597
        %599 = vrot.lane.b32.xlu0 %v568, 127
        %v600 = vpop.permute.xlu0 %599
        %601 = vrot.lane.b32.xlu0 %v521, 127
        %v602 = vpop.permute.xlu0 %601
        %603 = vrot.lane.b32.xlu0 %v569, 127
        %v604 = vpop.permute.xlu0 %603
        %605 = vrot.lane.b32.xlu0 %v522, 127
        %v606 = vpop.permute.xlu0 %605
        %607 = vrot.lane.b32.xlu0 %v570, 127
        %v608 = vpop.permute.xlu0 %607
        %609 = vrot.lane.b32.xlu0 %v523, 127
        %v610 = vpop.permute.xlu0 %609
        %611 = vrot.lane.b32.xlu0 %v571, 127
        %v612 = vpop.permute.xlu0 %611
        %613 = vrot.lane.b32.xlu0 %v524, 127
        %v614 = vpop.permute.xlu0 %613
        %615 = vrot.lane.b32.xlu0 %v572, 127
        %v616 = vpop.permute.xlu0 %615
        %617 = vrot.lane.b32.xlu0 %v525, 127
        %v618 = vpop.permute.xlu0 %617
        %619 = vrot.lane.b32.xlu0 %v573, 127
        %v620 = vpop.permute.xlu0 %619
        %621 = vrot.lane.b32.xlu0 %v526, 127
        %v622 = vpop.permute.xlu0 %621
        %623 = vrot.lane.b32.xlu0 %v574, 127
        %v624 = vpop.permute.xlu0 %623
        %625 = vrot.lane.b32.xlu0 %v527, 127
        %v626 = vpop.permute.xlu0 %625
        %627 = vrot.lane.b32.xlu0 %v575, 127
        %v628 = vpop.permute.xlu0 %627
        %vm629 = vcmask 1039360
        %v630 = vsel %vm629, %v598, %v600
        %v631 = vsel %vm629, %v602, %v604
        %v632 = vsel %vm629, %v606, %v608
        %v633 = vsel %vm629, %v610, %v612
        %v634 = vsel %vm629, %v614, %v616
        %v635 = vsel %vm629, %v618, %v620
        %v636 = vsel %vm629, %v622, %v624
        %v637 = vsel %vm629, %v626, %v628
        %646 = vmatpush.bf16.msra.mxu0 %v637
        %647 = vmatpush.bf16.msra.mxu0 %v636
        %648 = vmatpush.bf16.msra.mxu0 %v635
        %649 = vmatpush.bf16.msra.mxu0 %v634
        %650 = vmatpush.bf16.msra.mxu0 %v633
        %651 = vmatpush.bf16.msra.mxu0 %v632
        %652 = vmatpush.bf16.msra.mxu0 %v631
        %653 = vmatpush.bf16.msra.mxu0 %v630
        %654 = vmatmul.bf16.gmra.mxu0 %v593
        %v655 = vpop.f32.mrf.mxu0
        %v656 = vadd.f32 0.0, %v655
        %v657 = vpop.f32.mrf.mxu0
        %v658 = vadd.f32 0.0, %v657
        %659 = vmatmul.bf16.gmra.mxu0 %v594
        %v660 = vpop.f32.mrf.mxu0
        %v661 = vadd.f32 0.0, %v660
        %v662 = vpop.f32.mrf.mxu0
        %v663 = vadd.f32 0.0, %v662
        %664 = vdwg.mxu0
        %v669 = vunpack.c.l.b16 %v576
        %v670 = vunpack.c.l.b16 %v577
        %v671 = vunpack.c.l.b16 %v578
        %v672 = vunpack.c.l.b16 %v579
        %v673 = vpack.c.b16 %v670, %v669
        %v674 = vpack.c.b16 %v672, %v671
        %677 = vmatpush.bf16.msra.mxu0 %v527
        %678 = vmatpush.bf16.msra.mxu0 %v526
        %679 = vmatpush.bf16.msra.mxu0 %v525
        %680 = vmatpush.bf16.msra.mxu0 %v524
        %681 = vmatpush.bf16.msra.mxu0 %v523
        %682 = vmatpush.bf16.msra.mxu0 %v522
        %683 = vmatpush.bf16.msra.mxu0 %v521
        %684 = vmatpush.bf16.msra.mxu0 %v520
        %685 = vmatmul.bf16.gmra.mxu0 %v673
        %v686 = vpop.f32.mrf.mxu0
        %v687 = vadd.f32 %v656, %v686
        %v688 = vpop.f32.mrf.mxu0
        %v689 = vadd.f32 %v658, %v688
        %690 = vmatmul.bf16.gmra.mxu0 %v674
        %v691 = vpop.f32.mrf.mxu0
        %v692 = vadd.f32 %v661, %v691
        %v693 = vpop.f32.mrf.mxu0
        %v694 = vadd.f32 %v663, %v693
        %695 = vdwg.mxu0
        %s696 = scalar_lea.vmem %s2, 32
        %v697 = vld [vmem:[%s696] sm:$0xf]
        %v698 = vld [vmem:[%s696 + $0x4] sm:$0xf]
        %v699 = vld [vmem:[%s696 + $0x8] sm:$0xf]
        %v700 = vld [vmem:[%s696 + $0xc] sm:$0xf]
        %v705 = vunpack.c.l.b16 %v697
        %v706 = vunpack.c.l.b16 %v698
        %v707 = vunpack.c.l.b16 %v699
        %v708 = vunpack.c.l.b16 %v700
        %v709 = vpack.c.b16 %v706, %v705
        %v710 = vpack.c.b16 %v708, %v707
        %713 = vrot.lane.b32.xlu0 %v520, 126
        %v714 = vpop.permute.xlu0 %713
        %715 = vrot.lane.b32.xlu0 %v568, 126
        %v716 = vpop.permute.xlu0 %715
        %717 = vrot.lane.b32.xlu0 %v521, 126
        %v718 = vpop.permute.xlu0 %717
        %719 = vrot.lane.b32.xlu0 %v569, 126
        %v720 = vpop.permute.xlu0 %719
        %721 = vrot.lane.b32.xlu0 %v522, 126
        %v722 = vpop.permute.xlu0 %721
        %723 = vrot.lane.b32.xlu0 %v570, 126
        %v724 = vpop.permute.xlu0 %723
        %725 = vrot.lane.b32.xlu0 %v523, 126
        %v726 = vpop.permute.xlu0 %725
        %727 = vrot.lane.b32.xlu0 %v571, 126
        %v728 = vpop.permute.xlu0 %727
        %729 = vrot.lane.b32.xlu0 %v524, 126
        %v730 = vpop.permute.xlu0 %729
        %731 = vrot.lane.b32.xlu0 %v572, 126
        %v732 = vpop.permute.xlu0 %731
        %733 = vrot.lane.b32.xlu0 %v525, 126
        %v734 = vpop.permute.xlu0 %733
        %735 = vrot.lane.b32.xlu0 %v573, 126
        %v736 = vpop.permute.xlu0 %735
        %737 = vrot.lane.b32.xlu0 %v526, 126
        %v738 = vpop.permute.xlu0 %737
        %739 = vrot.lane.b32.xlu0 %v574, 126
        %v740 = vpop.permute.xlu0 %739
        %741 = vrot.lane.b32.xlu0 %v527, 126
        %v742 = vpop.permute.xlu0 %741
        %743 = vrot.lane.b32.xlu0 %v575, 126
        %v744 = vpop.permute.xlu0 %743
        %vm745 = vcmask 1031168
        %v746 = vsel %vm745, %v714, %v716
        %v747 = vsel %vm745, %v718, %v720
        %v748 = vsel %vm745, %v722, %v724
        %v749 = vsel %vm745, %v726, %v728
        %v750 = vsel %vm745, %v730, %v732
        %v751 = vsel %vm745, %v734, %v736
        %v752 = vsel %vm745, %v738, %v740
        %v753 = vsel %vm745, %v742, %v744
        %762 = vmatpush.bf16.msra.mxu0 %v753
        %763 = vmatpush.bf16.msra.mxu0 %v752
        %764 = vmatpush.bf16.msra.mxu0 %v751
        %765 = vmatpush.bf16.msra.mxu0 %v750
        %766 = vmatpush.bf16.msra.mxu0 %v749
        %767 = vmatpush.bf16.msra.mxu0 %v748
        %768 = vmatpush.bf16.msra.mxu0 %v747
        %769 = vmatpush.bf16.msra.mxu0 %v746
        %770 = vmatmul.bf16.gmra.mxu0 %v709
        %v771 = vpop.f32.mrf.mxu0
        %v772 = vadd.f32 0.0, %v771
        %v773 = vpop.f32.mrf.mxu0
        %v774 = vadd.f32 0.0, %v773
        %775 = vmatmul.bf16.gmra.mxu0 %v710
        %v776 = vpop.f32.mrf.mxu0
        %v777 = vadd.f32 0.0, %v776
        %v778 = vpop.f32.mrf.mxu0
        %v779 = vadd.f32 0.0, %v778
        %780 = vdwg.mxu0
        %v781 = vadd.f32 %v687, %v772
        %v782 = vadd.f32 %v689, %v774
        %v783 = vadd.f32 %v692, %v777
        %v784 = vadd.f32 %v694, %v779
        %s785 = scalar_lea.vmem %s2, 48
        %v786 = vld [vmem:[%s785] sm:$0xf]
        %v787 = vld [vmem:[%s785 + $0x4] sm:$0xf]
        %v788 = vld [vmem:[%s785 + $0x8] sm:$0xf]
        %v789 = vld [vmem:[%s785 + $0xc] sm:$0xf]
        %v794 = vunpack.c.l.b16 %v786
        %v795 = vunpack.c.l.b16 %v787
        %v796 = vunpack.c.l.b16 %v788
        %v797 = vunpack.c.l.b16 %v789
        %v798 = vpack.c.b16 %v795, %v794
        %v799 = vpack.c.b16 %v797, %v796
        %802 = vrot.lane.b32.xlu0 %v520, 125
        %v803 = vpop.permute.xlu0 %802
        %804 = vrot.lane.b32.xlu0 %v568, 125
        %v805 = vpop.permute.xlu0 %804
        %806 = vrot.lane.b32.xlu0 %v521, 125
        %v807 = vpop.permute.xlu0 %806
        %808 = vrot.lane.b32.xlu0 %v569, 125
        %v809 = vpop.permute.xlu0 %808
        %810 = vrot.lane.b32.xlu0 %v522, 125
        %v811 = vpop.permute.xlu0 %810
        %812 = vrot.lane.b32.xlu0 %v570, 125
        %v813 = vpop.permute.xlu0 %812
        %814 = vrot.lane.b32.xlu0 %v523, 125
        %v815 = vpop.permute.xlu0 %814
        %816 = vrot.lane.b32.xlu0 %v571, 125
        %v817 = vpop.permute.xlu0 %816
        %818 = vrot.lane.b32.xlu0 %v524, 125
        %v819 = vpop.permute.xlu0 %818
        %820 = vrot.lane.b32.xlu0 %v572, 125
        %v821 = vpop.permute.xlu0 %820
        %822 = vrot.lane.b32.xlu0 %v525, 125
        %v823 = vpop.permute.xlu0 %822
        %824 = vrot.lane.b32.xlu0 %v573, 125
        %v825 = vpop.permute.xlu0 %824
        %826 = vrot.lane.b32.xlu0 %v526, 125
        %v827 = vpop.permute.xlu0 %826
        %828 = vrot.lane.b32.xlu0 %v574, 125
        %v829 = vpop.permute.xlu0 %828
        %830 = vrot.lane.b32.xlu0 %v527, 125
        %v831 = vpop.permute.xlu0 %830
        %832 = vrot.lane.b32.xlu0 %v575, 125
        %v833 = vpop.permute.xlu0 %832
        %vm834 = vcmask 1022976
        %v835 = vsel %vm834, %v803, %v805
        %v836 = vsel %vm834, %v807, %v809
        %v837 = vsel %vm834, %v811, %v813
        %v838 = vsel %vm834, %v815, %v817
        %v839 = vsel %vm834, %v819, %v821
        %v840 = vsel %vm834, %v823, %v825
        %v841 = vsel %vm834, %v827, %v829
        %v842 = vsel %vm834, %v831, %v833
        %851 = vmatpush.bf16.msra.mxu0 %v842
        %852 = vmatpush.bf16.msra.mxu0 %v841
        %853 = vmatpush.bf16.msra.mxu0 %v840
        %854 = vmatpush.bf16.msra.mxu0 %v839
        %855 = vmatpush.bf16.msra.mxu0 %v838
        %856 = vmatpush.bf16.msra.mxu0 %v837
        %857 = vmatpush.bf16.msra.mxu0 %v836
        %858 = vmatpush.bf16.msra.mxu0 %v835
        %859 = vmatmul.bf16.gmra.mxu0 %v798
        %v860 = vpop.f32.mrf.mxu0
        %v861 = vadd.f32 0.0, %v860
        %v862 = vpop.f32.mrf.mxu0
        %v863 = vadd.f32 0.0, %v862
        %864 = vmatmul.bf16.gmra.mxu0 %v799
        %v865 = vpop.f32.mrf.mxu0
        %v866 = vadd.f32 0.0, %v865
        %v867 = vpop.f32.mrf.mxu0
        %v868 = vadd.f32 0.0, %v867
        %869 = vdwg.mxu0
        %v870 = vadd.f32 %v781, %v861
        %v871 = vadd.f32 %v782, %v863
        %v872 = vadd.f32 %v783, %v866
        %v873 = vadd.f32 %v784, %v868
        %s874 = scalar_lea.vmem %s2, 64
        %v875 = vld [vmem:[%s874] sm:$0xf]
        %v876 = vld [vmem:[%s874 + $0x4] sm:$0xf]
        %v877 = vld [vmem:[%s874 + $0x8] sm:$0xf]
        %v878 = vld [vmem:[%s874 + $0xc] sm:$0xf]
        %v883 = vunpack.c.l.b16 %v875
        %v884 = vunpack.c.l.b16 %v876
        %v885 = vunpack.c.l.b16 %v877
        %v886 = vunpack.c.l.b16 %v878
        %v887 = vpack.c.b16 %v884, %v883
        %v888 = vpack.c.b16 %v886, %v885
        %891 = vrot.lane.b32.xlu0 %v520, 124
        %v892 = vpop.permute.xlu0 %891
        %893 = vrot.lane.b32.xlu0 %v568, 124
        %v894 = vpop.permute.xlu0 %893
        %895 = vrot.lane.b32.xlu0 %v521, 124
        %v896 = vpop.permute.xlu0 %895
        %897 = vrot.lane.b32.xlu0 %v569, 124
        %v898 = vpop.permute.xlu0 %897
        %899 = vrot.lane.b32.xlu0 %v522, 124
        %v900 = vpop.permute.xlu0 %899
        %901 = vrot.lane.b32.xlu0 %v570, 124
        %v902 = vpop.permute.xlu0 %901
        %903 = vrot.lane.b32.xlu0 %v523, 124
        %v904 = vpop.permute.xlu0 %903
        %905 = vrot.lane.b32.xlu0 %v571, 124
        %v906 = vpop.permute.xlu0 %905
        %907 = vrot.lane.b32.xlu0 %v524, 124
        %v908 = vpop.permute.xlu0 %907
        %909 = vrot.lane.b32.xlu0 %v572, 124
        %v910 = vpop.permute.xlu0 %909
        %911 = vrot.lane.b32.xlu0 %v525, 124
        %v912 = vpop.permute.xlu0 %911
        %913 = vrot.lane.b32.xlu0 %v573, 124
        %v914 = vpop.permute.xlu0 %913
        %915 = vrot.lane.b32.xlu0 %v526, 124
        %v916 = vpop.permute.xlu0 %915
        %917 = vrot.lane.b32.xlu0 %v574, 124
        %v918 = vpop.permute.xlu0 %917
        %919 = vrot.lane.b32.xlu0 %v527, 124
        %v920 = vpop.permute.xlu0 %919
        %921 = vrot.lane.b32.xlu0 %v575, 124
        %v922 = vpop.permute.xlu0 %921
        %vm923 = vcmask 1014784
        %v924 = vsel %vm923, %v892, %v894
        %v925 = vsel %vm923, %v896, %v898
        %v926 = vsel %vm923, %v900, %v902
        %v927 = vsel %vm923, %v904, %v906
        %v928 = vsel %vm923, %v908, %v910
        %v929 = vsel %vm923, %v912, %v914
        %v930 = vsel %vm923, %v916, %v918
        %v931 = vsel %vm923, %v920, %v922
        %940 = vmatpush.bf16.msra.mxu0 %v931
        %941 = vmatpush.bf16.msra.mxu0 %v930
        %942 = vmatpush.bf16.msra.mxu0 %v929
        %943 = vmatpush.bf16.msra.mxu0 %v928
        %944 = vmatpush.bf16.msra.mxu0 %v927
        %945 = vmatpush.bf16.msra.mxu0 %v926
        %946 = vmatpush.bf16.msra.mxu0 %v925
        %947 = vmatpush.bf16.msra.mxu0 %v924
        %948 = vmatmul.bf16.gmra.mxu0 %v887
        %v949 = vpop.f32.mrf.mxu0
        %v950 = vadd.f32 0.0, %v949
        %v951 = vpop.f32.mrf.mxu0
        %v952 = vadd.f32 0.0, %v951
        %953 = vmatmul.bf16.gmra.mxu0 %v888
        %v954 = vpop.f32.mrf.mxu0
        %v955 = vadd.f32 0.0, %v954
        %v956 = vpop.f32.mrf.mxu0
        %v957 = vadd.f32 0.0, %v956
        %958 = vdwg.mxu0
        %v959 = vadd.f32 %v870, %v950
        %v960 = vadd.f32 %v871, %v952
        %v961 = vadd.f32 %v872, %v955
        %v962 = vadd.f32 %v873, %v957
        %v963 = vld [vmem:[%s3] sm:$0xff]
        %v964 = vld [vmem:[%s3 + $0x8] sm:$0xff]
        %v965 = vld [vmem:[%s3 + $0x10] sm:$0xff]
        %v966 = vld [vmem:[%s3 + $0x18] sm:$0xff]
        %968 = vset.pattern.permute.xlu0 0
        %969 = vperm.xlu0 %968, %v963
        %v970 = vpop.permute.xlu0 %969
        %973 = vset.pattern.permute.xlu0 0
        %974 = vperm.xlu0 %973, %v964
        %v975 = vpop.permute.xlu0 %974
        %978 = vset.pattern.permute.xlu0 0
        %979 = vperm.xlu0 %978, %v965
        %v980 = vpop.permute.xlu0 %979
        %983 = vset.pattern.permute.xlu0 0
        %984 = vperm.xlu0 %983, %v966
        %v985 = vpop.permute.xlu0 %984
        %v987 = vadd.f32 %v959, %v970
        %v988 = vadd.f32 %v960, %v975
        %v989 = vadd.f32 %v961, %v980
        %v990 = vadd.f32 %v962, %v985
        %991 = vst [vmem:[%s455] sm:$0xff] %v987
        %992 = vst [vmem:[%s455 + $0x8] sm:$0xff] %v988
        %993 = vst [vmem:[%s455 + $0x10] sm:$0xff] %v989
        %994 = vst [vmem:[%s455 + $0x18] sm:$0xff] %v990
        %p995 = scmp.lt.s32.totalorder %s19, 1
        %s996 = scalar_select %p995, %s19, 1
        %p997 = scmp.lt.s32.totalorder %s20, 0
        %s998 = scalar_select %p997, %s20, 0
        %s999 = smul.addr %s996, 4
        %s1000 = sadd.s32 %s998, %s999
        %s1001 = smul.addr %s1000, 8
        %s1002 = scalar_lea.vmem %s4, %s1001
        // Predicated region
        $region119: #{forward.19} parent=109 // pred_check
          %p1003 = pneg %p147
        $region120: #{forward.19} parent=109 // pred_check_branch
          %1005 = sbr.rel (%p1003) target = $region122
        $region121: #{forward.19} parent=109 // pred_region
          _
        $region122: #{forward.19} parent=109 // pred_fallthru
          _
      $region110: #{forward.19} parent=5 // pred_fallthru
        _
      %p1006 = scmp.le.s32.totalorder 2, %s10
      // Predicated region
      $region123: #{forward.19} parent=5 // pred_check
        %p1007 = pneg %p1006
      $region124: #{forward.19} parent=5 // pred_check_branch
        %1009 = sbr.rel (%p1007) target = $region126
      $region125: #{forward.19} parent=5 // pred_region
        %s1010 = ssub.s32 %s10, 2
        // Predicated region
        $region127: #{forward.19} parent=125 // pred_check
          %p1011 = pneg %p153
        $region128: #{forward.19} parent=125 // pred_check_branch
          %1013 = sbr.rel (%p1011) target = $region130
        $region129: #{forward.19} parent=125 // pred_region
          %p1014 = scmp.lt.s32.totalorder %s21, 1
          %s1015 = scalar_select %p1014, %s21, 1
          %p1016 = scmp.lt.s32.totalorder %s22, 0
          %s1017 = scalar_select %p1016, %s22, 0
          %s1018 = smul.addr %s1015, 4
          %s1019 = sadd.s32 %s1017, %s1018
          %s1020 = smul.addr %s1019, 8
          %s1021 = scalar_lea.vmem %s4, %s1020
        $region130: #{forward.19} parent=125 // pred_fallthru
          _
      $region126: #{forward.19} parent=5 // pred_fallthru
        _
    $region6: #{forward.19} parent=1 // loop_footer
      %s14 = sadd.s32 1, %s10
    $region7: #{forward.19} parent=1 // loop_footer_branch
      %9 = sbr.rel target = $region3
    $region8: #{forward.19} parent=1 // loop_exit
      _

</llo_original>
